<compile_context>
chip_gen: v7x
topology: tpu7x:2x2x1
jax: 0.10.0
libtpu: 0.0.40
codegen_flags: <defaults>
</compile_context>

<pallas_src>
import functools

import jax
import jax.numpy as jnp
from jax.experimental import pallas as pl
from jax.experimental.pallas import tpu as pltpu


def _round_up(x, m):
    return ((x + m - 1) // m) * m


def _pick_d_tile(d, cout, s_out, budget_bytes=2 << 20, max_unroll=32):
    """Largest divisor of d (capped) whose per-step output block fits the budget."""
    for dt in range(min(d, max_unroll), 0, -1):
        if d % dt == 0 and dt * cout * s_out * 2 <= budget_bytes:
            return dt
    return 1


# ----------------------------------------------------------------------------
# Pallas kernels
# ----------------------------------------------------------------------------
def _conv3d_kernel(x_ref, w_ref, mask_ref, y_ref, stat_ref, *,
                   cin, cout, wp, d_tile, s_out):
    """Direct 3x3x3 conv over d_tile output depth planes of one batch element.

    x_ref:    (1, (D+2)*Cin, S_in) bf16 -- whole depth-padded volume, depth and
              channels merged on sublanes, shifted padded plane on lanes.
    w_ref:    (9, Cout, 3*Cin) bf16 -- per (kh,kw) tap with the 3 depth taps
              folded into the contraction dim.
    mask_ref: (1, S_out) f32 -- 1.0 on lanes holding valid output pixels.
    y_ref:    (1, d_tile, Cout, S_out) bf16 -- lane-dense conv output.
    stat_ref: (1, 2, Cout, S_out) f32 -- masked sum / sum-of-squares partials,
              accumulated across the (arbitrary) depth-block grid axis.
    """
    j = pl.program_id(1)

    @pl.when(j == 0)
    def _():
        stat_ref[...] = jnp.zeros_like(stat_ref)

    m = mask_ref[...]                                   # (1, S_out)
    wk = [w_ref[t] for t in range(9)]                   # stays in vregs
    ssum = jnp.zeros((cout, s_out), jnp.float32)
    ssq = jnp.zeros((cout, s_out), jnp.float32)

    for dd in range(d_tile):
        dbase = pl.multiple_of((j * d_tile + dd) * cin, 8)
        acc = None
        for kh in range(3):
            for kw in range(3):
                # (3*Cin, S_out) window: 3 consecutive depth slices, lane-shifted tap.
                xt = x_ref[0, pl.ds(dbase, 3 * cin), pl.ds(kh * wp + kw, s_out)]
                c = jnp.dot(wk[kh * 3 + kw], xt, preferred_element_type=jnp.float32)
                acc = c if acc is None else acc + c      # chained -> MRB accumulate on v7x
        yb = acc.astype(jnp.bfloat16)
        y_ref[0, dd, :, :] = yb
        yf = yb.astype(jnp.float32)                      # stats of the bf16-rounded value
        am = yf * m
        ssum = ssum + am
        ssq = ssq + am * yf

    stat_ref[0, 0, :, :] = stat_ref[0, 0, :, :] + ssum
    stat_ref[0, 1, :, :] = stat_ref[0, 1, :, :] + ssq


def _bn_relu_repad_kernel(y_ref, scale_ref, shift_ref, mask_ref, o_ref, *,
                          d, cout, s_y, s_o):
    """BN affine + ReLU, emitted directly as conv2's depth-padded input slab.

    Conv1's output frame equals conv2's input frame, so every store here is a
    lane-0 aligned full-width vst; only the zero ring (mask), the two depth-pad
    slices and the lane tail are zero-filled."""
    zrow = jnp.zeros((cout, s_o), jnp.bfloat16)
    o_ref[0, 0:cout, :] = zrow                           # leading depth-pad slice
    o_ref[0, (d + 1) * cout:(d + 2) * cout, :] = zrow    # trailing depth-pad slice
    sc = scale_ref[...]
    sh = shift_ref[...]
    m = mask_ref[...]
    ztail = jnp.zeros((cout, s_o - s_y), jnp.bfloat16) if s_o > s_y else None
    for r in range(d):
        y = y_ref[0, r, :, :].astype(jnp.float32)
        v = jnp.maximum(y * sc + sh, 0.0) * m
        row0 = (r + 1) * cout
        o_ref[0, row0:row0 + cout, 0:s_y] = v.astype(jnp.bfloat16)
        if ztail is not None:
            o_ref[0, row0:row0 + cout, s_y:] = ztail


def _bn_relu_kernel(y_ref, scale_ref, shift_ref, o_ref):
    y = y_ref[0].astype(jnp.float32)                     # (d_tile, Cout, S_out)
    o_ref[0] = jnp.maximum(y * scale_ref[...] + shift_ref[...], 0.0).astype(o_ref.dtype)


# ----------------------------------------------------------------------------
# pallas_call wrappers
# ----------------------------------------------------------------------------
def conv3d_3x3x3(xp, w_taps, mask, *, d, cin, cout, wp, d_tile):
    """xp: (N, (D+2)*Cin, S_in) bf16.  w_taps: (9, Cout, 3*Cin) bf16.
    mask: (1, S_out) f32.  Returns y (N, D, Cout, S_out) bf16 and
    stats (N, 2, Cout, S_out) f32 (masked sum / sum-of-squares partials)."""
    n = xp.shape[0]
    s_in = xp.shape[2]
    s_out = mask.shape[1]
    kern = functools.partial(_conv3d_kernel, cin=cin, cout=cout, wp=wp,
                             d_tile=d_tile, s_out=s_out)
    return pl.pallas_call(
        kern,
        out_shape=(
            jax.ShapeDtypeStruct((n, d, cout, s_out), jnp.bfloat16),
            jax.ShapeDtypeStruct((n, 2, cout, s_out), jnp.float32),
        ),
        grid_spec=pltpu.PrefetchScalarGridSpec(
            num_scalar_prefetch=0,
            grid=(n, d // d_tile),
            in_specs=[
                # whole depth-padded volume stays resident per batch element
                pl.BlockSpec((1, (d + 2) * cin, s_in), lambda i, j: (i, 0, 0)),
                pl.BlockSpec((9, cout, 3 * cin), lambda i, j: (0, 0, 0)),
                pl.BlockSpec((1, s_out), lambda i, j: (0, 0)),
            ],
            out_specs=(
                pl.BlockSpec((1, d_tile, cout, s_out), lambda i, j: (i, j, 0, 0)),
                # stats block revisited across j -> resident accumulator, 1 write per n
                pl.BlockSpec((1, 2, cout, s_out), lambda i, j: (i, 0, 0, 0)),
            ),
        ),
        compiler_params=pltpu.CompilerParams(
            dimension_semantics=("parallel", "arbitrary")),
    )(xp, w_taps, mask)


def bn_relu_repad(y, scale, shift, mask, *, s_in_next):
    """Fused BN+ReLU producing conv2's depth-padded bf16 input slab
    (N, (D+2)*Cout, S_in_next), same lane frame as y (aligned stores)."""
    n, d, cout, s_y = y.shape
    kern = functools.partial(_bn_relu_repad_kernel, d=d, cout=cout,
                             s_y=s_y, s_o=s_in_next)
    return pl.pallas_call(
        kern,
        out_shape=jax.ShapeDtypeStruct((n, (d + 2) * cout, s_in_next), jnp.bfloat16),
        grid_spec=pltpu.PrefetchScalarGridSpec(
            num_scalar_prefetch=0,
            grid=(n,),
            in_specs=[
                pl.BlockSpec((1, d, cout, s_y), lambda i: (i, 0, 0, 0)),
                pl.BlockSpec((cout, 1), lambda i: (0, 0)),
                pl.BlockSpec((cout, 1), lambda i: (0, 0)),
                pl.BlockSpec((1, s_y), lambda i: (0, 0)),
            ],
            out_specs=pl.BlockSpec((1, (d + 2) * cout, s_in_next), lambda i: (i, 0, 0)),
        ),
        compiler_params=pltpu.CompilerParams(dimension_semantics=("parallel",)),
    )(y, scale, shift, mask)


def bn_relu(y, scale, shift, *, d_tile):
    n, d, cout, s_out = y.shape
    return pl.pallas_call(
        _bn_relu_kernel,
        out_shape=jax.ShapeDtypeStruct((n, d, cout, s_out), jnp.bfloat16),
        grid_spec=pltpu.PrefetchScalarGridSpec(
            num_scalar_prefetch=0,
            grid=(n, d // d_tile),
            in_specs=[
                pl.BlockSpec((1, d_tile, cout, s_out), lambda i, j: (i, j, 0, 0)),
                pl.BlockSpec((cout, 1), lambda i, j: (0, 0)),
                pl.BlockSpec((cout, 1), lambda i, j: (0, 0)),
            ],
            out_specs=pl.BlockSpec((1, d_tile, cout, s_out), lambda i, j: (i, j, 0, 0)),
        ),
        compiler_params=pltpu.CompilerParams(
            dimension_semantics=("parallel", "parallel")),
    )(y, scale, shift)


# ----------------------------------------------------------------------------
# JAX glue
# ----------------------------------------------------------------------------
def _bn_affine(stats, count, gamma, beta, eps):
    ssum = jnp.sum(stats[:, 0], axis=(0, 2))             # (Cout,)
    ssq = jnp.sum(stats[:, 1], axis=(0, 2))
    mean = ssum / count
    var = jnp.maximum(ssq / count - mean * mean, 0.0)     # clamp cancellation noise
    scale = gamma / jnp.sqrt(var + eps)
    shift = beta - mean * scale
    return (scale.reshape(-1, 1).astype(jnp.float32),
            shift.reshape(-1, 1).astype(jnp.float32))


def _interp_matrix(in_size, out_size, dtype=jnp.float32):
    """Linear interpolation matrix (out_size, in_size), align_corners=True."""
    if in_size == 1:
        return jnp.ones((out_size, 1), dtype)
    pos = jnp.arange(out_size, dtype=jnp.float32) * (in_size - 1) / (out_size - 1)
    lo = jnp.clip(jnp.floor(pos).astype(jnp.int32), 0, in_size - 2)
    frac = pos - lo.astype(jnp.float32)
    return (jax.nn.one_hot(lo, in_size, dtype=dtype) * (1.0 - frac)[:, None]
            + jax.nn.one_hot(lo + 1, in_size, dtype=dtype) * frac[:, None])


def init_up3d_params(key, in_channels, out_channels):
    k1, k2 = jax.random.split(key)
    # Weight layout: (kd, kh, kw, Cout, Cin).  To import a PyTorch Conv3d weight
    # (Cout, Cin, kd, kh, kw), transpose with (2, 3, 4, 0, 1).
    # Conv3d bias is intentionally omitted: the training-mode BatchNorm that
    # immediately follows subtracts the batch mean, cancelling it exactly.
    return {
        "w1": jax.random.normal(k1, (3, 3, 3, out_channels, in_channels), jnp.float32) * 0.1,
        "g1": jnp.ones((out_channels,), jnp.float32),
        "be1": jnp.zeros((out_channels,), jnp.float32),
        "w2": jax.random.normal(k2, (3, 3, 3, out_channels, out_channels), jnp.float32) * 0.1,
        "g2": jnp.ones((out_channels,), jnp.float32),
        "be2": jnp.zeros((out_channels,), jnp.float32),
    }


def up3d_forward(params, x1_ncdhw, x2_ncdhw, eps=1e-5):
    x1 = x1_ncdhw.astype(jnp.float32)
    x2 = x2_ncdhw.astype(jnp.float32)
    n, c1, d1, h1, w1 = x1.shape
    _, c2, d2, h2, w2 = x2.shape
    cout = params["w1"].shape[3]
    cin = params["w1"].shape[4]
    assert cin == c1 + c2 and cin % 8 == 0 and cout % 8 == 0

    # --- nn.Upsample(scale_factor=2, mode='trilinear', align_corners=True)
    #     as small interpolation matmuls, emitted directly in (N, D, C, H, W).
    ad = _interp_matrix(d1, 2 * d1)
    ah = _interp_matrix(h1, 2 * h1)
    aw = _interp_matrix(w1, 2 * w1)
    x1u = jnp.einsum("ncdhw,ad,bh,ew->nacbe", x1, ad, ah, aw)

    # --- F.pad([dX//2, dX-dX//2, dY//2, dY-dY//2, dZ//2, dZ-dZ//2])
    dz, dy, dx = d2 - 2 * d1, h2 - 2 * h1, w2 - 2 * w1
    x1u = jnp.pad(x1u, ((0, 0), (dz // 2, dz - dz // 2), (0, 0),
                        (dy // 2, dy - dy // 2), (dx // 2, dx - dx // 2)))

    # --- torch.cat([x2, x1], dim=1)
    x2t = jnp.transpose(x2, (0, 2, 1, 3, 4))
    xc = jnp.concatenate([x2t, x1u], axis=2)              # (N, D, Cin, H, W)

    # --- lane frames.  Output lane u holds the conv value at padded-grid
    #     position (u - lead_out); input slab lane u holds padded_grid[u - lead_in]
    #     with lead_in = lead_out + (Wp+1), so tap offsets are always kh*Wp+kw >= 0
    #     and the BN/ReLU repad is a pure lane-0 aligned pointwise write.
    hp, wp = h2 + 2, w2 + 2
    s = hp * wp
    lead2 = wp + 1                     # conv1 output frame == conv2 input frame
    lead1 = 2 * (wp + 1)               # conv1 input frame
    s_out1 = _round_up(lead2 + s, 128)
    s_in1 = _round_up(s_out1 + 2 * wp + 2, 128)
    s_out2 = _round_up(s, 128)
    s_in2 = _round_up(s_out2 + 2 * wp + 2, 128)
    d_tile = _pick_d_tile(d2, cout, max(s_out1, s_out2))

    # conv1 input slab: zero ring + depth pad + lane lead/tail, depth*Cin merged.
    xpad = jnp.pad(xc, ((0, 0), (1, 1), (0, 0), (1, 1), (1, 1)))
    xflat = xpad.reshape(n, d2 + 2, cin, s)
    xp1 = jnp.pad(xflat, ((0, 0), (0, 0), (0, 0), (lead1, s_in1 - lead1 - s)))
    xp1 = xp1.reshape(n, (d2 + 2) * cin, s_in1).astype(jnp.bfloat16)

    # Validity masks (interior pixels) in each output frame.
    def _interior_mask(width, lead):
        u = jnp.arange(width)
        t = u - lead
        row = t // wp
        col = t % wp
        m = ((t >= 0) & (t < s) & (row >= 1) & (row <= h2) & (col >= 1) & (col <= w2))
        return m.astype(jnp.float32).reshape(1, width)

    m1 = _interior_mask(s_out1, lead2)
    m2 = _interior_mask(s_out2, 0)
    count = float(n * d2 * h2 * w2)

    # Fold the 3 depth taps into the matmul contraction: (9, Cout, 3*Cin).
    w1t = jnp.transpose(params["w1"], (1, 2, 3, 0, 4)).reshape(9, cout, 3 * cin).astype(jnp.bfloat16)
    w2t = jnp.transpose(params["w2"], (1, 2, 3, 0, 4)).reshape(9, cout, 3 * cout).astype(jnp.bfloat16)

    # conv1 -> BN1 (batch statistics) -> ReLU fused with re-padding for conv2
    y1, st1 = conv3d_3x3x3(xp1, w1t, m1, d=d2, cin=cin, cout=cout, wp=wp, d_tile=d_tile)
    sc1, sh1 = _bn_affine(st1, count, params["g1"], params["be1"], eps)
    xp2 = bn_relu_repad(y1, sc1, sh1, m1, s_in_next=s_in2)

    # conv2 -> BN2 -> ReLU
    y2, st2 = conv3d_3x3x3(xp2, w2t, m2, d=d2, cin=cout, cout=cout, wp=wp, d_tile=d_tile)
    sc2, sh2 = _bn_affine(st2, count, params["g2"], params["be2"], eps)
    yf = bn_relu(y2, sc2, sh2, d_tile=d_tile)              # (N, D, Cout, S_out2) bf16

    # Extract the valid (centered) pixels and return NCDHW f32.
    out = yf[..., :s].reshape(n, d2, cout, hp, wp)[:, :, :, 1:h2 + 1, 1:w2 + 1]
    return jnp.transpose(out, (0, 2, 1, 3, 4)).astype(jnp.float32)


# TODO(synk): BatchNorm running_mean / running_var updates and the eval-mode
# (running-stat) path are not implemented; this is the training forward only.
# TODO(synk): for very large volumes the full-depth-resident input should be
# replaced by a manually pipelined overlapping depth window (VMEM budget).

if __name__ == "__main__":
    key = jax.random.PRNGKey(0)
    kp, kx1, kx2 = jax.random.split(key, 3)

    in_channels, out_channels = 16, 16
    n, d, h, w = 2, 4, 4, 4
    # x1: deeper level (half channels, half spatial resolution); x2: skip connection.
    x1 = jax.random.normal(kx1, (n, in_channels // 2, d, h, w), jnp.float32)
    x2 = jax.random.normal(kx2, (n, in_channels // 2, 2 * d, 2 * h, 2 * w), jnp.float32)

    params = init_up3d_params(kp, in_channels, out_channels)

    fwd = jax.jit(up3d_forward)
    y = fwd(params, x1, x2)
    jax.block_until_ready(y)
    assert y.shape == (n, out_channels, 2 * d, 2 * h, 2 * w), y.shape
    assert bool(jnp.all(jnp.isfinite(y)))
    print("KERNEL_OK")
</pallas_src>

<mosaic_0001>
module attributes {stable_mosaic.version = 11 : i64} {
  func.func @_conv3d_kernel(%arg0: i32, %arg1: i32, %arg2: memref<1x160x256xbf16, #tpu.memory_space<vmem>>, %arg3: memref<9x16x48xbf16, #tpu.memory_space<vmem>>, %arg4: memref<1x128xf32, #tpu.memory_space<vmem>>, %arg5: memref<1x8x16x128xbf16, #tpu.memory_space<vmem>>, %arg6: memref<1x2x16x128xf32, #tpu.memory_space<vmem>>) attributes {dimension_semantics = [#tpu.dimension_semantics<parallel>, #tpu.dimension_semantics<arbitrary>], iteration_bounds = array<i64: 2, 1>, scalar_prefetch = 0 : i64, scratch_operands = 0 : i64, tpu.core_type = #tpu.core_type<tc>, window_params = [{transform_indices = @transform_0, window_bounds = array<i64: 1, 160, 256>}, {pipeline_mode = #tpu.pipeline_mode<synchronous>, transform_indices = @transform_1, window_bounds = array<i64: 9, 16, 48>}, {pipeline_mode = #tpu.pipeline_mode<synchronous>, transform_indices = @transform_2, window_bounds = array<i64: 1, 128>}, {transform_indices = @transform_3, window_bounds = array<i64: 1, 8, 16, 128>}, {transform_indices = @transform_4, window_bounds = array<i64: 1, 2, 16, 128>}]} {
    %c0_i32 = arith.constant 0 : i32
    %0 = arith.cmpi eq, %arg1, %c0_i32 : i32
    %1 = arith.extui %0 : i1 to i32
    %c0_i32_0 = arith.constant 0 : i32
    %2 = arith.cmpi ne, %1, %c0_i32_0 : i32
    scf.if %2 {
      %cst_295 = arith.constant 0.000000e+00 : f32
      %500 = vector.broadcast %cst_295 : f32 to vector<1x2x16x128xf32>
      %c0_296 = arith.constant 0 : index
      %c0_297 = arith.constant 0 : index
      %c0_298 = arith.constant 0 : index
      %c0_299 = arith.constant 0 : index
      %501 = vector.load %arg6[%c0_296, %c0_297, %c0_298, %c0_299] : memref<1x2x16x128xf32, #tpu.memory_space<vmem>>, vector<1x2x16x128xf32>
      tpu.vector_store %arg6[%c0_296, %c0_297, %c0_298, %c0_299], %500 {strides = array<i32>} : memref<1x2x16x128xf32, #tpu.memory_space<vmem>>, vector<1x2x16x128xf32>,
    } else {
    }
    %c0 = arith.constant 0 : index
    %c0_1 = arith.constant 0 : index
    %3 = vector.load %arg4[%c0, %c0_1] : memref<1x128xf32, #tpu.memory_space<vmem>>, vector<1x128xf32>
    %c0_2 = arith.constant 0 : index
    %c0_3 = arith.constant 0 : index
    %c0_4 = arith.constant 0 : index
    %4 = vector.load %arg3[%c0_2, %c0_3, %c0_4] : memref<9x16x48xbf16, #tpu.memory_space<vmem>>, vector<1x16x48xbf16>
    %5 = vector.shape_cast %4 : vector<1x16x48xbf16> to vector<16x48xbf16>
    %c1 = arith.constant 1 : index
    %c0_5 = arith.constant 0 : index
    %c0_6 = arith.constant 0 : index
    %6 = vector.load %arg3[%c1, %c0_5, %c0_6] : memref<9x16x48xbf16, #tpu.memory_space<vmem>>, vector<1x16x48xbf16>
    %7 = vector.shape_cast %6 : vector<1x16x48xbf16> to vector<16x48xbf16>
    %c2 = arith.constant 2 : index
    %c0_7 = arith.constant 0 : index
    %c0_8 = arith.constant 0 : index
    %8 = vector.load %arg3[%c2, %c0_7, %c0_8] : memref<9x16x48xbf16, #tpu.memory_space<vmem>>, vector<1x16x48xbf16>
    %9 = vector.shape_cast %8 : vector<1x16x48xbf16> to vector<16x48xbf16>
    %c3 = arith.constant 3 : index
    %c0_9 = arith.constant 0 : index
    %c0_10 = arith.constant 0 : index
    %10 = vector.load %arg3[%c3, %c0_9, %c0_10] : memref<9x16x48xbf16, #tpu.memory_space<vmem>>, vector<1x16x48xbf16>
    %11 = vector.shape_cast %10 : vector<1x16x48xbf16> to vector<16x48xbf16>
    %c4 = arith.constant 4 : index
    %c0_11 = arith.constant 0 : index
    %c0_12 = arith.constant 0 : index
    %12 = vector.load %arg3[%c4, %c0_11, %c0_12] : memref<9x16x48xbf16, #tpu.memory_space<vmem>>, vector<1x16x48xbf16>
    %13 = vector.shape_cast %12 : vector<1x16x48xbf16> to vector<16x48xbf16>
    %c5 = arith.constant 5 : index
    %c0_13 = arith.constant 0 : index
    %c0_14 = arith.constant 0 : index
    %14 = vector.load %arg3[%c5, %c0_13, %c0_14] : memref<9x16x48xbf16, #tpu.memory_space<vmem>>, vector<1x16x48xbf16>
    %15 = vector.shape_cast %14 : vector<1x16x48xbf16> to vector<16x48xbf16>
    %c6 = arith.constant 6 : index
    %c0_15 = arith.constant 0 : index
    %c0_16 = arith.constant 0 : index
    %16 = vector.load %arg3[%c6, %c0_15, %c0_16] : memref<9x16x48xbf16, #tpu.memory_space<vmem>>, vector<1x16x48xbf16>
    %17 = vector.shape_cast %16 : vector<1x16x48xbf16> to vector<16x48xbf16>
    %c7 = arith.constant 7 : index
    %c0_17 = arith.constant 0 : index
    %c0_18 = arith.constant 0 : index
    %18 = vector.load %arg3[%c7, %c0_17, %c0_18] : memref<9x16x48xbf16, #tpu.memory_space<vmem>>, vector<1x16x48xbf16>
    %19 = vector.shape_cast %18 : vector<1x16x48xbf16> to vector<16x48xbf16>
    %c8 = arith.constant 8 : index
    %c0_19 = arith.constant 0 : index
    %c0_20 = arith.constant 0 : index
    %20 = vector.load %arg3[%c8, %c0_19, %c0_20] : memref<9x16x48xbf16, #tpu.memory_space<vmem>>, vector<1x16x48xbf16>
    %21 = vector.shape_cast %20 : vector<1x16x48xbf16> to vector<16x48xbf16>
    %cst = arith.constant 0.000000e+00 : f32
    %22 = vector.broadcast %cst : f32 to vector<16x128xf32>
    %cst_21 = arith.constant 0.000000e+00 : f32
    %23 = vector.broadcast %cst_21 : f32 to vector<16x128xf32>
    %c8_i32 = arith.constant 8 : i32
    %24 = arith.muli %arg1, %c8_i32 : i32
    %c0_i32_22 = arith.constant 0 : i32
    %25 = arith.addi %24, %c0_i32_22 : i32
    %c16_i32 = arith.constant 16 : i32
    %26 = arith.muli %25, %c16_i32 : i32
    %27 = tpu.assume_multiple %26, 8 : i32
    %c0_23 = arith.constant 0 : index
    %28 = arith.index_cast %27 : i32 to index
    %c0_24 = arith.constant 0 : index
    %29 = vector.load %arg2[%c0_23, %28, %c0_24] : memref<1x160x256xbf16, #tpu.memory_space<vmem>>, vector<1x48x128xbf16>
    %30 = vector.shape_cast %29 : vector<1x48x128xbf16> to vector<48x128xbf16>
    %cst_25 = arith.constant dense<0.000000e+00> : vector<16x128xf32>
    %31 = tpu.matmul %5, %30, %cst_25 {dimension_numbers = #tpu.dot_dimension_numbers<[1], [0], [0], [1], [0, 0, 1, 1], [], []>} : vector<16x48xbf16>, vector<48x128xbf16>, vector<16x128xf32> -> vector<16x128xf32>
    %c0_26 = arith.constant 0 : index
    %32 = arith.index_cast %27 : i32 to index
    %c1_27 = arith.constant 1 : index
    %33 = vector.load %arg2[%c0_26, %32, %c1_27] : memref<1x160x256xbf16, #tpu.memory_space<vmem>>, vector<1x48x128xbf16>
    %34 = vector.shape_cast %33 : vector<1x48x128xbf16> to vector<48x128xbf16>
    %cst_28 = arith.constant dense<0.000000e+00> : vector<16x128xf32>
    %35 = tpu.matmul %7, %34, %cst_28 {dimension_numbers = #tpu.dot_dimension_numbers<[1], [0], [0], [1], [0, 0, 1, 1], [], []>} : vector<16x48xbf16>, vector<48x128xbf16>, vector<16x128xf32> -> vector<16x128xf32>
    %36 = arith.addf %31, %35 : vector<16x128xf32>
    %c0_29 = arith.constant 0 : index
    %37 = arith.index_cast %27 : i32 to index
    %c2_30 = arith.constant 2 : index
    %38 = vector.load %arg2[%c0_29, %37, %c2_30] : memref<1x160x256xbf16, #tpu.memory_space<vmem>>, vector<1x48x128xbf16>
    %39 = vector.shape_cast %38 : vector<1x48x128xbf16> to vector<48x128xbf16>
    %cst_31 = arith.constant dense<0.000000e+00> : vector<16x128xf32>
    %40 = tpu.matmul %9, %39, %cst_31 {dimension_numbers = #tpu.dot_dimension_numbers<[1], [0], [0], [1], [0, 0, 1, 1], [], []>} : vector<16x48xbf16>, vector<48x128xbf16>, vector<16x128xf32> -> vector<16x128xf32>
    %41 = arith.addf %36, %40 : vector<16x128xf32>
    %c0_32 = arith.constant 0 : index
    %42 = arith.index_cast %27 : i32 to index
    %c10 = arith.constant 10 : index
    %43 = vector.load %arg2[%c0_32, %42, %c10] : memref<1x160x256xbf16, #tpu.memory_space<vmem>>, vector<1x48x128xbf16>
    %44 = vector.shape_cast %43 : vector<1x48x128xbf16> to vector<48x128xbf16>
    %cst_33 = arith.constant dense<0.000000e+00> : vector<16x128xf32>
    %45 = tpu.matmul %11, %44, %cst_33 {dimension_numbers = #tpu.dot_dimension_numbers<[1], [0], [0], [1], [0, 0, 1, 1], [], []>} : vector<16x48xbf16>, vector<48x128xbf16>, vector<16x128xf32> -> vector<16x128xf32>
    %46 = arith.addf %41, %45 : vector<16x128xf32>
    %c0_34 = arith.constant 0 : index
    %47 = arith.index_cast %27 : i32 to index
    %c11 = arith.constant 11 : index
    %48 = vector.load %arg2[%c0_34, %47, %c11] : memref<1x160x256xbf16, #tpu.memory_space<vmem>>, vector<1x48x128xbf16>
    %49 = vector.shape_cast %48 : vector<1x48x128xbf16> to vector<48x128xbf16>
    %cst_35 = arith.constant dense<0.000000e+00> : vector<16x128xf32>
    %50 = tpu.matmul %13, %49, %cst_35 {dimension_numbers = #tpu.dot_dimension_numbers<[1], [0], [0], [1], [0, 0, 1, 1], [], []>} : vector<16x48xbf16>, vector<48x128xbf16>, vector<16x128xf32> -> vector<16x128xf32>
    %51 = arith.addf %46, %50 : vector<16x128xf32>
    %c0_36 = arith.constant 0 : index
    %52 = arith.index_cast %27 : i32 to index
    %c12 = arith.constant 12 : index
    %53 = vector.load %arg2[%c0_36, %52, %c12] : memref<1x160x256xbf16, #tpu.memory_space<vmem>>, vector<1x48x128xbf16>
    %54 = vector.shape_cast %53 : vector<1x48x128xbf16> to vector<48x128xbf16>
    %cst_37 = arith.constant dense<0.000000e+00> : vector<16x128xf32>
    %55 = tpu.matmul %15, %54, %cst_37 {dimension_numbers = #tpu.dot_dimension_numbers<[1], [0], [0], [1], [0, 0, 1, 1], [], []>} : vector<16x48xbf16>, vector<48x128xbf16>, vector<16x128xf32> -> vector<16x128xf32>
    %56 = arith.addf %51, %55 : vector<16x128xf32>
    %c0_38 = arith.constant 0 : index
    %57 = arith.index_cast %27 : i32 to index
    %c20 = arith.constant 20 : index
    %58 = vector.load %arg2[%c0_38, %57, %c20] : memref<1x160x256xbf16, #tpu.memory_space<vmem>>, vector<1x48x128xbf16>
    %59 = vector.shape_cast %58 : vector<1x48x128xbf16> to vector<48x128xbf16>
    %cst_39 = arith.constant dense<0.000000e+00> : vector<16x128xf32>
    %60 = tpu.matmul %17, %59, %cst_39 {dimension_numbers = #tpu.dot_dimension_numbers<[1], [0], [0], [1], [0, 0, 1, 1], [], []>} : vector<16x48xbf16>, vector<48x128xbf16>, vector<16x128xf32> -> vector<16x128xf32>
    %61 = arith.addf %56, %60 : vector<16x128xf32>
    %c0_40 = arith.constant 0 : index
    %62 = arith.index_cast %27 : i32 to index
    %c21 = arith.constant 21 : index
    %63 = vector.load %arg2[%c0_40, %62, %c21] : memref<1x160x256xbf16, #tpu.memory_space<vmem>>, vector<1x48x128xbf16>
    %64 = vector.shape_cast %63 : vector<1x48x128xbf16> to vector<48x128xbf16>
    %cst_41 = arith.constant dense<0.000000e+00> : vector<16x128xf32>
    %65 = tpu.matmul %19, %64, %cst_41 {dimension_numbers = #tpu.dot_dimension_numbers<[1], [0], [0], [1], [0, 0, 1, 1], [], []>} : vector<16x48xbf16>, vector<48x128xbf16>, vector<16x128xf32> -> vector<16x128xf32>
    %66 = arith.addf %61, %65 : vector<16x128xf32>
    %c0_42 = arith.constant 0 : index
    %67 = arith.index_cast %27 : i32 to index
    %c22 = arith.constant 22 : index
    %68 = vector.load %arg2[%c0_42, %67, %c22] : memref<1x160x256xbf16, #tpu.memory_space<vmem>>, vector<1x48x128xbf16>
    %69 = vector.shape_cast %68 : vector<1x48x128xbf16> to vector<48x128xbf16>
    %cst_43 = arith.constant dense<0.000000e+00> : vector<16x128xf32>
    %70 = tpu.matmul %21, %69, %cst_43 {dimension_numbers = #tpu.dot_dimension_numbers<[1], [0], [0], [1], [0, 0, 1, 1], [], []>} : vector<16x48xbf16>, vector<48x128xbf16>, vector<16x128xf32> -> vector<16x128xf32>
    %71 = arith.addf %66, %70 : vector<16x128xf32>
    %72 = arith.truncf %71 : vector<16x128xf32> to vector<16x128xbf16>
    %c0_44 = arith.constant 0 : index
    %c0_45 = arith.constant 0 : index
    %c0_46 = arith.constant 0 : index
    %c0_47 = arith.constant 0 : index
    %73 = vector.load %arg5[%c0_44, %c0_45, %c0_46, %c0_47] : memref<1x8x16x128xbf16, #tpu.memory_space<vmem>>, vector<1x1x16x128xbf16>
    %74 = vector.shape_cast %73 : vector<1x1x16x128xbf16> to vector<16x128xbf16>
    %75 = vector.shape_cast %72 : vector<16x128xbf16> to vector<1x1x16x128xbf16>
    tpu.vector_store %arg5[%c0_44, %c0_45, %c0_46, %c0_47], %75 {strides = array<i32>} : memref<1x8x16x128xbf16, #tpu.memory_space<vmem>>, vector<1x1x16x128xbf16>,
    %76 = arith.extf %72 : vector<16x128xbf16> to vector<16x128xf32>
    %77 = vector.broadcast %3 : vector<1x128xf32> to vector<16x128xf32>
    %78 = arith.mulf %76, %77 : vector<16x128xf32>
    %79 = arith.addf %22, %78 : vector<16x128xf32>
    %80 = arith.mulf %78, %76 : vector<16x128xf32>
    %81 = arith.addf %23, %80 : vector<16x128xf32>
    %c8_i32_48 = arith.constant 8 : i32
    %82 = arith.muli %arg1, %c8_i32_48 : i32
    %c1_i32 = arith.constant 1 : i32
    %83 = arith.addi %82, %c1_i32 : i32
    %c16_i32_49 = arith.constant 16 : i32
    %84 = arith.muli %83, %c16_i32_49 : i32
    %85 = tpu.assume_multiple %84, 8 : i32
    %c0_50 = arith.constant 0 : index
    %86 = arith.index_cast %85 : i32 to index
    %c0_51 = arith.constant 0 : index
    %87 = vector.load %arg2[%c0_50, %86, %c0_51] : memref<1x160x256xbf16, #tpu.memory_space<vmem>>, vector<1x48x128xbf16>
    %88 = vector.shape_cast %87 : vector<1x48x128xbf16> to vector<48x128xbf16>
    %cst_52 = arith.constant dense<0.000000e+00> : vector<16x128xf32>
    %89 = tpu.matmul %5, %88, %cst_52 {dimension_numbers = #tpu.dot_dimension_numbers<[1], [0], [0], [1], [0, 0, 1, 1], [], []>} : vector<16x48xbf16>, vector<48x128xbf16>, vector<16x128xf32> -> vector<16x128xf32>
    %c0_53 = arith.constant 0 : index
    %90 = arith.index_cast %85 : i32 to index
    %c1_54 = arith.constant 1 : index
    %91 = vector.load %arg2[%c0_53, %90, %c1_54] : memref<1x160x256xbf16, #tpu.memory_space<vmem>>, vector<1x48x128xbf16>
    %92 = vector.shape_cast %91 : vector<1x48x128xbf16> to vector<48x128xbf16>
    %cst_55 = arith.constant dense<0.000000e+00> : vector<16x128xf32>
    %93 = tpu.matmul %7, %92, %cst_55 {dimension_numbers = #tpu.dot_dimension_numbers<[1], [0], [0], [1], [0, 0, 1, 1], [], []>} : vector<16x48xbf16>, vector<48x128xbf16>, vector<16x128xf32> -> vector<16x128xf32>
    %94 = arith.addf %89, %93 : vector<16x128xf32>
    %c0_56 = arith.constant 0 : index
    %95 = arith.index_cast %85 : i32 to index
    %c2_57 = arith.constant 2 : index
    %96 = vector.load %arg2[%c0_56, %95, %c2_57] : memref<1x160x256xbf16, #tpu.memory_space<vmem>>, vector<1x48x128xbf16>
    %97 = vector.shape_cast %96 : vector<1x48x128xbf16> to vector<48x128xbf16>
    %cst_58 = arith.constant dense<0.000000e+00> : vector<16x128xf32>
    %98 = tpu.matmul %9, %97, %cst_58 {dimension_numbers = #tpu.dot_dimension_numbers<[1], [0], [0], [1], [0, 0, 1, 1], [], []>} : vector<16x48xbf16>, vector<48x128xbf16>, vector<16x128xf32> -> vector<16x128xf32>
    %99 = arith.addf %94, %98 : vector<16x128xf32>
    %c0_59 = arith.constant 0 : index
    %100 = arith.index_cast %85 : i32 to index
    %c10_60 = arith.constant 10 : index
    %101 = vector.load %arg2[%c0_59, %100, %c10_60] : memref<1x160x256xbf16, #tpu.memory_space<vmem>>, vector<1x48x128xbf16>
    %102 = vector.shape_cast %101 : vector<1x48x128xbf16> to vector<48x128xbf16>
    %cst_61 = arith.constant dense<0.000000e+00> : vector<16x128xf32>
    %103 = tpu.matmul %11, %102, %cst_61 {dimension_numbers = #tpu.dot_dimension_numbers<[1], [0], [0], [1], [0, 0, 1, 1], [], []>} : vector<16x48xbf16>, vector<48x128xbf16>, vector<16x128xf32> -> vector<16x128xf32>
    %104 = arith.addf %99, %103 : vector<16x128xf32>
    %c0_62 = arith.constant 0 : index
    %105 = arith.index_cast %85 : i32 to index
    %c11_63 = arith.constant 11 : index
    %106 = vector.load %arg2[%c0_62, %105, %c11_63] : memref<1x160x256xbf16, #tpu.memory_space<vmem>>, vector<1x48x128xbf16>
    %107 = vector.shape_cast %106 : vector<1x48x128xbf16> to vector<48x128xbf16>
    %cst_64 = arith.constant dense<0.000000e+00> : vector<16x128xf32>
    %108 = tpu.matmul %13, %107, %cst_64 {dimension_numbers = #tpu.dot_dimension_numbers<[1], [0], [0], [1], [0, 0, 1, 1], [], []>} : vector<16x48xbf16>, vector<48x128xbf16>, vector<16x128xf32> -> vector<16x128xf32>
    %109 = arith.addf %104, %108 : vector<16x128xf32>
    %c0_65 = arith.constant 0 : index
    %110 = arith.index_cast %85 : i32 to index
    %c12_66 = arith.constant 12 : index
    %111 = vector.load %arg2[%c0_65, %110, %c12_66] : memref<1x160x256xbf16, #tpu.memory_space<vmem>>, vector<1x48x128xbf16>
    %112 = vector.shape_cast %111 : vector<1x48x128xbf16> to vector<48x128xbf16>
    %cst_67 = arith.constant dense<0.000000e+00> : vector<16x128xf32>
    %113 = tpu.matmul %15, %112, %cst_67 {dimension_numbers = #tpu.dot_dimension_numbers<[1], [0], [0], [1], [0, 0, 1, 1], [], []>} : vector<16x48xbf16>, vector<48x128xbf16>, vector<16x128xf32> -> vector<16x128xf32>
    %114 = arith.addf %109, %113 : vector<16x128xf32>
    %c0_68 = arith.constant 0 : index
    %115 = arith.index_cast %85 : i32 to index
    %c20_69 = arith.constant 20 : index
    %116 = vector.load %arg2[%c0_68, %115, %c20_69] : memref<1x160x256xbf16, #tpu.memory_space<vmem>>, vector<1x48x128xbf16>
    %117 = vector.shape_cast %116 : vector<1x48x128xbf16> to vector<48x128xbf16>
    %cst_70 = arith.constant dense<0.000000e+00> : vector<16x128xf32>
    %118 = tpu.matmul %17, %117, %cst_70 {dimension_numbers = #tpu.dot_dimension_numbers<[1], [0], [0], [1], [0, 0, 1, 1], [], []>} : vector<16x48xbf16>, vector<48x128xbf16>, vector<16x128xf32> -> vector<16x128xf32>
    %119 = arith.addf %114, %118 : vector<16x128xf32>
    %c0_71 = arith.constant 0 : index
    %120 = arith.index_cast %85 : i32 to index
    %c21_72 = arith.constant 21 : index
    %121 = vector.load %arg2[%c0_71, %120, %c21_72] : memref<1x160x256xbf16, #tpu.memory_space<vmem>>, vector<1x48x128xbf16>
    %122 = vector.shape_cast %121 : vector<1x48x128xbf16> to vector<48x128xbf16>
    %cst_73 = arith.constant dense<0.000000e+00> : vector<16x128xf32>
    %123 = tpu.matmul %19, %122, %cst_73 {dimension_numbers = #tpu.dot_dimension_numbers<[1], [0], [0], [1], [0, 0, 1, 1], [], []>} : vector<16x48xbf16>, vector<48x128xbf16>, vector<16x128xf32> -> vector<16x128xf32>
    %124 = arith.addf %119, %123 : vector<16x128xf32>
    %c0_74 = arith.constant 0 : index
    %125 = arith.index_cast %85 : i32 to index
    %c22_75 = arith.constant 22 : index
    %126 = vector.load %arg2[%c0_74, %125, %c22_75] : memref<1x160x256xbf16, #tpu.memory_space<vmem>>, vector<1x48x128xbf16>
    %127 = vector.shape_cast %126 : vector<1x48x128xbf16> to vector<48x128xbf16>
    %cst_76 = arith.constant dense<0.000000e+00> : vector<16x128xf32>
    %128 = tpu.matmul %21, %127, %cst_76 {dimension_numbers = #tpu.dot_dimension_numbers<[1], [0], [0], [1], [0, 0, 1, 1], [], []>} : vector<16x48xbf16>, vector<48x128xbf16>, vector<16x128xf32> -> vector<16x128xf32>
    %129 = arith.addf %124, %128 : vector<16x128xf32>
    %130 = arith.truncf %129 : vector<16x128xf32> to vector<16x128xbf16>
    %c0_77 = arith.constant 0 : index
    %c1_78 = arith.constant 1 : index
    %c0_79 = arith.constant 0 : index
    %c0_80 = arith.constant 0 : index
    %131 = vector.load %arg5[%c0_77, %c1_78, %c0_79, %c0_80] : memref<1x8x16x128xbf16, #tpu.memory_space<vmem>>, vector<1x1x16x128xbf16>
    %132 = vector.shape_cast %131 : vector<1x1x16x128xbf16> to vector<16x128xbf16>
    %133 = vector.shape_cast %130 : vector<16x128xbf16> to vector<1x1x16x128xbf16>
    tpu.vector_store %arg5[%c0_77, %c1_78, %c0_79, %c0_80], %133 {strides = array<i32>} : memref<1x8x16x128xbf16, #tpu.memory_space<vmem>>, vector<1x1x16x128xbf16>,
    %134 = arith.extf %130 : vector<16x128xbf16> to vector<16x128xf32>
    %135 = vector.broadcast %3 : vector<1x128xf32> to vector<16x128xf32>
    %136 = arith.mulf %134, %135 : vector<16x128xf32>
    %137 = arith.addf %79, %136 : vector<16x128xf32>
    %138 = arith.mulf %136, %134 : vector<16x128xf32>
    %139 = arith.addf %81, %138 : vector<16x128xf32>
    %c8_i32_81 = arith.constant 8 : i32
    %140 = arith.muli %arg1, %c8_i32_81 : i32
    %c2_i32 = arith.constant 2 : i32
    %141 = arith.addi %140, %c2_i32 : i32
    %c16_i32_82 = arith.constant 16 : i32
    %142 = arith.muli %141, %c16_i32_82 : i32
    %143 = tpu.assume_multiple %142, 8 : i32
    %c0_83 = arith.constant 0 : index
    %144 = arith.index_cast %143 : i32 to index
    %c0_84 = arith.constant 0 : index
    %145 = vector.load %arg2[%c0_83, %144, %c0_84] : memref<1x160x256xbf16, #tpu.memory_space<vmem>>, vector<1x48x128xbf16>
    %146 = vector.shape_cast %145 : vector<1x48x128xbf16> to vector<48x128xbf16>
    %cst_85 = arith.constant dense<0.000000e+00> : vector<16x128xf32>
    %147 = tpu.matmul %5, %146, %cst_85 {dimension_numbers = #tpu.dot_dimension_numbers<[1], [0], [0], [1], [0, 0, 1, 1], [], []>} : vector<16x48xbf16>, vector<48x128xbf16>, vector<16x128xf32> -> vector<16x128xf32>
    %c0_86 = arith.constant 0 : index
    %148 = arith.index_cast %143 : i32 to index
    %c1_87 = arith.constant 1 : index
    %149 = vector.load %arg2[%c0_86, %148, %c1_87] : memref<1x160x256xbf16, #tpu.memory_space<vmem>>, vector<1x48x128xbf16>
    %150 = vector.shape_cast %149 : vector<1x48x128xbf16> to vector<48x128xbf16>
    %cst_88 = arith.constant dense<0.000000e+00> : vector<16x128xf32>
    %151 = tpu.matmul %7, %150, %cst_88 {dimension_numbers = #tpu.dot_dimension_numbers<[1], [0], [0], [1], [0, 0, 1, 1], [], []>} : vector<16x48xbf16>, vector<48x128xbf16>, vector<16x128xf32> -> vector<16x128xf32>
    %152 = arith.addf %147, %151 : vector<16x128xf32>
    %c0_89 = arith.constant 0 : index
    %153 = arith.index_cast %143 : i32 to index
    %c2_90 = arith.constant 2 : index
    %154 = vector.load %arg2[%c0_89, %153, %c2_90] : memref<1x160x256xbf16, #tpu.memory_space<vmem>>, vector<1x48x128xbf16>
    %155 = vector.shape_cast %154 : vector<1x48x128xbf16> to vector<48x128xbf16>
    %cst_91 = arith.constant dense<0.000000e+00> : vector<16x128xf32>
    %156 = tpu.matmul %9, %155, %cst_91 {dimension_numbers = #tpu.dot_dimension_numbers<[1], [0], [0], [1], [0, 0, 1, 1], [], []>} : vector<16x48xbf16>, vector<48x128xbf16>, vector<16x128xf32> -> vector<16x128xf32>
    %157 = arith.addf %152, %156 : vector<16x128xf32>
    %c0_92 = arith.constant 0 : index
    %158 = arith.index_cast %143 : i32 to index
    %c10_93 = arith.constant 10 : index
    %159 = vector.load %arg2[%c0_92, %158, %c10_93] : memref<1x160x256xbf16, #tpu.memory_space<vmem>>, vector<1x48x128xbf16>
    %160 = vector.shape_cast %159 : vector<1x48x128xbf16> to vector<48x128xbf16>
    %cst_94 = arith.constant dense<0.000000e+00> : vector<16x128xf32>
    %161 = tpu.matmul %11, %160, %cst_94 {dimension_numbers = #tpu.dot_dimension_numbers<[1], [0], [0], [1], [0, 0, 1, 1], [], []>} : vector<16x48xbf16>, vector<48x128xbf16>, vector<16x128xf32> -> vector<16x128xf32>
    %162 = arith.addf %157, %161 : vector<16x128xf32>
    %c0_95 = arith.constant 0 : index
    %163 = arith.index_cast %143 : i32 to index
    %c11_96 = arith.constant 11 : index
    %164 = vector.load %arg2[%c0_95, %163, %c11_96] : memref<1x160x256xbf16, #tpu.memory_space<vmem>>, vector<1x48x128xbf16>
    %165 = vector.shape_cast %164 : vector<1x48x128xbf16> to vector<48x128xbf16>
    %cst_97 = arith.constant dense<0.000000e+00> : vector<16x128xf32>
    %166 = tpu.matmul %13, %165, %cst_97 {dimension_numbers = #tpu.dot_dimension_numbers<[1], [0], [0], [1], [0, 0, 1, 1], [], []>} : vector<16x48xbf16>, vector<48x128xbf16>, vector<16x128xf32> -> vector<16x128xf32>
    %167 = arith.addf %162, %166 : vector<16x128xf32>
    %c0_98 = arith.constant 0 : index
    %168 = arith.index_cast %143 : i32 to index
    %c12_99 = arith.constant 12 : index
    %169 = vector.load %arg2[%c0_98, %168, %c12_99] : memref<1x160x256xbf16, #tpu.memory_space<vmem>>, vector<1x48x128xbf16>
    %170 = vector.shape_cast %169 : vector<1x48x128xbf16> to vector<48x128xbf16>
    %cst_100 = arith.constant dense<0.000000e+00> : vector<16x128xf32>
    %171 = tpu.matmul %15, %170, %cst_100 {dimension_numbers = #tpu.dot_dimension_numbers<[1], [0], [0], [1], [0, 0, 1, 1], [], []>} : vector<16x48xbf16>, vector<48x128xbf16>, vector<16x128xf32> -> vector<16x128xf32>
    %172 = arith.addf %167, %171 : vector<16x128xf32>
    %c0_101 = arith.constant 0 : index
    %173 = arith.index_cast %143 : i32 to index
    %c20_102 = arith.constant 20 : index
    %174 = vector.load %arg2[%c0_101, %173, %c20_102] : memref<1x160x256xbf16, #tpu.memory_space<vmem>>, vector<1x48x128xbf16>
    %175 = vector.shape_cast %174 : vector<1x48x128xbf16> to vector<48x128xbf16>
    %cst_103 = arith.constant dense<0.000000e+00> : vector<16x128xf32>
    %176 = tpu.matmul %17, %175, %cst_103 {dimension_numbers = #tpu.dot_dimension_numbers<[1], [0], [0], [1], [0, 0, 1, 1], [], []>} : vector<16x48xbf16>, vector<48x128xbf16>, vector<16x128xf32> -> vector<16x128xf32>
    %177 = arith.addf %172, %176 : vector<16x128xf32>
    %c0_104 = arith.constant 0 : index
    %178 = arith.index_cast %143 : i32 to index
    %c21_105 = arith.constant 21 : index
    %179 = vector.load %arg2[%c0_104, %178, %c21_105] : memref<1x160x256xbf16, #tpu.memory_space<vmem>>, vector<1x48x128xbf16>
    %180 = vector.shape_cast %179 : vector<1x48x128xbf16> to vector<48x128xbf16>
    %cst_106 = arith.constant dense<0.000000e+00> : vector<16x128xf32>
    %181 = tpu.matmul %19, %180, %cst_106 {dimension_numbers = #tpu.dot_dimension_numbers<[1], [0], [0], [1], [0, 0, 1, 1], [], []>} : vector<16x48xbf16>, vector<48x128xbf16>, vector<16x128xf32> -> vector<16x128xf32>
    %182 = arith.addf %177, %181 : vector<16x128xf32>
    %c0_107 = arith.constant 0 : index
    %183 = arith.index_cast %143 : i32 to index
    %c22_108 = arith.constant 22 : index
    %184 = vector.load %arg2[%c0_107, %183, %c22_108] : memref<1x160x256xbf16, #tpu.memory_space<vmem>>, vector<1x48x128xbf16>
    %185 = vector.shape_cast %184 : vector<1x48x128xbf16> to vector<48x128xbf16>
    %cst_109 = arith.constant dense<0.000000e+00> : vector<16x128xf32>
    %186 = tpu.matmul %21, %185, %cst_109 {dimension_numbers = #tpu.dot_dimension_numbers<[1], [0], [0], [1], [0, 0, 1, 1], [], []>} : vector<16x48xbf16>, vector<48x128xbf16>, vector<16x128xf32> -> vector<16x128xf32>
    %187 = arith.addf %182, %186 : vector<16x128xf32>
    %188 = arith.truncf %187 : vector<16x128xf32> to vector<16x128xbf16>
    %c0_110 = arith.constant 0 : index
    %c2_111 = arith.constant 2 : index
    %c0_112 = arith.constant 0 : index
    %c0_113 = arith.constant 0 : index
    %189 = vector.load %arg5[%c0_110, %c2_111, %c0_112, %c0_113] : memref<1x8x16x128xbf16, #tpu.memory_space<vmem>>, vector<1x1x16x128xbf16>
    %190 = vector.shape_cast %189 : vector<1x1x16x128xbf16> to vector<16x128xbf16>
    %191 = vector.shape_cast %188 : vector<16x128xbf16> to vector<1x1x16x128xbf16>
    tpu.vector_store %arg5[%c0_110, %c2_111, %c0_112, %c0_113], %191 {strides = array<i32>} : memref<1x8x16x128xbf16, #tpu.memory_space<vmem>>, vector<1x1x16x128xbf16>,
    %192 = arith.extf %188 : vector<16x128xbf16> to vector<16x128xf32>
    %193 = vector.broadcast %3 : vector<1x128xf32> to vector<16x128xf32>
    %194 = arith.mulf %192, %193 : vector<16x128xf32>
    %195 = arith.addf %137, %194 : vector<16x128xf32>
    %196 = arith.mulf %194, %192 : vector<16x128xf32>
    %197 = arith.addf %139, %196 : vector<16x128xf32>
    %c8_i32_114 = arith.constant 8 : i32
    %198 = arith.muli %arg1, %c8_i32_114 : i32
    %c3_i32 = arith.constant 3 : i32
    %199 = arith.addi %198, %c3_i32 : i32
    %c16_i32_115 = arith.constant 16 : i32
    %200 = arith.muli %199, %c16_i32_115 : i32
    %201 = tpu.assume_multiple %200, 8 : i32
    %c0_116 = arith.constant 0 : index
    %202 = arith.index_cast %201 : i32 to index
    %c0_117 = arith.constant 0 : index
    %203 = vector.load %arg2[%c0_116, %202, %c0_117] : memref<1x160x256xbf16, #tpu.memory_space<vmem>>, vector<1x48x128xbf16>
    %204 = vector.shape_cast %203 : vector<1x48x128xbf16> to vector<48x128xbf16>
    %cst_118 = arith.constant dense<0.000000e+00> : vector<16x128xf32>
    %205 = tpu.matmul %5, %204, %cst_118 {dimension_numbers = #tpu.dot_dimension_numbers<[1], [0], [0], [1], [0, 0, 1, 1], [], []>} : vector<16x48xbf16>, vector<48x128xbf16>, vector<16x128xf32> -> vector<16x128xf32>
    %c0_119 = arith.constant 0 : index
    %206 = arith.index_cast %201 : i32 to index
    %c1_120 = arith.constant 1 : index
    %207 = vector.load %arg2[%c0_119, %206, %c1_120] : memref<1x160x256xbf16, #tpu.memory_space<vmem>>, vector<1x48x128xbf16>
    %208 = vector.shape_cast %207 : vector<1x48x128xbf16> to vector<48x128xbf16>
    %cst_121 = arith.constant dense<0.000000e+00> : vector<16x128xf32>
    %209 = tpu.matmul %7, %208, %cst_121 {dimension_numbers = #tpu.dot_dimension_numbers<[1], [0], [0], [1], [0, 0, 1, 1], [], []>} : vector<16x48xbf16>, vector<48x128xbf16>, vector<16x128xf32> -> vector<16x128xf32>
    %210 = arith.addf %205, %209 : vector<16x128xf32>
    %c0_122 = arith.constant 0 : index
    %211 = arith.index_cast %201 : i32 to index
    %c2_123 = arith.constant 2 : index
    %212 = vector.load %arg2[%c0_122, %211, %c2_123] : memref<1x160x256xbf16, #tpu.memory_space<vmem>>, vector<1x48x128xbf16>
    %213 = vector.shape_cast %212 : vector<1x48x128xbf16> to vector<48x128xbf16>
    %cst_124 = arith.constant dense<0.000000e+00> : vector<16x128xf32>
    %214 = tpu.matmul %9, %213, %cst_124 {dimension_numbers = #tpu.dot_dimension_numbers<[1], [0], [0], [1], [0, 0, 1, 1], [], []>} : vector<16x48xbf16>, vector<48x128xbf16>, vector<16x128xf32> -> vector<16x128xf32>
    %215 = arith.addf %210, %214 : vector<16x128xf32>
    %c0_125 = arith.constant 0 : index
    %216 = arith.index_cast %201 : i32 to index
    %c10_126 = arith.constant 10 : index
    %217 = vector.load %arg2[%c0_125, %216, %c10_126] : memref<1x160x256xbf16, #tpu.memory_space<vmem>>, vector<1x48x128xbf16>
    %218 = vector.shape_cast %217 : vector<1x48x128xbf16> to vector<48x128xbf16>
    %cst_127 = arith.constant dense<0.000000e+00> : vector<16x128xf32>
    %219 = tpu.matmul %11, %218, %cst_127 {dimension_numbers = #tpu.dot_dimension_numbers<[1], [0], [0], [1], [0, 0, 1, 1], [], []>} : vector<16x48xbf16>, vector<48x128xbf16>, vector<16x128xf32> -> vector<16x128xf32>
    %220 = arith.addf %215, %219 : vector<16x128xf32>
    %c0_128 = arith.constant 0 : index
    %221 = arith.index_cast %201 : i32 to index
    %c11_129 = arith.constant 11 : index
    %222 = vector.load %arg2[%c0_128, %221, %c11_129] : memref<1x160x256xbf16, #tpu.memory_space<vmem>>, vector<1x48x128xbf16>
    %223 = vector.shape_cast %222 : vector<1x48x128xbf16> to vector<48x128xbf16>
    %cst_130 = arith.constant dense<0.000000e+00> : vector<16x128xf32>
    %224 = tpu.matmul %13, %223, %cst_130 {dimension_numbers = #tpu.dot_dimension_numbers<[1], [0], [0], [1], [0, 0, 1, 1], [], []>} : vector<16x48xbf16>, vector<48x128xbf16>, vector<16x128xf32> -> vector<16x128xf32>
    %225 = arith.addf %220, %224 : vector<16x128xf32>
    %c0_131 = arith.constant 0 : index
    %226 = arith.index_cast %201 : i32 to index
    %c12_132 = arith.constant 12 : index
    %227 = vector.load %arg2[%c0_131, %226, %c12_132] : memref<1x160x256xbf16, #tpu.memory_space<vmem>>, vector<1x48x128xbf16>
    %228 = vector.shape_cast %227 : vector<1x48x128xbf16> to vector<48x128xbf16>
    %cst_133 = arith.constant dense<0.000000e+00> : vector<16x128xf32>
    %229 = tpu.matmul %15, %228, %cst_133 {dimension_numbers = #tpu.dot_dimension_numbers<[1], [0], [0], [1], [0, 0, 1, 1], [], []>} : vector<16x48xbf16>, vector<48x128xbf16>, vector<16x128xf32> -> vector<16x128xf32>
    %230 = arith.addf %225, %229 : vector<16x128xf32>
    %c0_134 = arith.constant 0 : index
    %231 = arith.index_cast %201 : i32 to index
    %c20_135 = arith.constant 20 : index
    %232 = vector.load %arg2[%c0_134, %231, %c20_135] : memref<1x160x256xbf16, #tpu.memory_space<vmem>>, vector<1x48x128xbf16>
    %233 = vector.shape_cast %232 : vector<1x48x128xbf16> to vector<48x128xbf16>
    %cst_136 = arith.constant dense<0.000000e+00> : vector<16x128xf32>
    %234 = tpu.matmul %17, %233, %cst_136 {dimension_numbers = #tpu.dot_dimension_numbers<[1], [0], [0], [1], [0, 0, 1, 1], [], []>} : vector<16x48xbf16>, vector<48x128xbf16>, vector<16x128xf32> -> vector<16x128xf32>
    %235 = arith.addf %230, %234 : vector<16x128xf32>
    %c0_137 = arith.constant 0 : index
    %236 = arith.index_cast %201 : i32 to index
    %c21_138 = arith.constant 21 : index
    %237 = vector.load %arg2[%c0_137, %236, %c21_138] : memref<1x160x256xbf16, #tpu.memory_space<vmem>>, vector<1x48x128xbf16>
    %238 = vector.shape_cast %237 : vector<1x48x128xbf16> to vector<48x128xbf16>
    %cst_139 = arith.constant dense<0.000000e+00> : vector<16x128xf32>
    %239 = tpu.matmul %19, %238, %cst_139 {dimension_numbers = #tpu.dot_dimension_numbers<[1], [0], [0], [1], [0, 0, 1, 1], [], []>} : vector<16x48xbf16>, vector<48x128xbf16>, vector<16x128xf32> -> vector<16x128xf32>
    %240 = arith.addf %235, %239 : vector<16x128xf32>
    %c0_140 = arith.constant 0 : index
    %241 = arith.index_cast %201 : i32 to index
    %c22_141 = arith.constant 22 : index
    %242 = vector.load %arg2[%c0_140, %241, %c22_141] : memref<1x160x256xbf16, #tpu.memory_space<vmem>>, vector<1x48x128xbf16>
    %243 = vector.shape_cast %242 : vector<1x48x128xbf16> to vector<48x128xbf16>
    %cst_142 = arith.constant dense<0.000000e+00> : vector<16x128xf32>
    %244 = tpu.matmul %21, %243, %cst_142 {dimension_numbers = #tpu.dot_dimension_numbers<[1], [0], [0], [1], [0, 0, 1, 1], [], []>} : vector<16x48xbf16>, vector<48x128xbf16>, vector<16x128xf32> -> vector<16x128xf32>
    %245 = arith.addf %240, %244 : vector<16x128xf32>
    %246 = arith.truncf %245 : vector<16x128xf32> to vector<16x128xbf16>
    %c0_143 = arith.constant 0 : index
    %c3_144 = arith.constant 3 : index
    %c0_145 = arith.constant 0 : index
    %c0_146 = arith.constant 0 : index
    %247 = vector.load %arg5[%c0_143, %c3_144, %c0_145, %c0_146] : memref<1x8x16x128xbf16, #tpu.memory_space<vmem>>, vector<1x1x16x128xbf16>
    %248 = vector.shape_cast %247 : vector<1x1x16x128xbf16> to vector<16x128xbf16>
    %249 = vector.shape_cast %246 : vector<16x128xbf16> to vector<1x1x16x128xbf16>
    tpu.vector_store %arg5[%c0_143, %c3_144, %c0_145, %c0_146], %249 {strides = array<i32>} : memref<1x8x16x128xbf16, #tpu.memory_space<vmem>>, vector<1x1x16x128xbf16>,
    %250 = arith.extf %246 : vector<16x128xbf16> to vector<16x128xf32>
    %251 = vector.broadcast %3 : vector<1x128xf32> to vector<16x128xf32>
    %252 = arith.mulf %250, %251 : vector<16x128xf32>
    %253 = arith.addf %195, %252 : vector<16x128xf32>
    %254 = arith.mulf %252, %250 : vector<16x128xf32>
    %255 = arith.addf %197, %254 : vector<16x128xf32>
    %c8_i32_147 = arith.constant 8 : i32
    %256 = arith.muli %arg1, %c8_i32_147 : i32
    %c4_i32 = arith.constant 4 : i32
    %257 = arith.addi %256, %c4_i32 : i32
    %c16_i32_148 = arith.constant 16 : i32
    %258 = arith.muli %257, %c16_i32_148 : i32
    %259 = tpu.assume_multiple %258, 8 : i32
    %c0_149 = arith.constant 0 : index
    %260 = arith.index_cast %259 : i32 to index
    %c0_150 = arith.constant 0 : index
    %261 = vector.load %arg2[%c0_149, %260, %c0_150] : memref<1x160x256xbf16, #tpu.memory_space<vmem>>, vector<1x48x128xbf16>
    %262 = vector.shape_cast %261 : vector<1x48x128xbf16> to vector<48x128xbf16>
    %cst_151 = arith.constant dense<0.000000e+00> : vector<16x128xf32>
    %263 = tpu.matmul %5, %262, %cst_151 {dimension_numbers = #tpu.dot_dimension_numbers<[1], [0], [0], [1], [0, 0, 1, 1], [], []>} : vector<16x48xbf16>, vector<48x128xbf16>, vector<16x128xf32> -> vector<16x128xf32>
    %c0_152 = arith.constant 0 : index
    %264 = arith.index_cast %259 : i32 to index
    %c1_153 = arith.constant 1 : index
    %265 = vector.load %arg2[%c0_152, %264, %c1_153] : memref<1x160x256xbf16, #tpu.memory_space<vmem>>, vector<1x48x128xbf16>
    %266 = vector.shape_cast %265 : vector<1x48x128xbf16> to vector<48x128xbf16>
    %cst_154 = arith.constant dense<0.000000e+00> : vector<16x128xf32>
    %267 = tpu.matmul %7, %266, %cst_154 {dimension_numbers = #tpu.dot_dimension_numbers<[1], [0], [0], [1], [0, 0, 1, 1], [], []>} : vector<16x48xbf16>, vector<48x128xbf16>, vector<16x128xf32> -> vector<16x128xf32>
    %268 = arith.addf %263, %267 : vector<16x128xf32>
    %c0_155 = arith.constant 0 : index
    %269 = arith.index_cast %259 : i32 to index
    %c2_156 = arith.constant 2 : index
    %270 = vector.load %arg2[%c0_155, %269, %c2_156] : memref<1x160x256xbf16, #tpu.memory_space<vmem>>, vector<1x48x128xbf16>
    %271 = vector.shape_cast %270 : vector<1x48x128xbf16> to vector<48x128xbf16>
    %cst_157 = arith.constant dense<0.000000e+00> : vector<16x128xf32>
    %272 = tpu.matmul %9, %271, %cst_157 {dimension_numbers = #tpu.dot_dimension_numbers<[1], [0], [0], [1], [0, 0, 1, 1], [], []>} : vector<16x48xbf16>, vector<48x128xbf16>, vector<16x128xf32> -> vector<16x128xf32>
    %273 = arith.addf %268, %272 : vector<16x128xf32>
    %c0_158 = arith.constant 0 : index
    %274 = arith.index_cast %259 : i32 to index
    %c10_159 = arith.constant 10 : index
    %275 = vector.load %arg2[%c0_158, %274, %c10_159] : memref<1x160x256xbf16, #tpu.memory_space<vmem>>, vector<1x48x128xbf16>
    %276 = vector.shape_cast %275 : vector<1x48x128xbf16> to vector<48x128xbf16>
    %cst_160 = arith.constant dense<0.000000e+00> : vector<16x128xf32>
    %277 = tpu.matmul %11, %276, %cst_160 {dimension_numbers = #tpu.dot_dimension_numbers<[1], [0], [0], [1], [0, 0, 1, 1], [], []>} : vector<16x48xbf16>, vector<48x128xbf16>, vector<16x128xf32> -> vector<16x128xf32>
    %278 = arith.addf %273, %277 : vector<16x128xf32>
    %c0_161 = arith.constant 0 : index
    %279 = arith.index_cast %259 : i32 to index
    %c11_162 = arith.constant 11 : index
    %280 = vector.load %arg2[%c0_161, %279, %c11_162] : memref<1x160x256xbf16, #tpu.memory_space<vmem>>, vector<1x48x128xbf16>
    %281 = vector.shape_cast %280 : vector<1x48x128xbf16> to vector<48x128xbf16>
    %cst_163 = arith.constant dense<0.000000e+00> : vector<16x128xf32>
    %282 = tpu.matmul %13, %281, %cst_163 {dimension_numbers = #tpu.dot_dimension_numbers<[1], [0], [0], [1], [0, 0, 1, 1], [], []>} : vector<16x48xbf16>, vector<48x128xbf16>, vector<16x128xf32> -> vector<16x128xf32>
    %283 = arith.addf %278, %282 : vector<16x128xf32>
    %c0_164 = arith.constant 0 : index
    %284 = arith.index_cast %259 : i32 to index
    %c12_165 = arith.constant 12 : index
    %285 = vector.load %arg2[%c0_164, %284, %c12_165] : memref<1x160x256xbf16, #tpu.memory_space<vmem>>, vector<1x48x128xbf16>
    %286 = vector.shape_cast %285 : vector<1x48x128xbf16> to vector<48x128xbf16>
    %cst_166 = arith.constant dense<0.000000e+00> : vector<16x128xf32>
    %287 = tpu.matmul %15, %286, %cst_166 {dimension_numbers = #tpu.dot_dimension_numbers<[1], [0], [0], [1], [0, 0, 1, 1], [], []>} : vector<16x48xbf16>, vector<48x128xbf16>, vector<16x128xf32> -> vector<16x128xf32>
    %288 = arith.addf %283, %287 : vector<16x128xf32>
    %c0_167 = arith.constant 0 : index
    %289 = arith.index_cast %259 : i32 to index
    %c20_168 = arith.constant 20 : index
    %290 = vector.load %arg2[%c0_167, %289, %c20_168] : memref<1x160x256xbf16, #tpu.memory_space<vmem>>, vector<1x48x128xbf16>
    %291 = vector.shape_cast %290 : vector<1x48x128xbf16> to vector<48x128xbf16>
    %cst_169 = arith.constant dense<0.000000e+00> : vector<16x128xf32>
    %292 = tpu.matmul %17, %291, %cst_169 {dimension_numbers = #tpu.dot_dimension_numbers<[1], [0], [0], [1], [0, 0, 1, 1], [], []>} : vector<16x48xbf16>, vector<48x128xbf16>, vector<16x128xf32> -> vector<16x128xf32>
    %293 = arith.addf %288, %292 : vector<16x128xf32>
    %c0_170 = arith.constant 0 : index
    %294 = arith.index_cast %259 : i32 to index
    %c21_171 = arith.constant 21 : index
    %295 = vector.load %arg2[%c0_170, %294, %c21_171] : memref<1x160x256xbf16, #tpu.memory_space<vmem>>, vector<1x48x128xbf16>
    %296 = vector.shape_cast %295 : vector<1x48x128xbf16> to vector<48x128xbf16>
    %cst_172 = arith.constant dense<0.000000e+00> : vector<16x128xf32>
    %297 = tpu.matmul %19, %296, %cst_172 {dimension_numbers = #tpu.dot_dimension_numbers<[1], [0], [0], [1], [0, 0, 1, 1], [], []>} : vector<16x48xbf16>, vector<48x128xbf16>, vector<16x128xf32> -> vector<16x128xf32>
    %298 = arith.addf %293, %297 : vector<16x128xf32>
    %c0_173 = arith.constant 0 : index
    %299 = arith.index_cast %259 : i32 to index
    %c22_174 = arith.constant 22 : index
    %300 = vector.load %arg2[%c0_173, %299, %c22_174] : memref<1x160x256xbf16, #tpu.memory_space<vmem>>, vector<1x48x128xbf16>
    %301 = vector.shape_cast %300 : vector<1x48x128xbf16> to vector<48x128xbf16>
    %cst_175 = arith.constant dense<0.000000e+00> : vector<16x128xf32>
    %302 = tpu.matmul %21, %301, %cst_175 {dimension_numbers = #tpu.dot_dimension_numbers<[1], [0], [0], [1], [0, 0, 1, 1], [], []>} : vector<16x48xbf16>, vector<48x128xbf16>, vector<16x128xf32> -> vector<16x128xf32>
    %303 = arith.addf %298, %302 : vector<16x128xf32>
    %304 = arith.truncf %303 : vector<16x128xf32> to vector<16x128xbf16>
    %c0_176 = arith.constant 0 : index
    %c4_177 = arith.constant 4 : index
    %c0_178 = arith.constant 0 : index
    %c0_179 = arith.constant 0 : index
    %305 = vector.load %arg5[%c0_176, %c4_177, %c0_178, %c0_179] : memref<1x8x16x128xbf16, #tpu.memory_space<vmem>>, vector<1x1x16x128xbf16>
    %306 = vector.shape_cast %305 : vector<1x1x16x128xbf16> to vector<16x128xbf16>
    %307 = vector.shape_cast %304 : vector<16x128xbf16> to vector<1x1x16x128xbf16>
    tpu.vector_store %arg5[%c0_176, %c4_177, %c0_178, %c0_179], %307 {strides = array<i32>} : memref<1x8x16x128xbf16, #tpu.memory_space<vmem>>, vector<1x1x16x128xbf16>,
    %308 = arith.extf %304 : vector<16x128xbf16> to vector<16x128xf32>
    %309 = vector.broadcast %3 : vector<1x128xf32> to vector<16x128xf32>
    %310 = arith.mulf %308, %309 : vector<16x128xf32>
    %311 = arith.addf %253, %310 : vector<16x128xf32>
    %312 = arith.mulf %310, %308 : vector<16x128xf32>
    %313 = arith.addf %255, %312 : vector<16x128xf32>
    %c8_i32_180 = arith.constant 8 : i32
    %314 = arith.muli %arg1, %c8_i32_180 : i32
    %c5_i32 = arith.constant 5 : i32
    %315 = arith.addi %314, %c5_i32 : i32
    %c16_i32_181 = arith.constant 16 : i32
    %316 = arith.muli %315, %c16_i32_181 : i32
    %317 = tpu.assume_multiple %316, 8 : i32
    %c0_182 = arith.constant 0 : index
    %318 = arith.index_cast %317 : i32 to index
    %c0_183 = arith.constant 0 : index
    %319 = vector.load %arg2[%c0_182, %318, %c0_183] : memref<1x160x256xbf16, #tpu.memory_space<vmem>>, vector<1x48x128xbf16>
    %320 = vector.shape_cast %319 : vector<1x48x128xbf16> to vector<48x128xbf16>
    %cst_184 = arith.constant dense<0.000000e+00> : vector<16x128xf32>
    %321 = tpu.matmul %5, %320, %cst_184 {dimension_numbers = #tpu.dot_dimension_numbers<[1], [0], [0], [1], [0, 0, 1, 1], [], []>} : vector<16x48xbf16>, vector<48x128xbf16>, vector<16x128xf32> -> vector<16x128xf32>
    %c0_185 = arith.constant 0 : index
    %322 = arith.index_cast %317 : i32 to index
    %c1_186 = arith.constant 1 : index
    %323 = vector.load %arg2[%c0_185, %322, %c1_186] : memref<1x160x256xbf16, #tpu.memory_space<vmem>>, vector<1x48x128xbf16>
    %324 = vector.shape_cast %323 : vector<1x48x128xbf16> to vector<48x128xbf16>
    %cst_187 = arith.constant dense<0.000000e+00> : vector<16x128xf32>
    %325 = tpu.matmul %7, %324, %cst_187 {dimension_numbers = #tpu.dot_dimension_numbers<[1], [0], [0], [1], [0, 0, 1, 1], [], []>} : vector<16x48xbf16>, vector<48x128xbf16>, vector<16x128xf32> -> vector<16x128xf32>
    %326 = arith.addf %321, %325 : vector<16x128xf32>
    %c0_188 = arith.constant 0 : index
    %327 = arith.index_cast %317 : i32 to index
    %c2_189 = arith.constant 2 : index
    %328 = vector.load %arg2[%c0_188, %327, %c2_189] : memref<1x160x256xbf16, #tpu.memory_space<vmem>>, vector<1x48x128xbf16>
    %329 = vector.shape_cast %328 : vector<1x48x128xbf16> to vector<48x128xbf16>
    %cst_190 = arith.constant dense<0.000000e+00> : vector<16x128xf32>
    %330 = tpu.matmul %9, %329, %cst_190 {dimension_numbers = #tpu.dot_dimension_numbers<[1], [0], [0], [1], [0, 0, 1, 1], [], []>} : vector<16x48xbf16>, vector<48x128xbf16>, vector<16x128xf32> -> vector<16x128xf32>
    %331 = arith.addf %326, %330 : vector<16x128xf32>
    %c0_191 = arith.constant 0 : index
    %332 = arith.index_cast %317 : i32 to index
    %c10_192 = arith.constant 10 : index
    %333 = vector.load %arg2[%c0_191, %332, %c10_192] : memref<1x160x256xbf16, #tpu.memory_space<vmem>>, vector<1x48x128xbf16>
    %334 = vector.shape_cast %333 : vector<1x48x128xbf16> to vector<48x128xbf16>
    %cst_193 = arith.constant dense<0.000000e+00> : vector<16x128xf32>
    %335 = tpu.matmul %11, %334, %cst_193 {dimension_numbers = #tpu.dot_dimension_numbers<[1], [0], [0], [1], [0, 0, 1, 1], [], []>} : vector<16x48xbf16>, vector<48x128xbf16>, vector<16x128xf32> -> vector<16x128xf32>
    %336 = arith.addf %331, %335 : vector<16x128xf32>
    %c0_194 = arith.constant 0 : index
    %337 = arith.index_cast %317 : i32 to index
    %c11_195 = arith.constant 11 : index
    %338 = vector.load %arg2[%c0_194, %337, %c11_195] : memref<1x160x256xbf16, #tpu.memory_space<vmem>>, vector<1x48x128xbf16>
    %339 = vector.shape_cast %338 : vector<1x48x128xbf16> to vector<48x128xbf16>
    %cst_196 = arith.constant dense<0.000000e+00> : vector<16x128xf32>
    %340 = tpu.matmul %13, %339, %cst_196 {dimension_numbers = #tpu.dot_dimension_numbers<[1], [0], [0], [1], [0, 0, 1, 1], [], []>} : vector<16x48xbf16>, vector<48x128xbf16>, vector<16x128xf32> -> vector<16x128xf32>
    %341 = arith.addf %336, %340 : vector<16x128xf32>
    %c0_197 = arith.constant 0 : index
    %342 = arith.index_cast %317 : i32 to index
    %c12_198 = arith.constant 12 : index
    %343 = vector.load %arg2[%c0_197, %342, %c12_198] : memref<1x160x256xbf16, #tpu.memory_space<vmem>>, vector<1x48x128xbf16>
    %344 = vector.shape_cast %343 : vector<1x48x128xbf16> to vector<48x128xbf16>
    %cst_199 = arith.constant dense<0.000000e+00> : vector<16x128xf32>
    %345 = tpu.matmul %15, %344, %cst_199 {dimension_numbers = #tpu.dot_dimension_numbers<[1], [0], [0], [1], [0, 0, 1, 1], [], []>} : vector<16x48xbf16>, vector<48x128xbf16>, vector<16x128xf32> -> vector<16x128xf32>
    %346 = arith.addf %341, %345 : vector<16x128xf32>
    %c0_200 = arith.constant 0 : index
    %347 = arith.index_cast %317 : i32 to index
    %c20_201 = arith.constant 20 : index
    %348 = vector.load %arg2[%c0_200, %347, %c20_201] : memref<1x160x256xbf16, #tpu.memory_space<vmem>>, vector<1x48x128xbf16>
    %349 = vector.shape_cast %348 : vector<1x48x128xbf16> to vector<48x128xbf16>
    %cst_202 = arith.constant dense<0.000000e+00> : vector<16x128xf32>
    %350 = tpu.matmul %17, %349, %cst_202 {dimension_numbers = #tpu.dot_dimension_numbers<[1], [0], [0], [1], [0, 0, 1, 1], [], []>} : vector<16x48xbf16>, vector<48x128xbf16>, vector<16x128xf32> -> vector<16x128xf32>
    %351 = arith.addf %346, %350 : vector<16x128xf32>
    %c0_203 = arith.constant 0 : index
    %352 = arith.index_cast %317 : i32 to index
    %c21_204 = arith.constant 21 : index
    %353 = vector.load %arg2[%c0_203, %352, %c21_204] : memref<1x160x256xbf16, #tpu.memory_space<vmem>>, vector<1x48x128xbf16>
    %354 = vector.shape_cast %353 : vector<1x48x128xbf16> to vector<48x128xbf16>
    %cst_205 = arith.constant dense<0.000000e+00> : vector<16x128xf32>
    %355 = tpu.matmul %19, %354, %cst_205 {dimension_numbers = #tpu.dot_dimension_numbers<[1], [0], [0], [1], [0, 0, 1, 1], [], []>} : vector<16x48xbf16>, vector<48x128xbf16>, vector<16x128xf32> -> vector<16x128xf32>
    %356 = arith.addf %351, %355 : vector<16x128xf32>
    %c0_206 = arith.constant 0 : index
    %357 = arith.index_cast %317 : i32 to index
    %c22_207 = arith.constant 22 : index
    %358 = vector.load %arg2[%c0_206, %357, %c22_207] : memref<1x160x256xbf16, #tpu.memory_space<vmem>>, vector<1x48x128xbf16>
    %359 = vector.shape_cast %358 : vector<1x48x128xbf16> to vector<48x128xbf16>
    %cst_208 = arith.constant dense<0.000000e+00> : vector<16x128xf32>
    %360 = tpu.matmul %21, %359, %cst_208 {dimension_numbers = #tpu.dot_dimension_numbers<[1], [0], [0], [1], [0, 0, 1, 1], [], []>} : vector<16x48xbf16>, vector<48x128xbf16>, vector<16x128xf32> -> vector<16x128xf32>
    %361 = arith.addf %356, %360 : vector<16x128xf32>
    %362 = arith.truncf %361 : vector<16x128xf32> to vector<16x128xbf16>
    %c0_209 = arith.constant 0 : index
    %c5_210 = arith.constant 5 : index
    %c0_211 = arith.constant 0 : index
    %c0_212 = arith.constant 0 : index
    %363 = vector.load %arg5[%c0_209, %c5_210, %c0_211, %c0_212] : memref<1x8x16x128xbf16, #tpu.memory_space<vmem>>, vector<1x1x16x128xbf16>
    %364 = vector.shape_cast %363 : vector<1x1x16x128xbf16> to vector<16x128xbf16>
    %365 = vector.shape_cast %362 : vector<16x128xbf16> to vector<1x1x16x128xbf16>
    tpu.vector_store %arg5[%c0_209, %c5_210, %c0_211, %c0_212], %365 {strides = array<i32>} : memref<1x8x16x128xbf16, #tpu.memory_space<vmem>>, vector<1x1x16x128xbf16>,
    %366 = arith.extf %362 : vector<16x128xbf16> to vector<16x128xf32>
    %367 = vector.broadcast %3 : vector<1x128xf32> to vector<16x128xf32>
    %368 = arith.mulf %366, %367 : vector<16x128xf32>
    %369 = arith.addf %311, %368 : vector<16x128xf32>
    %370 = arith.mulf %368, %366 : vector<16x128xf32>
    %371 = arith.addf %313, %370 : vector<16x128xf32>
    %c8_i32_213 = arith.constant 8 : i32
    %372 = arith.muli %arg1, %c8_i32_213 : i32
    %c6_i32 = arith.constant 6 : i32
    %373 = arith.addi %372, %c6_i32 : i32
    %c16_i32_214 = arith.constant 16 : i32
    %374 = arith.muli %373, %c16_i32_214 : i32
    %375 = tpu.assume_multiple %374, 8 : i32
    %c0_215 = arith.constant 0 : index
    %376 = arith.index_cast %375 : i32 to index
    %c0_216 = arith.constant 0 : index
    %377 = vector.load %arg2[%c0_215, %376, %c0_216] : memref<1x160x256xbf16, #tpu.memory_space<vmem>>, vector<1x48x128xbf16>
    %378 = vector.shape_cast %377 : vector<1x48x128xbf16> to vector<48x128xbf16>
    %cst_217 = arith.constant dense<0.000000e+00> : vector<16x128xf32>
    %379 = tpu.matmul %5, %378, %cst_217 {dimension_numbers = #tpu.dot_dimension_numbers<[1], [0], [0], [1], [0, 0, 1, 1], [], []>} : vector<16x48xbf16>, vector<48x128xbf16>, vector<16x128xf32> -> vector<16x128xf32>
    %c0_218 = arith.constant 0 : index
    %380 = arith.index_cast %375 : i32 to index
    %c1_219 = arith.constant 1 : index
    %381 = vector.load %arg2[%c0_218, %380, %c1_219] : memref<1x160x256xbf16, #tpu.memory_space<vmem>>, vector<1x48x128xbf16>
    %382 = vector.shape_cast %381 : vector<1x48x128xbf16> to vector<48x128xbf16>
    %cst_220 = arith.constant dense<0.000000e+00> : vector<16x128xf32>
    %383 = tpu.matmul %7, %382, %cst_220 {dimension_numbers = #tpu.dot_dimension_numbers<[1], [0], [0], [1], [0, 0, 1, 1], [], []>} : vector<16x48xbf16>, vector<48x128xbf16>, vector<16x128xf32> -> vector<16x128xf32>
    %384 = arith.addf %379, %383 : vector<16x128xf32>
    %c0_221 = arith.constant 0 : index
    %385 = arith.index_cast %375 : i32 to index
    %c2_222 = arith.constant 2 : index
    %386 = vector.load %arg2[%c0_221, %385, %c2_222] : memref<1x160x256xbf16, #tpu.memory_space<vmem>>, vector<1x48x128xbf16>
    %387 = vector.shape_cast %386 : vector<1x48x128xbf16> to vector<48x128xbf16>
    %cst_223 = arith.constant dense<0.000000e+00> : vector<16x128xf32>
    %388 = tpu.matmul %9, %387, %cst_223 {dimension_numbers = #tpu.dot_dimension_numbers<[1], [0], [0], [1], [0, 0, 1, 1], [], []>} : vector<16x48xbf16>, vector<48x128xbf16>, vector<16x128xf32> -> vector<16x128xf32>
    %389 = arith.addf %384, %388 : vector<16x128xf32>
    %c0_224 = arith.constant 0 : index
    %390 = arith.index_cast %375 : i32 to index
    %c10_225 = arith.constant 10 : index
    %391 = vector.load %arg2[%c0_224, %390, %c10_225] : memref<1x160x256xbf16, #tpu.memory_space<vmem>>, vector<1x48x128xbf16>
    %392 = vector.shape_cast %391 : vector<1x48x128xbf16> to vector<48x128xbf16>
    %cst_226 = arith.constant dense<0.000000e+00> : vector<16x128xf32>
    %393 = tpu.matmul %11, %392, %cst_226 {dimension_numbers = #tpu.dot_dimension_numbers<[1], [0], [0], [1], [0, 0, 1, 1], [], []>} : vector<16x48xbf16>, vector<48x128xbf16>, vector<16x128xf32> -> vector<16x128xf32>
    %394 = arith.addf %389, %393 : vector<16x128xf32>
    %c0_227 = arith.constant 0 : index
    %395 = arith.index_cast %375 : i32 to index
    %c11_228 = arith.constant 11 : index
    %396 = vector.load %arg2[%c0_227, %395, %c11_228] : memref<1x160x256xbf16, #tpu.memory_space<vmem>>, vector<1x48x128xbf16>
    %397 = vector.shape_cast %396 : vector<1x48x128xbf16> to vector<48x128xbf16>
    %cst_229 = arith.constant dense<0.000000e+00> : vector<16x128xf32>
    %398 = tpu.matmul %13, %397, %cst_229 {dimension_numbers = #tpu.dot_dimension_numbers<[1], [0], [0], [1], [0, 0, 1, 1], [], []>} : vector<16x48xbf16>, vector<48x128xbf16>, vector<16x128xf32> -> vector<16x128xf32>
    %399 = arith.addf %394, %398 : vector<16x128xf32>
    %c0_230 = arith.constant 0 : index
    %400 = arith.index_cast %375 : i32 to index
    %c12_231 = arith.constant 12 : index
    %401 = vector.load %arg2[%c0_230, %400, %c12_231] : memref<1x160x256xbf16, #tpu.memory_space<vmem>>, vector<1x48x128xbf16>
    %402 = vector.shape_cast %401 : vector<1x48x128xbf16> to vector<48x128xbf16>
    %cst_232 = arith.constant dense<0.000000e+00> : vector<16x128xf32>
    %403 = tpu.matmul %15, %402, %cst_232 {dimension_numbers = #tpu.dot_dimension_numbers<[1], [0], [0], [1], [0, 0, 1, 1], [], []>} : vector<16x48xbf16>, vector<48x128xbf16>, vector<16x128xf32> -> vector<16x128xf32>
    %404 = arith.addf %399, %403 : vector<16x128xf32>
    %c0_233 = arith.constant 0 : index
    %405 = arith.index_cast %375 : i32 to index
    %c20_234 = arith.constant 20 : index
    %406 = vector.load %arg2[%c0_233, %405, %c20_234] : memref<1x160x256xbf16, #tpu.memory_space<vmem>>, vector<1x48x128xbf16>
    %407 = vector.shape_cast %406 : vector<1x48x128xbf16> to vector<48x128xbf16>
    %cst_235 = arith.constant dense<0.000000e+00> : vector<16x128xf32>
    %408 = tpu.matmul %17, %407, %cst_235 {dimension_numbers = #tpu.dot_dimension_numbers<[1], [0], [0], [1], [0, 0, 1, 1], [], []>} : vector<16x48xbf16>, vector<48x128xbf16>, vector<16x128xf32> -> vector<16x128xf32>
    %409 = arith.addf %404, %408 : vector<16x128xf32>
    %c0_236 = arith.constant 0 : index
    %410 = arith.index_cast %375 : i32 to index
    %c21_237 = arith.constant 21 : index
    %411 = vector.load %arg2[%c0_236, %410, %c21_237] : memref<1x160x256xbf16, #tpu.memory_space<vmem>>, vector<1x48x128xbf16>
    %412 = vector.shape_cast %411 : vector<1x48x128xbf16> to vector<48x128xbf16>
    %cst_238 = arith.constant dense<0.000000e+00> : vector<16x128xf32>
    %413 = tpu.matmul %19, %412, %cst_238 {dimension_numbers = #tpu.dot_dimension_numbers<[1], [0], [0], [1], [0, 0, 1, 1], [], []>} : vector<16x48xbf16>, vector<48x128xbf16>, vector<16x128xf32> -> vector<16x128xf32>
    %414 = arith.addf %409, %413 : vector<16x128xf32>
    %c0_239 = arith.constant 0 : index
    %415 = arith.index_cast %375 : i32 to index
    %c22_240 = arith.constant 22 : index
    %416 = vector.load %arg2[%c0_239, %415, %c22_240] : memref<1x160x256xbf16, #tpu.memory_space<vmem>>, vector<1x48x128xbf16>
    %417 = vector.shape_cast %416 : vector<1x48x128xbf16> to vector<48x128xbf16>
    %cst_241 = arith.constant dense<0.000000e+00> : vector<16x128xf32>
    %418 = tpu.matmul %21, %417, %cst_241 {dimension_numbers = #tpu.dot_dimension_numbers<[1], [0], [0], [1], [0, 0, 1, 1], [], []>} : vector<16x48xbf16>, vector<48x128xbf16>, vector<16x128xf32> -> vector<16x128xf32>
    %419 = arith.addf %414, %418 : vector<16x128xf32>
    %420 = arith.truncf %419 : vector<16x128xf32> to vector<16x128xbf16>
    %c0_242 = arith.constant 0 : index
    %c6_243 = arith.constant 6 : index
    %c0_244 = arith.constant 0 : index
    %c0_245 = arith.constant 0 : index
    %421 = vector.load %arg5[%c0_242, %c6_243, %c0_244, %c0_245] : memref<1x8x16x128xbf16, #tpu.memory_space<vmem>>, vector<1x1x16x128xbf16>
    %422 = vector.shape_cast %421 : vector<1x1x16x128xbf16> to vector<16x128xbf16>
    %423 = vector.shape_cast %420 : vector<16x128xbf16> to vector<1x1x16x128xbf16>
    tpu.vector_store %arg5[%c0_242, %c6_243, %c0_244, %c0_245], %423 {strides = array<i32>} : memref<1x8x16x128xbf16, #tpu.memory_space<vmem>>, vector<1x1x16x128xbf16>,
    %424 = arith.extf %420 : vector<16x128xbf16> to vector<16x128xf32>
    %425 = vector.broadcast %3 : vector<1x128xf32> to vector<16x128xf32>
    %426 = arith.mulf %424, %425 : vector<16x128xf32>
    %427 = arith.addf %369, %426 : vector<16x128xf32>
    %428 = arith.mulf %426, %424 : vector<16x128xf32>
    %429 = arith.addf %371, %428 : vector<16x128xf32>
    %c8_i32_246 = arith.constant 8 : i32
    %430 = arith.muli %arg1, %c8_i32_246 : i32
    %c7_i32 = arith.constant 7 : i32
    %431 = arith.addi %430, %c7_i32 : i32
    %c16_i32_247 = arith.constant 16 : i32
    %432 = arith.muli %431, %c16_i32_247 : i32
    %433 = tpu.assume_multiple %432, 8 : i32
    %c0_248 = arith.constant 0 : index
    %434 = arith.index_cast %433 : i32 to index
    %c0_249 = arith.constant 0 : index
    %435 = vector.load %arg2[%c0_248, %434, %c0_249] : memref<1x160x256xbf16, #tpu.memory_space<vmem>>, vector<1x48x128xbf16>
    %436 = vector.shape_cast %435 : vector<1x48x128xbf16> to vector<48x128xbf16>
    %cst_250 = arith.constant dense<0.000000e+00> : vector<16x128xf32>
    %437 = tpu.matmul %5, %436, %cst_250 {dimension_numbers = #tpu.dot_dimension_numbers<[1], [0], [0], [1], [0, 0, 1, 1], [], []>} : vector<16x48xbf16>, vector<48x128xbf16>, vector<16x128xf32> -> vector<16x128xf32>
    %c0_251 = arith.constant 0 : index
    %438 = arith.index_cast %433 : i32 to index
    %c1_252 = arith.constant 1 : index
    %439 = vector.load %arg2[%c0_251, %438, %c1_252] : memref<1x160x256xbf16, #tpu.memory_space<vmem>>, vector<1x48x128xbf16>
    %440 = vector.shape_cast %439 : vector<1x48x128xbf16> to vector<48x128xbf16>
    %cst_253 = arith.constant dense<0.000000e+00> : vector<16x128xf32>
    %441 = tpu.matmul %7, %440, %cst_253 {dimension_numbers = #tpu.dot_dimension_numbers<[1], [0], [0], [1], [0, 0, 1, 1], [], []>} : vector<16x48xbf16>, vector<48x128xbf16>, vector<16x128xf32> -> vector<16x128xf32>
    %442 = arith.addf %437, %441 : vector<16x128xf32>
    %c0_254 = arith.constant 0 : index
    %443 = arith.index_cast %433 : i32 to index
    %c2_255 = arith.constant 2 : index
    %444 = vector.load %arg2[%c0_254, %443, %c2_255] : memref<1x160x256xbf16, #tpu.memory_space<vmem>>, vector<1x48x128xbf16>
    %445 = vector.shape_cast %444 : vector<1x48x128xbf16> to vector<48x128xbf16>
    %cst_256 = arith.constant dense<0.000000e+00> : vector<16x128xf32>
    %446 = tpu.matmul %9, %445, %cst_256 {dimension_numbers = #tpu.dot_dimension_numbers<[1], [0], [0], [1], [0, 0, 1, 1], [], []>} : vector<16x48xbf16>, vector<48x128xbf16>, vector<16x128xf32> -> vector<16x128xf32>
    %447 = arith.addf %442, %446 : vector<16x128xf32>
    %c0_257 = arith.constant 0 : index
    %448 = arith.index_cast %433 : i32 to index
    %c10_258 = arith.constant 10 : index
    %449 = vector.load %arg2[%c0_257, %448, %c10_258] : memref<1x160x256xbf16, #tpu.memory_space<vmem>>, vector<1x48x128xbf16>
    %450 = vector.shape_cast %449 : vector<1x48x128xbf16> to vector<48x128xbf16>
    %cst_259 = arith.constant dense<0.000000e+00> : vector<16x128xf32>
    %451 = tpu.matmul %11, %450, %cst_259 {dimension_numbers = #tpu.dot_dimension_numbers<[1], [0], [0], [1], [0, 0, 1, 1], [], []>} : vector<16x48xbf16>, vector<48x128xbf16>, vector<16x128xf32> -> vector<16x128xf32>
    %452 = arith.addf %447, %451 : vector<16x128xf32>
    %c0_260 = arith.constant 0 : index
    %453 = arith.index_cast %433 : i32 to index
    %c11_261 = arith.constant 11 : index
    %454 = vector.load %arg2[%c0_260, %453, %c11_261] : memref<1x160x256xbf16, #tpu.memory_space<vmem>>, vector<1x48x128xbf16>
    %455 = vector.shape_cast %454 : vector<1x48x128xbf16> to vector<48x128xbf16>
    %cst_262 = arith.constant dense<0.000000e+00> : vector<16x128xf32>
    %456 = tpu.matmul %13, %455, %cst_262 {dimension_numbers = #tpu.dot_dimension_numbers<[1], [0], [0], [1], [0, 0, 1, 1], [], []>} : vector<16x48xbf16>, vector<48x128xbf16>, vector<16x128xf32> -> vector<16x128xf32>
    %457 = arith.addf %452, %456 : vector<16x128xf32>
    %c0_263 = arith.constant 0 : index
    %458 = arith.index_cast %433 : i32 to index
    %c12_264 = arith.constant 12 : index
    %459 = vector.load %arg2[%c0_263, %458, %c12_264] : memref<1x160x256xbf16, #tpu.memory_space<vmem>>, vector<1x48x128xbf16>
    %460 = vector.shape_cast %459 : vector<1x48x128xbf16> to vector<48x128xbf16>
    %cst_265 = arith.constant dense<0.000000e+00> : vector<16x128xf32>
    %461 = tpu.matmul %15, %460, %cst_265 {dimension_numbers = #tpu.dot_dimension_numbers<[1], [0], [0], [1], [0, 0, 1, 1], [], []>} : vector<16x48xbf16>, vector<48x128xbf16>, vector<16x128xf32> -> vector<16x128xf32>
    %462 = arith.addf %457, %461 : vector<16x128xf32>
    %c0_266 = arith.constant 0 : index
    %463 = arith.index_cast %433 : i32 to index
    %c20_267 = arith.constant 20 : index
    %464 = vector.load %arg2[%c0_266, %463, %c20_267] : memref<1x160x256xbf16, #tpu.memory_space<vmem>>, vector<1x48x128xbf16>
    %465 = vector.shape_cast %464 : vector<1x48x128xbf16> to vector<48x128xbf16>
    %cst_268 = arith.constant dense<0.000000e+00> : vector<16x128xf32>
    %466 = tpu.matmul %17, %465, %cst_268 {dimension_numbers = #tpu.dot_dimension_numbers<[1], [0], [0], [1], [0, 0, 1, 1], [], []>} : vector<16x48xbf16>, vector<48x128xbf16>, vector<16x128xf32> -> vector<16x128xf32>
    %467 = arith.addf %462, %466 : vector<16x128xf32>
    %c0_269 = arith.constant 0 : index
    %468 = arith.index_cast %433 : i32 to index
    %c21_270 = arith.constant 21 : index
    %469 = vector.load %arg2[%c0_269, %468, %c21_270] : memref<1x160x256xbf16, #tpu.memory_space<vmem>>, vector<1x48x128xbf16>
    %470 = vector.shape_cast %469 : vector<1x48x128xbf16> to vector<48x128xbf16>
    %cst_271 = arith.constant dense<0.000000e+00> : vector<16x128xf32>
    %471 = tpu.matmul %19, %470, %cst_271 {dimension_numbers = #tpu.dot_dimension_numbers<[1], [0], [0], [1], [0, 0, 1, 1], [], []>} : vector<16x48xbf16>, vector<48x128xbf16>, vector<16x128xf32> -> vector<16x128xf32>
    %472 = arith.addf %467, %471 : vector<16x128xf32>
    %c0_272 = arith.constant 0 : index
    %473 = arith.index_cast %433 : i32 to index
    %c22_273 = arith.constant 22 : index
    %474 = vector.load %arg2[%c0_272, %473, %c22_273] : memref<1x160x256xbf16, #tpu.memory_space<vmem>>, vector<1x48x128xbf16>
    %475 = vector.shape_cast %474 : vector<1x48x128xbf16> to vector<48x128xbf16>
    %cst_274 = arith.constant dense<0.000000e+00> : vector<16x128xf32>
    %476 = tpu.matmul %21, %475, %cst_274 {dimension_numbers = #tpu.dot_dimension_numbers<[1], [0], [0], [1], [0, 0, 1, 1], [], []>} : vector<16x48xbf16>, vector<48x128xbf16>, vector<16x128xf32> -> vector<16x128xf32>
    %477 = arith.addf %472, %476 : vector<16x128xf32>
    %478 = arith.truncf %477 : vector<16x128xf32> to vector<16x128xbf16>
    %c0_275 = arith.constant 0 : index
    %c7_276 = arith.constant 7 : index
    %c0_277 = arith.constant 0 : index
    %c0_278 = arith.constant 0 : index
    %479 = vector.load %arg5[%c0_275, %c7_276, %c0_277, %c0_278] : memref<1x8x16x128xbf16, #tpu.memory_space<vmem>>, vector<1x1x16x128xbf16>
    %480 = vector.shape_cast %479 : vector<1x1x16x128xbf16> to vector<16x128xbf16>
    %481 = vector.shape_cast %478 : vector<16x128xbf16> to vector<1x1x16x128xbf16>
    tpu.vector_store %arg5[%c0_275, %c7_276, %c0_277, %c0_278], %481 {strides = array<i32>} : memref<1x8x16x128xbf16, #tpu.memory_space<vmem>>, vector<1x1x16x128xbf16>,
    %482 = arith.extf %478 : vector<16x128xbf16> to vector<16x128xf32>
    %483 = vector.broadcast %3 : vector<1x128xf32> to vector<16x128xf32>
    %484 = arith.mulf %482, %483 : vector<16x128xf32>
    %485 = arith.addf %427, %484 : vector<16x128xf32>
    %486 = arith.mulf %484, %482 : vector<16x128xf32>
    %487 = arith.addf %429, %486 : vector<16x128xf32>
    %c0_279 = arith.constant 0 : index
    %c0_280 = arith.constant 0 : index
    %c0_281 = arith.constant 0 : index
    %c0_282 = arith.constant 0 : index
    %488 = vector.load %arg6[%c0_279, %c0_280, %c0_281, %c0_282] : memref<1x2x16x128xf32, #tpu.memory_space<vmem>>, vector<1x1x16x128xf32>
    %489 = vector.shape_cast %488 : vector<1x1x16x128xf32> to vector<16x128xf32>
    %490 = arith.addf %489, %485 : vector<16x128xf32>
    %c0_283 = arith.constant 0 : index
    %c0_284 = arith.constant 0 : index
    %c0_285 = arith.constant 0 : index
    %c0_286 = arith.constant 0 : index
    %491 = vector.load %arg6[%c0_283, %c0_284, %c0_285, %c0_286] : memref<1x2x16x128xf32, #tpu.memory_space<vmem>>, vector<1x1x16x128xf32>
    %492 = vector.shape_cast %491 : vector<1x1x16x128xf32> to vector<16x128xf32>
    %493 = vector.shape_cast %490 : vector<16x128xf32> to vector<1x1x16x128xf32>
    tpu.vector_store %arg6[%c0_283, %c0_284, %c0_285, %c0_286], %493 {strides = array<i32>} : memref<1x2x16x128xf32, #tpu.memory_space<vmem>>, vector<1x1x16x128xf32>,
    %c0_287 = arith.constant 0 : index
    %c1_288 = arith.constant 1 : index
    %c0_289 = arith.constant 0 : index
    %c0_290 = arith.constant 0 : index
    %494 = vector.load %arg6[%c0_287, %c1_288, %c0_289, %c0_290] : memref<1x2x16x128xf32, #tpu.memory_space<vmem>>, vector<1x1x16x128xf32>
    %495 = vector.shape_cast %494 : vector<1x1x16x128xf32> to vector<16x128xf32>
    %496 = arith.addf %495, %487 : vector<16x128xf32>
    %c0_291 = arith.constant 0 : index
    %c1_292 = arith.constant 1 : index
    %c0_293 = arith.constant 0 : index
    %c0_294 = arith.constant 0 : index
    %497 = vector.load %arg6[%c0_291, %c1_292, %c0_293, %c0_294] : memref<1x2x16x128xf32, #tpu.memory_space<vmem>>, vector<1x1x16x128xf32>
    %498 = vector.shape_cast %497 : vector<1x1x16x128xf32> to vector<16x128xf32>
    %499 = vector.shape_cast %496 : vector<16x128xf32> to vector<1x1x16x128xf32>
    tpu.vector_store %arg6[%c0_291, %c1_292, %c0_293, %c0_294], %499 {strides = array<i32>} : memref<1x2x16x128xf32, #tpu.memory_space<vmem>>, vector<1x1x16x128xf32>,
    return
  }
  func.func @transform_0(%arg0: i32, %arg1: i32) -> (i32, i32, i32) {
    %c0_i32 = arith.constant 0 : i32
    %c0_i32_0 = arith.constant 0 : i32
    %c0_i32_1 = arith.constant 0 : i32
    return %arg0, %c0_i32, %c0_i32_0 : i32, i32, i32
  }
  func.func @transform_1(%arg0: i32, %arg1: i32) -> (i32, i32, i32) {
    %c0_i32 = arith.constant 0 : i32
    %c0_i32_0 = arith.constant 0 : i32
    %c0_i32_1 = arith.constant 0 : i32
    %c0_i32_2 = arith.constant 0 : i32
    return %c0_i32, %c0_i32_0, %c0_i32_1 : i32, i32, i32
  }
  func.func @transform_2(%arg0: i32, %arg1: i32) -> (i32, i32) {
    %c0_i32 = arith.constant 0 : i32
    %c0_i32_0 = arith.constant 0 : i32
    %c0_i32_1 = arith.constant 0 : i32
    return %c0_i32, %c0_i32_0 : i32, i32
  }
  func.func @transform_3(%arg0: i32, %arg1: i32) -> (i32, i32, i32, i32) {
    %c0_i32 = arith.constant 0 : i32
    %c0_i32_0 = arith.constant 0 : i32
    %c0_i32_1 = arith.constant 0 : i32
    return %arg0, %arg1, %c0_i32, %c0_i32_0 : i32, i32, i32, i32
  }
  func.func @transform_4(%arg0: i32, %arg1: i32) -> (i32, i32, i32, i32) {
    %c0_i32 = arith.constant 0 : i32
    %c0_i32_0 = arith.constant 0 : i32
    %c0_i32_1 = arith.constant 0 : i32
    %c0_i32_2 = arith.constant 0 : i32
    return %arg0, %c0_i32, %c0_i32_0, %c0_i32_1 : i32, i32, i32, i32
  }
}

module attributes {stable_mosaic.version = 11 : i64} {
  func.func @_bn_relu_repad_kernel(%arg0: i32, %arg1: memref<1x8x16x128xbf16, #tpu.memory_space<vmem>>, %arg2: memref<16x1xf32, #tpu.memory_space<vmem>>, %arg3: memref<16x1xf32, #tpu.memory_space<vmem>>, %arg4: memref<1x128xf32, #tpu.memory_space<vmem>>, %arg5: memref<1x160x256xbf16, #tpu.memory_space<vmem>>) attributes {dimension_semantics = [#tpu.dimension_semantics<parallel>], iteration_bounds = array<i64: 2>, scalar_prefetch = 0 : i64, scratch_operands = 0 : i64, tpu.core_type = #tpu.core_type<tc>, window_params = [{transform_indices = @transform_0, window_bounds = array<i64: 1, 8, 16, 128>}, {pipeline_mode = #tpu.pipeline_mode<synchronous>, transform_indices = @transform_1, window_bounds = array<i64: 16, 1>}, {pipeline_mode = #tpu.pipeline_mode<synchronous>, transform_indices = @transform_2, window_bounds = array<i64: 16, 1>}, {pipeline_mode = #tpu.pipeline_mode<synchronous>, transform_indices = @transform_3, window_bounds = array<i64: 1, 128>}, {transform_indices = @transform_4, window_bounds = array<i64: 1, 160, 256>}]} {
    %cst = arith.constant 0.000000e+00 : bf16
    %0 = vector.broadcast %cst : bf16 to vector<16x256xbf16>
    %c0 = arith.constant 0 : index
    %c0_0 = arith.constant 0 : index
    %c0_1 = arith.constant 0 : index
    %1 = vector.load %arg5[%c0, %c0_0, %c0_1] : memref<1x160x256xbf16, #tpu.memory_space<vmem>>, vector<1x16x256xbf16>
    %2 = vector.shape_cast %1 : vector<1x16x256xbf16> to vector<16x256xbf16>
    %3 = vector.shape_cast %0 : vector<16x256xbf16> to vector<1x16x256xbf16>
    tpu.vector_store %arg5[%c0, %c0_0, %c0_1], %3 {strides = array<i32>} : memref<1x160x256xbf16, #tpu.memory_space<vmem>>, vector<1x16x256xbf16>,
    %c0_2 = arith.constant 0 : index
    %c144 = arith.constant 144 : index
    %c0_3 = arith.constant 0 : index
    %4 = vector.load %arg5[%c0_2, %c144, %c0_3] : memref<1x160x256xbf16, #tpu.memory_space<vmem>>, vector<1x16x256xbf16>
    %5 = vector.shape_cast %4 : vector<1x16x256xbf16> to vector<16x256xbf16>
    %6 = vector.shape_cast %0 : vector<16x256xbf16> to vector<1x16x256xbf16>
    tpu.vector_store %arg5[%c0_2, %c144, %c0_3], %6 {strides = array<i32>} : memref<1x160x256xbf16, #tpu.memory_space<vmem>>, vector<1x16x256xbf16>,
    %c0_4 = arith.constant 0 : index
    %c0_5 = arith.constant 0 : index
    %7 = vector.load %arg2[%c0_4, %c0_5] : memref<16x1xf32, #tpu.memory_space<vmem>>, vector<16x1xf32>
    %c0_6 = arith.constant 0 : index
    %c0_7 = arith.constant 0 : index
    %8 = vector.load %arg3[%c0_6, %c0_7] : memref<16x1xf32, #tpu.memory_space<vmem>>, vector<16x1xf32>
    %c0_8 = arith.constant 0 : index
    %c0_9 = arith.constant 0 : index
    %9 = vector.load %arg4[%c0_8, %c0_9] : memref<1x128xf32, #tpu.memory_space<vmem>>, vector<1x128xf32>
    %cst_10 = arith.constant 0.000000e+00 : bf16
    %10 = vector.broadcast %cst_10 : bf16 to vector<16x128xbf16>
    %c0_11 = arith.constant 0 : index
    %c0_12 = arith.constant 0 : index
    %c0_13 = arith.constant 0 : index
    %c0_14 = arith.constant 0 : index
    %11 = vector.load %arg1[%c0_11, %c0_12, %c0_13, %c0_14] : memref<1x8x16x128xbf16, #tpu.memory_space<vmem>>, vector<1x1x16x128xbf16>
    %12 = vector.shape_cast %11 : vector<1x1x16x128xbf16> to vector<16x128xbf16>
    %13 = arith.extf %12 : vector<16x128xbf16> to vector<16x128xf32>
    %14 = vector.broadcast %7 : vector<16x1xf32> to vector<16x128xf32>
    %15 = arith.mulf %13, %14 : vector<16x128xf32>
    %16 = vector.broadcast %8 : vector<16x1xf32> to vector<16x128xf32>
    %17 = arith.addf %15, %16 : vector<16x128xf32>
    %cst_15 = arith.constant 0.000000e+00 : f32
    %18 = vector.broadcast %cst_15 : f32 to vector<16x128xf32>
    %19 = arith.maximumf %17, %18 : vector<16x128xf32>
    %20 = vector.broadcast %9 : vector<1x128xf32> to vector<16x128xf32>
    %21 = arith.mulf %19, %20 : vector<16x128xf32>
    %22 = arith.truncf %21 : vector<16x128xf32> to vector<16x128xbf16>
    %c0_16 = arith.constant 0 : index
    %c16 = arith.constant 16 : index
    %c0_17 = arith.constant 0 : index
    %23 = vector.load %arg5[%c0_16, %c16, %c0_17] : memref<1x160x256xbf16, #tpu.memory_space<vmem>>, vector<1x16x128xbf16>
    %24 = vector.shape_cast %23 : vector<1x16x128xbf16> to vector<16x128xbf16>
    %25 = vector.shape_cast %22 : vector<16x128xbf16> to vector<1x16x128xbf16>
    tpu.vector_store %arg5[%c0_16, %c16, %c0_17], %25 {strides = array<i32>} : memref<1x160x256xbf16, #tpu.memory_space<vmem>>, vector<1x16x128xbf16>,
    %c0_18 = arith.constant 0 : index
    %c16_19 = arith.constant 16 : index
    %c128 = arith.constant 128 : index
    %26 = vector.load %arg5[%c0_18, %c16_19, %c128] : memref<1x160x256xbf16, #tpu.memory_space<vmem>>, vector<1x16x128xbf16>
    %27 = vector.shape_cast %26 : vector<1x16x128xbf16> to vector<16x128xbf16>
    %28 = vector.shape_cast %10 : vector<16x128xbf16> to vector<1x16x128xbf16>
    tpu.vector_store %arg5[%c0_18, %c16_19, %c128], %28 {strides = array<i32>} : memref<1x160x256xbf16, #tpu.memory_space<vmem>>, vector<1x16x128xbf16>,
    %c0_20 = arith.constant 0 : index
    %c1 = arith.constant 1 : index
    %c0_21 = arith.constant 0 : index
    %c0_22 = arith.constant 0 : index
    %29 = vector.load %arg1[%c0_20, %c1, %c0_21, %c0_22] : memref<1x8x16x128xbf16, #tpu.memory_space<vmem>>, vector<1x1x16x128xbf16>
    %30 = vector.shape_cast %29 : vector<1x1x16x128xbf16> to vector<16x128xbf16>
    %31 = arith.extf %30 : vector<16x128xbf16> to vector<16x128xf32>
    %32 = vector.broadcast %7 : vector<16x1xf32> to vector<16x128xf32>
    %33 = arith.mulf %31, %32 : vector<16x128xf32>
    %34 = vector.broadcast %8 : vector<16x1xf32> to vector<16x128xf32>
    %35 = arith.addf %33, %34 : vector<16x128xf32>
    %cst_23 = arith.constant 0.000000e+00 : f32
    %36 = vector.broadcast %cst_23 : f32 to vector<16x128xf32>
    %37 = arith.maximumf %35, %36 : vector<16x128xf32>
    %38 = vector.broadcast %9 : vector<1x128xf32> to vector<16x128xf32>
    %39 = arith.mulf %37, %38 : vector<16x128xf32>
    %40 = arith.truncf %39 : vector<16x128xf32> to vector<16x128xbf16>
    %c0_24 = arith.constant 0 : index
    %c32 = arith.constant 32 : index
    %c0_25 = arith.constant 0 : index
    %41 = vector.load %arg5[%c0_24, %c32, %c0_25] : memref<1x160x256xbf16, #tpu.memory_space<vmem>>, vector<1x16x128xbf16>
    %42 = vector.shape_cast %41 : vector<1x16x128xbf16> to vector<16x128xbf16>
    %43 = vector.shape_cast %40 : vector<16x128xbf16> to vector<1x16x128xbf16>
    tpu.vector_store %arg5[%c0_24, %c32, %c0_25], %43 {strides = array<i32>} : memref<1x160x256xbf16, #tpu.memory_space<vmem>>, vector<1x16x128xbf16>,
    %c0_26 = arith.constant 0 : index
    %c32_27 = arith.constant 32 : index
    %c128_28 = arith.constant 128 : index
    %44 = vector.load %arg5[%c0_26, %c32_27, %c128_28] : memref<1x160x256xbf16, #tpu.memory_space<vmem>>, vector<1x16x128xbf16>
    %45 = vector.shape_cast %44 : vector<1x16x128xbf16> to vector<16x128xbf16>
    %46 = vector.shape_cast %10 : vector<16x128xbf16> to vector<1x16x128xbf16>
    tpu.vector_store %arg5[%c0_26, %c32_27, %c128_28], %46 {strides = array<i32>} : memref<1x160x256xbf16, #tpu.memory_space<vmem>>, vector<1x16x128xbf16>,
    %c0_29 = arith.constant 0 : index
    %c2 = arith.constant 2 : index
    %c0_30 = arith.constant 0 : index
    %c0_31 = arith.constant 0 : index
    %47 = vector.load %arg1[%c0_29, %c2, %c0_30, %c0_31] : memref<1x8x16x128xbf16, #tpu.memory_space<vmem>>, vector<1x1x16x128xbf16>
    %48 = vector.shape_cast %47 : vector<1x1x16x128xbf16> to vector<16x128xbf16>
    %49 = arith.extf %48 : vector<16x128xbf16> to vector<16x128xf32>
    %50 = vector.broadcast %7 : vector<16x1xf32> to vector<16x128xf32>
    %51 = arith.mulf %49, %50 : vector<16x128xf32>
    %52 = vector.broadcast %8 : vector<16x1xf32> to vector<16x128xf32>
    %53 = arith.addf %51, %52 : vector<16x128xf32>
    %cst_32 = arith.constant 0.000000e+00 : f32
    %54 = vector.broadcast %cst_32 : f32 to vector<16x128xf32>
    %55 = arith.maximumf %53, %54 : vector<16x128xf32>
    %56 = vector.broadcast %9 : vector<1x128xf32> to vector<16x128xf32>
    %57 = arith.mulf %55, %56 : vector<16x128xf32>
    %58 = arith.truncf %57 : vector<16x128xf32> to vector<16x128xbf16>
    %c0_33 = arith.constant 0 : index
    %c48 = arith.constant 48 : index
    %c0_34 = arith.constant 0 : index
    %59 = vector.load %arg5[%c0_33, %c48, %c0_34] : memref<1x160x256xbf16, #tpu.memory_space<vmem>>, vector<1x16x128xbf16>
    %60 = vector.shape_cast %59 : vector<1x16x128xbf16> to vector<16x128xbf16>
    %61 = vector.shape_cast %58 : vector<16x128xbf16> to vector<1x16x128xbf16>
    tpu.vector_store %arg5[%c0_33, %c48, %c0_34], %61 {strides = array<i32>} : memref<1x160x256xbf16, #tpu.memory_space<vmem>>, vector<1x16x128xbf16>,
    %c0_35 = arith.constant 0 : index
    %c48_36 = arith.constant 48 : index
    %c128_37 = arith.constant 128 : index
    %62 = vector.load %arg5[%c0_35, %c48_36, %c128_37] : memref<1x160x256xbf16, #tpu.memory_space<vmem>>, vector<1x16x128xbf16>
    %63 = vector.shape_cast %62 : vector<1x16x128xbf16> to vector<16x128xbf16>
    %64 = vector.shape_cast %10 : vector<16x128xbf16> to vector<1x16x128xbf16>
    tpu.vector_store %arg5[%c0_35, %c48_36, %c128_37], %64 {strides = array<i32>} : memref<1x160x256xbf16, #tpu.memory_space<vmem>>, vector<1x16x128xbf16>,
    %c0_38 = arith.constant 0 : index
    %c3 = arith.constant 3 : index
    %c0_39 = arith.constant 0 : index
    %c0_40 = arith.constant 0 : index
    %65 = vector.load %arg1[%c0_38, %c3, %c0_39, %c0_40] : memref<1x8x16x128xbf16, #tpu.memory_space<vmem>>, vector<1x1x16x128xbf16>
    %66 = vector.shape_cast %65 : vector<1x1x16x128xbf16> to vector<16x128xbf16>
    %67 = arith.extf %66 : vector<16x128xbf16> to vector<16x128xf32>
    %68 = vector.broadcast %7 : vector<16x1xf32> to vector<16x128xf32>
    %69 = arith.mulf %67, %68 : vector<16x128xf32>
    %70 = vector.broadcast %8 : vector<16x1xf32> to vector<16x128xf32>
    %71 = arith.addf %69, %70 : vector<16x128xf32>
    %cst_41 = arith.constant 0.000000e+00 : f32
    %72 = vector.broadcast %cst_41 : f32 to vector<16x128xf32>
    %73 = arith.maximumf %71, %72 : vector<16x128xf32>
    %74 = vector.broadcast %9 : vector<1x128xf32> to vector<16x128xf32>
    %75 = arith.mulf %73, %74 : vector<16x128xf32>
    %76 = arith.truncf %75 : vector<16x128xf32> to vector<16x128xbf16>
    %c0_42 = arith.constant 0 : index
    %c64 = arith.constant 64 : index
    %c0_43 = arith.constant 0 : index
    %77 = vector.load %arg5[%c0_42, %c64, %c0_43] : memref<1x160x256xbf16, #tpu.memory_space<vmem>>, vector<1x16x128xbf16>
    %78 = vector.shape_cast %77 : vector<1x16x128xbf16> to vector<16x128xbf16>
    %79 = vector.shape_cast %76 : vector<16x128xbf16> to vector<1x16x128xbf16>
    tpu.vector_store %arg5[%c0_42, %c64, %c0_43], %79 {strides = array<i32>} : memref<1x160x256xbf16, #tpu.memory_space<vmem>>, vector<1x16x128xbf16>,
    %c0_44 = arith.constant 0 : index
    %c64_45 = arith.constant 64 : index
    %c128_46 = arith.constant 128 : index
    %80 = vector.load %arg5[%c0_44, %c64_45, %c128_46] : memref<1x160x256xbf16, #tpu.memory_space<vmem>>, vector<1x16x128xbf16>
    %81 = vector.shape_cast %80 : vector<1x16x128xbf16> to vector<16x128xbf16>
    %82 = vector.shape_cast %10 : vector<16x128xbf16> to vector<1x16x128xbf16>
    tpu.vector_store %arg5[%c0_44, %c64_45, %c128_46], %82 {strides = array<i32>} : memref<1x160x256xbf16, #tpu.memory_space<vmem>>, vector<1x16x128xbf16>,
    %c0_47 = arith.constant 0 : index
    %c4 = arith.constant 4 : index
    %c0_48 = arith.constant 0 : index
    %c0_49 = arith.constant 0 : index
    %83 = vector.load %arg1[%c0_47, %c4, %c0_48, %c0_49] : memref<1x8x16x128xbf16, #tpu.memory_space<vmem>>, vector<1x1x16x128xbf16>
    %84 = vector.shape_cast %83 : vector<1x1x16x128xbf16> to vector<16x128xbf16>
    %85 = arith.extf %84 : vector<16x128xbf16> to vector<16x128xf32>
    %86 = vector.broadcast %7 : vector<16x1xf32> to vector<16x128xf32>
    %87 = arith.mulf %85, %86 : vector<16x128xf32>
    %88 = vector.broadcast %8 : vector<16x1xf32> to vector<16x128xf32>
    %89 = arith.addf %87, %88 : vector<16x128xf32>
    %cst_50 = arith.constant 0.000000e+00 : f32
    %90 = vector.broadcast %cst_50 : f32 to vector<16x128xf32>
    %91 = arith.maximumf %89, %90 : vector<16x128xf32>
    %92 = vector.broadcast %9 : vector<1x128xf32> to vector<16x128xf32>
    %93 = arith.mulf %91, %92 : vector<16x128xf32>
    %94 = arith.truncf %93 : vector<16x128xf32> to vector<16x128xbf16>
    %c0_51 = arith.constant 0 : index
    %c80 = arith.constant 80 : index
    %c0_52 = arith.constant 0 : index
    %95 = vector.load %arg5[%c0_51, %c80, %c0_52] : memref<1x160x256xbf16, #tpu.memory_space<vmem>>, vector<1x16x128xbf16>
    %96 = vector.shape_cast %95 : vector<1x16x128xbf16> to vector<16x128xbf16>
    %97 = vector.shape_cast %94 : vector<16x128xbf16> to vector<1x16x128xbf16>
    tpu.vector_store %arg5[%c0_51, %c80, %c0_52], %97 {strides = array<i32>} : memref<1x160x256xbf16, #tpu.memory_space<vmem>>, vector<1x16x128xbf16>,
    %c0_53 = arith.constant 0 : index
    %c80_54 = arith.constant 80 : index
    %c128_55 = arith.constant 128 : index
    %98 = vector.load %arg5[%c0_53, %c80_54, %c128_55] : memref<1x160x256xbf16, #tpu.memory_space<vmem>>, vector<1x16x128xbf16>
    %99 = vector.shape_cast %98 : vector<1x16x128xbf16> to vector<16x128xbf16>
    %100 = vector.shape_cast %10 : vector<16x128xbf16> to vector<1x16x128xbf16>
    tpu.vector_store %arg5[%c0_53, %c80_54, %c128_55], %100 {strides = array<i32>} : memref<1x160x256xbf16, #tpu.memory_space<vmem>>, vector<1x16x128xbf16>,
    %c0_56 = arith.constant 0 : index
    %c5 = arith.constant 5 : index
    %c0_57 = arith.constant 0 : index
    %c0_58 = arith.constant 0 : index
    %101 = vector.load %arg1[%c0_56, %c5, %c0_57, %c0_58] : memref<1x8x16x128xbf16, #tpu.memory_space<vmem>>, vector<1x1x16x128xbf16>
    %102 = vector.shape_cast %101 : vector<1x1x16x128xbf16> to vector<16x128xbf16>
    %103 = arith.extf %102 : vector<16x128xbf16> to vector<16x128xf32>
    %104 = vector.broadcast %7 : vector<16x1xf32> to vector<16x128xf32>
    %105 = arith.mulf %103, %104 : vector<16x128xf32>
    %106 = vector.broadcast %8 : vector<16x1xf32> to vector<16x128xf32>
    %107 = arith.addf %105, %106 : vector<16x128xf32>
    %cst_59 = arith.constant 0.000000e+00 : f32
    %108 = vector.broadcast %cst_59 : f32 to vector<16x128xf32>
    %109 = arith.maximumf %107, %108 : vector<16x128xf32>
    %110 = vector.broadcast %9 : vector<1x128xf32> to vector<16x128xf32>
    %111 = arith.mulf %109, %110 : vector<16x128xf32>
    %112 = arith.truncf %111 : vector<16x128xf32> to vector<16x128xbf16>
    %c0_60 = arith.constant 0 : index
    %c96 = arith.constant 96 : index
    %c0_61 = arith.constant 0 : index
    %113 = vector.load %arg5[%c0_60, %c96, %c0_61] : memref<1x160x256xbf16, #tpu.memory_space<vmem>>, vector<1x16x128xbf16>
    %114 = vector.shape_cast %113 : vector<1x16x128xbf16> to vector<16x128xbf16>
    %115 = vector.shape_cast %112 : vector<16x128xbf16> to vector<1x16x128xbf16>
    tpu.vector_store %arg5[%c0_60, %c96, %c0_61], %115 {strides = array<i32>} : memref<1x160x256xbf16, #tpu.memory_space<vmem>>, vector<1x16x128xbf16>,
    %c0_62 = arith.constant 0 : index
    %c96_63 = arith.constant 96 : index
    %c128_64 = arith.constant 128 : index
    %116 = vector.load %arg5[%c0_62, %c96_63, %c128_64] : memref<1x160x256xbf16, #tpu.memory_space<vmem>>, vector<1x16x128xbf16>
    %117 = vector.shape_cast %116 : vector<1x16x128xbf16> to vector<16x128xbf16>
    %118 = vector.shape_cast %10 : vector<16x128xbf16> to vector<1x16x128xbf16>
    tpu.vector_store %arg5[%c0_62, %c96_63, %c128_64], %118 {strides = array<i32>} : memref<1x160x256xbf16, #tpu.memory_space<vmem>>, vector<1x16x128xbf16>,
    %c0_65 = arith.constant 0 : index
    %c6 = arith.constant 6 : index
    %c0_66 = arith.constant 0 : index
    %c0_67 = arith.constant 0 : index
    %119 = vector.load %arg1[%c0_65, %c6, %c0_66, %c0_67] : memref<1x8x16x128xbf16, #tpu.memory_space<vmem>>, vector<1x1x16x128xbf16>
    %120 = vector.shape_cast %119 : vector<1x1x16x128xbf16> to vector<16x128xbf16>
    %121 = arith.extf %120 : vector<16x128xbf16> to vector<16x128xf32>
    %122 = vector.broadcast %7 : vector<16x1xf32> to vector<16x128xf32>
    %123 = arith.mulf %121, %122 : vector<16x128xf32>
    %124 = vector.broadcast %8 : vector<16x1xf32> to vector<16x128xf32>
    %125 = arith.addf %123, %124 : vector<16x128xf32>
    %cst_68 = arith.constant 0.000000e+00 : f32
    %126 = vector.broadcast %cst_68 : f32 to vector<16x128xf32>
    %127 = arith.maximumf %125, %126 : vector<16x128xf32>
    %128 = vector.broadcast %9 : vector<1x128xf32> to vector<16x128xf32>
    %129 = arith.mulf %127, %128 : vector<16x128xf32>
    %130 = arith.truncf %129 : vector<16x128xf32> to vector<16x128xbf16>
    %c0_69 = arith.constant 0 : index
    %c112 = arith.constant 112 : index
    %c0_70 = arith.constant 0 : index
    %131 = vector.load %arg5[%c0_69, %c112, %c0_70] : memref<1x160x256xbf16, #tpu.memory_space<vmem>>, vector<1x16x128xbf16>
    %132 = vector.shape_cast %131 : vector<1x16x128xbf16> to vector<16x128xbf16>
    %133 = vector.shape_cast %130 : vector<16x128xbf16> to vector<1x16x128xbf16>
    tpu.vector_store %arg5[%c0_69, %c112, %c0_70], %133 {strides = array<i32>} : memref<1x160x256xbf16, #tpu.memory_space<vmem>>, vector<1x16x128xbf16>,
    %c0_71 = arith.constant 0 : index
    %c112_72 = arith.constant 112 : index
    %c128_73 = arith.constant 128 : index
    %134 = vector.load %arg5[%c0_71, %c112_72, %c128_73] : memref<1x160x256xbf16, #tpu.memory_space<vmem>>, vector<1x16x128xbf16>
    %135 = vector.shape_cast %134 : vector<1x16x128xbf16> to vector<16x128xbf16>
    %136 = vector.shape_cast %10 : vector<16x128xbf16> to vector<1x16x128xbf16>
    tpu.vector_store %arg5[%c0_71, %c112_72, %c128_73], %136 {strides = array<i32>} : memref<1x160x256xbf16, #tpu.memory_space<vmem>>, vector<1x16x128xbf16>,
    %c0_74 = arith.constant 0 : index
    %c7 = arith.constant 7 : index
    %c0_75 = arith.constant 0 : index
    %c0_76 = arith.constant 0 : index
    %137 = vector.load %arg1[%c0_74, %c7, %c0_75, %c0_76] : memref<1x8x16x128xbf16, #tpu.memory_space<vmem>>, vector<1x1x16x128xbf16>
    %138 = vector.shape_cast %137 : vector<1x1x16x128xbf16> to vector<16x128xbf16>
    %139 = arith.extf %138 : vector<16x128xbf16> to vector<16x128xf32>
    %140 = vector.broadcast %7 : vector<16x1xf32> to vector<16x128xf32>
    %141 = arith.mulf %139, %140 : vector<16x128xf32>
    %142 = vector.broadcast %8 : vector<16x1xf32> to vector<16x128xf32>
    %143 = arith.addf %141, %142 : vector<16x128xf32>
    %cst_77 = arith.constant 0.000000e+00 : f32
    %144 = vector.broadcast %cst_77 : f32 to vector<16x128xf32>
    %145 = arith.maximumf %143, %144 : vector<16x128xf32>
    %146 = vector.broadcast %9 : vector<1x128xf32> to vector<16x128xf32>
    %147 = arith.mulf %145, %146 : vector<16x128xf32>
    %148 = arith.truncf %147 : vector<16x128xf32> to vector<16x128xbf16>
    %c0_78 = arith.constant 0 : index
    %c128_79 = arith.constant 128 : index
    %c0_80 = arith.constant 0 : index
    %149 = vector.load %arg5[%c0_78, %c128_79, %c0_80] : memref<1x160x256xbf16, #tpu.memory_space<vmem>>, vector<1x16x128xbf16>
    %150 = vector.shape_cast %149 : vector<1x16x128xbf16> to vector<16x128xbf16>
    %151 = vector.shape_cast %148 : vector<16x128xbf16> to vector<1x16x128xbf16>
    tpu.vector_store %arg5[%c0_78, %c128_79, %c0_80], %151 {strides = array<i32>} : memref<1x160x256xbf16, #tpu.memory_space<vmem>>, vector<1x16x128xbf16>,
    %c0_81 = arith.constant 0 : index
    %c128_82 = arith.constant 128 : index
    %c128_83 = arith.constant 128 : index
    %152 = vector.load %arg5[%c0_81, %c128_82, %c128_83] : memref<1x160x256xbf16, #tpu.memory_space<vmem>>, vector<1x16x128xbf16>
    %153 = vector.shape_cast %152 : vector<1x16x128xbf16> to vector<16x128xbf16>
    %154 = vector.shape_cast %10 : vector<16x128xbf16> to vector<1x16x128xbf16>
    tpu.vector_store %arg5[%c0_81, %c128_82, %c128_83], %154 {strides = array<i32>} : memref<1x160x256xbf16, #tpu.memory_space<vmem>>, vector<1x16x128xbf16>,
    return
  }
  func.func @transform_0(%arg0: i32) -> (i32, i32, i32, i32) {
    %c0_i32 = arith.constant 0 : i32
    %c0_i32_0 = arith.constant 0 : i32
    %c0_i32_1 = arith.constant 0 : i32
    %c0_i32_2 = arith.constant 0 : i32
    return %arg0, %c0_i32, %c0_i32_0, %c0_i32_1 : i32, i32, i32, i32
  }
  func.func @transform_1(%arg0: i32) -> (i32, i32) {
    %c0_i32 = arith.constant 0 : i32
    %c0_i32_0 = arith.constant 0 : i32
    %c0_i32_1 = arith.constant 0 : i32
    return %c0_i32, %c0_i32_0 : i32, i32
  }
  func.func @transform_2(%arg0: i32) -> (i32, i32) {
    %c0_i32 = arith.constant 0 : i32
    %c0_i32_0 = arith.constant 0 : i32
    %c0_i32_1 = arith.constant 0 : i32
    return %c0_i32, %c0_i32_0 : i32, i32
  }
  func.func @transform_3(%arg0: i32) -> (i32, i32) {
    %c0_i32 = arith.constant 0 : i32
    %c0_i32_0 = arith.constant 0 : i32
    %c0_i32_1 = arith.constant 0 : i32
    return %c0_i32, %c0_i32_0 : i32, i32
  }
  func.func @transform_4(%arg0: i32) -> (i32, i32, i32) {
    %c0_i32 = arith.constant 0 : i32
    %c0_i32_0 = arith.constant 0 : i32
    %c0_i32_1 = arith.constant 0 : i32
    return %arg0, %c0_i32, %c0_i32_0 : i32, i32, i32
  }
}

module attributes {stable_mosaic.version = 11 : i64} {
  func.func @_bn_relu_kernel(%arg0: i32, %arg1: i32, %arg2: memref<1x8x16x128xbf16, #tpu.memory_space<vmem>>, %arg3: memref<16x1xf32, #tpu.memory_space<vmem>>, %arg4: memref<16x1xf32, #tpu.memory_space<vmem>>, %arg5: memref<1x8x16x128xbf16, #tpu.memory_space<vmem>>) attributes {dimension_semantics = [#tpu.dimension_semantics<parallel>, #tpu.dimension_semantics<parallel>], iteration_bounds = array<i64: 2, 1>, scalar_prefetch = 0 : i64, scratch_operands = 0 : i64, tpu.core_type = #tpu.core_type<tc>, window_params = [{transform_indices = @transform_0, window_bounds = array<i64: 1, 8, 16, 128>}, {pipeline_mode = #tpu.pipeline_mode<synchronous>, transform_indices = @transform_1, window_bounds = array<i64: 16, 1>}, {pipeline_mode = #tpu.pipeline_mode<synchronous>, transform_indices = @transform_2, window_bounds = array<i64: 16, 1>}, {transform_indices = @transform_3, window_bounds = array<i64: 1, 8, 16, 128>}]} {
    %c0 = arith.constant 0 : index
    %c0_0 = arith.constant 0 : index
    %c0_1 = arith.constant 0 : index
    %c0_2 = arith.constant 0 : index
    %0 = vector.load %arg2[%c0, %c0_0, %c0_1, %c0_2] : memref<1x8x16x128xbf16, #tpu.memory_space<vmem>>, vector<1x8x16x128xbf16>
    %1 = vector.shape_cast %0 : vector<1x8x16x128xbf16> to vector<8x16x128xbf16>
    %2 = arith.extf %1 : vector<8x16x128xbf16> to vector<8x16x128xf32>
    %c0_3 = arith.constant 0 : index
    %c0_4 = arith.constant 0 : index
    %3 = vector.load %arg3[%c0_3, %c0_4] : memref<16x1xf32, #tpu.memory_space<vmem>>, vector<16x1xf32>
    %4 = vector.shape_cast %3 : vector<16x1xf32> to vector<1x16x1xf32>
    %5 = vector.broadcast %4 : vector<1x16x1xf32> to vector<8x16x128xf32>
    %6 = arith.mulf %2, %5 : vector<8x16x128xf32>
    %c0_5 = arith.constant 0 : index
    %c0_6 = arith.constant 0 : index
    %7 = vector.load %arg4[%c0_5, %c0_6] : memref<16x1xf32, #tpu.memory_space<vmem>>, vector<16x1xf32>
    %8 = vector.shape_cast %7 : vector<16x1xf32> to vector<1x16x1xf32>
    %9 = vector.broadcast %8 : vector<1x16x1xf32> to vector<8x16x128xf32>
    %10 = arith.addf %6, %9 : vector<8x16x128xf32>
    %cst = arith.constant 0.000000e+00 : f32
    %11 = vector.broadcast %cst : f32 to vector<8x16x128xf32>
    %12 = arith.maximumf %10, %11 : vector<8x16x128xf32>
    %13 = arith.truncf %12 : vector<8x16x128xf32> to vector<8x16x128xbf16>
    %c0_7 = arith.constant 0 : index
    %c0_8 = arith.constant 0 : index
    %c0_9 = arith.constant 0 : index
    %c0_10 = arith.constant 0 : index
    %14 = vector.load %arg5[%c0_7, %c0_8, %c0_9, %c0_10] : memref<1x8x16x128xbf16, #tpu.memory_space<vmem>>, vector<1x8x16x128xbf16>
    %15 = vector.shape_cast %14 : vector<1x8x16x128xbf16> to vector<8x16x128xbf16>
    %16 = vector.shape_cast %13 : vector<8x16x128xbf16> to vector<1x8x16x128xbf16>
    tpu.vector_store %arg5[%c0_7, %c0_8, %c0_9, %c0_10], %16 {strides = array<i32>} : memref<1x8x16x128xbf16, #tpu.memory_space<vmem>>, vector<1x8x16x128xbf16>,
    return
  }
  func.func @transform_0(%arg0: i32, %arg1: i32) -> (i32, i32, i32, i32) {
    %c0_i32 = arith.constant 0 : i32
    %c0_i32_0 = arith.constant 0 : i32
    %c0_i32_1 = arith.constant 0 : i32
    return %arg0, %arg1, %c0_i32, %c0_i32_0 : i32, i32, i32, i32
  }
  func.func @transform_1(%arg0: i32, %arg1: i32) -> (i32, i32) {
    %c0_i32 = arith.constant 0 : i32
    %c0_i32_0 = arith.constant 0 : i32
    %c0_i32_1 = arith.constant 0 : i32
    return %c0_i32, %c0_i32_0 : i32, i32
  }
  func.func @transform_2(%arg0: i32, %arg1: i32) -> (i32, i32) {
    %c0_i32 = arith.constant 0 : i32
    %c0_i32_0 = arith.constant 0 : i32
    %c0_i32_1 = arith.constant 0 : i32
    return %c0_i32, %c0_i32_0 : i32, i32
  }
  func.func @transform_3(%arg0: i32, %arg1: i32) -> (i32, i32, i32, i32) {
    %c0_i32 = arith.constant 0 : i32
    %c0_i32_0 = arith.constant 0 : i32
    %c0_i32_1 = arith.constant 0 : i32
    return %arg0, %arg1, %c0_i32, %c0_i32_0 : i32, i32, i32, i32
  }
}

</mosaic_0001>

<llo_original>
// kernel: up3d_forward.5
$region0: #{up3d_forward.5}
  #allocation0 [shape = 'u32[]', space=smem, size = 0x4, offset = 0x4, fixed_abs, tag = 'smem constant byte address 0x4 - core index']
  #allocation1 [shape = 'u32[144,128]{1,0:T(1,128)}', space=vmem, size = 0x12000, scoped, tag = 'internal scratch']
  %s0 = inlined_call_operand.vmem [shape: bf16[2,8,16,128], index: 0, kind: input, shape index: {}]
  %s1 = inlined_call_operand.vmem [shape: f32[16,1], index: 1, kind: input, shape index: {}]
  %s2 = inlined_call_operand.vmem [shape: f32[16,1], index: 2, kind: input, shape index: {}]
  %s3 = inlined_call_operand.vmem [shape: f32[1,128], index: 3, kind: input, shape index: {}]
  %s4 = inlined_call_operand.vmem [shape: bf16[2,160,256], index: 4, kind: output, shape index: {}]
  %s5 = sld [smem:[#allocation0]]
  $region49: #{up3d_forward.5} parent=0
    _
  %s7 = ssub.s32 1, %s5
  %s8 = scalar_select 0, %s7, %s5
  loop: start=0, step=1, limit=4
  $region2: #{up3d_forward.5} parent=0 // loop_pre_header
    _
  $region3: #{up3d_forward.5} parent=0 // loop_header
    %s10 = sphi 0, %s14
    %p11 = scmp.ge.s32.totalorder %s10, 4
    %s20 = sphi 0, %s22
    %s23 = sphi 0, %s20
    %s24 = sphi 0, %s23
    %s40 = sphi 0, %s24
    %s44 = sphi 0, %s44
    %s46 = sphi 0, %s44
    %s47 = sphi 0, %s46
    %s61 = sphi 0, %s47
    %s65 = sphi 0, %s65
    %s67 = sphi 0, %s65
    %s68 = sphi 0, %s67
    %s82 = sphi 0, %s68
    %s86 = sphi 0, %s86
    %s88 = sphi 0, %s86
    %s89 = sphi 0, %s88
    %s103 = sphi 0, %s89
    %s109 = sphi 0, %s111
    %s112 = sphi 0, %s109
    %s113 = sphi 0, %s112
    %s129 = sphi 0, %s113
  $region4: #{up3d_forward.5} parent=0 // loop_header_branch
    %13 = sbr.rel (%p11) target = $region8
  $region5: #{up3d_forward.5} parent=0 // loop_body
    %s15 = ssub.s32 %s10, 1
    %s16 = ssub.s32 %s10, 2
    %s17 = sadd.s32 %s10, 1
    %s18 = ssub.s32 %s10, %s17
    %p19 = scmp.eq.s32.totalorder %s18, 0
    %s21 = sadd.s32 %s20, 1
    %s22 = scalar_select %p19, %s20, %s21
    %p25 = pneg %p19
    %p26 = scmp.eq.s32.totalorder %s10, 1
    %p27 = por %p25, %p26
    %p28 = scmp.ne.s32.totalorder %s20, %s23
    %p29 = scmp.eq.s32.totalorder %s10, 0
    %p30 = por %p28, %p29
    %p31 = scmp.ne.s32.totalorder %s20, %s23
    %p32 = scmp.eq.s32.totalorder %s15, 1
    %p33 = por %p31, %p32
    %p34 = scmp.ne.s32.totalorder %s23, %s24
    %p35 = scmp.eq.s32.totalorder %s15, 0
    %p36 = por %p34, %p35
    %p37 = scmp.ne.s32.totalorder %s23, %s24
    %p38 = scmp.eq.s32.totalorder %s16, 1
    %p39 = por %p37, %p38
    %p41 = scmp.ne.s32.totalorder %s24, %s40
    %p42 = scmp.eq.s32.totalorder %s16, 0
    %p43 = por %p41, %p42
    %s45 = sadd.s32 %s44, 1
    %p48 = scmp.eq.s32.totalorder %s10, 1
    %p49 = scmp.ne.s32.totalorder %s44, %s46
    %p50 = scmp.eq.s32.totalorder %s10, 0
    %p51 = por %p49, %p50
    %p52 = scmp.ne.s32.totalorder %s44, %s46
    %p53 = scmp.eq.s32.totalorder %s15, 1
    %p54 = por %p52, %p53
    %p55 = scmp.ne.s32.totalorder %s46, %s47
    %p56 = scmp.eq.s32.totalorder %s15, 0
    %p57 = por %p55, %p56
    %p58 = scmp.ne.s32.totalorder %s46, %s47
    %p59 = scmp.eq.s32.totalorder %s16, 1
    %p60 = por %p58, %p59
    %p62 = scmp.ne.s32.totalorder %s47, %s61
    %p63 = scmp.eq.s32.totalorder %s16, 0
    %p64 = por %p62, %p63
    %s66 = sadd.s32 %s65, 1
    %p69 = scmp.eq.s32.totalorder %s10, 1
    %p70 = scmp.ne.s32.totalorder %s65, %s67
    %p71 = scmp.eq.s32.totalorder %s10, 0
    %p72 = por %p70, %p71
    %p73 = scmp.ne.s32.totalorder %s65, %s67
    %p74 = scmp.eq.s32.totalorder %s15, 1
    %p75 = por %p73, %p74
    %p76 = scmp.ne.s32.totalorder %s67, %s68
    %p77 = scmp.eq.s32.totalorder %s15, 0
    %p78 = por %p76, %p77
    %p79 = scmp.ne.s32.totalorder %s67, %s68
    %p80 = scmp.eq.s32.totalorder %s16, 1
    %p81 = por %p79, %p80
    %p83 = scmp.ne.s32.totalorder %s68, %s82
    %p84 = scmp.eq.s32.totalorder %s16, 0
    %p85 = por %p83, %p84
    %s87 = sadd.s32 %s86, 1
    %p90 = scmp.eq.s32.totalorder %s10, 1
    %p91 = scmp.ne.s32.totalorder %s86, %s88
    %p92 = scmp.eq.s32.totalorder %s10, 0
    %p93 = por %p91, %p92
    %p94 = scmp.ne.s32.totalorder %s86, %s88
    %p95 = scmp.eq.s32.totalorder %s15, 1
    %p96 = por %p94, %p95
    %p97 = scmp.ne.s32.totalorder %s88, %s89
    %p98 = scmp.eq.s32.totalorder %s15, 0
    %p99 = por %p97, %p98
    %p100 = scmp.ne.s32.totalorder %s88, %s89
    %p101 = scmp.eq.s32.totalorder %s16, 1
    %p102 = por %p100, %p101
    %p104 = scmp.ne.s32.totalorder %s89, %s103
    %p105 = scmp.eq.s32.totalorder %s16, 0
    %p106 = por %p104, %p105
    %s107 = ssub.s32 %s10, %s17
    %p108 = scmp.eq.s32.totalorder %s107, 0
    %s110 = sadd.s32 %s109, 1
    %s111 = scalar_select %p108, %s109, %s110
    %p114 = pneg %p108
    %p115 = scmp.eq.s32.totalorder %s10, 1
    %p116 = por %p114, %p115
    %p117 = scmp.ne.s32.totalorder %s109, %s112
    %p118 = scmp.eq.s32.totalorder %s10, 0
    %p119 = por %p117, %p118
    %p120 = scmp.ne.s32.totalorder %s109, %s112
    %p121 = scmp.eq.s32.totalorder %s15, 1
    %p122 = por %p120, %p121
    %p123 = scmp.ne.s32.totalorder %s112, %s113
    %p124 = scmp.eq.s32.totalorder %s15, 0
    %p125 = por %p123, %p124
    %p126 = scmp.ne.s32.totalorder %s112, %s113
    %p127 = scmp.eq.s32.totalorder %s16, 1
    %p128 = por %p126, %p127
    %p130 = scmp.ne.s32.totalorder %s113, %s129
    %p131 = scmp.eq.s32.totalorder %s16, 0
    %p132 = por %p130, %p131
    %p133 = scmp.le.s32.totalorder 1, %s10
    %p134 = scmp.lt.s32.totalorder %s10, 3
    %p135 = pnand %p133, %p134
    %p136 = pneg %p135
    // Predicated region
    $region9: #{up3d_forward.5} parent=5 // pred_check
      _
    $region10: #{up3d_forward.5} parent=5 // pred_check_branch
      %138 = sbr.rel (%p135) target = $region12
    $region11: #{up3d_forward.5} parent=5 // pred_region
      %s139 = ssub.s32 %s10, 1
      // Predicated region
      $region13: #{up3d_forward.5} parent=11 // pred_check
        %p140 = pneg %p57
      $region14: #{up3d_forward.5} parent=11 // pred_check_branch
        %142 = sbr.rel (%p140) target = $region16
      $region15: #{up3d_forward.5} parent=11 // pred_region
        _
      $region16: #{up3d_forward.5} parent=11 // pred_fallthru
        _
      // Predicated region
      $region17: #{up3d_forward.5} parent=11 // pred_check
        %p143 = pneg %p78
      $region18: #{up3d_forward.5} parent=11 // pred_check_branch
        %145 = sbr.rel (%p143) target = $region20
      $region19: #{up3d_forward.5} parent=11 // pred_region
        _
      $region20: #{up3d_forward.5} parent=11 // pred_fallthru
        _
      // Predicated region
      $region21: #{up3d_forward.5} parent=11 // pred_check
        %p146 = pneg %p99
      $region22: #{up3d_forward.5} parent=11 // pred_check_branch
        %148 = sbr.rel (%p146) target = $region24
      $region23: #{up3d_forward.5} parent=11 // pred_region
        _
      $region24: #{up3d_forward.5} parent=11 // pred_fallthru
        _
    $region12: #{up3d_forward.5} parent=5 // pred_fallthru
      _
    %p149 = scmp.lt.s32.totalorder %s10, 2
    // Predicated region
    $region25: #{up3d_forward.5} parent=5 // pred_check
      %p150 = pneg %p149
    $region26: #{up3d_forward.5} parent=5 // pred_check_branch
      %152 = sbr.rel (%p150) target = $region28
    $region27: #{up3d_forward.5} parent=5 // pred_region
      // Predicated region
      $region29: #{up3d_forward.5} parent=27 // pred_check
        %p153 = pneg %p30
      $region30: #{up3d_forward.5} parent=27 // pred_check_branch
        %155 = sbr.rel (%p153) target = $region32
      $region31: #{up3d_forward.5} parent=27 // pred_region
        %p156 = scmp.lt.s32.totalorder %s10, 1
        %s157 = scalar_select %p156, %s10, 1
        %s158 = smul.addr %s157, 16
        %s159 = smul.addr %s158, 4
        %s160 = scalar_lea.vmem %s0, %s159
      $region32: #{up3d_forward.5} parent=27 // pred_fallthru
        _
    $region28: #{up3d_forward.5} parent=5 // pred_fallthru
      _
    %p161 = scmp.le.s32.totalorder 1, %s10
    %p162 = scmp.lt.s32.totalorder %s10, 3
    %p163 = pnand %p161, %p162
    %p164 = pneg %p163
    // Predicated region
    $region33: #{up3d_forward.5} parent=5 // pred_check
      _
    $region34: #{up3d_forward.5} parent=5 // pred_check_branch
      %166 = sbr.rel (%p163) target = $region36
    $region35: #{up3d_forward.5} parent=5 // pred_region
      %s167 = ssub.s32 %s10, 1
      %p168 = scmp.lt.s32.totalorder %s15, 1
      %s169 = scalar_select %p168, %s15, 1
      %s170 = smul.addr %s169, 16
      %s171 = smul.addr %s170, 4
      %s172 = scalar_lea.vmem %s0, %s171
      %p173 = pneg %p36
      %p174 = pneg %p33
      %p175 = pneg %p57
      %p176 = pneg %p54
      %p177 = pneg %p78
      %p178 = pneg %p75
      %p179 = pneg %p99
      %p180 = pneg %p96
      %p181 = pneg %p125
      %p182 = pneg %p122
      %p183 = scmp.lt.s32.totalorder %s15, 1
      %s184 = scalar_select %p183, %s15, 1
      %s185 = smul.addr %s184, 40
      %s186 = smul.addr %s185, 4
      %s187 = scalar_lea.vmem %s4, %s186
      %p188 = scmp.lt.s32.totalorder %s15, 1
      %s189 = scalar_select %p188, %s15, 1
      %s190 = smul.addr %s189, 16
      %s191 = smul.addr %s190, 4
      %s192 = scalar_lea.vmem %s0, %s191
      %p193 = scmp.lt.s32.totalorder %s15, 1
      %s194 = scalar_select %p193, %s15, 1
      %s195 = smul.addr %s194, 40
      %s196 = smul.addr %s195, 4
      %s197 = scalar_lea.vmem %s4, %s196
      %199 = vst [vmem:[%s197] sm:$0xff] 0
      %200 = vst [vmem:[%s197 + $0x8] sm:$0xff] 0
      %201 = vst [vmem:[%s197 + $0x90] sm:$0xff] 0
      %202 = vst [vmem:[%s197 + $0x98] sm:$0xff] 0
      %v203 = vld [vmem:[%s1] sm:$0xff]
      %v204 = vld [vmem:[%s1 + $0x8] sm:$0xff]
      %v205 = vld [vmem:[%s2] sm:$0xff]
      %v206 = vld [vmem:[%s2 + $0x8] sm:$0xff]
      %v207 = vld [vmem:[%s3] sm:$0x1]
      %v208 = vld [vmem:[%s192] sm:$0xf]
      %v209 = vld [vmem:[%s192 + $0x4] sm:$0xf]
      %v210 = vunpack.c.l.bf16 %v208
      %v211 = vunpack.c.l.bf16 %v209
      %213 = vset.pattern.permute.xlu0 0
      %214 = vperm.xlu0 %213, %v203
      %v215 = vpop.permute.xlu0 %214
      %218 = vset.pattern.permute.xlu0 0
      %219 = vperm.xlu0 %218, %v204
      %v220 = vpop.permute.xlu0 %219
      %v222 = vmul.f32 %v210, %v215
      %v223 = vmul.f32 %v211, %v220
      %225 = vset.pattern.permute.xlu0 0
      %226 = vperm.xlu0 %225, %v205
      %v227 = vpop.permute.xlu0 %226
      %230 = vset.pattern.permute.xlu0 0
      %231 = vperm.xlu0 %230, %v206
      %v232 = vpop.permute.xlu0 %231
      %v234 = vadd.f32 %v222, %v227
      %v235 = vadd.f32 %v223, %v232
      %v236 = vmax.f32 %v234, 0.0
      %v237 = vmax.f32 %v235, 0.0
      %v239 = vlaneseq
      %v240 = vshrl.u32 %v239, 7
      %v241 = vsub.s32 0, %v240
      %v242 = vrot.slane %v207, %v241
      %v244 = vmul.f32 %v236, %v242
      %v245 = vmul.f32 %v237, %v242
      %v246 = vpack.c.bf16 %v245, %v244
      %v248 = vunpack.c.l.b16 %v246
      %v249 = vunpack.c.h.b16 %v246
      %v250 = vpack.c.b16 %v248, %v248
      %v251 = vpack.c.b16 %v249, %v249
      %254 = vst [vmem:[%s197 + $0x10] sm:$0xf] %v250
      %255 = vst [vmem:[%s197 + $0x18] sm:$0xf] %v251
      %256 = vst [vmem:[%s197 + $0x14] sm:$0xf] 0
      %257 = vst [vmem:[%s197 + $0x1c] sm:$0xf] 0
      %s258 = scalar_lea.vmem %s192, 8
      %v259 = vld [vmem:[%s258] sm:$0xf]
      %v260 = vld [vmem:[%s258 + $0x4] sm:$0xf]
      %v261 = vunpack.c.l.bf16 %v259
      %v262 = vunpack.c.l.bf16 %v260
      %v263 = vmul.f32 %v261, %v215
      %v264 = vmul.f32 %v262, %v220
      %v265 = vadd.f32 %v263, %v227
      %v266 = vadd.f32 %v264, %v232
      %v267 = vmax.f32 %v265, 0.0
      %v268 = vmax.f32 %v266, 0.0
      %v269 = vmul.f32 %v267, %v242
      %v270 = vmul.f32 %v268, %v242
      %v271 = vpack.c.bf16 %v270, %v269
      %v273 = vunpack.c.l.b16 %v271
      %v274 = vunpack.c.h.b16 %v271
      %v275 = vpack.c.b16 %v273, %v273
      %v276 = vpack.c.b16 %v274, %v274
      %279 = vst [vmem:[%s197 + $0x20] sm:$0xf] %v275
      %280 = vst [vmem:[%s197 + $0x28] sm:$0xf] %v276
      %281 = vst [vmem:[%s197 + $0x24] sm:$0xf] 0
      %282 = vst [vmem:[%s197 + $0x2c] sm:$0xf] 0
      %s283 = scalar_lea.vmem %s192, 16
      %v284 = vld [vmem:[%s283] sm:$0xf]
      %v285 = vld [vmem:[%s283 + $0x4] sm:$0xf]
      %v286 = vunpack.c.l.bf16 %v284
      %v287 = vunpack.c.l.bf16 %v285
      %v288 = vmul.f32 %v286, %v215
      %v289 = vmul.f32 %v287, %v220
      %v290 = vadd.f32 %v288, %v227
      %v291 = vadd.f32 %v289, %v232
      %v292 = vmax.f32 %v290, 0.0
      %v293 = vmax.f32 %v291, 0.0
      %v294 = vmul.f32 %v292, %v242
      %v295 = vmul.f32 %v293, %v242
      %v296 = vpack.c.bf16 %v295, %v294
      %v298 = vunpack.c.l.b16 %v296
      %v299 = vunpack.c.h.b16 %v296
      %v300 = vpack.c.b16 %v298, %v298
      %v301 = vpack.c.b16 %v299, %v299
      %304 = vst [vmem:[%s197 + $0x30] sm:$0xf] %v300
      %305 = vst [vmem:[%s197 + $0x38] sm:$0xf] %v301
      %306 = vst [vmem:[%s197 + $0x34] sm:$0xf] 0
      %307 = vst [vmem:[%s197 + $0x3c] sm:$0xf] 0
      %s308 = scalar_lea.vmem %s192, 24
      %v309 = vld [vmem:[%s308] sm:$0xf]
      %v310 = vld [vmem:[%s308 + $0x4] sm:$0xf]
      %v311 = vunpack.c.l.bf16 %v309
      %v312 = vunpack.c.l.bf16 %v310
      %v313 = vmul.f32 %v311, %v215
      %v314 = vmul.f32 %v312, %v220
      %v315 = vadd.f32 %v313, %v227
      %v316 = vadd.f32 %v314, %v232
      %v317 = vmax.f32 %v315, 0.0
      %v318 = vmax.f32 %v316, 0.0
      %v319 = vmul.f32 %v317, %v242
      %v320 = vmul.f32 %v318, %v242
      %v321 = vpack.c.bf16 %v320, %v319
      %v323 = vunpack.c.l.b16 %v321
      %v324 = vunpack.c.h.b16 %v321
      %v325 = vpack.c.b16 %v323, %v323
      %v326 = vpack.c.b16 %v324, %v324
      %329 = vst [vmem:[%s197 + $0x40] sm:$0xf] %v325
      %330 = vst [vmem:[%s197 + $0x48] sm:$0xf] %v326
      %331 = vst [vmem:[%s197 + $0x44] sm:$0xf] 0
      %332 = vst [vmem:[%s197 + $0x4c] sm:$0xf] 0
      %s333 = scalar_lea.vmem %s192, 32
      %v334 = vld [vmem:[%s333] sm:$0xf]
      %v335 = vld [vmem:[%s333 + $0x4] sm:$0xf]
      %v336 = vunpack.c.l.bf16 %v334
      %v337 = vunpack.c.l.bf16 %v335
      %v338 = vmul.f32 %v336, %v215
      %v339 = vmul.f32 %v337, %v220
      %v340 = vadd.f32 %v338, %v227
      %v341 = vadd.f32 %v339, %v232
      %v342 = vmax.f32 %v340, 0.0
      %v343 = vmax.f32 %v341, 0.0
      %v344 = vmul.f32 %v342, %v242
      %v345 = vmul.f32 %v343, %v242
      %v346 = vpack.c.bf16 %v345, %v344
      %v348 = vunpack.c.l.b16 %v346
      %v349 = vunpack.c.h.b16 %v346
      %v350 = vpack.c.b16 %v348, %v348
      %v351 = vpack.c.b16 %v349, %v349
      %354 = vst [vmem:[%s197 + $0x50] sm:$0xf] %v350
      %355 = vst [vmem:[%s197 + $0x58] sm:$0xf] %v351
      %356 = vst [vmem:[%s197 + $0x54] sm:$0xf] 0
      %357 = vst [vmem:[%s197 + $0x5c] sm:$0xf] 0
      %s358 = scalar_lea.vmem %s192, 40
      %v359 = vld [vmem:[%s358] sm:$0xf]
      %v360 = vld [vmem:[%s358 + $0x4] sm:$0xf]
      %v361 = vunpack.c.l.bf16 %v359
      %v362 = vunpack.c.l.bf16 %v360
      %v363 = vmul.f32 %v361, %v215
      %v364 = vmul.f32 %v362, %v220
      %v365 = vadd.f32 %v363, %v227
      %v366 = vadd.f32 %v364, %v232
      %v367 = vmax.f32 %v365, 0.0
      %v368 = vmax.f32 %v366, 0.0
      %v369 = vmul.f32 %v367, %v242
      %v370 = vmul.f32 %v368, %v242
      %v371 = vpack.c.bf16 %v370, %v369
      %v373 = vunpack.c.l.b16 %v371
      %v374 = vunpack.c.h.b16 %v371
      %v375 = vpack.c.b16 %v373, %v373
      %v376 = vpack.c.b16 %v374, %v374
      %379 = vst [vmem:[%s197 + $0x60] sm:$0xf] %v375
      %380 = vst [vmem:[%s197 + $0x68] sm:$0xf] %v376
      %381 = vst [vmem:[%s197 + $0x64] sm:$0xf] 0
      %382 = vst [vmem:[%s197 + $0x6c] sm:$0xf] 0
      %s383 = scalar_lea.vmem %s192, 48
      %v384 = vld [vmem:[%s383] sm:$0xf]
      %v385 = vld [vmem:[%s383 + $0x4] sm:$0xf]
      %v386 = vunpack.c.l.bf16 %v384
      %v387 = vunpack.c.l.bf16 %v385
      %v388 = vmul.f32 %v386, %v215
      %v389 = vmul.f32 %v387, %v220
      %v390 = vadd.f32 %v388, %v227
      %v391 = vadd.f32 %v389, %v232
      %v392 = vmax.f32 %v390, 0.0
      %v393 = vmax.f32 %v391, 0.0
      %v394 = vmul.f32 %v392, %v242
      %v395 = vmul.f32 %v393, %v242
      %v396 = vpack.c.bf16 %v395, %v394
      %v398 = vunpack.c.l.b16 %v396
      %v399 = vunpack.c.h.b16 %v396
      %v400 = vpack.c.b16 %v398, %v398
      %v401 = vpack.c.b16 %v399, %v399
      %404 = vst [vmem:[%s197 + $0x70] sm:$0xf] %v400
      %405 = vst [vmem:[%s197 + $0x78] sm:$0xf] %v401
      %406 = vst [vmem:[%s197 + $0x74] sm:$0xf] 0
      %407 = vst [vmem:[%s197 + $0x7c] sm:$0xf] 0
      %s408 = scalar_lea.vmem %s192, 56
      %v409 = vld [vmem:[%s408] sm:$0xf]
      %v410 = vld [vmem:[%s408 + $0x4] sm:$0xf]
      %v411 = vunpack.c.l.bf16 %v409
      %v412 = vunpack.c.l.bf16 %v410
      %v413 = vmul.f32 %v411, %v215
      %v414 = vmul.f32 %v412, %v220
      %v415 = vadd.f32 %v413, %v227
      %v416 = vadd.f32 %v414, %v232
      %v417 = vmax.f32 %v415, 0.0
      %v418 = vmax.f32 %v416, 0.0
      %v419 = vmul.f32 %v417, %v242
      %v420 = vmul.f32 %v418, %v242
      %v421 = vpack.c.bf16 %v420, %v419
      %v423 = vunpack.c.l.b16 %v421
      %v424 = vunpack.c.h.b16 %v421
      %v425 = vpack.c.b16 %v423, %v423
      %v426 = vpack.c.b16 %v424, %v424
      %429 = vst [vmem:[%s197 + $0x80] sm:$0xf] %v425
      %430 = vst [vmem:[%s197 + $0x88] sm:$0xf] %v426
      %431 = vst [vmem:[%s197 + $0x84] sm:$0xf] 0
      %432 = vst [vmem:[%s197 + $0x8c] sm:$0xf] 0
      %p433 = scmp.lt.s32.totalorder %s15, 1
      %s434 = scalar_select %p433, %s15, 1
      %s435 = smul.addr %s434, 40
      %s436 = smul.addr %s435, 4
      %s437 = scalar_lea.vmem %s4, %s436
      // Predicated region
      $region37: #{up3d_forward.5} parent=35 // pred_check
        %p438 = pneg %p122
      $region38: #{up3d_forward.5} parent=35 // pred_check_branch
        %440 = sbr.rel (%p438) target = $region40
      $region39: #{up3d_forward.5} parent=35 // pred_region
        _
      $region40: #{up3d_forward.5} parent=35 // pred_fallthru
        _
    $region36: #{up3d_forward.5} parent=5 // pred_fallthru
      _
    %p441 = scmp.le.s32.totalorder 2, %s10
    // Predicated region
    $region41: #{up3d_forward.5} parent=5 // pred_check
      %p442 = pneg %p441
    $region42: #{up3d_forward.5} parent=5 // pred_check_branch
      %444 = sbr.rel (%p442) target = $region44
    $region43: #{up3d_forward.5} parent=5 // pred_region
      %s445 = ssub.s32 %s10, 2
      // Predicated region
      $region45: #{up3d_forward.5} parent=43 // pred_check
        %p446 = pneg %p128
      $region46: #{up3d_forward.5} parent=43 // pred_check_branch
        %448 = sbr.rel (%p446) target = $region48
      $region47: #{up3d_forward.5} parent=43 // pred_region
        %p449 = scmp.lt.s32.totalorder %s16, 1
        %s450 = scalar_select %p449, %s16, 1
        %s451 = smul.addr %s450, 40
        %s452 = smul.addr %s451, 4
        %s453 = scalar_lea.vmem %s4, %s452
      $region48: #{up3d_forward.5} parent=43 // pred_fallthru
        _
    $region44: #{up3d_forward.5} parent=5 // pred_fallthru
      _
  $region6: #{up3d_forward.5} parent=0 // loop_footer
    %s14 = sadd.s32 1, %s10
  $region7: #{up3d_forward.5} parent=0 // loop_footer_branch
    %9 = sbr.rel target = $region3
  $region8: #{up3d_forward.5} parent=0 // loop_exit
    _

// kernel: up3d_forward.7
$region0: #{up3d_forward.7}
  #allocation0 [shape = 'u32[]', space=smem, size = 0x4, offset = 0x4, fixed_abs, tag = 'smem constant byte address 0x4 - core index']
  #allocation1 [shape = 'u32[144,128]{1,0:T(1,128)}', space=vmem, size = 0x12000, scoped, tag = 'internal scratch']
  %s0 = inlined_call_operand.vmem [shape: bf16[2,8,16,128], index: 0, kind: input, shape index: {}]
  %s1 = inlined_call_operand.vmem [shape: f32[16,1], index: 1, kind: input, shape index: {}]
  %s2 = inlined_call_operand.vmem [shape: f32[16,1], index: 2, kind: input, shape index: {}]
  %s3 = inlined_call_operand.vmem [shape: bf16[2,8,16,128], index: 3, kind: output, shape index: {}]
  %s4 = sld [smem:[#allocation0]]
  $region45: #{up3d_forward.7} parent=0
    _
  %s6 = ssub.s32 1, %s4
  %s7 = scalar_select 0, %s6, %s4
  loop: start=0, step=1, limit=4
  $region2: #{up3d_forward.7} parent=0 // loop_pre_header
    _
  $region3: #{up3d_forward.7} parent=0 // loop_header
    %s9 = sphi 0, %s13
    %p10 = scmp.ge.s32.totalorder %s9, 4
    %s16 = sphi 0, %s28
    %s17 = sphi 0, %s24
    %s18 = sphi 0, %s16
    %s19 = sphi 0, %s17
    %s20 = sphi 0, %s18
    %s21 = sphi 0, %s19
    %s33 = sphi 0, %s35
    %s36 = sphi 0, %s33
    %s37 = sphi 0, %s36
    %s53 = sphi 0, %s37
    %s57 = sphi 0, %s57
    %s59 = sphi 0, %s57
    %s60 = sphi 0, %s59
    %s74 = sphi 0, %s60
    %s78 = sphi 0, %s78
    %s80 = sphi 0, %s78
    %s81 = sphi 0, %s80
    %s95 = sphi 0, %s81
    %s103 = sphi 0, %s105
    %s106 = sphi 0, %s103
    %s107 = sphi 0, %s106
    %s123 = sphi 0, %s107
  $region4: #{up3d_forward.7} parent=0 // loop_header_branch
    %12 = sbr.rel (%p10) target = $region8
  $region5: #{up3d_forward.7} parent=0 // loop_body
    %s14 = ssub.s32 %s9, 1
    %s15 = ssub.s32 %s9, 2
    %s22 = sadd.s32 1, %s17
    %p23 = scmp.ge.s32.totalorder %s22, 1
    %s24 = scalar_select %p23, 0, %s22
    %s25 = sadd.s32 1, %s16
    %s26 = scalar_select %p23, %s25, %s16
    %p27 = scmp.ge.s32.totalorder %s26, 2
    %s28 = scalar_select %p27, 0, %s26
    %s29 = ssub.s32 %s16, %s28
    %s30 = ssub.s32 %s17, %s24
    %s31 = sor.u32 %s29, %s30
    %p32 = scmp.eq.s32.totalorder %s31, 0
    %s34 = sadd.s32 %s33, 1
    %s35 = scalar_select %p32, %s33, %s34
    %p38 = pneg %p32
    %p39 = scmp.eq.s32.totalorder %s9, 1
    %p40 = por %p38, %p39
    %p41 = scmp.ne.s32.totalorder %s33, %s36
    %p42 = scmp.eq.s32.totalorder %s9, 0
    %p43 = por %p41, %p42
    %p44 = scmp.ne.s32.totalorder %s33, %s36
    %p45 = scmp.eq.s32.totalorder %s14, 1
    %p46 = por %p44, %p45
    %p47 = scmp.ne.s32.totalorder %s36, %s37
    %p48 = scmp.eq.s32.totalorder %s14, 0
    %p49 = por %p47, %p48
    %p50 = scmp.ne.s32.totalorder %s36, %s37
    %p51 = scmp.eq.s32.totalorder %s15, 1
    %p52 = por %p50, %p51
    %p54 = scmp.ne.s32.totalorder %s37, %s53
    %p55 = scmp.eq.s32.totalorder %s15, 0
    %p56 = por %p54, %p55
    %s58 = sadd.s32 %s57, 1
    %p61 = scmp.eq.s32.totalorder %s9, 1
    %p62 = scmp.ne.s32.totalorder %s57, %s59
    %p63 = scmp.eq.s32.totalorder %s9, 0
    %p64 = por %p62, %p63
    %p65 = scmp.ne.s32.totalorder %s57, %s59
    %p66 = scmp.eq.s32.totalorder %s14, 1
    %p67 = por %p65, %p66
    %p68 = scmp.ne.s32.totalorder %s59, %s60
    %p69 = scmp.eq.s32.totalorder %s14, 0
    %p70 = por %p68, %p69
    %p71 = scmp.ne.s32.totalorder %s59, %s60
    %p72 = scmp.eq.s32.totalorder %s15, 1
    %p73 = por %p71, %p72
    %p75 = scmp.ne.s32.totalorder %s60, %s74
    %p76 = scmp.eq.s32.totalorder %s15, 0
    %p77 = por %p75, %p76
    %s79 = sadd.s32 %s78, 1
    %p82 = scmp.eq.s32.totalorder %s9, 1
    %p83 = scmp.ne.s32.totalorder %s78, %s80
    %p84 = scmp.eq.s32.totalorder %s9, 0
    %p85 = por %p83, %p84
    %p86 = scmp.ne.s32.totalorder %s78, %s80
    %p87 = scmp.eq.s32.totalorder %s14, 1
    %p88 = por %p86, %p87
    %p89 = scmp.ne.s32.totalorder %s80, %s81
    %p90 = scmp.eq.s32.totalorder %s14, 0
    %p91 = por %p89, %p90
    %p92 = scmp.ne.s32.totalorder %s80, %s81
    %p93 = scmp.eq.s32.totalorder %s15, 1
    %p94 = por %p92, %p93
    %p96 = scmp.ne.s32.totalorder %s81, %s95
    %p97 = scmp.eq.s32.totalorder %s15, 0
    %p98 = por %p96, %p97
    %s99 = ssub.s32 %s16, %s28
    %s100 = ssub.s32 %s17, %s24
    %s101 = sor.u32 %s99, %s100
    %p102 = scmp.eq.s32.totalorder %s101, 0
    %s104 = sadd.s32 %s103, 1
    %s105 = scalar_select %p102, %s103, %s104
    %p108 = pneg %p102
    %p109 = scmp.eq.s32.totalorder %s9, 1
    %p110 = por %p108, %p109
    %p111 = scmp.ne.s32.totalorder %s103, %s106
    %p112 = scmp.eq.s32.totalorder %s9, 0
    %p113 = por %p111, %p112
    %p114 = scmp.ne.s32.totalorder %s103, %s106
    %p115 = scmp.eq.s32.totalorder %s14, 1
    %p116 = por %p114, %p115
    %p117 = scmp.ne.s32.totalorder %s106, %s107
    %p118 = scmp.eq.s32.totalorder %s14, 0
    %p119 = por %p117, %p118
    %p120 = scmp.ne.s32.totalorder %s106, %s107
    %p121 = scmp.eq.s32.totalorder %s15, 1
    %p122 = por %p120, %p121
    %p124 = scmp.ne.s32.totalorder %s107, %s123
    %p125 = scmp.eq.s32.totalorder %s15, 0
    %p126 = por %p124, %p125
    %p127 = scmp.le.s32.totalorder 1, %s9
    %p128 = scmp.lt.s32.totalorder %s9, 3
    %p129 = pnand %p127, %p128
    %p130 = pneg %p129
    // Predicated region
    $region9: #{up3d_forward.7} parent=5 // pred_check
      _
    $region10: #{up3d_forward.7} parent=5 // pred_check_branch
      %132 = sbr.rel (%p129) target = $region12
    $region11: #{up3d_forward.7} parent=5 // pred_region
      %s133 = ssub.s32 %s9, 1
      // Predicated region
      $region13: #{up3d_forward.7} parent=11 // pred_check
        %p134 = pneg %p70
      $region14: #{up3d_forward.7} parent=11 // pred_check_branch
        %136 = sbr.rel (%p134) target = $region16
      $region15: #{up3d_forward.7} parent=11 // pred_region
        _
      $region16: #{up3d_forward.7} parent=11 // pred_fallthru
        _
      // Predicated region
      $region17: #{up3d_forward.7} parent=11 // pred_check
        %p137 = pneg %p91
      $region18: #{up3d_forward.7} parent=11 // pred_check_branch
        %139 = sbr.rel (%p137) target = $region20
      $region19: #{up3d_forward.7} parent=11 // pred_region
        _
      $region20: #{up3d_forward.7} parent=11 // pred_fallthru
        _
    $region12: #{up3d_forward.7} parent=5 // pred_fallthru
      _
    %p140 = scmp.lt.s32.totalorder %s9, 2
    // Predicated region
    $region21: #{up3d_forward.7} parent=5 // pred_check
      %p141 = pneg %p140
    $region22: #{up3d_forward.7} parent=5 // pred_check_branch
      %143 = sbr.rel (%p141) target = $region24
    $region23: #{up3d_forward.7} parent=5 // pred_region
      // Predicated region
      $region25: #{up3d_forward.7} parent=23 // pred_check
        %p144 = pneg %p43
      $region26: #{up3d_forward.7} parent=23 // pred_check_branch
        %146 = sbr.rel (%p144) target = $region28
      $region27: #{up3d_forward.7} parent=23 // pred_region
        %s147 = smul.u32 8, %s17
        %p148 = scmp.lt.s32.totalorder %s16, 1
        %s149 = scalar_select %p148, %s16, 1
        %p150 = scmp.lt.s32.totalorder %s147, 7
        %s151 = scalar_select %p150, %s147, 7
        %s152 = smul.addr %s151, 2
        %s153 = smul.addr %s149, 16
        %s154 = sadd.s32 %s152, %s153
        %s155 = smul.addr %s154, 4
        %s156 = scalar_lea.vmem %s0, %s155
        %s157 = smul.u32 8, %s17
      $region28: #{up3d_forward.7} parent=23 // pred_fallthru
        _
    $region24: #{up3d_forward.7} parent=5 // pred_fallthru
      _
    %p158 = scmp.le.s32.totalorder 1, %s9
    %p159 = scmp.lt.s32.totalorder %s9, 3
    %p160 = pnand %p158, %p159
    %p161 = pneg %p160
    // Predicated region
    $region29: #{up3d_forward.7} parent=5 // pred_check
      _
    $region30: #{up3d_forward.7} parent=5 // pred_check_branch
      %163 = sbr.rel (%p160) target = $region32
    $region31: #{up3d_forward.7} parent=5 // pred_region
      %s164 = ssub.s32 %s9, 1
      %s165 = smul.u32 8, %s19
      %p166 = scmp.lt.s32.totalorder %s18, 1
      %s167 = scalar_select %p166, %s18, 1
      %p168 = scmp.lt.s32.totalorder %s165, 7
      %s169 = scalar_select %p168, %s165, 7
      %s170 = smul.addr %s169, 2
      %s171 = smul.addr %s167, 16
      %s172 = sadd.s32 %s170, %s171
      %s173 = smul.addr %s172, 4
      %s174 = scalar_lea.vmem %s0, %s173
      %p175 = pneg %p49
      %p176 = pneg %p46
      %p177 = pneg %p70
      %p178 = pneg %p67
      %p179 = pneg %p91
      %p180 = pneg %p88
      %p181 = pneg %p119
      %p182 = pneg %p116
      %s183 = smul.u32 8, %s19
      %p184 = scmp.lt.s32.totalorder %s18, 1
      %s185 = scalar_select %p184, %s18, 1
      %p186 = scmp.lt.s32.totalorder %s183, 7
      %s187 = scalar_select %p186, %s183, 7
      %s188 = smul.addr %s187, 2
      %s189 = smul.addr %s185, 16
      %s190 = sadd.s32 %s188, %s189
      %s191 = smul.addr %s190, 4
      %s192 = scalar_lea.vmem %s3, %s191
      %s193 = smul.u32 8, %s19
      %p194 = scmp.lt.s32.totalorder %s18, 1
      %s195 = scalar_select %p194, %s18, 1
      %p196 = scmp.lt.s32.totalorder %s193, 7
      %s197 = scalar_select %p196, %s193, 7
      %s198 = smul.addr %s197, 2
      %s199 = smul.addr %s195, 16
      %s200 = sadd.s32 %s198, %s199
      %s201 = smul.addr %s200, 4
      %s202 = scalar_lea.vmem %s0, %s201
      %s203 = smul.u32 8, %s19
      %s204 = smul.u32 8, %s19
      %p205 = scmp.lt.s32.totalorder %s18, 1
      %s206 = scalar_select %p205, %s18, 1
      %p207 = scmp.lt.s32.totalorder %s204, 7
      %s208 = scalar_select %p207, %s204, 7
      %s209 = smul.addr %s208, 2
      %s210 = smul.addr %s206, 16
      %s211 = sadd.s32 %s209, %s210
      %s212 = smul.addr %s211, 4
      %s213 = scalar_lea.vmem %s3, %s212
      %s214 = smul.u32 8, %s19
      %v215 = vld [vmem:[%s202] sm:$0xf]
      %v216 = vld [vmem:[%s202 + $0x4] sm:$0xf]
      %v217 = vld [vmem:[%s202 + $0x8] sm:$0xf]
      %v218 = vld [vmem:[%s202 + $0xc] sm:$0xf]
      %v219 = vld [vmem:[%s202 + $0x10] sm:$0xf]
      %v220 = vld [vmem:[%s202 + $0x14] sm:$0xf]
      %v221 = vld [vmem:[%s202 + $0x18] sm:$0xf]
      %v222 = vld [vmem:[%s202 + $0x1c] sm:$0xf]
      %v223 = vld [vmem:[%s202 + $0x20] sm:$0xf]
      %v224 = vld [vmem:[%s202 + $0x24] sm:$0xf]
      %v225 = vld [vmem:[%s202 + $0x28] sm:$0xf]
      %v226 = vld [vmem:[%s202 + $0x2c] sm:$0xf]
      %v227 = vld [vmem:[%s202 + $0x30] sm:$0xf]
      %v228 = vld [vmem:[%s202 + $0x34] sm:$0xf]
      %v229 = vld [vmem:[%s202 + $0x38] sm:$0xf]
      %v230 = vld [vmem:[%s202 + $0x3c] sm:$0xf]
      %v231 = vunpack.c.l.bf16 %v215
      %v232 = vunpack.c.l.bf16 %v216
      %v233 = vunpack.c.l.bf16 %v217
      %v234 = vunpack.c.l.bf16 %v218
      %v235 = vunpack.c.l.bf16 %v219
      %v236 = vunpack.c.l.bf16 %v220
      %v237 = vunpack.c.l.bf16 %v221
      %v238 = vunpack.c.l.bf16 %v222
      %v239 = vunpack.c.l.bf16 %v223
      %v240 = vunpack.c.l.bf16 %v224
      %v241 = vunpack.c.l.bf16 %v225
      %v242 = vunpack.c.l.bf16 %v226
      %v243 = vunpack.c.l.bf16 %v227
      %v244 = vunpack.c.l.bf16 %v228
      %v245 = vunpack.c.l.bf16 %v229
      %v246 = vunpack.c.l.bf16 %v230
      %v247 = vld [vmem:[%s1] sm:$0xff]
      %v248 = vld [vmem:[%s1 + $0x8] sm:$0xff]
      %250 = vset.pattern.permute.xlu0 0
      %251 = vperm.xlu0 %250, %v247
      %v252 = vpop.permute.xlu0 %251
      %255 = vset.pattern.permute.xlu0 0
      %256 = vperm.xlu0 %255, %v248
      %v257 = vpop.permute.xlu0 %256
      %v259 = vmul.f32 %v231, %v252
      %v260 = vmul.f32 %v232, %v257
      %v261 = vmul.f32 %v233, %v252
      %v262 = vmul.f32 %v234, %v257
      %v263 = vmul.f32 %v235, %v252
      %v264 = vmul.f32 %v236, %v257
      %v265 = vmul.f32 %v237, %v252
      %v266 = vmul.f32 %v238, %v257
      %v267 = vmul.f32 %v239, %v252
      %v268 = vmul.f32 %v240, %v257
      %v269 = vmul.f32 %v241, %v252
      %v270 = vmul.f32 %v242, %v257
      %v271 = vmul.f32 %v243, %v252
      %v272 = vmul.f32 %v244, %v257
      %v273 = vmul.f32 %v245, %v252
      %v274 = vmul.f32 %v246, %v257
      %v275 = vld [vmem:[%s2] sm:$0xff]
      %v276 = vld [vmem:[%s2 + $0x8] sm:$0xff]
      %278 = vset.pattern.permute.xlu0 0
      %279 = vperm.xlu0 %278, %v275
      %v280 = vpop.permute.xlu0 %279
      %283 = vset.pattern.permute.xlu0 0
      %284 = vperm.xlu0 %283, %v276
      %v285 = vpop.permute.xlu0 %284
      %v287 = vadd.f32 %v259, %v280
      %v288 = vadd.f32 %v260, %v285
      %v289 = vadd.f32 %v261, %v280
      %v290 = vadd.f32 %v262, %v285
      %v291 = vadd.f32 %v263, %v280
      %v292 = vadd.f32 %v264, %v285
      %v293 = vadd.f32 %v265, %v280
      %v294 = vadd.f32 %v266, %v285
      %v295 = vadd.f32 %v267, %v280
      %v296 = vadd.f32 %v268, %v285
      %v297 = vadd.f32 %v269, %v280
      %v298 = vadd.f32 %v270, %v285
      %v299 = vadd.f32 %v271, %v280
      %v300 = vadd.f32 %v272, %v285
      %v301 = vadd.f32 %v273, %v280
      %v302 = vadd.f32 %v274, %v285
      %v303 = vmax.f32 %v287, 0.0
      %v304 = vmax.f32 %v288, 0.0
      %v305 = vmax.f32 %v289, 0.0
      %v306 = vmax.f32 %v290, 0.0
      %v307 = vmax.f32 %v291, 0.0
      %v308 = vmax.f32 %v292, 0.0
      %v309 = vmax.f32 %v293, 0.0
      %v310 = vmax.f32 %v294, 0.0
      %v311 = vmax.f32 %v295, 0.0
      %v312 = vmax.f32 %v296, 0.0
      %v313 = vmax.f32 %v297, 0.0
      %v314 = vmax.f32 %v298, 0.0
      %v315 = vmax.f32 %v299, 0.0
      %v316 = vmax.f32 %v300, 0.0
      %v317 = vmax.f32 %v301, 0.0
      %v318 = vmax.f32 %v302, 0.0
      %v319 = vpack.c.bf16 %v304, %v303
      %v320 = vpack.c.bf16 %v306, %v305
      %v321 = vpack.c.bf16 %v308, %v307
      %v322 = vpack.c.bf16 %v310, %v309
      %v323 = vpack.c.bf16 %v312, %v311
      %v324 = vpack.c.bf16 %v314, %v313
      %v325 = vpack.c.bf16 %v316, %v315
      %v326 = vpack.c.bf16 %v318, %v317
      %v335 = vunpack.c.l.b16 %v319
      %v336 = vunpack.c.h.b16 %v319
      %v337 = vunpack.c.l.b16 %v320
      %v338 = vunpack.c.h.b16 %v320
      %v339 = vunpack.c.l.b16 %v321
      %v340 = vunpack.c.h.b16 %v321
      %v341 = vunpack.c.l.b16 %v322
      %v342 = vunpack.c.h.b16 %v322
      %v343 = vunpack.c.l.b16 %v323
      %v344 = vunpack.c.h.b16 %v323
      %v345 = vunpack.c.l.b16 %v324
      %v346 = vunpack.c.h.b16 %v324
      %v347 = vunpack.c.l.b16 %v325
      %v348 = vunpack.c.h.b16 %v325
      %v349 = vunpack.c.l.b16 %v326
      %v350 = vunpack.c.h.b16 %v326
      %v351 = vpack.c.b16 %v335, %v335
      %v352 = vpack.c.b16 %v336, %v336
      %v353 = vpack.c.b16 %v337, %v337
      %v354 = vpack.c.b16 %v338, %v338
      %v355 = vpack.c.b16 %v339, %v339
      %v356 = vpack.c.b16 %v340, %v340
      %v357 = vpack.c.b16 %v341, %v341
      %v358 = vpack.c.b16 %v342, %v342
      %v359 = vpack.c.b16 %v343, %v343
      %v360 = vpack.c.b16 %v344, %v344
      %v361 = vpack.c.b16 %v345, %v345
      %v362 = vpack.c.b16 %v346, %v346
      %v363 = vpack.c.b16 %v347, %v347
      %v364 = vpack.c.b16 %v348, %v348
      %v365 = vpack.c.b16 %v349, %v349
      %v366 = vpack.c.b16 %v350, %v350
      %383 = vst [vmem:[%s213] sm:$0xf] %v351
      %384 = vst [vmem:[%s213 + $0x4] sm:$0xf] %v352
      %385 = vst [vmem:[%s213 + $0x8] sm:$0xf] %v353
      %386 = vst [vmem:[%s213 + $0xc] sm:$0xf] %v354
      %387 = vst [vmem:[%s213 + $0x10] sm:$0xf] %v355
      %388 = vst [vmem:[%s213 + $0x14] sm:$0xf] %v356
      %389 = vst [vmem:[%s213 + $0x18] sm:$0xf] %v357
      %390 = vst [vmem:[%s213 + $0x1c] sm:$0xf] %v358
      %391 = vst [vmem:[%s213 + $0x20] sm:$0xf] %v359
      %392 = vst [vmem:[%s213 + $0x24] sm:$0xf] %v360
      %393 = vst [vmem:[%s213 + $0x28] sm:$0xf] %v361
      %394 = vst [vmem:[%s213 + $0x2c] sm:$0xf] %v362
      %395 = vst [vmem:[%s213 + $0x30] sm:$0xf] %v363
      %396 = vst [vmem:[%s213 + $0x34] sm:$0xf] %v364
      %397 = vst [vmem:[%s213 + $0x38] sm:$0xf] %v365
      %398 = vst [vmem:[%s213 + $0x3c] sm:$0xf] %v366
      %s399 = smul.u32 8, %s19
      %p400 = scmp.lt.s32.totalorder %s18, 1
      %s401 = scalar_select %p400, %s18, 1
      %p402 = scmp.lt.s32.totalorder %s399, 7
      %s403 = scalar_select %p402, %s399, 7
      %s404 = smul.addr %s403, 2
      %s405 = smul.addr %s401, 16
      %s406 = sadd.s32 %s404, %s405
      %s407 = smul.addr %s406, 4
      %s408 = scalar_lea.vmem %s3, %s407
      // Predicated region
      $region33: #{up3d_forward.7} parent=31 // pred_check
        %p409 = pneg %p116
      $region34: #{up3d_forward.7} parent=31 // pred_check_branch
        %411 = sbr.rel (%p409) target = $region36
      $region35: #{up3d_forward.7} parent=31 // pred_region
        %s412 = smul.u32 8, %s19
      $region36: #{up3d_forward.7} parent=31 // pred_fallthru
        _
    $region32: #{up3d_forward.7} parent=5 // pred_fallthru
      _
    %p413 = scmp.le.s32.totalorder 2, %s9
    // Predicated region
    $region37: #{up3d_forward.7} parent=5 // pred_check
      %p414 = pneg %p413
    $region38: #{up3d_forward.7} parent=5 // pred_check_branch
      %416 = sbr.rel (%p414) target = $region40
    $region39: #{up3d_forward.7} parent=5 // pred_region
      %s417 = ssub.s32 %s9, 2
      // Predicated region
      $region41: #{up3d_forward.7} parent=39 // pred_check
        %p418 = pneg %p122
      $region42: #{up3d_forward.7} parent=39 // pred_check_branch
        %420 = sbr.rel (%p418) target = $region44
      $region43: #{up3d_forward.7} parent=39 // pred_region
        %s421 = smul.u32 8, %s21
        %p422 = scmp.lt.s32.totalorder %s20, 1
        %s423 = scalar_select %p422, %s20, 1
        %p424 = scmp.lt.s32.totalorder %s421, 7
        %s425 = scalar_select %p424, %s421, 7
        %s426 = smul.addr %s425, 2
        %s427 = smul.addr %s423, 16
        %s428 = sadd.s32 %s426, %s427
        %s429 = smul.addr %s428, 4
        %s430 = scalar_lea.vmem %s3, %s429
      $region44: #{up3d_forward.7} parent=39 // pred_fallthru
        _
    $region40: #{up3d_forward.7} parent=5 // pred_fallthru
      _
  $region6: #{up3d_forward.7} parent=0 // loop_footer
    %s13 = sadd.s32 1, %s9
  $region7: #{up3d_forward.7} parent=0 // loop_footer_branch
    %8 = sbr.rel target = $region3
  $region8: #{up3d_forward.7} parent=0 // loop_exit
    _

// kernel: up3d_forward.4
$region0: #{up3d_forward.4}
  #allocation0 [shape = 'u32[]', space=smem, size = 0x4, offset = 0x4, fixed_abs, tag = 'smem constant byte address 0x4 - core index']
  #allocation1 [shape = 'u32[144,128]{1,0:T(1,128)}', space=vmem, size = 0x12000, scoped, tag = 'internal scratch']
  %s0 = inlined_call_operand.vmem [shape: bf16[2,160,256], index: 0, kind: input, shape index: {}]
  %s1 = inlined_call_operand.vmem [shape: bf16[9,16,48], index: 1, kind: input, shape index: {}]
  %s2 = inlined_call_operand.vmem [shape: f32[1,128], index: 2, kind: input, shape index: {}]
  %s3 = inlined_call_operand.vmem [shape: bf16[2,8,16,128], index: 3, kind: output, shape index: {0}]
  %s4 = inlined_call_operand.vmem [shape: f32[2,2,16,128], index: 4, kind: output, shape index: {1}]
  %5 = xla_tuple %s3, %s4
  %s6 = sld [smem:[#allocation0]]
  $region57: #{up3d_forward.4} parent=0
    _
  %s8 = ssub.s32 1, %s6
  %s9 = scalar_select 0, %s8, %s6
  loop: start=0, step=1, limit=4
  $region2: #{up3d_forward.4} parent=0 // loop_pre_header
    _
  $region3: #{up3d_forward.4} parent=0 // loop_header
    %s11 = sphi 0, %s15
    %p12 = scmp.ge.s32.totalorder %s11, 4
    %s18 = sphi 0, %s30
    %s19 = sphi 0, %s26
    %s20 = sphi 0, %s18
    %s21 = sphi 0, %s19
    %s22 = sphi 0, %s20
    %s23 = sphi 0, %s21
    %s33 = sphi 0, %s35
    %s36 = sphi 0, %s33
    %s37 = sphi 0, %s36
    %s53 = sphi 0, %s37
    %s57 = sphi 0, %s57
    %s59 = sphi 0, %s57
    %s60 = sphi 0, %s59
    %s74 = sphi 0, %s60
    %s78 = sphi 0, %s78
    %s80 = sphi 0, %s78
    %s81 = sphi 0, %s80
    %s95 = sphi 0, %s81
    %s103 = sphi 0, %s105
    %s106 = sphi 0, %s103
    %s107 = sphi 0, %s106
    %s123 = sphi 0, %s107
    %s129 = sphi 0, %s131
    %s132 = sphi 0, %s129
    %s133 = sphi 0, %s132
    %s149 = sphi 0, %s133
  $region4: #{up3d_forward.4} parent=0 // loop_header_branch
    %14 = sbr.rel (%p12) target = $region8
  $region5: #{up3d_forward.4} parent=0 // loop_body
    %s16 = ssub.s32 %s11, 1
    %s17 = ssub.s32 %s11, 2
    %s24 = sadd.s32 1, %s19
    %p25 = scmp.ge.s32.totalorder %s24, 1
    %s26 = scalar_select %p25, 0, %s24
    %s27 = sadd.s32 1, %s18
    %s28 = scalar_select %p25, %s27, %s18
    %p29 = scmp.ge.s32.totalorder %s28, 2
    %s30 = scalar_select %p29, 0, %s28
    %s31 = ssub.s32 %s18, %s30
    %p32 = scmp.eq.s32.totalorder %s31, 0
    %s34 = sadd.s32 %s33, 1
    %s35 = scalar_select %p32, %s33, %s34
    %p38 = pneg %p32
    %p39 = scmp.eq.s32.totalorder %s11, 1
    %p40 = por %p38, %p39
    %p41 = scmp.ne.s32.totalorder %s33, %s36
    %p42 = scmp.eq.s32.totalorder %s11, 0
    %p43 = por %p41, %p42
    %p44 = scmp.ne.s32.totalorder %s33, %s36
    %p45 = scmp.eq.s32.totalorder %s16, 1
    %p46 = por %p44, %p45
    %p47 = scmp.ne.s32.totalorder %s36, %s37
    %p48 = scmp.eq.s32.totalorder %s16, 0
    %p49 = por %p47, %p48
    %p50 = scmp.ne.s32.totalorder %s36, %s37
    %p51 = scmp.eq.s32.totalorder %s17, 1
    %p52 = por %p50, %p51
    %p54 = scmp.ne.s32.totalorder %s37, %s53
    %p55 = scmp.eq.s32.totalorder %s17, 0
    %p56 = por %p54, %p55
    %s58 = sadd.s32 %s57, 1
    %p61 = scmp.eq.s32.totalorder %s11, 1
    %p62 = scmp.ne.s32.totalorder %s57, %s59
    %p63 = scmp.eq.s32.totalorder %s11, 0
    %p64 = por %p62, %p63
    %p65 = scmp.ne.s32.totalorder %s57, %s59
    %p66 = scmp.eq.s32.totalorder %s16, 1
    %p67 = por %p65, %p66
    %p68 = scmp.ne.s32.totalorder %s59, %s60
    %p69 = scmp.eq.s32.totalorder %s16, 0
    %p70 = por %p68, %p69
    %p71 = scmp.ne.s32.totalorder %s59, %s60
    %p72 = scmp.eq.s32.totalorder %s17, 1
    %p73 = por %p71, %p72
    %p75 = scmp.ne.s32.totalorder %s60, %s74
    %p76 = scmp.eq.s32.totalorder %s17, 0
    %p77 = por %p75, %p76
    %s79 = sadd.s32 %s78, 1
    %p82 = scmp.eq.s32.totalorder %s11, 1
    %p83 = scmp.ne.s32.totalorder %s78, %s80
    %p84 = scmp.eq.s32.totalorder %s11, 0
    %p85 = por %p83, %p84
    %p86 = scmp.ne.s32.totalorder %s78, %s80
    %p87 = scmp.eq.s32.totalorder %s16, 1
    %p88 = por %p86, %p87
    %p89 = scmp.ne.s32.totalorder %s80, %s81
    %p90 = scmp.eq.s32.totalorder %s16, 0
    %p91 = por %p89, %p90
    %p92 = scmp.ne.s32.totalorder %s80, %s81
    %p93 = scmp.eq.s32.totalorder %s17, 1
    %p94 = por %p92, %p93
    %p96 = scmp.ne.s32.totalorder %s81, %s95
    %p97 = scmp.eq.s32.totalorder %s17, 0
    %p98 = por %p96, %p97
    %s99 = ssub.s32 %s18, %s30
    %s100 = ssub.s32 %s19, %s26
    %s101 = sor.u32 %s99, %s100
    %p102 = scmp.eq.s32.totalorder %s101, 0
    %s104 = sadd.s32 %s103, 1
    %s105 = scalar_select %p102, %s103, %s104
    %p108 = pneg %p102
    %p109 = scmp.eq.s32.totalorder %s11, 1
    %p110 = por %p108, %p109
    %p111 = scmp.ne.s32.totalorder %s103, %s106
    %p112 = scmp.eq.s32.totalorder %s11, 0
    %p113 = por %p111, %p112
    %p114 = scmp.ne.s32.totalorder %s103, %s106
    %p115 = scmp.eq.s32.totalorder %s16, 1
    %p116 = por %p114, %p115
    %p117 = scmp.ne.s32.totalorder %s106, %s107
    %p118 = scmp.eq.s32.totalorder %s16, 0
    %p119 = por %p117, %p118
    %p120 = scmp.ne.s32.totalorder %s106, %s107
    %p121 = scmp.eq.s32.totalorder %s17, 1
    %p122 = por %p120, %p121
    %p124 = scmp.ne.s32.totalorder %s107, %s123
    %p125 = scmp.eq.s32.totalorder %s17, 0
    %p126 = por %p124, %p125
    %s127 = ssub.s32 %s18, %s30
    %p128 = scmp.eq.s32.totalorder %s127, 0
    %s130 = sadd.s32 %s129, 1
    %s131 = scalar_select %p128, %s129, %s130
    %p134 = pneg %p128
    %p135 = scmp.eq.s32.totalorder %s11, 1
    %p136 = por %p134, %p135
    %p137 = scmp.ne.s32.totalorder %s129, %s132
    %p138 = scmp.eq.s32.totalorder %s11, 0
    %p139 = por %p137, %p138
    %p140 = scmp.ne.s32.totalorder %s129, %s132
    %p141 = scmp.eq.s32.totalorder %s16, 1
    %p142 = por %p140, %p141
    %p143 = scmp.ne.s32.totalorder %s132, %s133
    %p144 = scmp.eq.s32.totalorder %s16, 0
    %p145 = por %p143, %p144
    %p146 = scmp.ne.s32.totalorder %s132, %s133
    %p147 = scmp.eq.s32.totalorder %s17, 1
    %p148 = por %p146, %p147
    %p150 = scmp.ne.s32.totalorder %s133, %s149
    %p151 = scmp.eq.s32.totalorder %s17, 0
    %p152 = por %p150, %p151
    %p153 = scmp.le.s32.totalorder 1, %s11
    %p154 = scmp.lt.s32.totalorder %s11, 3
    %p155 = pnand %p153, %p154
    %p156 = pneg %p155
    // Predicated region
    $region9: #{up3d_forward.4} parent=5 // pred_check
      _
    $region10: #{up3d_forward.4} parent=5 // pred_check_branch
      %158 = sbr.rel (%p155) target = $region12
    $region11: #{up3d_forward.4} parent=5 // pred_region
      %s159 = ssub.s32 %s11, 1
      // Predicated region
      $region13: #{up3d_forward.4} parent=11 // pred_check
        %p160 = pneg %p70
      $region14: #{up3d_forward.4} parent=11 // pred_check_branch
        %162 = sbr.rel (%p160) target = $region16
      $region15: #{up3d_forward.4} parent=11 // pred_region
        _
      $region16: #{up3d_forward.4} parent=11 // pred_fallthru
        _
      // Predicated region
      $region17: #{up3d_forward.4} parent=11 // pred_check
        %p163 = pneg %p91
      $region18: #{up3d_forward.4} parent=11 // pred_check_branch
        %165 = sbr.rel (%p163) target = $region20
      $region19: #{up3d_forward.4} parent=11 // pred_region
        _
      $region20: #{up3d_forward.4} parent=11 // pred_fallthru
        _
    $region12: #{up3d_forward.4} parent=5 // pred_fallthru
      _
    %p166 = scmp.lt.s32.totalorder %s11, 2
    // Predicated region
    $region21: #{up3d_forward.4} parent=5 // pred_check
      %p167 = pneg %p166
    $region22: #{up3d_forward.4} parent=5 // pred_check_branch
      %169 = sbr.rel (%p167) target = $region24
    $region23: #{up3d_forward.4} parent=5 // pred_region
      // Predicated region
      $region25: #{up3d_forward.4} parent=23 // pred_check
        %p170 = pneg %p43
      $region26: #{up3d_forward.4} parent=23 // pred_check_branch
        %172 = sbr.rel (%p170) target = $region28
      $region27: #{up3d_forward.4} parent=23 // pred_region
        %p173 = scmp.lt.s32.totalorder %s18, 1
        %s174 = scalar_select %p173, %s18, 1
        %s175 = smul.addr %s174, 40
        %s176 = smul.addr %s175, 4
        %s177 = scalar_lea.vmem %s0, %s176
      $region28: #{up3d_forward.4} parent=23 // pred_fallthru
        _
    $region24: #{up3d_forward.4} parent=5 // pred_fallthru
      _
    %p178 = scmp.le.s32.totalorder 1, %s11
    %p179 = scmp.lt.s32.totalorder %s11, 3
    %p180 = pnand %p178, %p179
    %p181 = pneg %p180
    // Predicated region
    $region29: #{up3d_forward.4} parent=5 // pred_check
      _
    $region30: #{up3d_forward.4} parent=5 // pred_check_branch
      %183 = sbr.rel (%p180) target = $region32
    $region31: #{up3d_forward.4} parent=5 // pred_region
      %s184 = ssub.s32 %s11, 1
      %p185 = scmp.lt.s32.totalorder %s20, 1
      %s186 = scalar_select %p185, %s20, 1
      %s187 = smul.addr %s186, 40
      %s188 = smul.addr %s187, 4
      %s189 = scalar_lea.vmem %s0, %s188
      %p190 = pneg %p49
      %p191 = pneg %p46
      %p192 = pneg %p70
      %p193 = pneg %p67
      %p194 = pneg %p91
      %p195 = pneg %p88
      %p196 = pneg %p119
      %p197 = pneg %p116
      %s198 = smul.u32 8, %s21
      %p199 = scmp.lt.s32.totalorder %s20, 1
      %s200 = scalar_select %p199, %s20, 1
      %p201 = scmp.lt.s32.totalorder %s198, 7
      %s202 = scalar_select %p201, %s198, 7
      %s203 = smul.addr %s202, 2
      %s204 = smul.addr %s200, 16
      %s205 = sadd.s32 %s203, %s204
      %s206 = smul.addr %s205, 4
      %s207 = scalar_lea.vmem %s3, %s206
      %p208 = pneg %p145
      %p209 = pneg %p142
      %p210 = scmp.lt.s32.totalorder %s20, 1
      %s211 = scalar_select %p210, %s20, 1
      %s212 = smul.addr %s211, 4
      %s213 = smul.addr %s212, 8
      %s214 = scalar_lea.vmem %s4, %s213
      %p215 = scmp.lt.s32.totalorder %s20, 1
      %s216 = scalar_select %p215, %s20, 1
      %s217 = smul.addr %s216, 40
      %s218 = smul.addr %s217, 4
      %s219 = scalar_lea.vmem %s0, %s218
      %s220 = smul.u32 8, %s21
      %p221 = scmp.lt.s32.totalorder %s20, 1
      %s222 = scalar_select %p221, %s20, 1
      %p223 = scmp.lt.s32.totalorder %s220, 7
      %s224 = scalar_select %p223, %s220, 7
      %s225 = smul.addr %s224, 2
      %s226 = smul.addr %s222, 16
      %s227 = sadd.s32 %s225, %s226
      %s228 = smul.addr %s227, 4
      %s229 = scalar_lea.vmem %s3, %s228
      %s230 = smul.u32 8, %s21
      %p231 = scmp.lt.s32.totalorder %s20, 1
      %s232 = scalar_select %p231, %s20, 1
      %s233 = smul.addr %s232, 4
      %s234 = smul.addr %s233, 8
      %s235 = scalar_lea.vmem %s4, %s234
      %p237 = scmp.eq.s32.totalorder %s21, 0
      // Predicated region
      $region33: #{up3d_forward.4} parent=31 // pred_check
        %p238 = pneg %p237
      $region34: #{up3d_forward.4} parent=31 // pred_check_branch
        %240 = sbr.rel (%p238) target = $region36
      $region35: #{up3d_forward.4} parent=31 // pred_region
        %241 = vst [vmem:[%s235] sm:$0xff] 0.0
        %242 = vst [vmem:[%s235 + $0x8] sm:$0xff] 0.0
        %243 = vst [vmem:[%s235 + $0x10] sm:$0xff] 0.0
        %244 = vst [vmem:[%s235 + $0x18] sm:$0xff] 0.0
      $region36: #{up3d_forward.4} parent=31 // pred_fallthru
        _
      %v245 = vld [vmem:[%s2] sm:$0x1]
      %v246 = vld [vmem:[%s1] sm:$0xf]
      %v247 = vld [vmem:[%s1 + $0x4] sm:$0xf]
      %s248 = scalar_lea.vmem %s1, 8
      %v249 = vld [vmem:[%s248] sm:$0xf]
      %v250 = vld [vmem:[%s248 + $0x4] sm:$0xf]
      %s251 = scalar_lea.vmem %s1, 16
      %v252 = vld [vmem:[%s251] sm:$0xf]
      %v253 = vld [vmem:[%s251 + $0x4] sm:$0xf]
      %s254 = scalar_lea.vmem %s1, 24
      %v255 = vld [vmem:[%s254] sm:$0xf]
      %v256 = vld [vmem:[%s254 + $0x4] sm:$0xf]
      %s257 = scalar_lea.vmem %s1, 32
      %v258 = vld [vmem:[%s257] sm:$0xf]
      %v259 = vld [vmem:[%s257 + $0x4] sm:$0xf]
      %s260 = scalar_lea.vmem %s1, 40
      %v261 = vld [vmem:[%s260] sm:$0xf]
      %v262 = vld [vmem:[%s260 + $0x4] sm:$0xf]
      %s263 = scalar_lea.vmem %s1, 48
      %v264 = vld [vmem:[%s263] sm:$0xf]
      %v265 = vld [vmem:[%s263 + $0x4] sm:$0xf]
      %s266 = scalar_lea.vmem %s1, 56
      %v267 = vld [vmem:[%s266] sm:$0xf]
      %v268 = vld [vmem:[%s266 + $0x4] sm:$0xf]
      %s269 = scalar_lea.vmem %s1, 64
      %v270 = vld [vmem:[%s269] sm:$0xf]
      %v271 = vld [vmem:[%s269 + $0x4] sm:$0xf]
      %s272 = smul.u32 %s21, 128
      %s273 = sshra.s32 %s272, 3
      %s274 = sand.u32 %s272, 7
      %s275 = smul.u32 %s273, 2
      %s276 = smul.addr %s275, 4
      %s277 = scalar_lea.vmem %s219, %s276
      %v278 = vld [vmem:[%s277] sm:$0xf]
      %v279 = vld [vmem:[%s277 + $0x8] sm:$0xf]
      %v280 = vld [vmem:[%s277 + $0x10] sm:$0xf]
      %v281 = vld [vmem:[%s277 + $0x18] sm:$0xf]
      %v282 = vld [vmem:[%s277 + $0x20] sm:$0xf]
      %v283 = vld [vmem:[%s277 + $0x28] sm:$0xf]
      %v284 = vld [vmem:[%s277] sm:$0xff]
      %v285 = vld [vmem:[%s277 + $0x8] sm:$0xff]
      %v286 = vld [vmem:[%s277 + $0x10] sm:$0xff]
      %v287 = vld [vmem:[%s277 + $0x18] sm:$0xff]
      %v288 = vld [vmem:[%s277 + $0x20] sm:$0xff]
      %v289 = vld [vmem:[%s277 + $0x28] sm:$0xff]
      %v292 = vunpack.c.l.b16 %v249
      %v293 = vunpack.c.l.b16 %v250
      %v294 = vpack.c.b16 %v293, %v292
      %v301 = vunpack.c.l.b16 %v284
      %v302 = vunpack.c.h.b16 %v284
      %v303 = vunpack.c.l.b16 %v285
      %v304 = vunpack.c.h.b16 %v285
      %v305 = vunpack.c.l.b16 %v286
      %v306 = vunpack.c.h.b16 %v286
      %v307 = vunpack.c.l.b16 %v287
      %v308 = vunpack.c.h.b16 %v287
      %v309 = vunpack.c.l.b16 %v288
      %v310 = vunpack.c.h.b16 %v288
      %v311 = vunpack.c.l.b16 %v289
      %v312 = vunpack.c.h.b16 %v289
      %v313 = vpack.c.b16 %v303, %v301
      %v314 = vpack.c.b16 %v304, %v302
      %v315 = vpack.c.b16 %v307, %v305
      %v316 = vpack.c.b16 %v308, %v306
      %v317 = vpack.c.b16 %v311, %v309
      %v318 = vpack.c.b16 %v312, %v310
      %319 = vrot.lane.b32.xlu0 %v313, 127
      %v320 = vpop.permute.xlu0 %319
      %321 = vrot.lane.b32.xlu0 %v314, 127
      %v322 = vpop.permute.xlu0 %321
      %323 = vrot.lane.b32.xlu0 %v315, 127
      %v324 = vpop.permute.xlu0 %323
      %325 = vrot.lane.b32.xlu0 %v316, 127
      %v326 = vpop.permute.xlu0 %325
      %327 = vrot.lane.b32.xlu0 %v317, 127
      %v328 = vpop.permute.xlu0 %327
      %329 = vrot.lane.b32.xlu0 %v318, 127
      %v330 = vpop.permute.xlu0 %329
      %vm331 = vcmask 1039360
      %v332 = vsel %vm331, %v320, %v322
      %v333 = vsel %vm331, %v324, %v326
      %v334 = vsel %vm331, %v328, %v330
      %vm338 = vcmask 392192
      %v340 = vsel %vm338, %v294, 0
      %342 = vmatprep.subr.bf16.mxu0 0
      %343 = vmatpush1.bf16.msra.mxu0 %v332
      %344 = vmatprep.subr.bf16.mxu0 0
      %345 = vmatpush1.bf16.msra.mxu0 %v333
      %346 = vmatprep.subr.bf16.mxu0 0
      %347 = vmatpush1.bf16.msra.mxu0 %v334
      %348 = vmatprep.subr.bf16.mxu0 0
      %349 = vmatpush1.bf16.msra.mxu0 0
      %350 = vmatprep.subr.bf16.mxu0 0
      %351 = vmatpush1.bf16.msra.mxu0 0
      %352 = vmatprep.subr.bf16.mxu0 0
      %353 = vmatpush1.bf16.msra.mxu0 0
      %354 = vmatprep.subr.bf16.mxu0 0
      %355 = vmatpush1.bf16.msra.mxu0 0
      %356 = vmatprep.subr.bf16.mxu0 0
      %357 = vmatpush1.bf16.msra.mxu0 0
      %358 = vmatprep.subr.bf16.mxu0 0
      %359 = vmatpush1.bf16.msra.mxu0 0
      %360 = vmatprep.subr.bf16.mxu0 0
      %361 = vmatpush1.bf16.msra.mxu0 0
      %362 = vmatprep.subr.bf16.mxu0 0
      %363 = vmatpush1.bf16.msra.mxu0 0
      %364 = vmatprep.subr.bf16.mxu0 0
      %365 = vmatpush1.bf16.msra.mxu0 0
      %366 = vmatprep.subr.bf16.mxu0 0
      %367 = vmatpush1.bf16.msra.mxu0 0
      %368 = vmatprep.subr.bf16.mxu0 0
      %369 = vmatpush1.bf16.msra.mxu0 0
      %370 = vmatprep.subr.bf16.mxu0 0
      %371 = vmatpush1.bf16.msra.mxu0 0
      %372 = vmatprep.subr.bf16.mxu0 0
      %373 = vmatpush1.bf16.msra.mxu0 0
      %374 = vmatprep.mubr.bf16.mxu0 0
      %375 = vmatmul.mubr.bf16.gmra.mrb[0].mxu0 %v340
      %v376 = vpop.f32.mrb[0].mxu0
      %v377 = vadd.f32 0.0, %v376
      %v378 = vpop.f32.mrb[0].mxu0
      %v379 = vpop.f32.mrb[0].mxu0
      %v380 = vadd.f32 0.0, %v379
      %v381 = vpop.f32.mrb[0].mxu0
      %382 = vdwg.mxu0
      %v385 = vunpack.c.l.b16 %v246
      %v386 = vunpack.c.l.b16 %v247
      %v387 = vpack.c.b16 %v386, %v385
      %v394 = vunpack.c.l.b16 %v278
      %v395 = vunpack.c.l.b16 %v279
      %v396 = vunpack.c.l.b16 %v280
      %v397 = vunpack.c.l.b16 %v281
      %v398 = vunpack.c.l.b16 %v282
      %v399 = vunpack.c.l.b16 %v283
      %v400 = vpack.c.b16 %v395, %v394
      %v401 = vpack.c.b16 %v397, %v396
      %v402 = vpack.c.b16 %v399, %v398
      %v407 = vsel %vm338, %v387, 0
      %409 = vmatprep.subr.bf16.mxu0 0
      %410 = vmatpush1.bf16.msra.mxu0 %v400
      %411 = vmatprep.subr.bf16.mxu0 0
      %412 = vmatpush1.bf16.msra.mxu0 %v401
      %413 = vmatprep.subr.bf16.mxu0 0
      %414 = vmatpush1.bf16.msra.mxu0 %v402
      %415 = vmatprep.subr.bf16.mxu0 0
      %416 = vmatpush1.bf16.msra.mxu0 0
      %417 = vmatprep.subr.bf16.mxu0 0
      %418 = vmatpush1.bf16.msra.mxu0 0
      %419 = vmatprep.subr.bf16.mxu0 0
      %420 = vmatpush1.bf16.msra.mxu0 0
      %421 = vmatprep.subr.bf16.mxu0 0
      %422 = vmatpush1.bf16.msra.mxu0 0
      %423 = vmatprep.subr.bf16.mxu0 0
      %424 = vmatpush1.bf16.msra.mxu0 0
      %425 = vmatprep.subr.bf16.mxu0 0
      %426 = vmatpush1.bf16.msra.mxu0 0
      %427 = vmatprep.subr.bf16.mxu0 0
      %428 = vmatpush1.bf16.msra.mxu0 0
      %429 = vmatprep.subr.bf16.mxu0 0
      %430 = vmatpush1.bf16.msra.mxu0 0
      %431 = vmatprep.subr.bf16.mxu0 0
      %432 = vmatpush1.bf16.msra.mxu0 0
      %433 = vmatprep.subr.bf16.mxu0 0
      %434 = vmatpush1.bf16.msra.mxu0 0
      %435 = vmatprep.subr.bf16.mxu0 0
      %436 = vmatpush1.bf16.msra.mxu0 0
      %437 = vmatprep.subr.bf16.mxu0 0
      %438 = vmatpush1.bf16.msra.mxu0 0
      %439 = vmatprep.subr.bf16.mxu0 0
      %440 = vmatpush1.bf16.msra.mxu0 0
      %441 = vmatprep.mubr.bf16.mxu0 0
      %442 = vmatmul.mubr.bf16.gmra.mrb[0].mxu0 %v407
      %v443 = vpop.f32.mrb[0].mxu0
      %v444 = vadd.f32 %v377, %v443
      %v445 = vpop.f32.mrb[0].mxu0
      %v446 = vpop.f32.mrb[0].mxu0
      %v447 = vadd.f32 %v380, %v446
      %v448 = vpop.f32.mrb[0].mxu0
      %449 = vdwg.mxu0
      %v452 = vunpack.c.l.b16 %v252
      %v453 = vunpack.c.l.b16 %v253
      %v454 = vpack.c.b16 %v453, %v452
      %455 = vrot.lane.b32.xlu0 %v313, 126
      %v456 = vpop.permute.xlu0 %455
      %457 = vrot.lane.b32.xlu0 %v314, 126
      %v458 = vpop.permute.xlu0 %457
      %459 = vrot.lane.b32.xlu0 %v315, 126
      %v460 = vpop.permute.xlu0 %459
      %461 = vrot.lane.b32.xlu0 %v316, 126
      %v462 = vpop.permute.xlu0 %461
      %463 = vrot.lane.b32.xlu0 %v317, 126
      %v464 = vpop.permute.xlu0 %463
      %465 = vrot.lane.b32.xlu0 %v318, 126
      %v466 = vpop.permute.xlu0 %465
      %vm467 = vcmask 1031168
      %v468 = vsel %vm467, %v456, %v458
      %v469 = vsel %vm467, %v460, %v462
      %v470 = vsel %vm467, %v464, %v466
      %v475 = vsel %vm338, %v454, 0
      %477 = vmatprep.subr.bf16.mxu0 0
      %478 = vmatpush1.bf16.msra.mxu0 %v468
      %479 = vmatprep.subr.bf16.mxu0 0
      %480 = vmatpush1.bf16.msra.mxu0 %v469
      %481 = vmatprep.subr.bf16.mxu0 0
      %482 = vmatpush1.bf16.msra.mxu0 %v470
      %483 = vmatprep.subr.bf16.mxu0 0
      %484 = vmatpush1.bf16.msra.mxu0 0
      %485 = vmatprep.subr.bf16.mxu0 0
      %486 = vmatpush1.bf16.msra.mxu0 0
      %487 = vmatprep.subr.bf16.mxu0 0
      %488 = vmatpush1.bf16.msra.mxu0 0
      %489 = vmatprep.subr.bf16.mxu0 0
      %490 = vmatpush1.bf16.msra.mxu0 0
      %491 = vmatprep.subr.bf16.mxu0 0
      %492 = vmatpush1.bf16.msra.mxu0 0
      %493 = vmatprep.subr.bf16.mxu0 0
      %494 = vmatpush1.bf16.msra.mxu0 0
      %495 = vmatprep.subr.bf16.mxu0 0
      %496 = vmatpush1.bf16.msra.mxu0 0
      %497 = vmatprep.subr.bf16.mxu0 0
      %498 = vmatpush1.bf16.msra.mxu0 0
      %499 = vmatprep.subr.bf16.mxu0 0
      %500 = vmatpush1.bf16.msra.mxu0 0
      %501 = vmatprep.subr.bf16.mxu0 0
      %502 = vmatpush1.bf16.msra.mxu0 0
      %503 = vmatprep.subr.bf16.mxu0 0
      %504 = vmatpush1.bf16.msra.mxu0 0
      %505 = vmatprep.subr.bf16.mxu0 0
      %506 = vmatpush1.bf16.msra.mxu0 0
      %507 = vmatprep.subr.bf16.mxu0 0
      %508 = vmatpush1.bf16.msra.mxu0 0
      %509 = vmatprep.mubr.bf16.mxu0 0
      %510 = vmatmul.mubr.bf16.gmra.mrb[0].mxu0 %v475
      %v511 = vpop.f32.mrb[0].mxu0
      %v512 = vadd.f32 0.0, %v511
      %v513 = vpop.f32.mrb[0].mxu0
      %v514 = vpop.f32.mrb[0].mxu0
      %v515 = vadd.f32 0.0, %v514
      %v516 = vpop.f32.mrb[0].mxu0
      %517 = vdwg.mxu0
      %v518 = vadd.f32 %v444, %v512
      %v519 = vadd.f32 %v447, %v515
      %v522 = vunpack.c.l.b16 %v255
      %v523 = vunpack.c.l.b16 %v256
      %v524 = vpack.c.b16 %v523, %v522
      %525 = vrot.lane.b32.xlu0 %v313, 118
      %v526 = vpop.permute.xlu0 %525
      %527 = vrot.lane.b32.xlu0 %v314, 118
      %v528 = vpop.permute.xlu0 %527
      %529 = vrot.lane.b32.xlu0 %v315, 118
      %v530 = vpop.permute.xlu0 %529
      %531 = vrot.lane.b32.xlu0 %v316, 118
      %v532 = vpop.permute.xlu0 %531
      %533 = vrot.lane.b32.xlu0 %v317, 118
      %v534 = vpop.permute.xlu0 %533
      %535 = vrot.lane.b32.xlu0 %v318, 118
      %v536 = vpop.permute.xlu0 %535
      %vm537 = vcmask 965632
      %v538 = vsel %vm537, %v526, %v528
      %v539 = vsel %vm537, %v530, %v532
      %v540 = vsel %vm537, %v534, %v536
      %v545 = vsel %vm338, %v524, 0
      %547 = vmatprep.subr.bf16.mxu0 0
      %548 = vmatpush1.bf16.msra.mxu0 %v538
      %549 = vmatprep.subr.bf16.mxu0 0
      %550 = vmatpush1.bf16.msra.mxu0 %v539
      %551 = vmatprep.subr.bf16.mxu0 0
      %552 = vmatpush1.bf16.msra.mxu0 %v540
      %553 = vmatprep.subr.bf16.mxu0 0
      %554 = vmatpush1.bf16.msra.mxu0 0
      %555 = vmatprep.subr.bf16.mxu0 0
      %556 = vmatpush1.bf16.msra.mxu0 0
      %557 = vmatprep.subr.bf16.mxu0 0
      %558 = vmatpush1.bf16.msra.mxu0 0
      %559 = vmatprep.subr.bf16.mxu0 0
      %560 = vmatpush1.bf16.msra.mxu0 0
      %561 = vmatprep.subr.bf16.mxu0 0
      %562 = vmatpush1.bf16.msra.mxu0 0
      %563 = vmatprep.subr.bf16.mxu0 0
      %564 = vmatpush1.bf16.msra.mxu0 0
      %565 = vmatprep.subr.bf16.mxu0 0
      %566 = vmatpush1.bf16.msra.mxu0 0
      %567 = vmatprep.subr.bf16.mxu0 0
      %568 = vmatpush1.bf16.msra.mxu0 0
      %569 = vmatprep.subr.bf16.mxu0 0
      %570 = vmatpush1.bf16.msra.mxu0 0
      %571 = vmatprep.subr.bf16.mxu0 0
      %572 = vmatpush1.bf16.msra.mxu0 0
      %573 = vmatprep.subr.bf16.mxu0 0
      %574 = vmatpush1.bf16.msra.mxu0 0
      %575 = vmatprep.subr.bf16.mxu0 0
      %576 = vmatpush1.bf16.msra.mxu0 0
      %577 = vmatprep.subr.bf16.mxu0 0
      %578 = vmatpush1.bf16.msra.mxu0 0
      %579 = vmatprep.mubr.bf16.mxu0 0
      %580 = vmatmul.mubr.bf16.gmra.mrb[0].mxu0 %v545
      %v581 = vpop.f32.mrb[0].mxu0
      %v582 = vadd.f32 0.0, %v581
      %v583 = vpop.f32.mrb[0].mxu0
      %v584 = vpop.f32.mrb[0].mxu0
      %v585 = vadd.f32 0.0, %v584
      %v586 = vpop.f32.mrb[0].mxu0
      %587 = vdwg.mxu0
      %v588 = vadd.f32 %v518, %v582
      %v589 = vadd.f32 %v519, %v585
      %v592 = vunpack.c.l.b16 %v258
      %v593 = vunpack.c.l.b16 %v259
      %v594 = vpack.c.b16 %v593, %v592
      %595 = vrot.lane.b32.xlu0 %v313, 117
      %v596 = vpop.permute.xlu0 %595
      %597 = vrot.lane.b32.xlu0 %v314, 117
      %v598 = vpop.permute.xlu0 %597
      %599 = vrot.lane.b32.xlu0 %v315, 117
      %v600 = vpop.permute.xlu0 %599
      %601 = vrot.lane.b32.xlu0 %v316, 117
      %v602 = vpop.permute.xlu0 %601
      %603 = vrot.lane.b32.xlu0 %v317, 117
      %v604 = vpop.permute.xlu0 %603
      %605 = vrot.lane.b32.xlu0 %v318, 117
      %v606 = vpop.permute.xlu0 %605
      %vm607 = vcmask 957440
      %v608 = vsel %vm607, %v596, %v598
      %v609 = vsel %vm607, %v600, %v602
      %v610 = vsel %vm607, %v604, %v606
      %v615 = vsel %vm338, %v594, 0
      %617 = vmatprep.subr.bf16.mxu0 0
      %618 = vmatpush1.bf16.msra.mxu0 %v608
      %619 = vmatprep.subr.bf16.mxu0 0
      %620 = vmatpush1.bf16.msra.mxu0 %v609
      %621 = vmatprep.subr.bf16.mxu0 0
      %622 = vmatpush1.bf16.msra.mxu0 %v610
      %623 = vmatprep.subr.bf16.mxu0 0
      %624 = vmatpush1.bf16.msra.mxu0 0
      %625 = vmatprep.subr.bf16.mxu0 0
      %626 = vmatpush1.bf16.msra.mxu0 0
      %627 = vmatprep.subr.bf16.mxu0 0
      %628 = vmatpush1.bf16.msra.mxu0 0
      %629 = vmatprep.subr.bf16.mxu0 0
      %630 = vmatpush1.bf16.msra.mxu0 0
      %631 = vmatprep.subr.bf16.mxu0 0
      %632 = vmatpush1.bf16.msra.mxu0 0
      %633 = vmatprep.subr.bf16.mxu0 0
      %634 = vmatpush1.bf16.msra.mxu0 0
      %635 = vmatprep.subr.bf16.mxu0 0
      %636 = vmatpush1.bf16.msra.mxu0 0
      %637 = vmatprep.subr.bf16.mxu0 0
      %638 = vmatpush1.bf16.msra.mxu0 0
      %639 = vmatprep.subr.bf16.mxu0 0
      %640 = vmatpush1.bf16.msra.mxu0 0
      %641 = vmatprep.subr.bf16.mxu0 0
      %642 = vmatpush1.bf16.msra.mxu0 0
      %643 = vmatprep.subr.bf16.mxu0 0
      %644 = vmatpush1.bf16.msra.mxu0 0
      %645 = vmatprep.subr.bf16.mxu0 0
      %646 = vmatpush1.bf16.msra.mxu0 0
      %647 = vmatprep.subr.bf16.mxu0 0
      %648 = vmatpush1.bf16.msra.mxu0 0
      %649 = vmatprep.mubr.bf16.mxu0 0
      %650 = vmatmul.mubr.bf16.gmra.mrb[0].mxu0 %v615
      %v651 = vpop.f32.mrb[0].mxu0
      %v652 = vadd.f32 0.0, %v651
      %v653 = vpop.f32.mrb[0].mxu0
      %v654 = vpop.f32.mrb[0].mxu0
      %v655 = vadd.f32 0.0, %v654
      %v656 = vpop.f32.mrb[0].mxu0
      %657 = vdwg.mxu0
      %v658 = vadd.f32 %v588, %v652
      %v659 = vadd.f32 %v589, %v655
      %v662 = vunpack.c.l.b16 %v261
      %v663 = vunpack.c.l.b16 %v262
      %v664 = vpack.c.b16 %v663, %v662
      %665 = vrot.lane.b32.xlu0 %v313, 116
      %v666 = vpop.permute.xlu0 %665
      %667 = vrot.lane.b32.xlu0 %v314, 116
      %v668 = vpop.permute.xlu0 %667
      %669 = vrot.lane.b32.xlu0 %v315, 116
      %v670 = vpop.permute.xlu0 %669
      %671 = vrot.lane.b32.xlu0 %v316, 116
      %v672 = vpop.permute.xlu0 %671
      %673 = vrot.lane.b32.xlu0 %v317, 116
      %v674 = vpop.permute.xlu0 %673
      %675 = vrot.lane.b32.xlu0 %v318, 116
      %v676 = vpop.permute.xlu0 %675
      %vm677 = vcmask 949248
      %v678 = vsel %vm677, %v666, %v668
      %v679 = vsel %vm677, %v670, %v672
      %v680 = vsel %vm677, %v674, %v676
      %v685 = vsel %vm338, %v664, 0
      %687 = vmatprep.subr.bf16.mxu0 0
      %688 = vmatpush1.bf16.msra.mxu0 %v678
      %689 = vmatprep.subr.bf16.mxu0 0
      %690 = vmatpush1.bf16.msra.mxu0 %v679
      %691 = vmatprep.subr.bf16.mxu0 0
      %692 = vmatpush1.bf16.msra.mxu0 %v680
      %693 = vmatprep.subr.bf16.mxu0 0
      %694 = vmatpush1.bf16.msra.mxu0 0
      %695 = vmatprep.subr.bf16.mxu0 0
      %696 = vmatpush1.bf16.msra.mxu0 0
      %697 = vmatprep.subr.bf16.mxu0 0
      %698 = vmatpush1.bf16.msra.mxu0 0
      %699 = vmatprep.subr.bf16.mxu0 0
      %700 = vmatpush1.bf16.msra.mxu0 0
      %701 = vmatprep.subr.bf16.mxu0 0
      %702 = vmatpush1.bf16.msra.mxu0 0
      %703 = vmatprep.subr.bf16.mxu0 0
      %704 = vmatpush1.bf16.msra.mxu0 0
      %705 = vmatprep.subr.bf16.mxu0 0
      %706 = vmatpush1.bf16.msra.mxu0 0
      %707 = vmatprep.subr.bf16.mxu0 0
      %708 = vmatpush1.bf16.msra.mxu0 0
      %709 = vmatprep.subr.bf16.mxu0 0
      %710 = vmatpush1.bf16.msra.mxu0 0
      %711 = vmatprep.subr.bf16.mxu0 0
      %712 = vmatpush1.bf16.msra.mxu0 0
      %713 = vmatprep.subr.bf16.mxu0 0
      %714 = vmatpush1.bf16.msra.mxu0 0
      %715 = vmatprep.subr.bf16.mxu0 0
      %716 = vmatpush1.bf16.msra.mxu0 0
      %717 = vmatprep.subr.bf16.mxu0 0
      %718 = vmatpush1.bf16.msra.mxu0 0
      %719 = vmatprep.mubr.bf16.mxu0 0
      %720 = vmatmul.mubr.bf16.gmra.mrb[0].mxu0 %v685
      %v721 = vpop.f32.mrb[0].mxu0
      %v722 = vadd.f32 0.0, %v721
      %v723 = vpop.f32.mrb[0].mxu0
      %v724 = vpop.f32.mrb[0].mxu0
      %v725 = vadd.f32 0.0, %v724
      %v726 = vpop.f32.mrb[0].mxu0
      %727 = vdwg.mxu0
      %v728 = vadd.f32 %v658, %v722
      %v729 = vadd.f32 %v659, %v725
      %v732 = vunpack.c.l.b16 %v264
      %v733 = vunpack.c.l.b16 %v265
      %v734 = vpack.c.b16 %v733, %v732
      %735 = vrot.lane.b32.xlu0 %v313, 108
      %v736 = vpop.permute.xlu0 %735
      %737 = vrot.lane.b32.xlu0 %v314, 108
      %v738 = vpop.permute.xlu0 %737
      %739 = vrot.lane.b32.xlu0 %v315, 108
      %v740 = vpop.permute.xlu0 %739
      %741 = vrot.lane.b32.xlu0 %v316, 108
      %v742 = vpop.permute.xlu0 %741
      %743 = vrot.lane.b32.xlu0 %v317, 108
      %v744 = vpop.permute.xlu0 %743
      %745 = vrot.lane.b32.xlu0 %v318, 108
      %v746 = vpop.permute.xlu0 %745
      %vm747 = vcmask 883712
      %v748 = vsel %vm747, %v736, %v738
      %v749 = vsel %vm747, %v740, %v742
      %v750 = vsel %vm747, %v744, %v746
      %v755 = vsel %vm338, %v734, 0
      %757 = vmatprep.subr.bf16.mxu0 0
      %758 = vmatpush1.bf16.msra.mxu0 %v748
      %759 = vmatprep.subr.bf16.mxu0 0
      %760 = vmatpush1.bf16.msra.mxu0 %v749
      %761 = vmatprep.subr.bf16.mxu0 0
      %762 = vmatpush1.bf16.msra.mxu0 %v750
      %763 = vmatprep.subr.bf16.mxu0 0
      %764 = vmatpush1.bf16.msra.mxu0 0
      %765 = vmatprep.subr.bf16.mxu0 0
      %766 = vmatpush1.bf16.msra.mxu0 0
      %767 = vmatprep.subr.bf16.mxu0 0
      %768 = vmatpush1.bf16.msra.mxu0 0
      %769 = vmatprep.subr.bf16.mxu0 0
      %770 = vmatpush1.bf16.msra.mxu0 0
      %771 = vmatprep.subr.bf16.mxu0 0
      %772 = vmatpush1.bf16.msra.mxu0 0
      %773 = vmatprep.subr.bf16.mxu0 0
      %774 = vmatpush1.bf16.msra.mxu0 0
      %775 = vmatprep.subr.bf16.mxu0 0
      %776 = vmatpush1.bf16.msra.mxu0 0
      %777 = vmatprep.subr.bf16.mxu0 0
      %778 = vmatpush1.bf16.msra.mxu0 0
      %779 = vmatprep.subr.bf16.mxu0 0
      %780 = vmatpush1.bf16.msra.mxu0 0
      %781 = vmatprep.subr.bf16.mxu0 0
      %782 = vmatpush1.bf16.msra.mxu0 0
      %783 = vmatprep.subr.bf16.mxu0 0
      %784 = vmatpush1.bf16.msra.mxu0 0
      %785 = vmatprep.subr.bf16.mxu0 0
      %786 = vmatpush1.bf16.msra.mxu0 0
      %787 = vmatprep.subr.bf16.mxu0 0
      %788 = vmatpush1.bf16.msra.mxu0 0
      %789 = vmatprep.mubr.bf16.mxu0 0
      %790 = vmatmul.mubr.bf16.gmra.mrb[0].mxu0 %v755
      %v791 = vpop.f32.mrb[0].mxu0
      %v792 = vadd.f32 0.0, %v791
      %v793 = vpop.f32.mrb[0].mxu0
      %v794 = vpop.f32.mrb[0].mxu0
      %v795 = vadd.f32 0.0, %v794
      %v796 = vpop.f32.mrb[0].mxu0
      %797 = vdwg.mxu0
      %v798 = vadd.f32 %v728, %v792
      %v799 = vadd.f32 %v729, %v795
      %v802 = vunpack.c.l.b16 %v267
      %v803 = vunpack.c.l.b16 %v268
      %v804 = vpack.c.b16 %v803, %v802
      %805 = vrot.lane.b32.xlu0 %v313, 107
      %v806 = vpop.permute.xlu0 %805
      %807 = vrot.lane.b32.xlu0 %v314, 107
      %v808 = vpop.permute.xlu0 %807
      %809 = vrot.lane.b32.xlu0 %v315, 107
      %v810 = vpop.permute.xlu0 %809
      %811 = vrot.lane.b32.xlu0 %v316, 107
      %v812 = vpop.permute.xlu0 %811
      %813 = vrot.lane.b32.xlu0 %v317, 107
      %v814 = vpop.permute.xlu0 %813
      %815 = vrot.lane.b32.xlu0 %v318, 107
      %v816 = vpop.permute.xlu0 %815
      %vm817 = vcmask 875520
      %v818 = vsel %vm817, %v806, %v808
      %v819 = vsel %vm817, %v810, %v812
      %v820 = vsel %vm817, %v814, %v816
      %v825 = vsel %vm338, %v804, 0
      %827 = vmatprep.subr.bf16.mxu0 0
      %828 = vmatpush1.bf16.msra.mxu0 %v818
      %829 = vmatprep.subr.bf16.mxu0 0
      %830 = vmatpush1.bf16.msra.mxu0 %v819
      %831 = vmatprep.subr.bf16.mxu0 0
      %832 = vmatpush1.bf16.msra.mxu0 %v820
      %833 = vmatprep.subr.bf16.mxu0 0
      %834 = vmatpush1.bf16.msra.mxu0 0
      %835 = vmatprep.subr.bf16.mxu0 0
      %836 = vmatpush1.bf16.msra.mxu0 0
      %837 = vmatprep.subr.bf16.mxu0 0
      %838 = vmatpush1.bf16.msra.mxu0 0
      %839 = vmatprep.subr.bf16.mxu0 0
      %840 = vmatpush1.bf16.msra.mxu0 0
      %841 = vmatprep.subr.bf16.mxu0 0
      %842 = vmatpush1.bf16.msra.mxu0 0
      %843 = vmatprep.subr.bf16.mxu0 0
      %844 = vmatpush1.bf16.msra.mxu0 0
      %845 = vmatprep.subr.bf16.mxu0 0
      %846 = vmatpush1.bf16.msra.mxu0 0
      %847 = vmatprep.subr.bf16.mxu0 0
      %848 = vmatpush1.bf16.msra.mxu0 0
      %849 = vmatprep.subr.bf16.mxu0 0
      %850 = vmatpush1.bf16.msra.mxu0 0
      %851 = vmatprep.subr.bf16.mxu0 0
      %852 = vmatpush1.bf16.msra.mxu0 0
      %853 = vmatprep.subr.bf16.mxu0 0
      %854 = vmatpush1.bf16.msra.mxu0 0
      %855 = vmatprep.subr.bf16.mxu0 0
      %856 = vmatpush1.bf16.msra.mxu0 0
      %857 = vmatprep.subr.bf16.mxu0 0
      %858 = vmatpush1.bf16.msra.mxu0 0
      %859 = vmatprep.mubr.bf16.mxu0 0
      %860 = vmatmul.mubr.bf16.gmra.mrb[0].mxu0 %v825
      %v861 = vpop.f32.mrb[0].mxu0
      %v862 = vadd.f32 0.0, %v861
      %v863 = vpop.f32.mrb[0].mxu0
      %v864 = vpop.f32.mrb[0].mxu0
      %v865 = vadd.f32 0.0, %v864
      %v866 = vpop.f32.mrb[0].mxu0
      %867 = vdwg.mxu0
      %v868 = vadd.f32 %v798, %v862
      %v869 = vadd.f32 %v799, %v865
      %v872 = vunpack.c.l.b16 %v270
      %v873 = vunpack.c.l.b16 %v271
      %v874 = vpack.c.b16 %v873, %v872
      %875 = vrot.lane.b32.xlu0 %v313, 106
      %v876 = vpop.permute.xlu0 %875
      %877 = vrot.lane.b32.xlu0 %v314, 106
      %v878 = vpop.permute.xlu0 %877
      %879 = vrot.lane.b32.xlu0 %v315, 106
      %v880 = vpop.permute.xlu0 %879
      %881 = vrot.lane.b32.xlu0 %v316, 106
      %v882 = vpop.permute.xlu0 %881
      %883 = vrot.lane.b32.xlu0 %v317, 106
      %v884 = vpop.permute.xlu0 %883
      %885 = vrot.lane.b32.xlu0 %v318, 106
      %v886 = vpop.permute.xlu0 %885
      %vm887 = vcmask 867328
      %v888 = vsel %vm887, %v876, %v878
      %v889 = vsel %vm887, %v880, %v882
      %v890 = vsel %vm887, %v884, %v886
      %v895 = vsel %vm338, %v874, 0
      %897 = vmatprep.subr.bf16.mxu0 0
      %898 = vmatpush1.bf16.msra.mxu0 %v888
      %899 = vmatprep.subr.bf16.mxu0 0
      %900 = vmatpush1.bf16.msra.mxu0 %v889
      %901 = vmatprep.subr.bf16.mxu0 0
      %902 = vmatpush1.bf16.msra.mxu0 %v890
      %903 = vmatprep.subr.bf16.mxu0 0
      %904 = vmatpush1.bf16.msra.mxu0 0
      %905 = vmatprep.subr.bf16.mxu0 0
      %906 = vmatpush1.bf16.msra.mxu0 0
      %907 = vmatprep.subr.bf16.mxu0 0
      %908 = vmatpush1.bf16.msra.mxu0 0
      %909 = vmatprep.subr.bf16.mxu0 0
      %910 = vmatpush1.bf16.msra.mxu0 0
      %911 = vmatprep.subr.bf16.mxu0 0
      %912 = vmatpush1.bf16.msra.mxu0 0
      %913 = vmatprep.subr.bf16.mxu0 0
      %914 = vmatpush1.bf16.msra.mxu0 0
      %915 = vmatprep.subr.bf16.mxu0 0
      %916 = vmatpush1.bf16.msra.mxu0 0
      %917 = vmatprep.subr.bf16.mxu0 0
      %918 = vmatpush1.bf16.msra.mxu0 0
      %919 = vmatprep.subr.bf16.mxu0 0
      %920 = vmatpush1.bf16.msra.mxu0 0
      %921 = vmatprep.subr.bf16.mxu0 0
      %922 = vmatpush1.bf16.msra.mxu0 0
      %923 = vmatprep.subr.bf16.mxu0 0
      %924 = vmatpush1.bf16.msra.mxu0 0
      %925 = vmatprep.subr.bf16.mxu0 0
      %926 = vmatpush1.bf16.msra.mxu0 0
      %927 = vmatprep.subr.bf16.mxu0 0
      %928 = vmatpush1.bf16.msra.mxu0 0
      %929 = vmatprep.mubr.bf16.mxu0 0
      %930 = vmatmul.mubr.bf16.gmra.mrb[0].mxu0 %v895
      %v931 = vpop.f32.mrb[0].mxu0
      %v932 = vadd.f32 0.0, %v931
      %v933 = vpop.f32.mrb[0].mxu0
      %v934 = vpop.f32.mrb[0].mxu0
      %v935 = vadd.f32 0.0, %v934
      %v936 = vpop.f32.mrb[0].mxu0
      %937 = vdwg.mxu0
      %v938 = vadd.f32 %v868, %v932
      %v939 = vadd.f32 %v869, %v935
      %v940 = vpack.c.bf16 %v939, %v938
      %v942 = vunpack.c.l.b16 %v940
      %v943 = vunpack.c.h.b16 %v940
      %v944 = vpack.c.b16 %v942, %v942
      %v945 = vpack.c.b16 %v943, %v943
      %948 = vst [vmem:[%s229] sm:$0xf] %v944
      %949 = vst [vmem:[%s229 + $0x4] sm:$0xf] %v945
      %v950 = vunpack.c.l.bf16 %v940
      %v951 = vunpack.c.h.bf16 %v940
      %v953 = vlaneseq
      %v954 = vshrl.u32 %v953, 7
      %v955 = vsub.s32 0, %v954
      %v956 = vrot.slane %v245, %v955
      %v958 = vmul.f32 %v950, %v956
      %v959 = vmul.f32 %v951, %v956
      %v960 = vadd.f32 %v958, 0.0
      %v961 = vadd.f32 %v959, 0.0
      %v962 = vmul.f32 %v958, %v950
      %v963 = vmul.f32 %v959, %v951
      %v964 = vadd.f32 %v962, 0.0
      %v965 = vadd.f32 %v963, 0.0
      %s966 = smul.u32 %s21, 8
      %s967 = sadd.s32 %s966, 1
      %s968 = smul.u32 %s967, 16
      %s969 = sshra.s32 %s968, 3
      %s970 = sand.u32 %s968, 7
      %s971 = smul.u32 %s969, 2
      %s972 = smul.addr %s971, 4
      %s973 = scalar_lea.vmem %s219, %s972
      %v974 = vld [vmem:[%s973] sm:$0xf]
      %v975 = vld [vmem:[%s973 + $0x8] sm:$0xf]
      %v976 = vld [vmem:[%s973 + $0x10] sm:$0xf]
      %v977 = vld [vmem:[%s973 + $0x18] sm:$0xf]
      %v978 = vld [vmem:[%s973 + $0x20] sm:$0xf]
      %v979 = vld [vmem:[%s973 + $0x28] sm:$0xf]
      %v980 = vld [vmem:[%s973] sm:$0xff]
      %v981 = vld [vmem:[%s973 + $0x8] sm:$0xff]
      %v982 = vld [vmem:[%s973 + $0x10] sm:$0xff]
      %v983 = vld [vmem:[%s973 + $0x18] sm:$0xff]
      %v984 = vld [vmem:[%s973 + $0x20] sm:$0xff]
      %v985 = vld [vmem:[%s973 + $0x28] sm:$0xff]
      %v992 = vunpack.c.l.b16 %v980
      %v993 = vunpack.c.h.b16 %v980
      %v994 = vunpack.c.l.b16 %v981
      %v995 = vunpack.c.h.b16 %v981
      %v996 = vunpack.c.l.b16 %v982
      %v997 = vunpack.c.h.b16 %v982
      %v998 = vunpack.c.l.b16 %v983
      %v999 = vunpack.c.h.b16 %v983
      %v1000 = vunpack.c.l.b16 %v984
      %v1001 = vunpack.c.h.b16 %v984
      %v1002 = vunpack.c.l.b16 %v985
      %v1003 = vunpack.c.h.b16 %v985
      %v1004 = vpack.c.b16 %v994, %v992
      %v1005 = vpack.c.b16 %v995, %v993
      %v1006 = vpack.c.b16 %v998, %v996
      %v1007 = vpack.c.b16 %v999, %v997
      %v1008 = vpack.c.b16 %v1002, %v1000
      %v1009 = vpack.c.b16 %v1003, %v1001
      %1010 = vrot.lane.b32.xlu0 %v1004, 127
      %v1011 = vpop.permute.xlu0 %1010
      %1012 = vrot.lane.b32.xlu0 %v1005, 127
      %v1013 = vpop.permute.xlu0 %1012
      %1014 = vrot.lane.b32.xlu0 %v1006, 127
      %v1015 = vpop.permute.xlu0 %1014
      %1016 = vrot.lane.b32.xlu0 %v1007, 127
      %v1017 = vpop.permute.xlu0 %1016
      %1018 = vrot.lane.b32.xlu0 %v1008, 127
      %v1019 = vpop.permute.xlu0 %1018
      %1020 = vrot.lane.b32.xlu0 %v1009, 127
      %v1021 = vpop.permute.xlu0 %1020
      %v1022 = vsel %vm331, %v1011, %v1013
      %v1023 = vsel %vm331, %v1015, %v1017
      %v1024 = vsel %vm331, %v1019, %v1021
      %1028 = vmatprep.subr.bf16.mxu0 0
      %1029 = vmatpush1.bf16.msra.mxu0 %v1022
      %1030 = vmatprep.subr.bf16.mxu0 0
      %1031 = vmatpush1.bf16.msra.mxu0 %v1023
      %1032 = vmatprep.subr.bf16.mxu0 0
      %1033 = vmatpush1.bf16.msra.mxu0 %v1024
      %1034 = vmatprep.subr.bf16.mxu0 0
      %1035 = vmatpush1.bf16.msra.mxu0 0
      %1036 = vmatprep.subr.bf16.mxu0 0
      %1037 = vmatpush1.bf16.msra.mxu0 0
      %1038 = vmatprep.subr.bf16.mxu0 0
      %1039 = vmatpush1.bf16.msra.mxu0 0
      %1040 = vmatprep.subr.bf16.mxu0 0
      %1041 = vmatpush1.bf16.msra.mxu0 0
      %1042 = vmatprep.subr.bf16.mxu0 0
      %1043 = vmatpush1.bf16.msra.mxu0 0
      %1044 = vmatprep.subr.bf16.mxu0 0
      %1045 = vmatpush1.bf16.msra.mxu0 0
      %1046 = vmatprep.subr.bf16.mxu0 0
      %1047 = vmatpush1.bf16.msra.mxu0 0
      %1048 = vmatprep.subr.bf16.mxu0 0
      %1049 = vmatpush1.bf16.msra.mxu0 0
      %1050 = vmatprep.subr.bf16.mxu0 0
      %1051 = vmatpush1.bf16.msra.mxu0 0
      %1052 = vmatprep.subr.bf16.mxu0 0
      %1053 = vmatpush1.bf16.msra.mxu0 0
      %1054 = vmatprep.subr.bf16.mxu0 0
      %1055 = vmatpush1.bf16.msra.mxu0 0
      %1056 = vmatprep.subr.bf16.mxu0 0
      %1057 = vmatpush1.bf16.msra.mxu0 0
      %1058 = vmatprep.subr.bf16.mxu0 0
      %1059 = vmatpush1.bf16.msra.mxu0 0
      %1060 = vmatprep.mubr.bf16.mxu0 0
      %1061 = vmatmul.mubr.bf16.gmra.mrb[0].mxu0 %v340
      %v1062 = vpop.f32.mrb[0].mxu0
      %v1063 = vadd.f32 0.0, %v1062
      %v1064 = vpop.f32.mrb[0].mxu0
      %v1065 = vpop.f32.mrb[0].mxu0
      %v1066 = vadd.f32 0.0, %v1065
      %v1067 = vpop.f32.mrb[0].mxu0
      %1068 = vdwg.mxu0
      %v1075 = vunpack.c.l.b16 %v974
      %v1076 = vunpack.c.l.b16 %v975
      %v1077 = vunpack.c.l.b16 %v976
      %v1078 = vunpack.c.l.b16 %v977
      %v1079 = vunpack.c.l.b16 %v978
      %v1080 = vunpack.c.l.b16 %v979
      %v1081 = vpack.c.b16 %v1076, %v1075
      %v1082 = vpack.c.b16 %v1078, %v1077
      %v1083 = vpack.c.b16 %v1080, %v1079
      %1087 = vmatprep.subr.bf16.mxu0 0
      %1088 = vmatpush1.bf16.msra.mxu0 %v1081
      %1089 = vmatprep.subr.bf16.mxu0 0
      %1090 = vmatpush1.bf16.msra.mxu0 %v1082
      %1091 = vmatprep.subr.bf16.mxu0 0
      %1092 = vmatpush1.bf16.msra.mxu0 %v1083
      %1093 = vmatprep.subr.bf16.mxu0 0
      %1094 = vmatpush1.bf16.msra.mxu0 0
      %1095 = vmatprep.subr.bf16.mxu0 0
      %1096 = vmatpush1.bf16.msra.mxu0 0
      %1097 = vmatprep.subr.bf16.mxu0 0
      %1098 = vmatpush1.bf16.msra.mxu0 0
      %1099 = vmatprep.subr.bf16.mxu0 0
      %1100 = vmatpush1.bf16.msra.mxu0 0
      %1101 = vmatprep.subr.bf16.mxu0 0
      %1102 = vmatpush1.bf16.msra.mxu0 0
      %1103 = vmatprep.subr.bf16.mxu0 0
      %1104 = vmatpush1.bf16.msra.mxu0 0
      %1105 = vmatprep.subr.bf16.mxu0 0
      %1106 = vmatpush1.bf16.msra.mxu0 0
      %1107 = vmatprep.subr.bf16.mxu0 0
      %1108 = vmatpush1.bf16.msra.mxu0 0
      %1109 = vmatprep.subr.bf16.mxu0 0
      %1110 = vmatpush1.bf16.msra.mxu0 0
      %1111 = vmatprep.subr.bf16.mxu0 0
      %1112 = vmatpush1.bf16.msra.mxu0 0
      %1113 = vmatprep.subr.bf16.mxu0 0
      %1114 = vmatpush1.bf16.msra.mxu0 0
      %1115 = vmatprep.subr.bf16.mxu0 0
      %1116 = vmatpush1.bf16.msra.mxu0 0
      %1117 = vmatprep.subr.bf16.mxu0 0
      %1118 = vmatpush1.bf16.msra.mxu0 0
      %1119 = vmatprep.mubr.bf16.mxu0 0
      %1120 = vmatmul.mubr.bf16.gmra.mrb[0].mxu0 %v407
      %v1121 = vpop.f32.mrb[0].mxu0
      %v1122 = vadd.f32 %v1063, %v1121
      %v1123 = vpop.f32.mrb[0].mxu0
      %v1124 = vpop.f32.mrb[0].mxu0
      %v1125 = vadd.f32 %v1066, %v1124
      %v1126 = vpop.f32.mrb[0].mxu0
      %1127 = vdwg.mxu0
      %1128 = vrot.lane.b32.xlu0 %v1004, 126
      %v1129 = vpop.permute.xlu0 %1128
      %1130 = vrot.lane.b32.xlu0 %v1005, 126
      %v1131 = vpop.permute.xlu0 %1130
      %1132 = vrot.lane.b32.xlu0 %v1006, 126
      %v1133 = vpop.permute.xlu0 %1132
      %1134 = vrot.lane.b32.xlu0 %v1007, 126
      %v1135 = vpop.permute.xlu0 %1134
      %1136 = vrot.lane.b32.xlu0 %v1008, 126
      %v1137 = vpop.permute.xlu0 %1136
      %1138 = vrot.lane.b32.xlu0 %v1009, 126
      %v1139 = vpop.permute.xlu0 %1138
      %v1140 = vsel %vm467, %v1129, %v1131
      %v1141 = vsel %vm467, %v1133, %v1135
      %v1142 = vsel %vm467, %v1137, %v1139
      %1146 = vmatprep.subr.bf16.mxu0 0
      %1147 = vmatpush1.bf16.msra.mxu0 %v1140
      %1148 = vmatprep.subr.bf16.mxu0 0
      %1149 = vmatpush1.bf16.msra.mxu0 %v1141
      %1150 = vmatprep.subr.bf16.mxu0 0
      %1151 = vmatpush1.bf16.msra.mxu0 %v1142
      %1152 = vmatprep.subr.bf16.mxu0 0
      %1153 = vmatpush1.bf16.msra.mxu0 0
      %1154 = vmatprep.subr.bf16.mxu0 0
      %1155 = vmatpush1.bf16.msra.mxu0 0
      %1156 = vmatprep.subr.bf16.mxu0 0
      %1157 = vmatpush1.bf16.msra.mxu0 0
      %1158 = vmatprep.subr.bf16.mxu0 0
      %1159 = vmatpush1.bf16.msra.mxu0 0
      %1160 = vmatprep.subr.bf16.mxu0 0
      %1161 = vmatpush1.bf16.msra.mxu0 0
      %1162 = vmatprep.subr.bf16.mxu0 0
      %1163 = vmatpush1.bf16.msra.mxu0 0
      %1164 = vmatprep.subr.bf16.mxu0 0
      %1165 = vmatpush1.bf16.msra.mxu0 0
      %1166 = vmatprep.subr.bf16.mxu0 0
      %1167 = vmatpush1.bf16.msra.mxu0 0
      %1168 = vmatprep.subr.bf16.mxu0 0
      %1169 = vmatpush1.bf16.msra.mxu0 0
      %1170 = vmatprep.subr.bf16.mxu0 0
      %1171 = vmatpush1.bf16.msra.mxu0 0
      %1172 = vmatprep.subr.bf16.mxu0 0
      %1173 = vmatpush1.bf16.msra.mxu0 0
      %1174 = vmatprep.subr.bf16.mxu0 0
      %1175 = vmatpush1.bf16.msra.mxu0 0
      %1176 = vmatprep.subr.bf16.mxu0 0
      %1177 = vmatpush1.bf16.msra.mxu0 0
      %1178 = vmatprep.mubr.bf16.mxu0 0
      %1179 = vmatmul.mubr.bf16.gmra.mrb[0].mxu0 %v475
      %v1180 = vpop.f32.mrb[0].mxu0
      %v1181 = vadd.f32 0.0, %v1180
      %v1182 = vpop.f32.mrb[0].mxu0
      %v1183 = vpop.f32.mrb[0].mxu0
      %v1184 = vadd.f32 0.0, %v1183
      %v1185 = vpop.f32.mrb[0].mxu0
      %1186 = vdwg.mxu0
      %v1187 = vadd.f32 %v1122, %v1181
      %v1188 = vadd.f32 %v1125, %v1184
      %1189 = vrot.lane.b32.xlu0 %v1004, 118
      %v1190 = vpop.permute.xlu0 %1189
      %1191 = vrot.lane.b32.xlu0 %v1005, 118
      %v1192 = vpop.permute.xlu0 %1191
      %1193 = vrot.lane.b32.xlu0 %v1006, 118
      %v1194 = vpop.permute.xlu0 %1193
      %1195 = vrot.lane.b32.xlu0 %v1007, 118
      %v1196 = vpop.permute.xlu0 %1195
      %1197 = vrot.lane.b32.xlu0 %v1008, 118
      %v1198 = vpop.permute.xlu0 %1197
      %1199 = vrot.lane.b32.xlu0 %v1009, 118
      %v1200 = vpop.permute.xlu0 %1199
      %v1201 = vsel %vm537, %v1190, %v1192
      %v1202 = vsel %vm537, %v1194, %v1196
      %v1203 = vsel %vm537, %v1198, %v1200
      %1207 = vmatprep.subr.bf16.mxu0 0
      %1208 = vmatpush1.bf16.msra.mxu0 %v1201
      %1209 = vmatprep.subr.bf16.mxu0 0
      %1210 = vmatpush1.bf16.msra.mxu0 %v1202
      %1211 = vmatprep.subr.bf16.mxu0 0
      %1212 = vmatpush1.bf16.msra.mxu0 %v1203
      %1213 = vmatprep.subr.bf16.mxu0 0
      %1214 = vmatpush1.bf16.msra.mxu0 0
      %1215 = vmatprep.subr.bf16.mxu0 0
      %1216 = vmatpush1.bf16.msra.mxu0 0
      %1217 = vmatprep.subr.bf16.mxu0 0
      %1218 = vmatpush1.bf16.msra.mxu0 0
      %1219 = vmatprep.subr.bf16.mxu0 0
      %1220 = vmatpush1.bf16.msra.mxu0 0
      %1221 = vmatprep.subr.bf16.mxu0 0
      %1222 = vmatpush1.bf16.msra.mxu0 0
      %1223 = vmatprep.subr.bf16.mxu0 0
      %1224 = vmatpush1.bf16.msra.mxu0 0
      %1225 = vmatprep.subr.bf16.mxu0 0
      %1226 = vmatpush1.bf16.msra.mxu0 0
      %1227 = vmatprep.subr.bf16.mxu0 0
      %1228 = vmatpush1.bf16.msra.mxu0 0
      %1229 = vmatprep.subr.bf16.mxu0 0
      %1230 = vmatpush1.bf16.msra.mxu0 0
      %1231 = vmatprep.subr.bf16.mxu0 0
      %1232 = vmatpush1.bf16.msra.mxu0 0
      %1233 = vmatprep.subr.bf16.mxu0 0
      %1234 = vmatpush1.bf16.msra.mxu0 0
      %1235 = vmatprep.subr.bf16.mxu0 0
      %1236 = vmatpush1.bf16.msra.mxu0 0
      %1237 = vmatprep.subr.bf16.mxu0 0
      %1238 = vmatpush1.bf16.msra.mxu0 0
      %1239 = vmatprep.mubr.bf16.mxu0 0
      %1240 = vmatmul.mubr.bf16.gmra.mrb[0].mxu0 %v545
      %v1241 = vpop.f32.mrb[0].mxu0
      %v1242 = vadd.f32 0.0, %v1241
      %v1243 = vpop.f32.mrb[0].mxu0
      %v1244 = vpop.f32.mrb[0].mxu0
      %v1245 = vadd.f32 0.0, %v1244
      %v1246 = vpop.f32.mrb[0].mxu0
      %1247 = vdwg.mxu0
      %v1248 = vadd.f32 %v1187, %v1242
      %v1249 = vadd.f32 %v1188, %v1245
      %1250 = vrot.lane.b32.xlu0 %v1004, 117
      %v1251 = vpop.permute.xlu0 %1250
      %1252 = vrot.lane.b32.xlu0 %v1005, 117
      %v1253 = vpop.permute.xlu0 %1252
      %1254 = vrot.lane.b32.xlu0 %v1006, 117
      %v1255 = vpop.permute.xlu0 %1254
      %1256 = vrot.lane.b32.xlu0 %v1007, 117
      %v1257 = vpop.permute.xlu0 %1256
      %1258 = vrot.lane.b32.xlu0 %v1008, 117
      %v1259 = vpop.permute.xlu0 %1258
      %1260 = vrot.lane.b32.xlu0 %v1009, 117
      %v1261 = vpop.permute.xlu0 %1260
      %v1262 = vsel %vm607, %v1251, %v1253
      %v1263 = vsel %vm607, %v1255, %v1257
      %v1264 = vsel %vm607, %v1259, %v1261
      %1268 = vmatprep.subr.bf16.mxu0 0
      %1269 = vmatpush1.bf16.msra.mxu0 %v1262
      %1270 = vmatprep.subr.bf16.mxu0 0
      %1271 = vmatpush1.bf16.msra.mxu0 %v1263
      %1272 = vmatprep.subr.bf16.mxu0 0
      %1273 = vmatpush1.bf16.msra.mxu0 %v1264
      %1274 = vmatprep.subr.bf16.mxu0 0
      %1275 = vmatpush1.bf16.msra.mxu0 0
      %1276 = vmatprep.subr.bf16.mxu0 0
      %1277 = vmatpush1.bf16.msra.mxu0 0
      %1278 = vmatprep.subr.bf16.mxu0 0
      %1279 = vmatpush1.bf16.msra.mxu0 0
      %1280 = vmatprep.subr.bf16.mxu0 0
      %1281 = vmatpush1.bf16.msra.mxu0 0
      %1282 = vmatprep.subr.bf16.mxu0 0
      %1283 = vmatpush1.bf16.msra.mxu0 0
      %1284 = vmatprep.subr.bf16.mxu0 0
      %1285 = vmatpush1.bf16.msra.mxu0 0
      %1286 = vmatprep.subr.bf16.mxu0 0
      %1287 = vmatpush1.bf16.msra.mxu0 0
      %1288 = vmatprep.subr.bf16.mxu0 0
      %1289 = vmatpush1.bf16.msra.mxu0 0
      %1290 = vmatprep.subr.bf16.mxu0 0
      %1291 = vmatpush1.bf16.msra.mxu0 0
      %1292 = vmatprep.subr.bf16.mxu0 0
      %1293 = vmatpush1.bf16.msra.mxu0 0
      %1294 = vmatprep.subr.bf16.mxu0 0
      %1295 = vmatpush1.bf16.msra.mxu0 0
      %1296 = vmatprep.subr.bf16.mxu0 0
      %1297 = vmatpush1.bf16.msra.mxu0 0
      %1298 = vmatprep.subr.bf16.mxu0 0
      %1299 = vmatpush1.bf16.msra.mxu0 0
      %1300 = vmatprep.mubr.bf16.mxu0 0
      %1301 = vmatmul.mubr.bf16.gmra.mrb[0].mxu0 %v615
      %v1302 = vpop.f32.mrb[0].mxu0
      %v1303 = vadd.f32 0.0, %v1302
      %v1304 = vpop.f32.mrb[0].mxu0
      %v1305 = vpop.f32.mrb[0].mxu0
      %v1306 = vadd.f32 0.0, %v1305
      %v1307 = vpop.f32.mrb[0].mxu0
      %1308 = vdwg.mxu0
      %v1309 = vadd.f32 %v1248, %v1303
      %v1310 = vadd.f32 %v1249, %v1306
      %1311 = vrot.lane.b32.xlu0 %v1004, 116
      %v1312 = vpop.permute.xlu0 %1311
      %1313 = vrot.lane.b32.xlu0 %v1005, 116
      %v1314 = vpop.permute.xlu0 %1313
      %1315 = vrot.lane.b32.xlu0 %v1006, 116
      %v1316 = vpop.permute.xlu0 %1315
      %1317 = vrot.lane.b32.xlu0 %v1007, 116
      %v1318 = vpop.permute.xlu0 %1317
      %1319 = vrot.lane.b32.xlu0 %v1008, 116
      %v1320 = vpop.permute.xlu0 %1319
      %1321 = vrot.lane.b32.xlu0 %v1009, 116
      %v1322 = vpop.permute.xlu0 %1321
      %v1323 = vsel %vm677, %v1312, %v1314
      %v1324 = vsel %vm677, %v1316, %v1318
      %v1325 = vsel %vm677, %v1320, %v1322
      %1329 = vmatprep.subr.bf16.mxu0 0
      %1330 = vmatpush1.bf16.msra.mxu0 %v1323
      %1331 = vmatprep.subr.bf16.mxu0 0
      %1332 = vmatpush1.bf16.msra.mxu0 %v1324
      %1333 = vmatprep.subr.bf16.mxu0 0
      %1334 = vmatpush1.bf16.msra.mxu0 %v1325
      %1335 = vmatprep.subr.bf16.mxu0 0
      %1336 = vmatpush1.bf16.msra.mxu0 0
      %1337 = vmatprep.subr.bf16.mxu0 0
      %1338 = vmatpush1.bf16.msra.mxu0 0
      %1339 = vmatprep.subr.bf16.mxu0 0
      %1340 = vmatpush1.bf16.msra.mxu0 0
      %1341 = vmatprep.subr.bf16.mxu0 0
      %1342 = vmatpush1.bf16.msra.mxu0 0
      %1343 = vmatprep.subr.bf16.mxu0 0
      %1344 = vmatpush1.bf16.msra.mxu0 0
      %1345 = vmatprep.subr.bf16.mxu0 0
      %1346 = vmatpush1.bf16.msra.mxu0 0
      %1347 = vmatprep.subr.bf16.mxu0 0
      %1348 = vmatpush1.bf16.msra.mxu0 0
      %1349 = vmatprep.subr.bf16.mxu0 0
      %1350 = vmatpush1.bf16.msra.mxu0 0
      %1351 = vmatprep.subr.bf16.mxu0 0
      %1352 = vmatpush1.bf16.msra.mxu0 0
      %1353 = vmatprep.subr.bf16.mxu0 0
      %1354 = vmatpush1.bf16.msra.mxu0 0
      %1355 = vmatprep.subr.bf16.mxu0 0
      %1356 = vmatpush1.bf16.msra.mxu0 0
      %1357 = vmatprep.subr.bf16.mxu0 0
      %1358 = vmatpush1.bf16.msra.mxu0 0
      %1359 = vmatprep.subr.bf16.mxu0 0
      %1360 = vmatpush1.bf16.msra.mxu0 0
      %1361 = vmatprep.mubr.bf16.mxu0 0
      %1362 = vmatmul.mubr.bf16.gmra.mrb[0].mxu0 %v685
      %v1363 = vpop.f32.mrb[0].mxu0
      %v1364 = vadd.f32 0.0, %v1363
      %v1365 = vpop.f32.mrb[0].mxu0
      %v1366 = vpop.f32.mrb[0].mxu0
      %v1367 = vadd.f32 0.0, %v1366
      %v1368 = vpop.f32.mrb[0].mxu0
      %1369 = vdwg.mxu0
      %v1370 = vadd.f32 %v1309, %v1364
      %v1371 = vadd.f32 %v1310, %v1367
      %1372 = vrot.lane.b32.xlu0 %v1004, 108
      %v1373 = vpop.permute.xlu0 %1372
      %1374 = vrot.lane.b32.xlu0 %v1005, 108
      %v1375 = vpop.permute.xlu0 %1374
      %1376 = vrot.lane.b32.xlu0 %v1006, 108
      %v1377 = vpop.permute.xlu0 %1376
      %1378 = vrot.lane.b32.xlu0 %v1007, 108
      %v1379 = vpop.permute.xlu0 %1378
      %1380 = vrot.lane.b32.xlu0 %v1008, 108
      %v1381 = vpop.permute.xlu0 %1380
      %1382 = vrot.lane.b32.xlu0 %v1009, 108
      %v1383 = vpop.permute.xlu0 %1382
      %v1384 = vsel %vm747, %v1373, %v1375
      %v1385 = vsel %vm747, %v1377, %v1379
      %v1386 = vsel %vm747, %v1381, %v1383
      %1390 = vmatprep.subr.bf16.mxu0 0
      %1391 = vmatpush1.bf16.msra.mxu0 %v1384
      %1392 = vmatprep.subr.bf16.mxu0 0
      %1393 = vmatpush1.bf16.msra.mxu0 %v1385
      %1394 = vmatprep.subr.bf16.mxu0 0
      %1395 = vmatpush1.bf16.msra.mxu0 %v1386
      %1396 = vmatprep.subr.bf16.mxu0 0
      %1397 = vmatpush1.bf16.msra.mxu0 0
      %1398 = vmatprep.subr.bf16.mxu0 0
      %1399 = vmatpush1.bf16.msra.mxu0 0
      %1400 = vmatprep.subr.bf16.mxu0 0
      %1401 = vmatpush1.bf16.msra.mxu0 0
      %1402 = vmatprep.subr.bf16.mxu0 0
      %1403 = vmatpush1.bf16.msra.mxu0 0
      %1404 = vmatprep.subr.bf16.mxu0 0
      %1405 = vmatpush1.bf16.msra.mxu0 0
      %1406 = vmatprep.subr.bf16.mxu0 0
      %1407 = vmatpush1.bf16.msra.mxu0 0
      %1408 = vmatprep.subr.bf16.mxu0 0
      %1409 = vmatpush1.bf16.msra.mxu0 0
      %1410 = vmatprep.subr.bf16.mxu0 0
      %1411 = vmatpush1.bf16.msra.mxu0 0
      %1412 = vmatprep.subr.bf16.mxu0 0
      %1413 = vmatpush1.bf16.msra.mxu0 0
      %1414 = vmatprep.subr.bf16.mxu0 0
      %1415 = vmatpush1.bf16.msra.mxu0 0
      %1416 = vmatprep.subr.bf16.mxu0 0
      %1417 = vmatpush1.bf16.msra.mxu0 0
      %1418 = vmatprep.subr.bf16.mxu0 0
      %1419 = vmatpush1.bf16.msra.mxu0 0
      %1420 = vmatprep.subr.bf16.mxu0 0
      %1421 = vmatpush1.bf16.msra.mxu0 0
      %1422 = vmatprep.mubr.bf16.mxu0 0
      %1423 = vmatmul.mubr.bf16.gmra.mrb[0].mxu0 %v755
      %v1424 = vpop.f32.mrb[0].mxu0
      %v1425 = vadd.f32 0.0, %v1424
      %v1426 = vpop.f32.mrb[0].mxu0
      %v1427 = vpop.f32.mrb[0].mxu0
      %v1428 = vadd.f32 0.0, %v1427
      %v1429 = vpop.f32.mrb[0].mxu0
      %1430 = vdwg.mxu0
      %v1431 = vadd.f32 %v1370, %v1425
      %v1432 = vadd.f32 %v1371, %v1428
      %1433 = vrot.lane.b32.xlu0 %v1004, 107
      %v1434 = vpop.permute.xlu0 %1433
      %1435 = vrot.lane.b32.xlu0 %v1005, 107
      %v1436 = vpop.permute.xlu0 %1435
      %1437 = vrot.lane.b32.xlu0 %v1006, 107
      %v1438 = vpop.permute.xlu0 %1437
      %1439 = vrot.lane.b32.xlu0 %v1007, 107
      %v1440 = vpop.permute.xlu0 %1439
      %1441 = vrot.lane.b32.xlu0 %v1008, 107
      %v1442 = vpop.permute.xlu0 %1441
      %1443 = vrot.lane.b32.xlu0 %v1009, 107
      %v1444 = vpop.permute.xlu0 %1443
      %v1445 = vsel %vm817, %v1434, %v1436
      %v1446 = vsel %vm817, %v1438, %v1440
      %v1447 = vsel %vm817, %v1442, %v1444
      %1451 = vmatprep.subr.bf16.mxu0 0
      %1452 = vmatpush1.bf16.msra.mxu0 %v1445
      %1453 = vmatprep.subr.bf16.mxu0 0
      %1454 = vmatpush1.bf16.msra.mxu0 %v1446
      %1455 = vmatprep.subr.bf16.mxu0 0
      %1456 = vmatpush1.bf16.msra.mxu0 %v1447
      %1457 = vmatprep.subr.bf16.mxu0 0
      %1458 = vmatpush1.bf16.msra.mxu0 0
      %1459 = vmatprep.subr.bf16.mxu0 0
      %1460 = vmatpush1.bf16.msra.mxu0 0
      %1461 = vmatprep.subr.bf16.mxu0 0
      %1462 = vmatpush1.bf16.msra.mxu0 0
      %1463 = vmatprep.subr.bf16.mxu0 0
      %1464 = vmatpush1.bf16.msra.mxu0 0
      %1465 = vmatprep.subr.bf16.mxu0 0
      %1466 = vmatpush1.bf16.msra.mxu0 0
      %1467 = vmatprep.subr.bf16.mxu0 0
      %1468 = vmatpush1.bf16.msra.mxu0 0
      %1469 = vmatprep.subr.bf16.mxu0 0
      %1470 = vmatpush1.bf16.msra.mxu0 0
      %1471 = vmatprep.subr.bf16.mxu0 0
      %1472 = vmatpush1.bf16.msra.mxu0 0
      %1473 = vmatprep.subr.bf16.mxu0 0
      %1474 = vmatpush1.bf16.msra.mxu0 0
      %1475 = vmatprep.subr.bf16.mxu0 0
      %1476 = vmatpush1.bf16.msra.mxu0 0
      %1477 = vmatprep.subr.bf16.mxu0 0
      %1478 = vmatpush1.bf16.msra.mxu0 0
      %1479 = vmatprep.subr.bf16.mxu0 0
      %1480 = vmatpush1.bf16.msra.mxu0 0
      %1481 = vmatprep.subr.bf16.mxu0 0
      %1482 = vmatpush1.bf16.msra.mxu0 0
      %1483 = vmatprep.mubr.bf16.mxu0 0
      %1484 = vmatmul.mubr.bf16.gmra.mrb[0].mxu0 %v825
      %v1485 = vpop.f32.mrb[0].mxu0
      %v1486 = vadd.f32 0.0, %v1485
      %v1487 = vpop.f32.mrb[0].mxu0
      %v1488 = vpop.f32.mrb[0].mxu0
      %v1489 = vadd.f32 0.0, %v1488
      %v1490 = vpop.f32.mrb[0].mxu0
      %1491 = vdwg.mxu0
      %v1492 = vadd.f32 %v1431, %v1486
      %v1493 = vadd.f32 %v1432, %v1489
      %1494 = vrot.lane.b32.xlu0 %v1004, 106
      %v1495 = vpop.permute.xlu0 %1494
      %1496 = vrot.lane.b32.xlu0 %v1005, 106
      %v1497 = vpop.permute.xlu0 %1496
      %1498 = vrot.lane.b32.xlu0 %v1006, 106
      %v1499 = vpop.permute.xlu0 %1498
      %1500 = vrot.lane.b32.xlu0 %v1007, 106
      %v1501 = vpop.permute.xlu0 %1500
      %1502 = vrot.lane.b32.xlu0 %v1008, 106
      %v1503 = vpop.permute.xlu0 %1502
      %1504 = vrot.lane.b32.xlu0 %v1009, 106
      %v1505 = vpop.permute.xlu0 %1504
      %v1506 = vsel %vm887, %v1495, %v1497
      %v1507 = vsel %vm887, %v1499, %v1501
      %v1508 = vsel %vm887, %v1503, %v1505
      %1512 = vmatprep.subr.bf16.mxu0 0
      %1513 = vmatpush1.bf16.msra.mxu0 %v1506
      %1514 = vmatprep.subr.bf16.mxu0 0
      %1515 = vmatpush1.bf16.msra.mxu0 %v1507
      %1516 = vmatprep.subr.bf16.mxu0 0
      %1517 = vmatpush1.bf16.msra.mxu0 %v1508
      %1518 = vmatprep.subr.bf16.mxu0 0
      %1519 = vmatpush1.bf16.msra.mxu0 0
      %1520 = vmatprep.subr.bf16.mxu0 0
      %1521 = vmatpush1.bf16.msra.mxu0 0
      %1522 = vmatprep.subr.bf16.mxu0 0
      %1523 = vmatpush1.bf16.msra.mxu0 0
      %1524 = vmatprep.subr.bf16.mxu0 0
      %1525 = vmatpush1.bf16.msra.mxu0 0
      %1526 = vmatprep.subr.bf16.mxu0 0
      %1527 = vmatpush1.bf16.msra.mxu0 0
      %1528 = vmatprep.subr.bf16.mxu0 0
      %1529 = vmatpush1.bf16.msra.mxu0 0
      %1530 = vmatprep.subr.bf16.mxu0 0
      %1531 = vmatpush1.bf16.msra.mxu0 0
      %1532 = vmatprep.subr.bf16.mxu0 0
      %1533 = vmatpush1.bf16.msra.mxu0 0
      %1534 = vmatprep.subr.bf16.mxu0 0
      %1535 = vmatpush1.bf16.msra.mxu0 0
      %1536 = vmatprep.subr.bf16.mxu0 0
      %1537 = vmatpush1.bf16.msra.mxu0 0
      %1538 = vmatprep.subr.bf16.mxu0 0
      %1539 = vmatpush1.bf16.msra.mxu0 0
      %1540 = vmatprep.subr.bf16.mxu0 0
      %1541 = vmatpush1.bf16.msra.mxu0 0
      %1542 = vmatprep.subr.bf16.mxu0 0
      %1543 = vmatpush1.bf16.msra.mxu0 0
      %1544 = vmatprep.mubr.bf16.mxu0 0
      %1545 = vmatmul.mubr.bf16.gmra.mrb[0].mxu0 %v895
      %v1546 = vpop.f32.mrb[0].mxu0
      %v1547 = vadd.f32 0.0, %v1546
      %v1548 = vpop.f32.mrb[0].mxu0
      %v1549 = vpop.f32.mrb[0].mxu0
      %v1550 = vadd.f32 0.0, %v1549
      %v1551 = vpop.f32.mrb[0].mxu0
      %1552 = vdwg.mxu0
      %v1553 = vadd.f32 %v1492, %v1547
      %v1554 = vadd.f32 %v1493, %v1550
      %v1555 = vpack.c.bf16 %v1554, %v1553
      %v1557 = vunpack.c.l.b16 %v1555
      %v1558 = vunpack.c.h.b16 %v1555
      %v1559 = vpack.c.b16 %v1557, %v1557
      %v1560 = vpack.c.b16 %v1558, %v1558
      %s1563 = scalar_lea.vmem %s229, 8
      %1564 = vst [vmem:[%s1563] sm:$0xf] %v1559
      %1565 = vst [vmem:[%s1563 + $0x4] sm:$0xf] %v1560
      %v1566 = vunpack.c.l.bf16 %v1555
      %v1567 = vunpack.c.h.bf16 %v1555
      %v1568 = vmul.f32 %v1566, %v956
      %v1569 = vmul.f32 %v1567, %v956
      %v1570 = vadd.f32 %v960, %v1568
      %v1571 = vadd.f32 %v961, %v1569
      %v1572 = vmul.f32 %v1568, %v1566
      %v1573 = vmul.f32 %v1569, %v1567
      %v1574 = vadd.f32 %v964, %v1572
      %v1575 = vadd.f32 %v965, %v1573
      %s1576 = sadd.s32 %s966, 2
      %s1577 = smul.u32 %s1576, 16
      %s1578 = sshra.s32 %s1577, 3
      %s1579 = sand.u32 %s1577, 7
      %s1580 = smul.u32 %s1578, 2
      %s1581 = smul.addr %s1580, 4
      %s1582 = scalar_lea.vmem %s219, %s1581
      %v1583 = vld [vmem:[%s1582] sm:$0xf]
      %v1584 = vld [vmem:[%s1582 + $0x8] sm:$0xf]
      %v1585 = vld [vmem:[%s1582 + $0x10] sm:$0xf]
      %v1586 = vld [vmem:[%s1582 + $0x18] sm:$0xf]
      %v1587 = vld [vmem:[%s1582 + $0x20] sm:$0xf]
      %v1588 = vld [vmem:[%s1582 + $0x28] sm:$0xf]
      %v1589 = vld [vmem:[%s1582] sm:$0xff]
      %v1590 = vld [vmem:[%s1582 + $0x8] sm:$0xff]
      %v1591 = vld [vmem:[%s1582 + $0x10] sm:$0xff]
      %v1592 = vld [vmem:[%s1582 + $0x18] sm:$0xff]
      %v1593 = vld [vmem:[%s1582 + $0x20] sm:$0xff]
      %v1594 = vld [vmem:[%s1582 + $0x28] sm:$0xff]
      %v1601 = vunpack.c.l.b16 %v1589
      %v1602 = vunpack.c.h.b16 %v1589
      %v1603 = vunpack.c.l.b16 %v1590
      %v1604 = vunpack.c.h.b16 %v1590
      %v1605 = vunpack.c.l.b16 %v1591
      %v1606 = vunpack.c.h.b16 %v1591
      %v1607 = vunpack.c.l.b16 %v1592
      %v1608 = vunpack.c.h.b16 %v1592
      %v1609 = vunpack.c.l.b16 %v1593
      %v1610 = vunpack.c.h.b16 %v1593
      %v1611 = vunpack.c.l.b16 %v1594
      %v1612 = vunpack.c.h.b16 %v1594
      %v1613 = vpack.c.b16 %v1603, %v1601
      %v1614 = vpack.c.b16 %v1604, %v1602
      %v1615 = vpack.c.b16 %v1607, %v1605
      %v1616 = vpack.c.b16 %v1608, %v1606
      %v1617 = vpack.c.b16 %v1611, %v1609
      %v1618 = vpack.c.b16 %v1612, %v1610
      %1619 = vrot.lane.b32.xlu0 %v1613, 127
      %v1620 = vpop.permute.xlu0 %1619
      %1621 = vrot.lane.b32.xlu0 %v1614, 127
      %v1622 = vpop.permute.xlu0 %1621
      %1623 = vrot.lane.b32.xlu0 %v1615, 127
      %v1624 = vpop.permute.xlu0 %1623
      %1625 = vrot.lane.b32.xlu0 %v1616, 127
      %v1626 = vpop.permute.xlu0 %1625
      %1627 = vrot.lane.b32.xlu0 %v1617, 127
      %v1628 = vpop.permute.xlu0 %1627
      %1629 = vrot.lane.b32.xlu0 %v1618, 127
      %v1630 = vpop.permute.xlu0 %1629
      %v1631 = vsel %vm331, %v1620, %v1622
      %v1632 = vsel %vm331, %v1624, %v1626
      %v1633 = vsel %vm331, %v1628, %v1630
      %1637 = vmatprep.subr.bf16.mxu0 0
      %1638 = vmatpush1.bf16.msra.mxu0 %v1631
      %1639 = vmatprep.subr.bf16.mxu0 0
      %1640 = vmatpush1.bf16.msra.mxu0 %v1632
      %1641 = vmatprep.subr.bf16.mxu0 0
      %1642 = vmatpush1.bf16.msra.mxu0 %v1633
      %1643 = vmatprep.subr.bf16.mxu0 0
      %1644 = vmatpush1.bf16.msra.mxu0 0
      %1645 = vmatprep.subr.bf16.mxu0 0
      %1646 = vmatpush1.bf16.msra.mxu0 0
      %1647 = vmatprep.subr.bf16.mxu0 0
      %1648 = vmatpush1.bf16.msra.mxu0 0
      %1649 = vmatprep.subr.bf16.mxu0 0
      %1650 = vmatpush1.bf16.msra.mxu0 0
      %1651 = vmatprep.subr.bf16.mxu0 0
      %1652 = vmatpush1.bf16.msra.mxu0 0
      %1653 = vmatprep.subr.bf16.mxu0 0
      %1654 = vmatpush1.bf16.msra.mxu0 0
      %1655 = vmatprep.subr.bf16.mxu0 0
      %1656 = vmatpush1.bf16.msra.mxu0 0
      %1657 = vmatprep.subr.bf16.mxu0 0
      %1658 = vmatpush1.bf16.msra.mxu0 0
      %1659 = vmatprep.subr.bf16.mxu0 0
      %1660 = vmatpush1.bf16.msra.mxu0 0
      %1661 = vmatprep.subr.bf16.mxu0 0
      %1662 = vmatpush1.bf16.msra.mxu0 0
      %1663 = vmatprep.subr.bf16.mxu0 0
      %1664 = vmatpush1.bf16.msra.mxu0 0
      %1665 = vmatprep.subr.bf16.mxu0 0
      %1666 = vmatpush1.bf16.msra.mxu0 0
      %1667 = vmatprep.subr.bf16.mxu0 0
      %1668 = vmatpush1.bf16.msra.mxu0 0
      %1669 = vmatprep.mubr.bf16.mxu0 0
      %1670 = vmatmul.mubr.bf16.gmra.mrb[0].mxu0 %v340
      %v1671 = vpop.f32.mrb[0].mxu0
      %v1672 = vadd.f32 0.0, %v1671
      %v1673 = vpop.f32.mrb[0].mxu0
      %v1674 = vpop.f32.mrb[0].mxu0
      %v1675 = vadd.f32 0.0, %v1674
      %v1676 = vpop.f32.mrb[0].mxu0
      %1677 = vdwg.mxu0
      %v1684 = vunpack.c.l.b16 %v1583
      %v1685 = vunpack.c.l.b16 %v1584
      %v1686 = vunpack.c.l.b16 %v1585
      %v1687 = vunpack.c.l.b16 %v1586
      %v1688 = vunpack.c.l.b16 %v1587
      %v1689 = vunpack.c.l.b16 %v1588
      %v1690 = vpack.c.b16 %v1685, %v1684
      %v1691 = vpack.c.b16 %v1687, %v1686
      %v1692 = vpack.c.b16 %v1689, %v1688
      %1696 = vmatprep.subr.bf16.mxu0 0
      %1697 = vmatpush1.bf16.msra.mxu0 %v1690
      %1698 = vmatprep.subr.bf16.mxu0 0
      %1699 = vmatpush1.bf16.msra.mxu0 %v1691
      %1700 = vmatprep.subr.bf16.mxu0 0
      %1701 = vmatpush1.bf16.msra.mxu0 %v1692
      %1702 = vmatprep.subr.bf16.mxu0 0
      %1703 = vmatpush1.bf16.msra.mxu0 0
      %1704 = vmatprep.subr.bf16.mxu0 0
      %1705 = vmatpush1.bf16.msra.mxu0 0
      %1706 = vmatprep.subr.bf16.mxu0 0
      %1707 = vmatpush1.bf16.msra.mxu0 0
      %1708 = vmatprep.subr.bf16.mxu0 0
      %1709 = vmatpush1.bf16.msra.mxu0 0
      %1710 = vmatprep.subr.bf16.mxu0 0
      %1711 = vmatpush1.bf16.msra.mxu0 0
      %1712 = vmatprep.subr.bf16.mxu0 0
      %1713 = vmatpush1.bf16.msra.mxu0 0
      %1714 = vmatprep.subr.bf16.mxu0 0
      %1715 = vmatpush1.bf16.msra.mxu0 0
      %1716 = vmatprep.subr.bf16.mxu0 0
      %1717 = vmatpush1.bf16.msra.mxu0 0
      %1718 = vmatprep.subr.bf16.mxu0 0
      %1719 = vmatpush1.bf16.msra.mxu0 0
      %1720 = vmatprep.subr.bf16.mxu0 0
      %1721 = vmatpush1.bf16.msra.mxu0 0
      %1722 = vmatprep.subr.bf16.mxu0 0
      %1723 = vmatpush1.bf16.msra.mxu0 0
      %1724 = vmatprep.subr.bf16.mxu0 0
      %1725 = vmatpush1.bf16.msra.mxu0 0
      %1726 = vmatprep.subr.bf16.mxu0 0
      %1727 = vmatpush1.bf16.msra.mxu0 0
      %1728 = vmatprep.mubr.bf16.mxu0 0
      %1729 = vmatmul.mubr.bf16.gmra.mrb[0].mxu0 %v407
      %v1730 = vpop.f32.mrb[0].mxu0
      %v1731 = vadd.f32 %v1672, %v1730
      %v1732 = vpop.f32.mrb[0].mxu0
      %v1733 = vpop.f32.mrb[0].mxu0
      %v1734 = vadd.f32 %v1675, %v1733
      %v1735 = vpop.f32.mrb[0].mxu0
      %1736 = vdwg.mxu0
      %1737 = vrot.lane.b32.xlu0 %v1613, 126
      %v1738 = vpop.permute.xlu0 %1737
      %1739 = vrot.lane.b32.xlu0 %v1614, 126
      %v1740 = vpop.permute.xlu0 %1739
      %1741 = vrot.lane.b32.xlu0 %v1615, 126
      %v1742 = vpop.permute.xlu0 %1741
      %1743 = vrot.lane.b32.xlu0 %v1616, 126
      %v1744 = vpop.permute.xlu0 %1743
      %1745 = vrot.lane.b32.xlu0 %v1617, 126
      %v1746 = vpop.permute.xlu0 %1745
      %1747 = vrot.lane.b32.xlu0 %v1618, 126
      %v1748 = vpop.permute.xlu0 %1747
      %v1749 = vsel %vm467, %v1738, %v1740
      %v1750 = vsel %vm467, %v1742, %v1744
      %v1751 = vsel %vm467, %v1746, %v1748
      %1755 = vmatprep.subr.bf16.mxu0 0
      %1756 = vmatpush1.bf16.msra.mxu0 %v1749
      %1757 = vmatprep.subr.bf16.mxu0 0
      %1758 = vmatpush1.bf16.msra.mxu0 %v1750
      %1759 = vmatprep.subr.bf16.mxu0 0
      %1760 = vmatpush1.bf16.msra.mxu0 %v1751
      %1761 = vmatprep.subr.bf16.mxu0 0
      %1762 = vmatpush1.bf16.msra.mxu0 0
      %1763 = vmatprep.subr.bf16.mxu0 0
      %1764 = vmatpush1.bf16.msra.mxu0 0
      %1765 = vmatprep.subr.bf16.mxu0 0
      %1766 = vmatpush1.bf16.msra.mxu0 0
      %1767 = vmatprep.subr.bf16.mxu0 0
      %1768 = vmatpush1.bf16.msra.mxu0 0
      %1769 = vmatprep.subr.bf16.mxu0 0
      %1770 = vmatpush1.bf16.msra.mxu0 0
      %1771 = vmatprep.subr.bf16.mxu0 0
      %1772 = vmatpush1.bf16.msra.mxu0 0
      %1773 = vmatprep.subr.bf16.mxu0 0
      %1774 = vmatpush1.bf16.msra.mxu0 0
      %1775 = vmatprep.subr.bf16.mxu0 0
      %1776 = vmatpush1.bf16.msra.mxu0 0
      %1777 = vmatprep.subr.bf16.mxu0 0
      %1778 = vmatpush1.bf16.msra.mxu0 0
      %1779 = vmatprep.subr.bf16.mxu0 0
      %1780 = vmatpush1.bf16.msra.mxu0 0
      %1781 = vmatprep.subr.bf16.mxu0 0
      %1782 = vmatpush1.bf16.msra.mxu0 0
      %1783 = vmatprep.subr.bf16.mxu0 0
      %1784 = vmatpush1.bf16.msra.mxu0 0
      %1785 = vmatprep.subr.bf16.mxu0 0
      %1786 = vmatpush1.bf16.msra.mxu0 0
      %1787 = vmatprep.mubr.bf16.mxu0 0
      %1788 = vmatmul.mubr.bf16.gmra.mrb[0].mxu0 %v475
      %v1789 = vpop.f32.mrb[0].mxu0
      %v1790 = vadd.f32 0.0, %v1789
      %v1791 = vpop.f32.mrb[0].mxu0
      %v1792 = vpop.f32.mrb[0].mxu0
      %v1793 = vadd.f32 0.0, %v1792
      %v1794 = vpop.f32.mrb[0].mxu0
      %1795 = vdwg.mxu0
      %v1796 = vadd.f32 %v1731, %v1790
      %v1797 = vadd.f32 %v1734, %v1793
      %1798 = vrot.lane.b32.xlu0 %v1613, 118
      %v1799 = vpop.permute.xlu0 %1798
      %1800 = vrot.lane.b32.xlu0 %v1614, 118
      %v1801 = vpop.permute.xlu0 %1800
      %1802 = vrot.lane.b32.xlu0 %v1615, 118
      %v1803 = vpop.permute.xlu0 %1802
      %1804 = vrot.lane.b32.xlu0 %v1616, 118
      %v1805 = vpop.permute.xlu0 %1804
      %1806 = vrot.lane.b32.xlu0 %v1617, 118
      %v1807 = vpop.permute.xlu0 %1806
      %1808 = vrot.lane.b32.xlu0 %v1618, 118
      %v1809 = vpop.permute.xlu0 %1808
      %v1810 = vsel %vm537, %v1799, %v1801
      %v1811 = vsel %vm537, %v1803, %v1805
      %v1812 = vsel %vm537, %v1807, %v1809
      %1816 = vmatprep.subr.bf16.mxu0 0
      %1817 = vmatpush1.bf16.msra.mxu0 %v1810
      %1818 = vmatprep.subr.bf16.mxu0 0
      %1819 = vmatpush1.bf16.msra.mxu0 %v1811
      %1820 = vmatprep.subr.bf16.mxu0 0
      %1821 = vmatpush1.bf16.msra.mxu0 %v1812
      %1822 = vmatprep.subr.bf16.mxu0 0
      %1823 = vmatpush1.bf16.msra.mxu0 0
      %1824 = vmatprep.subr.bf16.mxu0 0
      %1825 = vmatpush1.bf16.msra.mxu0 0
      %1826 = vmatprep.subr.bf16.mxu0 0
      %1827 = vmatpush1.bf16.msra.mxu0 0
      %1828 = vmatprep.subr.bf16.mxu0 0
      %1829 = vmatpush1.bf16.msra.mxu0 0
      %1830 = vmatprep.subr.bf16.mxu0 0
      %1831 = vmatpush1.bf16.msra.mxu0 0
      %1832 = vmatprep.subr.bf16.mxu0 0
      %1833 = vmatpush1.bf16.msra.mxu0 0
      %1834 = vmatprep.subr.bf16.mxu0 0
      %1835 = vmatpush1.bf16.msra.mxu0 0
      %1836 = vmatprep.subr.bf16.mxu0 0
      %1837 = vmatpush1.bf16.msra.mxu0 0
      %1838 = vmatprep.subr.bf16.mxu0 0
      %1839 = vmatpush1.bf16.msra.mxu0 0
      %1840 = vmatprep.subr.bf16.mxu0 0
      %1841 = vmatpush1.bf16.msra.mxu0 0
      %1842 = vmatprep.subr.bf16.mxu0 0
      %1843 = vmatpush1.bf16.msra.mxu0 0
      %1844 = vmatprep.subr.bf16.mxu0 0
      %1845 = vmatpush1.bf16.msra.mxu0 0
      %1846 = vmatprep.subr.bf16.mxu0 0
      %1847 = vmatpush1.bf16.msra.mxu0 0
      %1848 = vmatprep.mubr.bf16.mxu0 0
      %1849 = vmatmul.mubr.bf16.gmra.mrb[0].mxu0 %v545
      %v1850 = vpop.f32.mrb[0].mxu0
      %v1851 = vadd.f32 0.0, %v1850
      %v1852 = vpop.f32.mrb[0].mxu0
      %v1853 = vpop.f32.mrb[0].mxu0
      %v1854 = vadd.f32 0.0, %v1853
      %v1855 = vpop.f32.mrb[0].mxu0
      %1856 = vdwg.mxu0
      %v1857 = vadd.f32 %v1796, %v1851
      %v1858 = vadd.f32 %v1797, %v1854
      %1859 = vrot.lane.b32.xlu0 %v1613, 117
      %v1860 = vpop.permute.xlu0 %1859
      %1861 = vrot.lane.b32.xlu0 %v1614, 117
      %v1862 = vpop.permute.xlu0 %1861
      %1863 = vrot.lane.b32.xlu0 %v1615, 117
      %v1864 = vpop.permute.xlu0 %1863
      %1865 = vrot.lane.b32.xlu0 %v1616, 117
      %v1866 = vpop.permute.xlu0 %1865
      %1867 = vrot.lane.b32.xlu0 %v1617, 117
      %v1868 = vpop.permute.xlu0 %1867
      %1869 = vrot.lane.b32.xlu0 %v1618, 117
      %v1870 = vpop.permute.xlu0 %1869
      %v1871 = vsel %vm607, %v1860, %v1862
      %v1872 = vsel %vm607, %v1864, %v1866
      %v1873 = vsel %vm607, %v1868, %v1870
      %1877 = vmatprep.subr.bf16.mxu0 0
      %1878 = vmatpush1.bf16.msra.mxu0 %v1871
      %1879 = vmatprep.subr.bf16.mxu0 0
      %1880 = vmatpush1.bf16.msra.mxu0 %v1872
      %1881 = vmatprep.subr.bf16.mxu0 0
      %1882 = vmatpush1.bf16.msra.mxu0 %v1873
      %1883 = vmatprep.subr.bf16.mxu0 0
      %1884 = vmatpush1.bf16.msra.mxu0 0
      %1885 = vmatprep.subr.bf16.mxu0 0
      %1886 = vmatpush1.bf16.msra.mxu0 0
      %1887 = vmatprep.subr.bf16.mxu0 0
      %1888 = vmatpush1.bf16.msra.mxu0 0
      %1889 = vmatprep.subr.bf16.mxu0 0
      %1890 = vmatpush1.bf16.msra.mxu0 0
      %1891 = vmatprep.subr.bf16.mxu0 0
      %1892 = vmatpush1.bf16.msra.mxu0 0
      %1893 = vmatprep.subr.bf16.mxu0 0
      %1894 = vmatpush1.bf16.msra.mxu0 0
      %1895 = vmatprep.subr.bf16.mxu0 0
      %1896 = vmatpush1.bf16.msra.mxu0 0
      %1897 = vmatprep.subr.bf16.mxu0 0
      %1898 = vmatpush1.bf16.msra.mxu0 0
      %1899 = vmatprep.subr.bf16.mxu0 0
      %1900 = vmatpush1.bf16.msra.mxu0 0
      %1901 = vmatprep.subr.bf16.mxu0 0
      %1902 = vmatpush1.bf16.msra.mxu0 0
      %1903 = vmatprep.subr.bf16.mxu0 0
      %1904 = vmatpush1.bf16.msra.mxu0 0
      %1905 = vmatprep.subr.bf16.mxu0 0
      %1906 = vmatpush1.bf16.msra.mxu0 0
      %1907 = vmatprep.subr.bf16.mxu0 0
      %1908 = vmatpush1.bf16.msra.mxu0 0
      %1909 = vmatprep.mubr.bf16.mxu0 0
      %1910 = vmatmul.mubr.bf16.gmra.mrb[0].mxu0 %v615
      %v1911 = vpop.f32.mrb[0].mxu0
      %v1912 = vadd.f32 0.0, %v1911
      %v1913 = vpop.f32.mrb[0].mxu0
      %v1914 = vpop.f32.mrb[0].mxu0
      %v1915 = vadd.f32 0.0, %v1914
      %v1916 = vpop.f32.mrb[0].mxu0
      %1917 = vdwg.mxu0
      %v1918 = vadd.f32 %v1857, %v1912
      %v1919 = vadd.f32 %v1858, %v1915
      %1920 = vrot.lane.b32.xlu0 %v1613, 116
      %v1921 = vpop.permute.xlu0 %1920
      %1922 = vrot.lane.b32.xlu0 %v1614, 116
      %v1923 = vpop.permute.xlu0 %1922
      %1924 = vrot.lane.b32.xlu0 %v1615, 116
      %v1925 = vpop.permute.xlu0 %1924
      %1926 = vrot.lane.b32.xlu0 %v1616, 116
      %v1927 = vpop.permute.xlu0 %1926
      %1928 = vrot.lane.b32.xlu0 %v1617, 116
      %v1929 = vpop.permute.xlu0 %1928
      %1930 = vrot.lane.b32.xlu0 %v1618, 116
      %v1931 = vpop.permute.xlu0 %1930
      %v1932 = vsel %vm677, %v1921, %v1923
      %v1933 = vsel %vm677, %v1925, %v1927
      %v1934 = vsel %vm677, %v1929, %v1931
      %1938 = vmatprep.subr.bf16.mxu0 0
      %1939 = vmatpush1.bf16.msra.mxu0 %v1932
      %1940 = vmatprep.subr.bf16.mxu0 0
      %1941 = vmatpush1.bf16.msra.mxu0 %v1933
      %1942 = vmatprep.subr.bf16.mxu0 0
      %1943 = vmatpush1.bf16.msra.mxu0 %v1934
      %1944 = vmatprep.subr.bf16.mxu0 0
      %1945 = vmatpush1.bf16.msra.mxu0 0
      %1946 = vmatprep.subr.bf16.mxu0 0
      %1947 = vmatpush1.bf16.msra.mxu0 0
      %1948 = vmatprep.subr.bf16.mxu0 0
      %1949 = vmatpush1.bf16.msra.mxu0 0
      %1950 = vmatprep.subr.bf16.mxu0 0
      %1951 = vmatpush1.bf16.msra.mxu0 0
      %1952 = vmatprep.subr.bf16.mxu0 0
      %1953 = vmatpush1.bf16.msra.mxu0 0
      %1954 = vmatprep.subr.bf16.mxu0 0
      %1955 = vmatpush1.bf16.msra.mxu0 0
      %1956 = vmatprep.subr.bf16.mxu0 0
      %1957 = vmatpush1.bf16.msra.mxu0 0
      %1958 = vmatprep.subr.bf16.mxu0 0
      %1959 = vmatpush1.bf16.msra.mxu0 0
      %1960 = vmatprep.subr.bf16.mxu0 0
      %1961 = vmatpush1.bf16.msra.mxu0 0
      %1962 = vmatprep.subr.bf16.mxu0 0
      %1963 = vmatpush1.bf16.msra.mxu0 0
      %1964 = vmatprep.subr.bf16.mxu0 0
      %1965 = vmatpush1.bf16.msra.mxu0 0
      %1966 = vmatprep.subr.bf16.mxu0 0
      %1967 = vmatpush1.bf16.msra.mxu0 0
      %1968 = vmatprep.subr.bf16.mxu0 0
      %1969 = vmatpush1.bf16.msra.mxu0 0
      %1970 = vmatprep.mubr.bf16.mxu0 0
      %1971 = vmatmul.mubr.bf16.gmra.mrb[0].mxu0 %v685
      %v1972 = vpop.f32.mrb[0].mxu0
      %v1973 = vadd.f32 0.0, %v1972
      %v1974 = vpop.f32.mrb[0].mxu0
      %v1975 = vpop.f32.mrb[0].mxu0
      %v1976 = vadd.f32 0.0, %v1975
      %v1977 = vpop.f32.mrb[0].mxu0
      %1978 = vdwg.mxu0
      %v1979 = vadd.f32 %v1918, %v1973
      %v1980 = vadd.f32 %v1919, %v1976
      %1981 = vrot.lane.b32.xlu0 %v1613, 108
      %v1982 = vpop.permute.xlu0 %1981
      %1983 = vrot.lane.b32.xlu0 %v1614, 108
      %v1984 = vpop.permute.xlu0 %1983
      %1985 = vrot.lane.b32.xlu0 %v1615, 108
      %v1986 = vpop.permute.xlu0 %1985
      %1987 = vrot.lane.b32.xlu0 %v1616, 108
      %v1988 = vpop.permute.xlu0 %1987
      %1989 = vrot.lane.b32.xlu0 %v1617, 108
      %v1990 = vpop.permute.xlu0 %1989
      %1991 = vrot.lane.b32.xlu0 %v1618, 108
      %v1992 = vpop.permute.xlu0 %1991
      %v1993 = vsel %vm747, %v1982, %v1984
      %v1994 = vsel %vm747, %v1986, %v1988
      %v1995 = vsel %vm747, %v1990, %v1992
      %1999 = vmatprep.subr.bf16.mxu0 0
      %2000 = vmatpush1.bf16.msra.mxu0 %v1993
      %2001 = vmatprep.subr.bf16.mxu0 0
      %2002 = vmatpush1.bf16.msra.mxu0 %v1994
      %2003 = vmatprep.subr.bf16.mxu0 0
      %2004 = vmatpush1.bf16.msra.mxu0 %v1995
      %2005 = vmatprep.subr.bf16.mxu0 0
      %2006 = vmatpush1.bf16.msra.mxu0 0
      %2007 = vmatprep.subr.bf16.mxu0 0
      %2008 = vmatpush1.bf16.msra.mxu0 0
      %2009 = vmatprep.subr.bf16.mxu0 0
      %2010 = vmatpush1.bf16.msra.mxu0 0
      %2011 = vmatprep.subr.bf16.mxu0 0
      %2012 = vmatpush1.bf16.msra.mxu0 0
      %2013 = vmatprep.subr.bf16.mxu0 0
      %2014 = vmatpush1.bf16.msra.mxu0 0
      %2015 = vmatprep.subr.bf16.mxu0 0
      %2016 = vmatpush1.bf16.msra.mxu0 0
      %2017 = vmatprep.subr.bf16.mxu0 0
      %2018 = vmatpush1.bf16.msra.mxu0 0
      %2019 = vmatprep.subr.bf16.mxu0 0
      %2020 = vmatpush1.bf16.msra.mxu0 0
      %2021 = vmatprep.subr.bf16.mxu0 0
      %2022 = vmatpush1.bf16.msra.mxu0 0
      %2023 = vmatprep.subr.bf16.mxu0 0
      %2024 = vmatpush1.bf16.msra.mxu0 0
      %2025 = vmatprep.subr.bf16.mxu0 0
      %2026 = vmatpush1.bf16.msra.mxu0 0
      %2027 = vmatprep.subr.bf16.mxu0 0
      %2028 = vmatpush1.bf16.msra.mxu0 0
      %2029 = vmatprep.subr.bf16.mxu0 0
      %2030 = vmatpush1.bf16.msra.mxu0 0
      %2031 = vmatprep.mubr.bf16.mxu0 0
      %2032 = vmatmul.mubr.bf16.gmra.mrb[0].mxu0 %v755
      %v2033 = vpop.f32.mrb[0].mxu0
      %v2034 = vadd.f32 0.0, %v2033
      %v2035 = vpop.f32.mrb[0].mxu0
      %v2036 = vpop.f32.mrb[0].mxu0
      %v2037 = vadd.f32 0.0, %v2036
      %v2038 = vpop.f32.mrb[0].mxu0
      %2039 = vdwg.mxu0
      %v2040 = vadd.f32 %v1979, %v2034
      %v2041 = vadd.f32 %v1980, %v2037
      %2042 = vrot.lane.b32.xlu0 %v1613, 107
      %v2043 = vpop.permute.xlu0 %2042
      %2044 = vrot.lane.b32.xlu0 %v1614, 107
      %v2045 = vpop.permute.xlu0 %2044
      %2046 = vrot.lane.b32.xlu0 %v1615, 107
      %v2047 = vpop.permute.xlu0 %2046
      %2048 = vrot.lane.b32.xlu0 %v1616, 107
      %v2049 = vpop.permute.xlu0 %2048
      %2050 = vrot.lane.b32.xlu0 %v1617, 107
      %v2051 = vpop.permute.xlu0 %2050
      %2052 = vrot.lane.b32.xlu0 %v1618, 107
      %v2053 = vpop.permute.xlu0 %2052
      %v2054 = vsel %vm817, %v2043, %v2045
      %v2055 = vsel %vm817, %v2047, %v2049
      %v2056 = vsel %vm817, %v2051, %v2053
      %2060 = vmatprep.subr.bf16.mxu0 0
      %2061 = vmatpush1.bf16.msra.mxu0 %v2054
      %2062 = vmatprep.subr.bf16.mxu0 0
      %2063 = vmatpush1.bf16.msra.mxu0 %v2055
      %2064 = vmatprep.subr.bf16.mxu0 0
      %2065 = vmatpush1.bf16.msra.mxu0 %v2056
      %2066 = vmatprep.subr.bf16.mxu0 0
      %2067 = vmatpush1.bf16.msra.mxu0 0
      %2068 = vmatprep.subr.bf16.mxu0 0
      %2069 = vmatpush1.bf16.msra.mxu0 0
      %2070 = vmatprep.subr.bf16.mxu0 0
      %2071 = vmatpush1.bf16.msra.mxu0 0
      %2072 = vmatprep.subr.bf16.mxu0 0
      %2073 = vmatpush1.bf16.msra.mxu0 0
      %2074 = vmatprep.subr.bf16.mxu0 0
      %2075 = vmatpush1.bf16.msra.mxu0 0
      %2076 = vmatprep.subr.bf16.mxu0 0
      %2077 = vmatpush1.bf16.msra.mxu0 0
      %2078 = vmatprep.subr.bf16.mxu0 0
      %2079 = vmatpush1.bf16.msra.mxu0 0
      %2080 = vmatprep.subr.bf16.mxu0 0
      %2081 = vmatpush1.bf16.msra.mxu0 0
      %2082 = vmatprep.subr.bf16.mxu0 0
      %2083 = vmatpush1.bf16.msra.mxu0 0
      %2084 = vmatprep.subr.bf16.mxu0 0
      %2085 = vmatpush1.bf16.msra.mxu0 0
      %2086 = vmatprep.subr.bf16.mxu0 0
      %2087 = vmatpush1.bf16.msra.mxu0 0
      %2088 = vmatprep.subr.bf16.mxu0 0
      %2089 = vmatpush1.bf16.msra.mxu0 0
      %2090 = vmatprep.subr.bf16.mxu0 0
      %2091 = vmatpush1.bf16.msra.mxu0 0
      %2092 = vmatprep.mubr.bf16.mxu0 0
      %2093 = vmatmul.mubr.bf16.gmra.mrb[0].mxu0 %v825
      %v2094 = vpop.f32.mrb[0].mxu0
      %v2095 = vadd.f32 0.0, %v2094
      %v2096 = vpop.f32.mrb[0].mxu0
      %v2097 = vpop.f32.mrb[0].mxu0
      %v2098 = vadd.f32 0.0, %v2097
      %v2099 = vpop.f32.mrb[0].mxu0
      %2100 = vdwg.mxu0
      %v2101 = vadd.f32 %v2040, %v2095
      %v2102 = vadd.f32 %v2041, %v2098
      %2103 = vrot.lane.b32.xlu0 %v1613, 106
      %v2104 = vpop.permute.xlu0 %2103
      %2105 = vrot.lane.b32.xlu0 %v1614, 106
      %v2106 = vpop.permute.xlu0 %2105
      %2107 = vrot.lane.b32.xlu0 %v1615, 106
      %v2108 = vpop.permute.xlu0 %2107
      %2109 = vrot.lane.b32.xlu0 %v1616, 106
      %v2110 = vpop.permute.xlu0 %2109
      %2111 = vrot.lane.b32.xlu0 %v1617, 106
      %v2112 = vpop.permute.xlu0 %2111
      %2113 = vrot.lane.b32.xlu0 %v1618, 106
      %v2114 = vpop.permute.xlu0 %2113
      %v2115 = vsel %vm887, %v2104, %v2106
      %v2116 = vsel %vm887, %v2108, %v2110
      %v2117 = vsel %vm887, %v2112, %v2114
      %2121 = vmatprep.subr.bf16.mxu0 0
      %2122 = vmatpush1.bf16.msra.mxu0 %v2115
      %2123 = vmatprep.subr.bf16.mxu0 0
      %2124 = vmatpush1.bf16.msra.mxu0 %v2116
      %2125 = vmatprep.subr.bf16.mxu0 0
      %2126 = vmatpush1.bf16.msra.mxu0 %v2117
      %2127 = vmatprep.subr.bf16.mxu0 0
      %2128 = vmatpush1.bf16.msra.mxu0 0
      %2129 = vmatprep.subr.bf16.mxu0 0
      %2130 = vmatpush1.bf16.msra.mxu0 0
      %2131 = vmatprep.subr.bf16.mxu0 0
      %2132 = vmatpush1.bf16.msra.mxu0 0
      %2133 = vmatprep.subr.bf16.mxu0 0
      %2134 = vmatpush1.bf16.msra.mxu0 0
      %2135 = vmatprep.subr.bf16.mxu0 0
      %2136 = vmatpush1.bf16.msra.mxu0 0
      %2137 = vmatprep.subr.bf16.mxu0 0
      %2138 = vmatpush1.bf16.msra.mxu0 0
      %2139 = vmatprep.subr.bf16.mxu0 0
      %2140 = vmatpush1.bf16.msra.mxu0 0
      %2141 = vmatprep.subr.bf16.mxu0 0
      %2142 = vmatpush1.bf16.msra.mxu0 0
      %2143 = vmatprep.subr.bf16.mxu0 0
      %2144 = vmatpush1.bf16.msra.mxu0 0
      %2145 = vmatprep.subr.bf16.mxu0 0
      %2146 = vmatpush1.bf16.msra.mxu0 0
      %2147 = vmatprep.subr.bf16.mxu0 0
      %2148 = vmatpush1.bf16.msra.mxu0 0
      %2149 = vmatprep.subr.bf16.mxu0 0
      %2150 = vmatpush1.bf16.msra.mxu0 0
      %2151 = vmatprep.subr.bf16.mxu0 0
      %2152 = vmatpush1.bf16.msra.mxu0 0
      %2153 = vmatprep.mubr.bf16.mxu0 0
      %2154 = vmatmul.mubr.bf16.gmra.mrb[0].mxu0 %v895
      %v2155 = vpop.f32.mrb[0].mxu0
      %v2156 = vadd.f32 0.0, %v2155
      %v2157 = vpop.f32.mrb[0].mxu0
      %v2158 = vpop.f32.mrb[0].mxu0
      %v2159 = vadd.f32 0.0, %v2158
      %v2160 = vpop.f32.mrb[0].mxu0
      %2161 = vdwg.mxu0
      %v2162 = vadd.f32 %v2101, %v2156
      %v2163 = vadd.f32 %v2102, %v2159
      %v2164 = vpack.c.bf16 %v2163, %v2162
      %v2166 = vunpack.c.l.b16 %v2164
      %v2167 = vunpack.c.h.b16 %v2164
      %v2168 = vpack.c.b16 %v2166, %v2166
      %v2169 = vpack.c.b16 %v2167, %v2167
      %s2172 = scalar_lea.vmem %s229, 16
      %2173 = vst [vmem:[%s2172] sm:$0xf] %v2168
      %2174 = vst [vmem:[%s2172 + $0x4] sm:$0xf] %v2169
      %v2175 = vunpack.c.l.bf16 %v2164
      %v2176 = vunpack.c.h.bf16 %v2164
      %v2177 = vmul.f32 %v2175, %v956
      %v2178 = vmul.f32 %v2176, %v956
      %v2179 = vadd.f32 %v1570, %v2177
      %v2180 = vadd.f32 %v1571, %v2178
      %v2181 = vmul.f32 %v2177, %v2175
      %v2182 = vmul.f32 %v2178, %v2176
      %v2183 = vadd.f32 %v1574, %v2181
      %v2184 = vadd.f32 %v1575, %v2182
      %s2185 = sadd.s32 %s966, 3
      %s2186 = smul.u32 %s2185, 16
      %s2187 = sshra.s32 %s2186, 3
      %s2188 = sand.u32 %s2186, 7
      %s2189 = smul.u32 %s2187, 2
      %s2190 = smul.addr %s2189, 4
      %s2191 = scalar_lea.vmem %s219, %s2190
      %v2192 = vld [vmem:[%s2191] sm:$0xf]
      %v2193 = vld [vmem:[%s2191 + $0x8] sm:$0xf]
      %v2194 = vld [vmem:[%s2191 + $0x10] sm:$0xf]
      %v2195 = vld [vmem:[%s2191 + $0x18] sm:$0xf]
      %v2196 = vld [vmem:[%s2191 + $0x20] sm:$0xf]
      %v2197 = vld [vmem:[%s2191 + $0x28] sm:$0xf]
      %v2198 = vld [vmem:[%s2191] sm:$0xff]
      %v2199 = vld [vmem:[%s2191 + $0x8] sm:$0xff]
      %v2200 = vld [vmem:[%s2191 + $0x10] sm:$0xff]
      %v2201 = vld [vmem:[%s2191 + $0x18] sm:$0xff]
      %v2202 = vld [vmem:[%s2191 + $0x20] sm:$0xff]
      %v2203 = vld [vmem:[%s2191 + $0x28] sm:$0xff]
      %v2210 = vunpack.c.l.b16 %v2198
      %v2211 = vunpack.c.h.b16 %v2198
      %v2212 = vunpack.c.l.b16 %v2199
      %v2213 = vunpack.c.h.b16 %v2199
      %v2214 = vunpack.c.l.b16 %v2200
      %v2215 = vunpack.c.h.b16 %v2200
      %v2216 = vunpack.c.l.b16 %v2201
      %v2217 = vunpack.c.h.b16 %v2201
      %v2218 = vunpack.c.l.b16 %v2202
      %v2219 = vunpack.c.h.b16 %v2202
      %v2220 = vunpack.c.l.b16 %v2203
      %v2221 = vunpack.c.h.b16 %v2203
      %v2222 = vpack.c.b16 %v2212, %v2210
      %v2223 = vpack.c.b16 %v2213, %v2211
      %v2224 = vpack.c.b16 %v2216, %v2214
      %v2225 = vpack.c.b16 %v2217, %v2215
      %v2226 = vpack.c.b16 %v2220, %v2218
      %v2227 = vpack.c.b16 %v2221, %v2219
      %2228 = vrot.lane.b32.xlu0 %v2222, 127
      %v2229 = vpop.permute.xlu0 %2228
      %2230 = vrot.lane.b32.xlu0 %v2223, 127
      %v2231 = vpop.permute.xlu0 %2230
      %2232 = vrot.lane.b32.xlu0 %v2224, 127
      %v2233 = vpop.permute.xlu0 %2232
      %2234 = vrot.lane.b32.xlu0 %v2225, 127
      %v2235 = vpop.permute.xlu0 %2234
      %2236 = vrot.lane.b32.xlu0 %v2226, 127
      %v2237 = vpop.permute.xlu0 %2236
      %2238 = vrot.lane.b32.xlu0 %v2227, 127
      %v2239 = vpop.permute.xlu0 %2238
      %v2240 = vsel %vm331, %v2229, %v2231
      %v2241 = vsel %vm331, %v2233, %v2235
      %v2242 = vsel %vm331, %v2237, %v2239
      %2246 = vmatprep.subr.bf16.mxu0 0
      %2247 = vmatpush1.bf16.msra.mxu0 %v2240
      %2248 = vmatprep.subr.bf16.mxu0 0
      %2249 = vmatpush1.bf16.msra.mxu0 %v2241
      %2250 = vmatprep.subr.bf16.mxu0 0
      %2251 = vmatpush1.bf16.msra.mxu0 %v2242
      %2252 = vmatprep.subr.bf16.mxu0 0
      %2253 = vmatpush1.bf16.msra.mxu0 0
      %2254 = vmatprep.subr.bf16.mxu0 0
      %2255 = vmatpush1.bf16.msra.mxu0 0
      %2256 = vmatprep.subr.bf16.mxu0 0
      %2257 = vmatpush1.bf16.msra.mxu0 0
      %2258 = vmatprep.subr.bf16.mxu0 0
      %2259 = vmatpush1.bf16.msra.mxu0 0
      %2260 = vmatprep.subr.bf16.mxu0 0
      %2261 = vmatpush1.bf16.msra.mxu0 0
      %2262 = vmatprep.subr.bf16.mxu0 0
      %2263 = vmatpush1.bf16.msra.mxu0 0
      %2264 = vmatprep.subr.bf16.mxu0 0
      %2265 = vmatpush1.bf16.msra.mxu0 0
      %2266 = vmatprep.subr.bf16.mxu0 0
      %2267 = vmatpush1.bf16.msra.mxu0 0
      %2268 = vmatprep.subr.bf16.mxu0 0
      %2269 = vmatpush1.bf16.msra.mxu0 0
      %2270 = vmatprep.subr.bf16.mxu0 0
      %2271 = vmatpush1.bf16.msra.mxu0 0
      %2272 = vmatprep.subr.bf16.mxu0 0
      %2273 = vmatpush1.bf16.msra.mxu0 0
      %2274 = vmatprep.subr.bf16.mxu0 0
      %2275 = vmatpush1.bf16.msra.mxu0 0
      %2276 = vmatprep.subr.bf16.mxu0 0
      %2277 = vmatpush1.bf16.msra.mxu0 0
      %2278 = vmatprep.mubr.bf16.mxu0 0
      %2279 = vmatmul.mubr.bf16.gmra.mrb[0].mxu0 %v340
      %v2280 = vpop.f32.mrb[0].mxu0
      %v2281 = vadd.f32 0.0, %v2280
      %v2282 = vpop.f32.mrb[0].mxu0
      %v2283 = vpop.f32.mrb[0].mxu0
      %v2284 = vadd.f32 0.0, %v2283
      %v2285 = vpop.f32.mrb[0].mxu0
      %2286 = vdwg.mxu0
      %v2293 = vunpack.c.l.b16 %v2192
      %v2294 = vunpack.c.l.b16 %v2193
      %v2295 = vunpack.c.l.b16 %v2194
      %v2296 = vunpack.c.l.b16 %v2195
      %v2297 = vunpack.c.l.b16 %v2196
      %v2298 = vunpack.c.l.b16 %v2197
      %v2299 = vpack.c.b16 %v2294, %v2293
      %v2300 = vpack.c.b16 %v2296, %v2295
      %v2301 = vpack.c.b16 %v2298, %v2297
      %2305 = vmatprep.subr.bf16.mxu0 0
      %2306 = vmatpush1.bf16.msra.mxu0 %v2299
      %2307 = vmatprep.subr.bf16.mxu0 0
      %2308 = vmatpush1.bf16.msra.mxu0 %v2300
      %2309 = vmatprep.subr.bf16.mxu0 0
      %2310 = vmatpush1.bf16.msra.mxu0 %v2301
      %2311 = vmatprep.subr.bf16.mxu0 0
      %2312 = vmatpush1.bf16.msra.mxu0 0
      %2313 = vmatprep.subr.bf16.mxu0 0
      %2314 = vmatpush1.bf16.msra.mxu0 0
      %2315 = vmatprep.subr.bf16.mxu0 0
      %2316 = vmatpush1.bf16.msra.mxu0 0
      %2317 = vmatprep.subr.bf16.mxu0 0
      %2318 = vmatpush1.bf16.msra.mxu0 0
      %2319 = vmatprep.subr.bf16.mxu0 0
      %2320 = vmatpush1.bf16.msra.mxu0 0
      %2321 = vmatprep.subr.bf16.mxu0 0
      %2322 = vmatpush1.bf16.msra.mxu0 0
      %2323 = vmatprep.subr.bf16.mxu0 0
      %2324 = vmatpush1.bf16.msra.mxu0 0
      %2325 = vmatprep.subr.bf16.mxu0 0
      %2326 = vmatpush1.bf16.msra.mxu0 0
      %2327 = vmatprep.subr.bf16.mxu0 0
      %2328 = vmatpush1.bf16.msra.mxu0 0
      %2329 = vmatprep.subr.bf16.mxu0 0
      %2330 = vmatpush1.bf16.msra.mxu0 0
      %2331 = vmatprep.subr.bf16.mxu0 0
      %2332 = vmatpush1.bf16.msra.mxu0 0
      %2333 = vmatprep.subr.bf16.mxu0 0
      %2334 = vmatpush1.bf16.msra.mxu0 0
      %2335 = vmatprep.subr.bf16.mxu0 0
      %2336 = vmatpush1.bf16.msra.mxu0 0
      %2337 = vmatprep.mubr.bf16.mxu0 0
      %2338 = vmatmul.mubr.bf16.gmra.mrb[0].mxu0 %v407
      %v2339 = vpop.f32.mrb[0].mxu0
      %v2340 = vadd.f32 %v2281, %v2339
      %v2341 = vpop.f32.mrb[0].mxu0
      %v2342 = vpop.f32.mrb[0].mxu0
      %v2343 = vadd.f32 %v2284, %v2342
      %v2344 = vpop.f32.mrb[0].mxu0
      %2345 = vdwg.mxu0
      %2346 = vrot.lane.b32.xlu0 %v2222, 126
      %v2347 = vpop.permute.xlu0 %2346
      %2348 = vrot.lane.b32.xlu0 %v2223, 126
      %v2349 = vpop.permute.xlu0 %2348
      %2350 = vrot.lane.b32.xlu0 %v2224, 126
      %v2351 = vpop.permute.xlu0 %2350
      %2352 = vrot.lane.b32.xlu0 %v2225, 126
      %v2353 = vpop.permute.xlu0 %2352
      %2354 = vrot.lane.b32.xlu0 %v2226, 126
      %v2355 = vpop.permute.xlu0 %2354
      %2356 = vrot.lane.b32.xlu0 %v2227, 126
      %v2357 = vpop.permute.xlu0 %2356
      %v2358 = vsel %vm467, %v2347, %v2349
      %v2359 = vsel %vm467, %v2351, %v2353
      %v2360 = vsel %vm467, %v2355, %v2357
      %2364 = vmatprep.subr.bf16.mxu0 0
      %2365 = vmatpush1.bf16.msra.mxu0 %v2358
      %2366 = vmatprep.subr.bf16.mxu0 0
      %2367 = vmatpush1.bf16.msra.mxu0 %v2359
      %2368 = vmatprep.subr.bf16.mxu0 0
      %2369 = vmatpush1.bf16.msra.mxu0 %v2360
      %2370 = vmatprep.subr.bf16.mxu0 0
      %2371 = vmatpush1.bf16.msra.mxu0 0
      %2372 = vmatprep.subr.bf16.mxu0 0
      %2373 = vmatpush1.bf16.msra.mxu0 0
      %2374 = vmatprep.subr.bf16.mxu0 0
      %2375 = vmatpush1.bf16.msra.mxu0 0
      %2376 = vmatprep.subr.bf16.mxu0 0
      %2377 = vmatpush1.bf16.msra.mxu0 0
      %2378 = vmatprep.subr.bf16.mxu0 0
      %2379 = vmatpush1.bf16.msra.mxu0 0
      %2380 = vmatprep.subr.bf16.mxu0 0
      %2381 = vmatpush1.bf16.msra.mxu0 0
      %2382 = vmatprep.subr.bf16.mxu0 0
      %2383 = vmatpush1.bf16.msra.mxu0 0
      %2384 = vmatprep.subr.bf16.mxu0 0
      %2385 = vmatpush1.bf16.msra.mxu0 0
      %2386 = vmatprep.subr.bf16.mxu0 0
      %2387 = vmatpush1.bf16.msra.mxu0 0
      %2388 = vmatprep.subr.bf16.mxu0 0
      %2389 = vmatpush1.bf16.msra.mxu0 0
      %2390 = vmatprep.subr.bf16.mxu0 0
      %2391 = vmatpush1.bf16.msra.mxu0 0
      %2392 = vmatprep.subr.bf16.mxu0 0
      %2393 = vmatpush1.bf16.msra.mxu0 0
      %2394 = vmatprep.subr.bf16.mxu0 0
      %2395 = vmatpush1.bf16.msra.mxu0 0
      %2396 = vmatprep.mubr.bf16.mxu0 0
      %2397 = vmatmul.mubr.bf16.gmra.mrb[0].mxu0 %v475
      %v2398 = vpop.f32.mrb[0].mxu0
      %v2399 = vadd.f32 0.0, %v2398
      %v2400 = vpop.f32.mrb[0].mxu0
      %v2401 = vpop.f32.mrb[0].mxu0
      %v2402 = vadd.f32 0.0, %v2401
      %v2403 = vpop.f32.mrb[0].mxu0
      %2404 = vdwg.mxu0
      %v2405 = vadd.f32 %v2340, %v2399
      %v2406 = vadd.f32 %v2343, %v2402
      %2407 = vrot.lane.b32.xlu0 %v2222, 118
      %v2408 = vpop.permute.xlu0 %2407
      %2409 = vrot.lane.b32.xlu0 %v2223, 118
      %v2410 = vpop.permute.xlu0 %2409
      %2411 = vrot.lane.b32.xlu0 %v2224, 118
      %v2412 = vpop.permute.xlu0 %2411
      %2413 = vrot.lane.b32.xlu0 %v2225, 118
      %v2414 = vpop.permute.xlu0 %2413
      %2415 = vrot.lane.b32.xlu0 %v2226, 118
      %v2416 = vpop.permute.xlu0 %2415
      %2417 = vrot.lane.b32.xlu0 %v2227, 118
      %v2418 = vpop.permute.xlu0 %2417
      %v2419 = vsel %vm537, %v2408, %v2410
      %v2420 = vsel %vm537, %v2412, %v2414
      %v2421 = vsel %vm537, %v2416, %v2418
      %2425 = vmatprep.subr.bf16.mxu0 0
      %2426 = vmatpush1.bf16.msra.mxu0 %v2419
      %2427 = vmatprep.subr.bf16.mxu0 0
      %2428 = vmatpush1.bf16.msra.mxu0 %v2420
      %2429 = vmatprep.subr.bf16.mxu0 0
      %2430 = vmatpush1.bf16.msra.mxu0 %v2421
      %2431 = vmatprep.subr.bf16.mxu0 0
      %2432 = vmatpush1.bf16.msra.mxu0 0
      %2433 = vmatprep.subr.bf16.mxu0 0
      %2434 = vmatpush1.bf16.msra.mxu0 0
      %2435 = vmatprep.subr.bf16.mxu0 0
      %2436 = vmatpush1.bf16.msra.mxu0 0
      %2437 = vmatprep.subr.bf16.mxu0 0
      %2438 = vmatpush1.bf16.msra.mxu0 0
      %2439 = vmatprep.subr.bf16.mxu0 0
      %2440 = vmatpush1.bf16.msra.mxu0 0
      %2441 = vmatprep.subr.bf16.mxu0 0
      %2442 = vmatpush1.bf16.msra.mxu0 0
      %2443 = vmatprep.subr.bf16.mxu0 0
      %2444 = vmatpush1.bf16.msra.mxu0 0
      %2445 = vmatprep.subr.bf16.mxu0 0
      %2446 = vmatpush1.bf16.msra.mxu0 0
      %2447 = vmatprep.subr.bf16.mxu0 0
      %2448 = vmatpush1.bf16.msra.mxu0 0
      %2449 = vmatprep.subr.bf16.mxu0 0
      %2450 = vmatpush1.bf16.msra.mxu0 0
      %2451 = vmatprep.subr.bf16.mxu0 0
      %2452 = vmatpush1.bf16.msra.mxu0 0
      %2453 = vmatprep.subr.bf16.mxu0 0
      %2454 = vmatpush1.bf16.msra.mxu0 0
      %2455 = vmatprep.subr.bf16.mxu0 0
      %2456 = vmatpush1.bf16.msra.mxu0 0
      %2457 = vmatprep.mubr.bf16.mxu0 0
      %2458 = vmatmul.mubr.bf16.gmra.mrb[0].mxu0 %v545
      %v2459 = vpop.f32.mrb[0].mxu0
      %v2460 = vadd.f32 0.0, %v2459
      %v2461 = vpop.f32.mrb[0].mxu0
      %v2462 = vpop.f32.mrb[0].mxu0
      %v2463 = vadd.f32 0.0, %v2462
      %v2464 = vpop.f32.mrb[0].mxu0
      %2465 = vdwg.mxu0
      %v2466 = vadd.f32 %v2405, %v2460
      %v2467 = vadd.f32 %v2406, %v2463
      %2468 = vrot.lane.b32.xlu0 %v2222, 117
      %v2469 = vpop.permute.xlu0 %2468
      %2470 = vrot.lane.b32.xlu0 %v2223, 117
      %v2471 = vpop.permute.xlu0 %2470
      %2472 = vrot.lane.b32.xlu0 %v2224, 117
      %v2473 = vpop.permute.xlu0 %2472
      %2474 = vrot.lane.b32.xlu0 %v2225, 117
      %v2475 = vpop.permute.xlu0 %2474
      %2476 = vrot.lane.b32.xlu0 %v2226, 117
      %v2477 = vpop.permute.xlu0 %2476
      %2478 = vrot.lane.b32.xlu0 %v2227, 117
      %v2479 = vpop.permute.xlu0 %2478
      %v2480 = vsel %vm607, %v2469, %v2471
      %v2481 = vsel %vm607, %v2473, %v2475
      %v2482 = vsel %vm607, %v2477, %v2479
      %2486 = vmatprep.subr.bf16.mxu0 0
      %2487 = vmatpush1.bf16.msra.mxu0 %v2480
      %2488 = vmatprep.subr.bf16.mxu0 0
      %2489 = vmatpush1.bf16.msra.mxu0 %v2481
      %2490 = vmatprep.subr.bf16.mxu0 0
      %2491 = vmatpush1.bf16.msra.mxu0 %v2482
      %2492 = vmatprep.subr.bf16.mxu0 0
      %2493 = vmatpush1.bf16.msra.mxu0 0
      %2494 = vmatprep.subr.bf16.mxu0 0
      %2495 = vmatpush1.bf16.msra.mxu0 0
      %2496 = vmatprep.subr.bf16.mxu0 0
      %2497 = vmatpush1.bf16.msra.mxu0 0
      %2498 = vmatprep.subr.bf16.mxu0 0
      %2499 = vmatpush1.bf16.msra.mxu0 0
      %2500 = vmatprep.subr.bf16.mxu0 0
      %2501 = vmatpush1.bf16.msra.mxu0 0
      %2502 = vmatprep.subr.bf16.mxu0 0
      %2503 = vmatpush1.bf16.msra.mxu0 0
      %2504 = vmatprep.subr.bf16.mxu0 0
      %2505 = vmatpush1.bf16.msra.mxu0 0
      %2506 = vmatprep.subr.bf16.mxu0 0
      %2507 = vmatpush1.bf16.msra.mxu0 0
      %2508 = vmatprep.subr.bf16.mxu0 0
      %2509 = vmatpush1.bf16.msra.mxu0 0
      %2510 = vmatprep.subr.bf16.mxu0 0
      %2511 = vmatpush1.bf16.msra.mxu0 0
      %2512 = vmatprep.subr.bf16.mxu0 0
      %2513 = vmatpush1.bf16.msra.mxu0 0
      %2514 = vmatprep.subr.bf16.mxu0 0
      %2515 = vmatpush1.bf16.msra.mxu0 0
      %2516 = vmatprep.subr.bf16.mxu0 0
      %2517 = vmatpush1.bf16.msra.mxu0 0
      %2518 = vmatprep.mubr.bf16.mxu0 0
      %2519 = vmatmul.mubr.bf16.gmra.mrb[0].mxu0 %v615
      %v2520 = vpop.f32.mrb[0].mxu0
      %v2521 = vadd.f32 0.0, %v2520
      %v2522 = vpop.f32.mrb[0].mxu0
      %v2523 = vpop.f32.mrb[0].mxu0
      %v2524 = vadd.f32 0.0, %v2523
      %v2525 = vpop.f32.mrb[0].mxu0
      %2526 = vdwg.mxu0
      %v2527 = vadd.f32 %v2466, %v2521
      %v2528 = vadd.f32 %v2467, %v2524
      %2529 = vrot.lane.b32.xlu0 %v2222, 116
      %v2530 = vpop.permute.xlu0 %2529
      %2531 = vrot.lane.b32.xlu0 %v2223, 116
      %v2532 = vpop.permute.xlu0 %2531
      %2533 = vrot.lane.b32.xlu0 %v2224, 116
      %v2534 = vpop.permute.xlu0 %2533
      %2535 = vrot.lane.b32.xlu0 %v2225, 116
      %v2536 = vpop.permute.xlu0 %2535
      %2537 = vrot.lane.b32.xlu0 %v2226, 116
      %v2538 = vpop.permute.xlu0 %2537
      %2539 = vrot.lane.b32.xlu0 %v2227, 116
      %v2540 = vpop.permute.xlu0 %2539
      %v2541 = vsel %vm677, %v2530, %v2532
      %v2542 = vsel %vm677, %v2534, %v2536
      %v2543 = vsel %vm677, %v2538, %v2540
      %2547 = vmatprep.subr.bf16.mxu0 0
      %2548 = vmatpush1.bf16.msra.mxu0 %v2541
      %2549 = vmatprep.subr.bf16.mxu0 0
      %2550 = vmatpush1.bf16.msra.mxu0 %v2542
      %2551 = vmatprep.subr.bf16.mxu0 0
      %2552 = vmatpush1.bf16.msra.mxu0 %v2543
      %2553 = vmatprep.subr.bf16.mxu0 0
      %2554 = vmatpush1.bf16.msra.mxu0 0
      %2555 = vmatprep.subr.bf16.mxu0 0
      %2556 = vmatpush1.bf16.msra.mxu0 0
      %2557 = vmatprep.subr.bf16.mxu0 0
      %2558 = vmatpush1.bf16.msra.mxu0 0
      %2559 = vmatprep.subr.bf16.mxu0 0
      %2560 = vmatpush1.bf16.msra.mxu0 0
      %2561 = vmatprep.subr.bf16.mxu0 0
      %2562 = vmatpush1.bf16.msra.mxu0 0
      %2563 = vmatprep.subr.bf16.mxu0 0
      %2564 = vmatpush1.bf16.msra.mxu0 0
      %2565 = vmatprep.subr.bf16.mxu0 0
      %2566 = vmatpush1.bf16.msra.mxu0 0
      %2567 = vmatprep.subr.bf16.mxu0 0
      %2568 = vmatpush1.bf16.msra.mxu0 0
      %2569 = vmatprep.subr.bf16.mxu0 0
      %2570 = vmatpush1.bf16.msra.mxu0 0
      %2571 = vmatprep.subr.bf16.mxu0 0
      %2572 = vmatpush1.bf16.msra.mxu0 0
      %2573 = vmatprep.subr.bf16.mxu0 0
      %2574 = vmatpush1.bf16.msra.mxu0 0
      %2575 = vmatprep.subr.bf16.mxu0 0
      %2576 = vmatpush1.bf16.msra.mxu0 0
      %2577 = vmatprep.subr.bf16.mxu0 0
      %2578 = vmatpush1.bf16.msra.mxu0 0
      %2579 = vmatprep.mubr.bf16.mxu0 0
      %2580 = vmatmul.mubr.bf16.gmra.mrb[0].mxu0 %v685
      %v2581 = vpop.f32.mrb[0].mxu0
      %v2582 = vadd.f32 0.0, %v2581
      %v2583 = vpop.f32.mrb[0].mxu0
      %v2584 = vpop.f32.mrb[0].mxu0
      %v2585 = vadd.f32 0.0, %v2584
      %v2586 = vpop.f32.mrb[0].mxu0
      %2587 = vdwg.mxu0
      %v2588 = vadd.f32 %v2527, %v2582
      %v2589 = vadd.f32 %v2528, %v2585
      %2590 = vrot.lane.b32.xlu0 %v2222, 108
      %v2591 = vpop.permute.xlu0 %2590
      %2592 = vrot.lane.b32.xlu0 %v2223, 108
      %v2593 = vpop.permute.xlu0 %2592
      %2594 = vrot.lane.b32.xlu0 %v2224, 108
      %v2595 = vpop.permute.xlu0 %2594
      %2596 = vrot.lane.b32.xlu0 %v2225, 108
      %v2597 = vpop.permute.xlu0 %2596
      %2598 = vrot.lane.b32.xlu0 %v2226, 108
      %v2599 = vpop.permute.xlu0 %2598
      %2600 = vrot.lane.b32.xlu0 %v2227, 108
      %v2601 = vpop.permute.xlu0 %2600
      %v2602 = vsel %vm747, %v2591, %v2593
      %v2603 = vsel %vm747, %v2595, %v2597
      %v2604 = vsel %vm747, %v2599, %v2601
      %2608 = vmatprep.subr.bf16.mxu0 0
      %2609 = vmatpush1.bf16.msra.mxu0 %v2602
      %2610 = vmatprep.subr.bf16.mxu0 0
      %2611 = vmatpush1.bf16.msra.mxu0 %v2603
      %2612 = vmatprep.subr.bf16.mxu0 0
      %2613 = vmatpush1.bf16.msra.mxu0 %v2604
      %2614 = vmatprep.subr.bf16.mxu0 0
      %2615 = vmatpush1.bf16.msra.mxu0 0
      %2616 = vmatprep.subr.bf16.mxu0 0
      %2617 = vmatpush1.bf16.msra.mxu0 0
      %2618 = vmatprep.subr.bf16.mxu0 0
      %2619 = vmatpush1.bf16.msra.mxu0 0
      %2620 = vmatprep.subr.bf16.mxu0 0
      %2621 = vmatpush1.bf16.msra.mxu0 0
      %2622 = vmatprep.subr.bf16.mxu0 0
      %2623 = vmatpush1.bf16.msra.mxu0 0
      %2624 = vmatprep.subr.bf16.mxu0 0
      %2625 = vmatpush1.bf16.msra.mxu0 0
      %2626 = vmatprep.subr.bf16.mxu0 0
      %2627 = vmatpush1.bf16.msra.mxu0 0
      %2628 = vmatprep.subr.bf16.mxu0 0
      %2629 = vmatpush1.bf16.msra.mxu0 0
      %2630 = vmatprep.subr.bf16.mxu0 0
      %2631 = vmatpush1.bf16.msra.mxu0 0
      %2632 = vmatprep.subr.bf16.mxu0 0
      %2633 = vmatpush1.bf16.msra.mxu0 0
      %2634 = vmatprep.subr.bf16.mxu0 0
      %2635 = vmatpush1.bf16.msra.mxu0 0
      %2636 = vmatprep.subr.bf16.mxu0 0
      %2637 = vmatpush1.bf16.msra.mxu0 0
      %2638 = vmatprep.subr.bf16.mxu0 0
      %2639 = vmatpush1.bf16.msra.mxu0 0
      %2640 = vmatprep.mubr.bf16.mxu0 0
      %2641 = vmatmul.mubr.bf16.gmra.mrb[0].mxu0 %v755
      %v2642 = vpop.f32.mrb[0].mxu0
      %v2643 = vadd.f32 0.0, %v2642
      %v2644 = vpop.f32.mrb[0].mxu0
      %v2645 = vpop.f32.mrb[0].mxu0
      %v2646 = vadd.f32 0.0, %v2645
      %v2647 = vpop.f32.mrb[0].mxu0
      %2648 = vdwg.mxu0
      %v2649 = vadd.f32 %v2588, %v2643
      %v2650 = vadd.f32 %v2589, %v2646
      %2651 = vrot.lane.b32.xlu0 %v2222, 107
      %v2652 = vpop.permute.xlu0 %2651
      %2653 = vrot.lane.b32.xlu0 %v2223, 107
      %v2654 = vpop.permute.xlu0 %2653
      %2655 = vrot.lane.b32.xlu0 %v2224, 107
      %v2656 = vpop.permute.xlu0 %2655
      %2657 = vrot.lane.b32.xlu0 %v2225, 107
      %v2658 = vpop.permute.xlu0 %2657
      %2659 = vrot.lane.b32.xlu0 %v2226, 107
      %v2660 = vpop.permute.xlu0 %2659
      %2661 = vrot.lane.b32.xlu0 %v2227, 107
      %v2662 = vpop.permute.xlu0 %2661
      %v2663 = vsel %vm817, %v2652, %v2654
      %v2664 = vsel %vm817, %v2656, %v2658
      %v2665 = vsel %vm817, %v2660, %v2662
      %2669 = vmatprep.subr.bf16.mxu0 0
      %2670 = vmatpush1.bf16.msra.mxu0 %v2663
      %2671 = vmatprep.subr.bf16.mxu0 0
      %2672 = vmatpush1.bf16.msra.mxu0 %v2664
      %2673 = vmatprep.subr.bf16.mxu0 0
      %2674 = vmatpush1.bf16.msra.mxu0 %v2665
      %2675 = vmatprep.subr.bf16.mxu0 0
      %2676 = vmatpush1.bf16.msra.mxu0 0
      %2677 = vmatprep.subr.bf16.mxu0 0
      %2678 = vmatpush1.bf16.msra.mxu0 0
      %2679 = vmatprep.subr.bf16.mxu0 0
      %2680 = vmatpush1.bf16.msra.mxu0 0
      %2681 = vmatprep.subr.bf16.mxu0 0
      %2682 = vmatpush1.bf16.msra.mxu0 0
      %2683 = vmatprep.subr.bf16.mxu0 0
      %2684 = vmatpush1.bf16.msra.mxu0 0
      %2685 = vmatprep.subr.bf16.mxu0 0
      %2686 = vmatpush1.bf16.msra.mxu0 0
      %2687 = vmatprep.subr.bf16.mxu0 0
      %2688 = vmatpush1.bf16.msra.mxu0 0
      %2689 = vmatprep.subr.bf16.mxu0 0
      %2690 = vmatpush1.bf16.msra.mxu0 0
      %2691 = vmatprep.subr.bf16.mxu0 0
      %2692 = vmatpush1.bf16.msra.mxu0 0
      %2693 = vmatprep.subr.bf16.mxu0 0
      %2694 = vmatpush1.bf16.msra.mxu0 0
      %2695 = vmatprep.subr.bf16.mxu0 0
      %2696 = vmatpush1.bf16.msra.mxu0 0
      %2697 = vmatprep.subr.bf16.mxu0 0
      %2698 = vmatpush1.bf16.msra.mxu0 0
      %2699 = vmatprep.subr.bf16.mxu0 0
      %2700 = vmatpush1.bf16.msra.mxu0 0
      %2701 = vmatprep.mubr.bf16.mxu0 0
      %2702 = vmatmul.mubr.bf16.gmra.mrb[0].mxu0 %v825
      %v2703 = vpop.f32.mrb[0].mxu0
      %v2704 = vadd.f32 0.0, %v2703
      %v2705 = vpop.f32.mrb[0].mxu0
      %v2706 = vpop.f32.mrb[0].mxu0
      %v2707 = vadd.f32 0.0, %v2706
      %v2708 = vpop.f32.mrb[0].mxu0
      %2709 = vdwg.mxu0
      %v2710 = vadd.f32 %v2649, %v2704
      %v2711 = vadd.f32 %v2650, %v2707
      %2712 = vrot.lane.b32.xlu0 %v2222, 106
      %v2713 = vpop.permute.xlu0 %2712
      %2714 = vrot.lane.b32.xlu0 %v2223, 106
      %v2715 = vpop.permute.xlu0 %2714
      %2716 = vrot.lane.b32.xlu0 %v2224, 106
      %v2717 = vpop.permute.xlu0 %2716
      %2718 = vrot.lane.b32.xlu0 %v2225, 106
      %v2719 = vpop.permute.xlu0 %2718
      %2720 = vrot.lane.b32.xlu0 %v2226, 106
      %v2721 = vpop.permute.xlu0 %2720
      %2722 = vrot.lane.b32.xlu0 %v2227, 106
      %v2723 = vpop.permute.xlu0 %2722
      %v2724 = vsel %vm887, %v2713, %v2715
      %v2725 = vsel %vm887, %v2717, %v2719
      %v2726 = vsel %vm887, %v2721, %v2723
      %2730 = vmatprep.subr.bf16.mxu0 0
      %2731 = vmatpush1.bf16.msra.mxu0 %v2724
      %2732 = vmatprep.subr.bf16.mxu0 0
      %2733 = vmatpush1.bf16.msra.mxu0 %v2725
      %2734 = vmatprep.subr.bf16.mxu0 0
      %2735 = vmatpush1.bf16.msra.mxu0 %v2726
      %2736 = vmatprep.subr.bf16.mxu0 0
      %2737 = vmatpush1.bf16.msra.mxu0 0
      %2738 = vmatprep.subr.bf16.mxu0 0
      %2739 = vmatpush1.bf16.msra.mxu0 0
      %2740 = vmatprep.subr.bf16.mxu0 0
      %2741 = vmatpush1.bf16.msra.mxu0 0
      %2742 = vmatprep.subr.bf16.mxu0 0
      %2743 = vmatpush1.bf16.msra.mxu0 0
      %2744 = vmatprep.subr.bf16.mxu0 0
      %2745 = vmatpush1.bf16.msra.mxu0 0
      %2746 = vmatprep.subr.bf16.mxu0 0
      %2747 = vmatpush1.bf16.msra.mxu0 0
      %2748 = vmatprep.subr.bf16.mxu0 0
      %2749 = vmatpush1.bf16.msra.mxu0 0
      %2750 = vmatprep.subr.bf16.mxu0 0
      %2751 = vmatpush1.bf16.msra.mxu0 0
      %2752 = vmatprep.subr.bf16.mxu0 0
      %2753 = vmatpush1.bf16.msra.mxu0 0
      %2754 = vmatprep.subr.bf16.mxu0 0
      %2755 = vmatpush1.bf16.msra.mxu0 0
      %2756 = vmatprep.subr.bf16.mxu0 0
      %2757 = vmatpush1.bf16.msra.mxu0 0
      %2758 = vmatprep.subr.bf16.mxu0 0
      %2759 = vmatpush1.bf16.msra.mxu0 0
      %2760 = vmatprep.subr.bf16.mxu0 0
      %2761 = vmatpush1.bf16.msra.mxu0 0
      %2762 = vmatprep.mubr.bf16.mxu0 0
      %2763 = vmatmul.mubr.bf16.gmra.mrb[0].mxu0 %v895
      %v2764 = vpop.f32.mrb[0].mxu0
      %v2765 = vadd.f32 0.0, %v2764
      %v2766 = vpop.f32.mrb[0].mxu0
      %v2767 = vpop.f32.mrb[0].mxu0
      %v2768 = vadd.f32 0.0, %v2767
      %v2769 = vpop.f32.mrb[0].mxu0
      %2770 = vdwg.mxu0
      %v2771 = vadd.f32 %v2710, %v2765
      %v2772 = vadd.f32 %v2711, %v2768
      %v2773 = vpack.c.bf16 %v2772, %v2771
      %v2775 = vunpack.c.l.b16 %v2773
      %v2776 = vunpack.c.h.b16 %v2773
      %v2777 = vpack.c.b16 %v2775, %v2775
      %v2778 = vpack.c.b16 %v2776, %v2776
      %s2781 = scalar_lea.vmem %s229, 24
      %2782 = vst [vmem:[%s2781] sm:$0xf] %v2777
      %2783 = vst [vmem:[%s2781 + $0x4] sm:$0xf] %v2778
      %v2784 = vunpack.c.l.bf16 %v2773
      %v2785 = vunpack.c.h.bf16 %v2773
      %v2786 = vmul.f32 %v2784, %v956
      %v2787 = vmul.f32 %v2785, %v956
      %v2788 = vadd.f32 %v2179, %v2786
      %v2789 = vadd.f32 %v2180, %v2787
      %v2790 = vmul.f32 %v2786, %v2784
      %v2791 = vmul.f32 %v2787, %v2785
      %v2792 = vadd.f32 %v2183, %v2790
      %v2793 = vadd.f32 %v2184, %v2791
      %s2794 = sadd.s32 %s966, 4
      %s2795 = smul.u32 %s2794, 16
      %s2796 = sshra.s32 %s2795, 3
      %s2797 = sand.u32 %s2795, 7
      %s2798 = smul.u32 %s2796, 2
      %s2799 = smul.addr %s2798, 4
      %s2800 = scalar_lea.vmem %s219, %s2799
      %v2801 = vld [vmem:[%s2800] sm:$0xf]
      %v2802 = vld [vmem:[%s2800 + $0x8] sm:$0xf]
      %v2803 = vld [vmem:[%s2800 + $0x10] sm:$0xf]
      %v2804 = vld [vmem:[%s2800 + $0x18] sm:$0xf]
      %v2805 = vld [vmem:[%s2800 + $0x20] sm:$0xf]
      %v2806 = vld [vmem:[%s2800 + $0x28] sm:$0xf]
      %v2807 = vld [vmem:[%s2800] sm:$0xff]
      %v2808 = vld [vmem:[%s2800 + $0x8] sm:$0xff]
      %v2809 = vld [vmem:[%s2800 + $0x10] sm:$0xff]
      %v2810 = vld [vmem:[%s2800 + $0x18] sm:$0xff]
      %v2811 = vld [vmem:[%s2800 + $0x20] sm:$0xff]
      %v2812 = vld [vmem:[%s2800 + $0x28] sm:$0xff]
      %v2819 = vunpack.c.l.b16 %v2807
      %v2820 = vunpack.c.h.b16 %v2807
      %v2821 = vunpack.c.l.b16 %v2808
      %v2822 = vunpack.c.h.b16 %v2808
      %v2823 = vunpack.c.l.b16 %v2809
      %v2824 = vunpack.c.h.b16 %v2809
      %v2825 = vunpack.c.l.b16 %v2810
      %v2826 = vunpack.c.h.b16 %v2810
      %v2827 = vunpack.c.l.b16 %v2811
      %v2828 = vunpack.c.h.b16 %v2811
      %v2829 = vunpack.c.l.b16 %v2812
      %v2830 = vunpack.c.h.b16 %v2812
      %v2831 = vpack.c.b16 %v2821, %v2819
      %v2832 = vpack.c.b16 %v2822, %v2820
      %v2833 = vpack.c.b16 %v2825, %v2823
      %v2834 = vpack.c.b16 %v2826, %v2824
      %v2835 = vpack.c.b16 %v2829, %v2827
      %v2836 = vpack.c.b16 %v2830, %v2828
      %2837 = vrot.lane.b32.xlu0 %v2831, 127
      %v2838 = vpop.permute.xlu0 %2837
      %2839 = vrot.lane.b32.xlu0 %v2832, 127
      %v2840 = vpop.permute.xlu0 %2839
      %2841 = vrot.lane.b32.xlu0 %v2833, 127
      %v2842 = vpop.permute.xlu0 %2841
      %2843 = vrot.lane.b32.xlu0 %v2834, 127
      %v2844 = vpop.permute.xlu0 %2843
      %2845 = vrot.lane.b32.xlu0 %v2835, 127
      %v2846 = vpop.permute.xlu0 %2845
      %2847 = vrot.lane.b32.xlu0 %v2836, 127
      %v2848 = vpop.permute.xlu0 %2847
      %v2849 = vsel %vm331, %v2838, %v2840
      %v2850 = vsel %vm331, %v2842, %v2844
      %v2851 = vsel %vm331, %v2846, %v2848
      %2855 = vmatprep.subr.bf16.mxu0 0
      %2856 = vmatpush1.bf16.msra.mxu0 %v2849
      %2857 = vmatprep.subr.bf16.mxu0 0
      %2858 = vmatpush1.bf16.msra.mxu0 %v2850
      %2859 = vmatprep.subr.bf16.mxu0 0
      %2860 = vmatpush1.bf16.msra.mxu0 %v2851
      %2861 = vmatprep.subr.bf16.mxu0 0
      %2862 = vmatpush1.bf16.msra.mxu0 0
      %2863 = vmatprep.subr.bf16.mxu0 0
      %2864 = vmatpush1.bf16.msra.mxu0 0
      %2865 = vmatprep.subr.bf16.mxu0 0
      %2866 = vmatpush1.bf16.msra.mxu0 0
      %2867 = vmatprep.subr.bf16.mxu0 0
      %2868 = vmatpush1.bf16.msra.mxu0 0
      %2869 = vmatprep.subr.bf16.mxu0 0
      %2870 = vmatpush1.bf16.msra.mxu0 0
      %2871 = vmatprep.subr.bf16.mxu0 0
      %2872 = vmatpush1.bf16.msra.mxu0 0
      %2873 = vmatprep.subr.bf16.mxu0 0
      %2874 = vmatpush1.bf16.msra.mxu0 0
      %2875 = vmatprep.subr.bf16.mxu0 0
      %2876 = vmatpush1.bf16.msra.mxu0 0
      %2877 = vmatprep.subr.bf16.mxu0 0
      %2878 = vmatpush1.bf16.msra.mxu0 0
      %2879 = vmatprep.subr.bf16.mxu0 0
      %2880 = vmatpush1.bf16.msra.mxu0 0
      %2881 = vmatprep.subr.bf16.mxu0 0
      %2882 = vmatpush1.bf16.msra.mxu0 0
      %2883 = vmatprep.subr.bf16.mxu0 0
      %2884 = vmatpush1.bf16.msra.mxu0 0
      %2885 = vmatprep.subr.bf16.mxu0 0
      %2886 = vmatpush1.bf16.msra.mxu0 0
      %2887 = vmatprep.mubr.bf16.mxu0 0
      %2888 = vmatmul.mubr.bf16.gmra.mrb[0].mxu0 %v340
      %v2889 = vpop.f32.mrb[0].mxu0
      %v2890 = vadd.f32 0.0, %v2889
      %v2891 = vpop.f32.mrb[0].mxu0
      %v2892 = vpop.f32.mrb[0].mxu0
      %v2893 = vadd.f32 0.0, %v2892
      %v2894 = vpop.f32.mrb[0].mxu0
      %2895 = vdwg.mxu0
      %v2902 = vunpack.c.l.b16 %v2801
      %v2903 = vunpack.c.l.b16 %v2802
      %v2904 = vunpack.c.l.b16 %v2803
      %v2905 = vunpack.c.l.b16 %v2804
      %v2906 = vunpack.c.l.b16 %v2805
      %v2907 = vunpack.c.l.b16 %v2806
      %v2908 = vpack.c.b16 %v2903, %v2902
      %v2909 = vpack.c.b16 %v2905, %v2904
      %v2910 = vpack.c.b16 %v2907, %v2906
      %2914 = vmatprep.subr.bf16.mxu0 0
      %2915 = vmatpush1.bf16.msra.mxu0 %v2908
      %2916 = vmatprep.subr.bf16.mxu0 0
      %2917 = vmatpush1.bf16.msra.mxu0 %v2909
      %2918 = vmatprep.subr.bf16.mxu0 0
      %2919 = vmatpush1.bf16.msra.mxu0 %v2910
      %2920 = vmatprep.subr.bf16.mxu0 0
      %2921 = vmatpush1.bf16.msra.mxu0 0
      %2922 = vmatprep.subr.bf16.mxu0 0
      %2923 = vmatpush1.bf16.msra.mxu0 0
      %2924 = vmatprep.subr.bf16.mxu0 0
      %2925 = vmatpush1.bf16.msra.mxu0 0
      %2926 = vmatprep.subr.bf16.mxu0 0
      %2927 = vmatpush1.bf16.msra.mxu0 0
      %2928 = vmatprep.subr.bf16.mxu0 0
      %2929 = vmatpush1.bf16.msra.mxu0 0
      %2930 = vmatprep.subr.bf16.mxu0 0
      %2931 = vmatpush1.bf16.msra.mxu0 0
      %2932 = vmatprep.subr.bf16.mxu0 0
      %2933 = vmatpush1.bf16.msra.mxu0 0
      %2934 = vmatprep.subr.bf16.mxu0 0
      %2935 = vmatpush1.bf16.msra.mxu0 0
      %2936 = vmatprep.subr.bf16.mxu0 0
      %2937 = vmatpush1.bf16.msra.mxu0 0
      %2938 = vmatprep.subr.bf16.mxu0 0
      %2939 = vmatpush1.bf16.msra.mxu0 0
      %2940 = vmatprep.subr.bf16.mxu0 0
      %2941 = vmatpush1.bf16.msra.mxu0 0
      %2942 = vmatprep.subr.bf16.mxu0 0
      %2943 = vmatpush1.bf16.msra.mxu0 0
      %2944 = vmatprep.subr.bf16.mxu0 0
      %2945 = vmatpush1.bf16.msra.mxu0 0
      %2946 = vmatprep.mubr.bf16.mxu0 0
      %2947 = vmatmul.mubr.bf16.gmra.mrb[0].mxu0 %v407
      %v2948 = vpop.f32.mrb[0].mxu0
      %v2949 = vadd.f32 %v2890, %v2948
      %v2950 = vpop.f32.mrb[0].mxu0
      %v2951 = vpop.f32.mrb[0].mxu0
      %v2952 = vadd.f32 %v2893, %v2951
      %v2953 = vpop.f32.mrb[0].mxu0
      %2954 = vdwg.mxu0
      %2955 = vrot.lane.b32.xlu0 %v2831, 126
      %v2956 = vpop.permute.xlu0 %2955
      %2957 = vrot.lane.b32.xlu0 %v2832, 126
      %v2958 = vpop.permute.xlu0 %2957
      %2959 = vrot.lane.b32.xlu0 %v2833, 126
      %v2960 = vpop.permute.xlu0 %2959
      %2961 = vrot.lane.b32.xlu0 %v2834, 126
      %v2962 = vpop.permute.xlu0 %2961
      %2963 = vrot.lane.b32.xlu0 %v2835, 126
      %v2964 = vpop.permute.xlu0 %2963
      %2965 = vrot.lane.b32.xlu0 %v2836, 126
      %v2966 = vpop.permute.xlu0 %2965
      %v2967 = vsel %vm467, %v2956, %v2958
      %v2968 = vsel %vm467, %v2960, %v2962
      %v2969 = vsel %vm467, %v2964, %v2966
      %2973 = vmatprep.subr.bf16.mxu0 0
      %2974 = vmatpush1.bf16.msra.mxu0 %v2967
      %2975 = vmatprep.subr.bf16.mxu0 0
      %2976 = vmatpush1.bf16.msra.mxu0 %v2968
      %2977 = vmatprep.subr.bf16.mxu0 0
      %2978 = vmatpush1.bf16.msra.mxu0 %v2969
      %2979 = vmatprep.subr.bf16.mxu0 0
      %2980 = vmatpush1.bf16.msra.mxu0 0
      %2981 = vmatprep.subr.bf16.mxu0 0
      %2982 = vmatpush1.bf16.msra.mxu0 0
      %2983 = vmatprep.subr.bf16.mxu0 0
      %2984 = vmatpush1.bf16.msra.mxu0 0
      %2985 = vmatprep.subr.bf16.mxu0 0
      %2986 = vmatpush1.bf16.msra.mxu0 0
      %2987 = vmatprep.subr.bf16.mxu0 0
      %2988 = vmatpush1.bf16.msra.mxu0 0
      %2989 = vmatprep.subr.bf16.mxu0 0
      %2990 = vmatpush1.bf16.msra.mxu0 0
      %2991 = vmatprep.subr.bf16.mxu0 0
      %2992 = vmatpush1.bf16.msra.mxu0 0
      %2993 = vmatprep.subr.bf16.mxu0 0
      %2994 = vmatpush1.bf16.msra.mxu0 0
      %2995 = vmatprep.subr.bf16.mxu0 0
      %2996 = vmatpush1.bf16.msra.mxu0 0
      %2997 = vmatprep.subr.bf16.mxu0 0
      %2998 = vmatpush1.bf16.msra.mxu0 0
      %2999 = vmatprep.subr.bf16.mxu0 0
      %3000 = vmatpush1.bf16.msra.mxu0 0
      %3001 = vmatprep.subr.bf16.mxu0 0
      %3002 = vmatpush1.bf16.msra.mxu0 0
      %3003 = vmatprep.subr.bf16.mxu0 0
      %3004 = vmatpush1.bf16.msra.mxu0 0
      %3005 = vmatprep.mubr.bf16.mxu0 0
      %3006 = vmatmul.mubr.bf16.gmra.mrb[0].mxu0 %v475
      %v3007 = vpop.f32.mrb[0].mxu0
      %v3008 = vadd.f32 0.0, %v3007
      %v3009 = vpop.f32.mrb[0].mxu0
      %v3010 = vpop.f32.mrb[0].mxu0
      %v3011 = vadd.f32 0.0, %v3010
      %v3012 = vpop.f32.mrb[0].mxu0
      %3013 = vdwg.mxu0
      %v3014 = vadd.f32 %v2949, %v3008
      %v3015 = vadd.f32 %v2952, %v3011
      %3016 = vrot.lane.b32.xlu0 %v2831, 118
      %v3017 = vpop.permute.xlu0 %3016
      %3018 = vrot.lane.b32.xlu0 %v2832, 118
      %v3019 = vpop.permute.xlu0 %3018
      %3020 = vrot.lane.b32.xlu0 %v2833, 118
      %v3021 = vpop.permute.xlu0 %3020
      %3022 = vrot.lane.b32.xlu0 %v2834, 118
      %v3023 = vpop.permute.xlu0 %3022
      %3024 = vrot.lane.b32.xlu0 %v2835, 118
      %v3025 = vpop.permute.xlu0 %3024
      %3026 = vrot.lane.b32.xlu0 %v2836, 118
      %v3027 = vpop.permute.xlu0 %3026
      %v3028 = vsel %vm537, %v3017, %v3019
      %v3029 = vsel %vm537, %v3021, %v3023
      %v3030 = vsel %vm537, %v3025, %v3027
      %3034 = vmatprep.subr.bf16.mxu0 0
      %3035 = vmatpush1.bf16.msra.mxu0 %v3028
      %3036 = vmatprep.subr.bf16.mxu0 0
      %3037 = vmatpush1.bf16.msra.mxu0 %v3029
      %3038 = vmatprep.subr.bf16.mxu0 0
      %3039 = vmatpush1.bf16.msra.mxu0 %v3030
      %3040 = vmatprep.subr.bf16.mxu0 0
      %3041 = vmatpush1.bf16.msra.mxu0 0
      %3042 = vmatprep.subr.bf16.mxu0 0
      %3043 = vmatpush1.bf16.msra.mxu0 0
      %3044 = vmatprep.subr.bf16.mxu0 0
      %3045 = vmatpush1.bf16.msra.mxu0 0
      %3046 = vmatprep.subr.bf16.mxu0 0
      %3047 = vmatpush1.bf16.msra.mxu0 0
      %3048 = vmatprep.subr.bf16.mxu0 0
      %3049 = vmatpush1.bf16.msra.mxu0 0
      %3050 = vmatprep.subr.bf16.mxu0 0
      %3051 = vmatpush1.bf16.msra.mxu0 0
      %3052 = vmatprep.subr.bf16.mxu0 0
      %3053 = vmatpush1.bf16.msra.mxu0 0
      %3054 = vmatprep.subr.bf16.mxu0 0
      %3055 = vmatpush1.bf16.msra.mxu0 0
      %3056 = vmatprep.subr.bf16.mxu0 0
      %3057 = vmatpush1.bf16.msra.mxu0 0
      %3058 = vmatprep.subr.bf16.mxu0 0
      %3059 = vmatpush1.bf16.msra.mxu0 0
      %3060 = vmatprep.subr.bf16.mxu0 0
      %3061 = vmatpush1.bf16.msra.mxu0 0
      %3062 = vmatprep.subr.bf16.mxu0 0
      %3063 = vmatpush1.bf16.msra.mxu0 0
      %3064 = vmatprep.subr.bf16.mxu0 0
      %3065 = vmatpush1.bf16.msra.mxu0 0
      %3066 = vmatprep.mubr.bf16.mxu0 0
      %3067 = vmatmul.mubr.bf16.gmra.mrb[0].mxu0 %v545
      %v3068 = vpop.f32.mrb[0].mxu0
      %v3069 = vadd.f32 0.0, %v3068
      %v3070 = vpop.f32.mrb[0].mxu0
      %v3071 = vpop.f32.mrb[0].mxu0
      %v3072 = vadd.f32 0.0, %v3071
      %v3073 = vpop.f32.mrb[0].mxu0
      %3074 = vdwg.mxu0
      %v3075 = vadd.f32 %v3014, %v3069
      %v3076 = vadd.f32 %v3015, %v3072
      %3077 = vrot.lane.b32.xlu0 %v2831, 117
      %v3078 = vpop.permute.xlu0 %3077
      %3079 = vrot.lane.b32.xlu0 %v2832, 117
      %v3080 = vpop.permute.xlu0 %3079
      %3081 = vrot.lane.b32.xlu0 %v2833, 117
      %v3082 = vpop.permute.xlu0 %3081
      %3083 = vrot.lane.b32.xlu0 %v2834, 117
      %v3084 = vpop.permute.xlu0 %3083
      %3085 = vrot.lane.b32.xlu0 %v2835, 117
      %v3086 = vpop.permute.xlu0 %3085
      %3087 = vrot.lane.b32.xlu0 %v2836, 117
      %v3088 = vpop.permute.xlu0 %3087
      %v3089 = vsel %vm607, %v3078, %v3080
      %v3090 = vsel %vm607, %v3082, %v3084
      %v3091 = vsel %vm607, %v3086, %v3088
      %3095 = vmatprep.subr.bf16.mxu0 0
      %3096 = vmatpush1.bf16.msra.mxu0 %v3089
      %3097 = vmatprep.subr.bf16.mxu0 0
      %3098 = vmatpush1.bf16.msra.mxu0 %v3090
      %3099 = vmatprep.subr.bf16.mxu0 0
      %3100 = vmatpush1.bf16.msra.mxu0 %v3091
      %3101 = vmatprep.subr.bf16.mxu0 0
      %3102 = vmatpush1.bf16.msra.mxu0 0
      %3103 = vmatprep.subr.bf16.mxu0 0
      %3104 = vmatpush1.bf16.msra.mxu0 0
      %3105 = vmatprep.subr.bf16.mxu0 0
      %3106 = vmatpush1.bf16.msra.mxu0 0
      %3107 = vmatprep.subr.bf16.mxu0 0
      %3108 = vmatpush1.bf16.msra.mxu0 0
      %3109 = vmatprep.subr.bf16.mxu0 0
      %3110 = vmatpush1.bf16.msra.mxu0 0
      %3111 = vmatprep.subr.bf16.mxu0 0
      %3112 = vmatpush1.bf16.msra.mxu0 0
      %3113 = vmatprep.subr.bf16.mxu0 0
      %3114 = vmatpush1.bf16.msra.mxu0 0
      %3115 = vmatprep.subr.bf16.mxu0 0
      %3116 = vmatpush1.bf16.msra.mxu0 0
      %3117 = vmatprep.subr.bf16.mxu0 0
      %3118 = vmatpush1.bf16.msra.mxu0 0
      %3119 = vmatprep.subr.bf16.mxu0 0
      %3120 = vmatpush1.bf16.msra.mxu0 0
      %3121 = vmatprep.subr.bf16.mxu0 0
      %3122 = vmatpush1.bf16.msra.mxu0 0
      %3123 = vmatprep.subr.bf16.mxu0 0
      %3124 = vmatpush1.bf16.msra.mxu0 0
      %3125 = vmatprep.subr.bf16.mxu0 0
      %3126 = vmatpush1.bf16.msra.mxu0 0
      %3127 = vmatprep.mubr.bf16.mxu0 0
      %3128 = vmatmul.mubr.bf16.gmra.mrb[0].mxu0 %v615
      %v3129 = vpop.f32.mrb[0].mxu0
      %v3130 = vadd.f32 0.0, %v3129
      %v3131 = vpop.f32.mrb[0].mxu0
      %v3132 = vpop.f32.mrb[0].mxu0
      %v3133 = vadd.f32 0.0, %v3132
      %v3134 = vpop.f32.mrb[0].mxu0
      %3135 = vdwg.mxu0
      %v3136 = vadd.f32 %v3075, %v3130
      %v3137 = vadd.f32 %v3076, %v3133
      %3138 = vrot.lane.b32.xlu0 %v2831, 116
      %v3139 = vpop.permute.xlu0 %3138
      %3140 = vrot.lane.b32.xlu0 %v2832, 116
      %v3141 = vpop.permute.xlu0 %3140
      %3142 = vrot.lane.b32.xlu0 %v2833, 116
      %v3143 = vpop.permute.xlu0 %3142
      %3144 = vrot.lane.b32.xlu0 %v2834, 116
      %v3145 = vpop.permute.xlu0 %3144
      %3146 = vrot.lane.b32.xlu0 %v2835, 116
      %v3147 = vpop.permute.xlu0 %3146
      %3148 = vrot.lane.b32.xlu0 %v2836, 116
      %v3149 = vpop.permute.xlu0 %3148
      %v3150 = vsel %vm677, %v3139, %v3141
      %v3151 = vsel %vm677, %v3143, %v3145
      %v3152 = vsel %vm677, %v3147, %v3149
      %3156 = vmatprep.subr.bf16.mxu0 0
      %3157 = vmatpush1.bf16.msra.mxu0 %v3150
      %3158 = vmatprep.subr.bf16.mxu0 0
      %3159 = vmatpush1.bf16.msra.mxu0 %v3151
      %3160 = vmatprep.subr.bf16.mxu0 0
      %3161 = vmatpush1.bf16.msra.mxu0 %v3152
      %3162 = vmatprep.subr.bf16.mxu0 0
      %3163 = vmatpush1.bf16.msra.mxu0 0
      %3164 = vmatprep.subr.bf16.mxu0 0
      %3165 = vmatpush1.bf16.msra.mxu0 0
      %3166 = vmatprep.subr.bf16.mxu0 0
      %3167 = vmatpush1.bf16.msra.mxu0 0
      %3168 = vmatprep.subr.bf16.mxu0 0
      %3169 = vmatpush1.bf16.msra.mxu0 0
      %3170 = vmatprep.subr.bf16.mxu0 0
      %3171 = vmatpush1.bf16.msra.mxu0 0
      %3172 = vmatprep.subr.bf16.mxu0 0
      %3173 = vmatpush1.bf16.msra.mxu0 0
      %3174 = vmatprep.subr.bf16.mxu0 0
      %3175 = vmatpush1.bf16.msra.mxu0 0
      %3176 = vmatprep.subr.bf16.mxu0 0
      %3177 = vmatpush1.bf16.msra.mxu0 0
      %3178 = vmatprep.subr.bf16.mxu0 0
      %3179 = vmatpush1.bf16.msra.mxu0 0
      %3180 = vmatprep.subr.bf16.mxu0 0
      %3181 = vmatpush1.bf16.msra.mxu0 0
      %3182 = vmatprep.subr.bf16.mxu0 0
      %3183 = vmatpush1.bf16.msra.mxu0 0
      %3184 = vmatprep.subr.bf16.mxu0 0
      %3185 = vmatpush1.bf16.msra.mxu0 0
      %3186 = vmatprep.subr.bf16.mxu0 0
      %3187 = vmatpush1.bf16.msra.mxu0 0
      %3188 = vmatprep.mubr.bf16.mxu0 0
      %3189 = vmatmul.mubr.bf16.gmra.mrb[0].mxu0 %v685
      %v3190 = vpop.f32.mrb[0].mxu0
      %v3191 = vadd.f32 0.0, %v3190
      %v3192 = vpop.f32.mrb[0].mxu0
      %v3193 = vpop.f32.mrb[0].mxu0
      %v3194 = vadd.f32 0.0, %v3193
      %v3195 = vpop.f32.mrb[0].mxu0
      %3196 = vdwg.mxu0
      %v3197 = vadd.f32 %v3136, %v3191
      %v3198 = vadd.f32 %v3137, %v3194
      %3199 = vrot.lane.b32.xlu0 %v2831, 108
      %v3200 = vpop.permute.xlu0 %3199
      %3201 = vrot.lane.b32.xlu0 %v2832, 108
      %v3202 = vpop.permute.xlu0 %3201
      %3203 = vrot.lane.b32.xlu0 %v2833, 108
      %v3204 = vpop.permute.xlu0 %3203
      %3205 = vrot.lane.b32.xlu0 %v2834, 108
      %v3206 = vpop.permute.xlu0 %3205
      %3207 = vrot.lane.b32.xlu0 %v2835, 108
      %v3208 = vpop.permute.xlu0 %3207
      %3209 = vrot.lane.b32.xlu0 %v2836, 108
      %v3210 = vpop.permute.xlu0 %3209
      %v3211 = vsel %vm747, %v3200, %v3202
      %v3212 = vsel %vm747, %v3204, %v3206
      %v3213 = vsel %vm747, %v3208, %v3210
      %3217 = vmatprep.subr.bf16.mxu0 0
      %3218 = vmatpush1.bf16.msra.mxu0 %v3211
      %3219 = vmatprep.subr.bf16.mxu0 0
      %3220 = vmatpush1.bf16.msra.mxu0 %v3212
      %3221 = vmatprep.subr.bf16.mxu0 0
      %3222 = vmatpush1.bf16.msra.mxu0 %v3213
      %3223 = vmatprep.subr.bf16.mxu0 0
      %3224 = vmatpush1.bf16.msra.mxu0 0
      %3225 = vmatprep.subr.bf16.mxu0 0
      %3226 = vmatpush1.bf16.msra.mxu0 0
      %3227 = vmatprep.subr.bf16.mxu0 0
      %3228 = vmatpush1.bf16.msra.mxu0 0
      %3229 = vmatprep.subr.bf16.mxu0 0
      %3230 = vmatpush1.bf16.msra.mxu0 0
      %3231 = vmatprep.subr.bf16.mxu0 0
      %3232 = vmatpush1.bf16.msra.mxu0 0
      %3233 = vmatprep.subr.bf16.mxu0 0
      %3234 = vmatpush1.bf16.msra.mxu0 0
      %3235 = vmatprep.subr.bf16.mxu0 0
      %3236 = vmatpush1.bf16.msra.mxu0 0
      %3237 = vmatprep.subr.bf16.mxu0 0
      %3238 = vmatpush1.bf16.msra.mxu0 0
      %3239 = vmatprep.subr.bf16.mxu0 0
      %3240 = vmatpush1.bf16.msra.mxu0 0
      %3241 = vmatprep.subr.bf16.mxu0 0
      %3242 = vmatpush1.bf16.msra.mxu0 0
      %3243 = vmatprep.subr.bf16.mxu0 0
      %3244 = vmatpush1.bf16.msra.mxu0 0
      %3245 = vmatprep.subr.bf16.mxu0 0
      %3246 = vmatpush1.bf16.msra.mxu0 0
      %3247 = vmatprep.subr.bf16.mxu0 0
      %3248 = vmatpush1.bf16.msra.mxu0 0
      %3249 = vmatprep.mubr.bf16.mxu0 0
      %3250 = vmatmul.mubr.bf16.gmra.mrb[0].mxu0 %v755
      %v3251 = vpop.f32.mrb[0].mxu0
      %v3252 = vadd.f32 0.0, %v3251
      %v3253 = vpop.f32.mrb[0].mxu0
      %v3254 = vpop.f32.mrb[0].mxu0
      %v3255 = vadd.f32 0.0, %v3254
      %v3256 = vpop.f32.mrb[0].mxu0
      %3257 = vdwg.mxu0
      %v3258 = vadd.f32 %v3197, %v3252
      %v3259 = vadd.f32 %v3198, %v3255
      %3260 = vrot.lane.b32.xlu0 %v2831, 107
      %v3261 = vpop.permute.xlu0 %3260
      %3262 = vrot.lane.b32.xlu0 %v2832, 107
      %v3263 = vpop.permute.xlu0 %3262
      %3264 = vrot.lane.b32.xlu0 %v2833, 107
      %v3265 = vpop.permute.xlu0 %3264
      %3266 = vrot.lane.b32.xlu0 %v2834, 107
      %v3267 = vpop.permute.xlu0 %3266
      %3268 = vrot.lane.b32.xlu0 %v2835, 107
      %v3269 = vpop.permute.xlu0 %3268
      %3270 = vrot.lane.b32.xlu0 %v2836, 107
      %v3271 = vpop.permute.xlu0 %3270
      %v3272 = vsel %vm817, %v3261, %v3263
      %v3273 = vsel %vm817, %v3265, %v3267
      %v3274 = vsel %vm817, %v3269, %v3271
      %3278 = vmatprep.subr.bf16.mxu0 0
      %3279 = vmatpush1.bf16.msra.mxu0 %v3272
      %3280 = vmatprep.subr.bf16.mxu0 0
      %3281 = vmatpush1.bf16.msra.mxu0 %v3273
      %3282 = vmatprep.subr.bf16.mxu0 0
      %3283 = vmatpush1.bf16.msra.mxu0 %v3274
      %3284 = vmatprep.subr.bf16.mxu0 0
      %3285 = vmatpush1.bf16.msra.mxu0 0
      %3286 = vmatprep.subr.bf16.mxu0 0
      %3287 = vmatpush1.bf16.msra.mxu0 0
      %3288 = vmatprep.subr.bf16.mxu0 0
      %3289 = vmatpush1.bf16.msra.mxu0 0
      %3290 = vmatprep.subr.bf16.mxu0 0
      %3291 = vmatpush1.bf16.msra.mxu0 0
      %3292 = vmatprep.subr.bf16.mxu0 0
      %3293 = vmatpush1.bf16.msra.mxu0 0
      %3294 = vmatprep.subr.bf16.mxu0 0
      %3295 = vmatpush1.bf16.msra.mxu0 0
      %3296 = vmatprep.subr.bf16.mxu0 0
      %3297 = vmatpush1.bf16.msra.mxu0 0
      %3298 = vmatprep.subr.bf16.mxu0 0
      %3299 = vmatpush1.bf16.msra.mxu0 0
      %3300 = vmatprep.subr.bf16.mxu0 0
      %3301 = vmatpush1.bf16.msra.mxu0 0
      %3302 = vmatprep.subr.bf16.mxu0 0
      %3303 = vmatpush1.bf16.msra.mxu0 0
      %3304 = vmatprep.subr.bf16.mxu0 0
      %3305 = vmatpush1.bf16.msra.mxu0 0
      %3306 = vmatprep.subr.bf16.mxu0 0
      %3307 = vmatpush1.bf16.msra.mxu0 0
      %3308 = vmatprep.subr.bf16.mxu0 0
      %3309 = vmatpush1.bf16.msra.mxu0 0
      %3310 = vmatprep.mubr.bf16.mxu0 0
      %3311 = vmatmul.mubr.bf16.gmra.mrb[0].mxu0 %v825
      %v3312 = vpop.f32.mrb[0].mxu0
      %v3313 = vadd.f32 0.0, %v3312
      %v3314 = vpop.f32.mrb[0].mxu0
      %v3315 = vpop.f32.mrb[0].mxu0
      %v3316 = vadd.f32 0.0, %v3315
      %v3317 = vpop.f32.mrb[0].mxu0
      %3318 = vdwg.mxu0
      %v3319 = vadd.f32 %v3258, %v3313
      %v3320 = vadd.f32 %v3259, %v3316
      %3321 = vrot.lane.b32.xlu0 %v2831, 106
      %v3322 = vpop.permute.xlu0 %3321
      %3323 = vrot.lane.b32.xlu0 %v2832, 106
      %v3324 = vpop.permute.xlu0 %3323
      %3325 = vrot.lane.b32.xlu0 %v2833, 106
      %v3326 = vpop.permute.xlu0 %3325
      %3327 = vrot.lane.b32.xlu0 %v2834, 106
      %v3328 = vpop.permute.xlu0 %3327
      %3329 = vrot.lane.b32.xlu0 %v2835, 106
      %v3330 = vpop.permute.xlu0 %3329
      %3331 = vrot.lane.b32.xlu0 %v2836, 106
      %v3332 = vpop.permute.xlu0 %3331
      %v3333 = vsel %vm887, %v3322, %v3324
      %v3334 = vsel %vm887, %v3326, %v3328
      %v3335 = vsel %vm887, %v3330, %v3332
      %3339 = vmatprep.subr.bf16.mxu0 0
      %3340 = vmatpush1.bf16.msra.mxu0 %v3333
      %3341 = vmatprep.subr.bf16.mxu0 0
      %3342 = vmatpush1.bf16.msra.mxu0 %v3334
      %3343 = vmatprep.subr.bf16.mxu0 0
      %3344 = vmatpush1.bf16.msra.mxu0 %v3335
      %3345 = vmatprep.subr.bf16.mxu0 0
      %3346 = vmatpush1.bf16.msra.mxu0 0
      %3347 = vmatprep.subr.bf16.mxu0 0
      %3348 = vmatpush1.bf16.msra.mxu0 0
      %3349 = vmatprep.subr.bf16.mxu0 0
      %3350 = vmatpush1.bf16.msra.mxu0 0
      %3351 = vmatprep.subr.bf16.mxu0 0
      %3352 = vmatpush1.bf16.msra.mxu0 0
      %3353 = vmatprep.subr.bf16.mxu0 0
      %3354 = vmatpush1.bf16.msra.mxu0 0
      %3355 = vmatprep.subr.bf16.mxu0 0
      %3356 = vmatpush1.bf16.msra.mxu0 0
      %3357 = vmatprep.subr.bf16.mxu0 0
      %3358 = vmatpush1.bf16.msra.mxu0 0
      %3359 = vmatprep.subr.bf16.mxu0 0
      %3360 = vmatpush1.bf16.msra.mxu0 0
      %3361 = vmatprep.subr.bf16.mxu0 0
      %3362 = vmatpush1.bf16.msra.mxu0 0
      %3363 = vmatprep.subr.bf16.mxu0 0
      %3364 = vmatpush1.bf16.msra.mxu0 0
      %3365 = vmatprep.subr.bf16.mxu0 0
      %3366 = vmatpush1.bf16.msra.mxu0 0
      %3367 = vmatprep.subr.bf16.mxu0 0
      %3368 = vmatpush1.bf16.msra.mxu0 0
      %3369 = vmatprep.subr.bf16.mxu0 0
      %3370 = vmatpush1.bf16.msra.mxu0 0
      %3371 = vmatprep.mubr.bf16.mxu0 0
      %3372 = vmatmul.mubr.bf16.gmra.mrb[0].mxu0 %v895
      %v3373 = vpop.f32.mrb[0].mxu0
      %v3374 = vadd.f32 0.0, %v3373
      %v3375 = vpop.f32.mrb[0].mxu0
      %v3376 = vpop.f32.mrb[0].mxu0
      %v3377 = vadd.f32 0.0, %v3376
      %v3378 = vpop.f32.mrb[0].mxu0
      %3379 = vdwg.mxu0
      %v3380 = vadd.f32 %v3319, %v3374
      %v3381 = vadd.f32 %v3320, %v3377
      %v3382 = vpack.c.bf16 %v3381, %v3380
      %v3384 = vunpack.c.l.b16 %v3382
      %v3385 = vunpack.c.h.b16 %v3382
      %v3386 = vpack.c.b16 %v3384, %v3384
      %v3387 = vpack.c.b16 %v3385, %v3385
      %s3390 = scalar_lea.vmem %s229, 32
      %3391 = vst [vmem:[%s3390] sm:$0xf] %v3386
      %3392 = vst [vmem:[%s3390 + $0x4] sm:$0xf] %v3387
      %v3393 = vunpack.c.l.bf16 %v3382
      %v3394 = vunpack.c.h.bf16 %v3382
      %v3395 = vmul.f32 %v3393, %v956
      %v3396 = vmul.f32 %v3394, %v956
      %v3397 = vadd.f32 %v2788, %v3395
      %v3398 = vadd.f32 %v2789, %v3396
      %v3399 = vmul.f32 %v3395, %v3393
      %v3400 = vmul.f32 %v3396, %v3394
      %v3401 = vadd.f32 %v2792, %v3399
      %v3402 = vadd.f32 %v2793, %v3400
      %s3403 = sadd.s32 %s966, 5
      %s3404 = smul.u32 %s3403, 16
      %s3405 = sshra.s32 %s3404, 3
      %s3406 = sand.u32 %s3404, 7
      %s3407 = smul.u32 %s3405, 2
      %s3408 = smul.addr %s3407, 4
      %s3409 = scalar_lea.vmem %s219, %s3408
      %v3410 = vld [vmem:[%s3409] sm:$0xf]
      %v3411 = vld [vmem:[%s3409 + $0x8] sm:$0xf]
      %v3412 = vld [vmem:[%s3409 + $0x10] sm:$0xf]
      %v3413 = vld [vmem:[%s3409 + $0x18] sm:$0xf]
      %v3414 = vld [vmem:[%s3409 + $0x20] sm:$0xf]
      %v3415 = vld [vmem:[%s3409 + $0x28] sm:$0xf]
      %v3416 = vld [vmem:[%s3409] sm:$0xff]
      %v3417 = vld [vmem:[%s3409 + $0x8] sm:$0xff]
      %v3418 = vld [vmem:[%s3409 + $0x10] sm:$0xff]
      %v3419 = vld [vmem:[%s3409 + $0x18] sm:$0xff]
      %v3420 = vld [vmem:[%s3409 + $0x20] sm:$0xff]
      %v3421 = vld [vmem:[%s3409 + $0x28] sm:$0xff]
      %v3428 = vunpack.c.l.b16 %v3416
      %v3429 = vunpack.c.h.b16 %v3416
      %v3430 = vunpack.c.l.b16 %v3417
      %v3431 = vunpack.c.h.b16 %v3417
      %v3432 = vunpack.c.l.b16 %v3418
      %v3433 = vunpack.c.h.b16 %v3418
      %v3434 = vunpack.c.l.b16 %v3419
      %v3435 = vunpack.c.h.b16 %v3419
      %v3436 = vunpack.c.l.b16 %v3420
      %v3437 = vunpack.c.h.b16 %v3420
      %v3438 = vunpack.c.l.b16 %v3421
      %v3439 = vunpack.c.h.b16 %v3421
      %v3440 = vpack.c.b16 %v3430, %v3428
      %v3441 = vpack.c.b16 %v3431, %v3429
      %v3442 = vpack.c.b16 %v3434, %v3432
      %v3443 = vpack.c.b16 %v3435, %v3433
      %v3444 = vpack.c.b16 %v3438, %v3436
      %v3445 = vpack.c.b16 %v3439, %v3437
      %3446 = vrot.lane.b32.xlu0 %v3440, 127
      %v3447 = vpop.permute.xlu0 %3446
      %3448 = vrot.lane.b32.xlu0 %v3441, 127
      %v3449 = vpop.permute.xlu0 %3448
      %3450 = vrot.lane.b32.xlu0 %v3442, 127
      %v3451 = vpop.permute.xlu0 %3450
      %3452 = vrot.lane.b32.xlu0 %v3443, 127
      %v3453 = vpop.permute.xlu0 %3452
      %3454 = vrot.lane.b32.xlu0 %v3444, 127
      %v3455 = vpop.permute.xlu0 %3454
      %3456 = vrot.lane.b32.xlu0 %v3445, 127
      %v3457 = vpop.permute.xlu0 %3456
      %v3458 = vsel %vm331, %v3447, %v3449
      %v3459 = vsel %vm331, %v3451, %v3453
      %v3460 = vsel %vm331, %v3455, %v3457
      %3464 = vmatprep.subr.bf16.mxu0 0
      %3465 = vmatpush1.bf16.msra.mxu0 %v3458
      %3466 = vmatprep.subr.bf16.mxu0 0
      %3467 = vmatpush1.bf16.msra.mxu0 %v3459
      %3468 = vmatprep.subr.bf16.mxu0 0
      %3469 = vmatpush1.bf16.msra.mxu0 %v3460
      %3470 = vmatprep.subr.bf16.mxu0 0
      %3471 = vmatpush1.bf16.msra.mxu0 0
      %3472 = vmatprep.subr.bf16.mxu0 0
      %3473 = vmatpush1.bf16.msra.mxu0 0
      %3474 = vmatprep.subr.bf16.mxu0 0
      %3475 = vmatpush1.bf16.msra.mxu0 0
      %3476 = vmatprep.subr.bf16.mxu0 0
      %3477 = vmatpush1.bf16.msra.mxu0 0
      %3478 = vmatprep.subr.bf16.mxu0 0
      %3479 = vmatpush1.bf16.msra.mxu0 0
      %3480 = vmatprep.subr.bf16.mxu0 0
      %3481 = vmatpush1.bf16.msra.mxu0 0
      %3482 = vmatprep.subr.bf16.mxu0 0
      %3483 = vmatpush1.bf16.msra.mxu0 0
      %3484 = vmatprep.subr.bf16.mxu0 0
      %3485 = vmatpush1.bf16.msra.mxu0 0
      %3486 = vmatprep.subr.bf16.mxu0 0
      %3487 = vmatpush1.bf16.msra.mxu0 0
      %3488 = vmatprep.subr.bf16.mxu0 0
      %3489 = vmatpush1.bf16.msra.mxu0 0
      %3490 = vmatprep.subr.bf16.mxu0 0
      %3491 = vmatpush1.bf16.msra.mxu0 0
      %3492 = vmatprep.subr.bf16.mxu0 0
      %3493 = vmatpush1.bf16.msra.mxu0 0
      %3494 = vmatprep.subr.bf16.mxu0 0
      %3495 = vmatpush1.bf16.msra.mxu0 0
      %3496 = vmatprep.mubr.bf16.mxu0 0
      %3497 = vmatmul.mubr.bf16.gmra.mrb[0].mxu0 %v340
      %v3498 = vpop.f32.mrb[0].mxu0
      %v3499 = vadd.f32 0.0, %v3498
      %v3500 = vpop.f32.mrb[0].mxu0
      %v3501 = vpop.f32.mrb[0].mxu0
      %v3502 = vadd.f32 0.0, %v3501
      %v3503 = vpop.f32.mrb[0].mxu0
      %3504 = vdwg.mxu0
      %v3511 = vunpack.c.l.b16 %v3410
      %v3512 = vunpack.c.l.b16 %v3411
      %v3513 = vunpack.c.l.b16 %v3412
      %v3514 = vunpack.c.l.b16 %v3413
      %v3515 = vunpack.c.l.b16 %v3414
      %v3516 = vunpack.c.l.b16 %v3415
      %v3517 = vpack.c.b16 %v3512, %v3511
      %v3518 = vpack.c.b16 %v3514, %v3513
      %v3519 = vpack.c.b16 %v3516, %v3515
      %3523 = vmatprep.subr.bf16.mxu0 0
      %3524 = vmatpush1.bf16.msra.mxu0 %v3517
      %3525 = vmatprep.subr.bf16.mxu0 0
      %3526 = vmatpush1.bf16.msra.mxu0 %v3518
      %3527 = vmatprep.subr.bf16.mxu0 0
      %3528 = vmatpush1.bf16.msra.mxu0 %v3519
      %3529 = vmatprep.subr.bf16.mxu0 0
      %3530 = vmatpush1.bf16.msra.mxu0 0
      %3531 = vmatprep.subr.bf16.mxu0 0
      %3532 = vmatpush1.bf16.msra.mxu0 0
      %3533 = vmatprep.subr.bf16.mxu0 0
      %3534 = vmatpush1.bf16.msra.mxu0 0
      %3535 = vmatprep.subr.bf16.mxu0 0
      %3536 = vmatpush1.bf16.msra.mxu0 0
      %3537 = vmatprep.subr.bf16.mxu0 0
      %3538 = vmatpush1.bf16.msra.mxu0 0
      %3539 = vmatprep.subr.bf16.mxu0 0
      %3540 = vmatpush1.bf16.msra.mxu0 0
      %3541 = vmatprep.subr.bf16.mxu0 0
      %3542 = vmatpush1.bf16.msra.mxu0 0
      %3543 = vmatprep.subr.bf16.mxu0 0
      %3544 = vmatpush1.bf16.msra.mxu0 0
      %3545 = vmatprep.subr.bf16.mxu0 0
      %3546 = vmatpush1.bf16.msra.mxu0 0
      %3547 = vmatprep.subr.bf16.mxu0 0
      %3548 = vmatpush1.bf16.msra.mxu0 0
      %3549 = vmatprep.subr.bf16.mxu0 0
      %3550 = vmatpush1.bf16.msra.mxu0 0
      %3551 = vmatprep.subr.bf16.mxu0 0
      %3552 = vmatpush1.bf16.msra.mxu0 0
      %3553 = vmatprep.subr.bf16.mxu0 0
      %3554 = vmatpush1.bf16.msra.mxu0 0
      %3555 = vmatprep.mubr.bf16.mxu0 0
      %3556 = vmatmul.mubr.bf16.gmra.mrb[0].mxu0 %v407
      %v3557 = vpop.f32.mrb[0].mxu0
      %v3558 = vadd.f32 %v3499, %v3557
      %v3559 = vpop.f32.mrb[0].mxu0
      %v3560 = vpop.f32.mrb[0].mxu0
      %v3561 = vadd.f32 %v3502, %v3560
      %v3562 = vpop.f32.mrb[0].mxu0
      %3563 = vdwg.mxu0
      %3564 = vrot.lane.b32.xlu0 %v3440, 126
      %v3565 = vpop.permute.xlu0 %3564
      %3566 = vrot.lane.b32.xlu0 %v3441, 126
      %v3567 = vpop.permute.xlu0 %3566
      %3568 = vrot.lane.b32.xlu0 %v3442, 126
      %v3569 = vpop.permute.xlu0 %3568
      %3570 = vrot.lane.b32.xlu0 %v3443, 126
      %v3571 = vpop.permute.xlu0 %3570
      %3572 = vrot.lane.b32.xlu0 %v3444, 126
      %v3573 = vpop.permute.xlu0 %3572
      %3574 = vrot.lane.b32.xlu0 %v3445, 126
      %v3575 = vpop.permute.xlu0 %3574
      %v3576 = vsel %vm467, %v3565, %v3567
      %v3577 = vsel %vm467, %v3569, %v3571
      %v3578 = vsel %vm467, %v3573, %v3575
      %3582 = vmatprep.subr.bf16.mxu0 0
      %3583 = vmatpush1.bf16.msra.mxu0 %v3576
      %3584 = vmatprep.subr.bf16.mxu0 0
      %3585 = vmatpush1.bf16.msra.mxu0 %v3577
      %3586 = vmatprep.subr.bf16.mxu0 0
      %3587 = vmatpush1.bf16.msra.mxu0 %v3578
      %3588 = vmatprep.subr.bf16.mxu0 0
      %3589 = vmatpush1.bf16.msra.mxu0 0
      %3590 = vmatprep.subr.bf16.mxu0 0
      %3591 = vmatpush1.bf16.msra.mxu0 0
      %3592 = vmatprep.subr.bf16.mxu0 0
      %3593 = vmatpush1.bf16.msra.mxu0 0
      %3594 = vmatprep.subr.bf16.mxu0 0
      %3595 = vmatpush1.bf16.msra.mxu0 0
      %3596 = vmatprep.subr.bf16.mxu0 0
      %3597 = vmatpush1.bf16.msra.mxu0 0
      %3598 = vmatprep.subr.bf16.mxu0 0
      %3599 = vmatpush1.bf16.msra.mxu0 0
      %3600 = vmatprep.subr.bf16.mxu0 0
      %3601 = vmatpush1.bf16.msra.mxu0 0
      %3602 = vmatprep.subr.bf16.mxu0 0
      %3603 = vmatpush1.bf16.msra.mxu0 0
      %3604 = vmatprep.subr.bf16.mxu0 0
      %3605 = vmatpush1.bf16.msra.mxu0 0
      %3606 = vmatprep.subr.bf16.mxu0 0
      %3607 = vmatpush1.bf16.msra.mxu0 0
      %3608 = vmatprep.subr.bf16.mxu0 0
      %3609 = vmatpush1.bf16.msra.mxu0 0
      %3610 = vmatprep.subr.bf16.mxu0 0
      %3611 = vmatpush1.bf16.msra.mxu0 0
      %3612 = vmatprep.subr.bf16.mxu0 0
      %3613 = vmatpush1.bf16.msra.mxu0 0
      %3614 = vmatprep.mubr.bf16.mxu0 0
      %3615 = vmatmul.mubr.bf16.gmra.mrb[0].mxu0 %v475
      %v3616 = vpop.f32.mrb[0].mxu0
      %v3617 = vadd.f32 0.0, %v3616
      %v3618 = vpop.f32.mrb[0].mxu0
      %v3619 = vpop.f32.mrb[0].mxu0
      %v3620 = vadd.f32 0.0, %v3619
      %v3621 = vpop.f32.mrb[0].mxu0
      %3622 = vdwg.mxu0
      %v3623 = vadd.f32 %v3558, %v3617
      %v3624 = vadd.f32 %v3561, %v3620
      %3625 = vrot.lane.b32.xlu0 %v3440, 118
      %v3626 = vpop.permute.xlu0 %3625
      %3627 = vrot.lane.b32.xlu0 %v3441, 118
      %v3628 = vpop.permute.xlu0 %3627
      %3629 = vrot.lane.b32.xlu0 %v3442, 118
      %v3630 = vpop.permute.xlu0 %3629
      %3631 = vrot.lane.b32.xlu0 %v3443, 118
      %v3632 = vpop.permute.xlu0 %3631
      %3633 = vrot.lane.b32.xlu0 %v3444, 118
      %v3634 = vpop.permute.xlu0 %3633
      %3635 = vrot.lane.b32.xlu0 %v3445, 118
      %v3636 = vpop.permute.xlu0 %3635
      %v3637 = vsel %vm537, %v3626, %v3628
      %v3638 = vsel %vm537, %v3630, %v3632
      %v3639 = vsel %vm537, %v3634, %v3636
      %3643 = vmatprep.subr.bf16.mxu0 0
      %3644 = vmatpush1.bf16.msra.mxu0 %v3637
      %3645 = vmatprep.subr.bf16.mxu0 0
      %3646 = vmatpush1.bf16.msra.mxu0 %v3638
      %3647 = vmatprep.subr.bf16.mxu0 0
      %3648 = vmatpush1.bf16.msra.mxu0 %v3639
      %3649 = vmatprep.subr.bf16.mxu0 0
      %3650 = vmatpush1.bf16.msra.mxu0 0
      %3651 = vmatprep.subr.bf16.mxu0 0
      %3652 = vmatpush1.bf16.msra.mxu0 0
      %3653 = vmatprep.subr.bf16.mxu0 0
      %3654 = vmatpush1.bf16.msra.mxu0 0
      %3655 = vmatprep.subr.bf16.mxu0 0
      %3656 = vmatpush1.bf16.msra.mxu0 0
      %3657 = vmatprep.subr.bf16.mxu0 0
      %3658 = vmatpush1.bf16.msra.mxu0 0
      %3659 = vmatprep.subr.bf16.mxu0 0
      %3660 = vmatpush1.bf16.msra.mxu0 0
      %3661 = vmatprep.subr.bf16.mxu0 0
      %3662 = vmatpush1.bf16.msra.mxu0 0
      %3663 = vmatprep.subr.bf16.mxu0 0
      %3664 = vmatpush1.bf16.msra.mxu0 0
      %3665 = vmatprep.subr.bf16.mxu0 0
      %3666 = vmatpush1.bf16.msra.mxu0 0
      %3667 = vmatprep.subr.bf16.mxu0 0
      %3668 = vmatpush1.bf16.msra.mxu0 0
      %3669 = vmatprep.subr.bf16.mxu0 0
      %3670 = vmatpush1.bf16.msra.mxu0 0
      %3671 = vmatprep.subr.bf16.mxu0 0
      %3672 = vmatpush1.bf16.msra.mxu0 0
      %3673 = vmatprep.subr.bf16.mxu0 0
      %3674 = vmatpush1.bf16.msra.mxu0 0
      %3675 = vmatprep.mubr.bf16.mxu0 0
      %3676 = vmatmul.mubr.bf16.gmra.mrb[0].mxu0 %v545
      %v3677 = vpop.f32.mrb[0].mxu0
      %v3678 = vadd.f32 0.0, %v3677
      %v3679 = vpop.f32.mrb[0].mxu0
      %v3680 = vpop.f32.mrb[0].mxu0
      %v3681 = vadd.f32 0.0, %v3680
      %v3682 = vpop.f32.mrb[0].mxu0
      %3683 = vdwg.mxu0
      %v3684 = vadd.f32 %v3623, %v3678
      %v3685 = vadd.f32 %v3624, %v3681
      %3686 = vrot.lane.b32.xlu0 %v3440, 117
      %v3687 = vpop.permute.xlu0 %3686
      %3688 = vrot.lane.b32.xlu0 %v3441, 117
      %v3689 = vpop.permute.xlu0 %3688
      %3690 = vrot.lane.b32.xlu0 %v3442, 117
      %v3691 = vpop.permute.xlu0 %3690
      %3692 = vrot.lane.b32.xlu0 %v3443, 117
      %v3693 = vpop.permute.xlu0 %3692
      %3694 = vrot.lane.b32.xlu0 %v3444, 117
      %v3695 = vpop.permute.xlu0 %3694
      %3696 = vrot.lane.b32.xlu0 %v3445, 117
      %v3697 = vpop.permute.xlu0 %3696
      %v3698 = vsel %vm607, %v3687, %v3689
      %v3699 = vsel %vm607, %v3691, %v3693
      %v3700 = vsel %vm607, %v3695, %v3697
      %3704 = vmatprep.subr.bf16.mxu0 0
      %3705 = vmatpush1.bf16.msra.mxu0 %v3698
      %3706 = vmatprep.subr.bf16.mxu0 0
      %3707 = vmatpush1.bf16.msra.mxu0 %v3699
      %3708 = vmatprep.subr.bf16.mxu0 0
      %3709 = vmatpush1.bf16.msra.mxu0 %v3700
      %3710 = vmatprep.subr.bf16.mxu0 0
      %3711 = vmatpush1.bf16.msra.mxu0 0
      %3712 = vmatprep.subr.bf16.mxu0 0
      %3713 = vmatpush1.bf16.msra.mxu0 0
      %3714 = vmatprep.subr.bf16.mxu0 0
      %3715 = vmatpush1.bf16.msra.mxu0 0
      %3716 = vmatprep.subr.bf16.mxu0 0
      %3717 = vmatpush1.bf16.msra.mxu0 0
      %3718 = vmatprep.subr.bf16.mxu0 0
      %3719 = vmatpush1.bf16.msra.mxu0 0
      %3720 = vmatprep.subr.bf16.mxu0 0
      %3721 = vmatpush1.bf16.msra.mxu0 0
      %3722 = vmatprep.subr.bf16.mxu0 0
      %3723 = vmatpush1.bf16.msra.mxu0 0
      %3724 = vmatprep.subr.bf16.mxu0 0
      %3725 = vmatpush1.bf16.msra.mxu0 0
      %3726 = vmatprep.subr.bf16.mxu0 0
      %3727 = vmatpush1.bf16.msra.mxu0 0
      %3728 = vmatprep.subr.bf16.mxu0 0
      %3729 = vmatpush1.bf16.msra.mxu0 0
      %3730 = vmatprep.subr.bf16.mxu0 0
      %3731 = vmatpush1.bf16.msra.mxu0 0
      %3732 = vmatprep.subr.bf16.mxu0 0
      %3733 = vmatpush1.bf16.msra.mxu0 0
      %3734 = vmatprep.subr.bf16.mxu0 0
      %3735 = vmatpush1.bf16.msra.mxu0 0
      %3736 = vmatprep.mubr.bf16.mxu0 0
      %3737 = vmatmul.mubr.bf16.gmra.mrb[0].mxu0 %v615
      %v3738 = vpop.f32.mrb[0].mxu0
      %v3739 = vadd.f32 0.0, %v3738
      %v3740 = vpop.f32.mrb[0].mxu0
      %v3741 = vpop.f32.mrb[0].mxu0
      %v3742 = vadd.f32 0.0, %v3741
      %v3743 = vpop.f32.mrb[0].mxu0
      %3744 = vdwg.mxu0
      %v3745 = vadd.f32 %v3684, %v3739
      %v3746 = vadd.f32 %v3685, %v3742
      %3747 = vrot.lane.b32.xlu0 %v3440, 116
      %v3748 = vpop.permute.xlu0 %3747
      %3749 = vrot.lane.b32.xlu0 %v3441, 116
      %v3750 = vpop.permute.xlu0 %3749
      %3751 = vrot.lane.b32.xlu0 %v3442, 116
      %v3752 = vpop.permute.xlu0 %3751
      %3753 = vrot.lane.b32.xlu0 %v3443, 116
      %v3754 = vpop.permute.xlu0 %3753
      %3755 = vrot.lane.b32.xlu0 %v3444, 116
      %v3756 = vpop.permute.xlu0 %3755
      %3757 = vrot.lane.b32.xlu0 %v3445, 116
      %v3758 = vpop.permute.xlu0 %3757
      %v3759 = vsel %vm677, %v3748, %v3750
      %v3760 = vsel %vm677, %v3752, %v3754
      %v3761 = vsel %vm677, %v3756, %v3758
      %3765 = vmatprep.subr.bf16.mxu0 0
      %3766 = vmatpush1.bf16.msra.mxu0 %v3759
      %3767 = vmatprep.subr.bf16.mxu0 0
      %3768 = vmatpush1.bf16.msra.mxu0 %v3760
      %3769 = vmatprep.subr.bf16.mxu0 0
      %3770 = vmatpush1.bf16.msra.mxu0 %v3761
      %3771 = vmatprep.subr.bf16.mxu0 0
      %3772 = vmatpush1.bf16.msra.mxu0 0
      %3773 = vmatprep.subr.bf16.mxu0 0
      %3774 = vmatpush1.bf16.msra.mxu0 0
      %3775 = vmatprep.subr.bf16.mxu0 0
      %3776 = vmatpush1.bf16.msra.mxu0 0
      %3777 = vmatprep.subr.bf16.mxu0 0
      %3778 = vmatpush1.bf16.msra.mxu0 0
      %3779 = vmatprep.subr.bf16.mxu0 0
      %3780 = vmatpush1.bf16.msra.mxu0 0
      %3781 = vmatprep.subr.bf16.mxu0 0
      %3782 = vmatpush1.bf16.msra.mxu0 0
      %3783 = vmatprep.subr.bf16.mxu0 0
      %3784 = vmatpush1.bf16.msra.mxu0 0
      %3785 = vmatprep.subr.bf16.mxu0 0
      %3786 = vmatpush1.bf16.msra.mxu0 0
      %3787 = vmatprep.subr.bf16.mxu0 0
      %3788 = vmatpush1.bf16.msra.mxu0 0
      %3789 = vmatprep.subr.bf16.mxu0 0
      %3790 = vmatpush1.bf16.msra.mxu0 0
      %3791 = vmatprep.subr.bf16.mxu0 0
      %3792 = vmatpush1.bf16.msra.mxu0 0
      %3793 = vmatprep.subr.bf16.mxu0 0
      %3794 = vmatpush1.bf16.msra.mxu0 0
      %3795 = vmatprep.subr.bf16.mxu0 0
      %3796 = vmatpush1.bf16.msra.mxu0 0
      %3797 = vmatprep.mubr.bf16.mxu0 0
      %3798 = vmatmul.mubr.bf16.gmra.mrb[0].mxu0 %v685
      %v3799 = vpop.f32.mrb[0].mxu0
      %v3800 = vadd.f32 0.0, %v3799
      %v3801 = vpop.f32.mrb[0].mxu0
      %v3802 = vpop.f32.mrb[0].mxu0
      %v3803 = vadd.f32 0.0, %v3802
      %v3804 = vpop.f32.mrb[0].mxu0
      %3805 = vdwg.mxu0
      %v3806 = vadd.f32 %v3745, %v3800
      %v3807 = vadd.f32 %v3746, %v3803
      %3808 = vrot.lane.b32.xlu0 %v3440, 108
      %v3809 = vpop.permute.xlu0 %3808
      %3810 = vrot.lane.b32.xlu0 %v3441, 108
      %v3811 = vpop.permute.xlu0 %3810
      %3812 = vrot.lane.b32.xlu0 %v3442, 108
      %v3813 = vpop.permute.xlu0 %3812
      %3814 = vrot.lane.b32.xlu0 %v3443, 108
      %v3815 = vpop.permute.xlu0 %3814
      %3816 = vrot.lane.b32.xlu0 %v3444, 108
      %v3817 = vpop.permute.xlu0 %3816
      %3818 = vrot.lane.b32.xlu0 %v3445, 108
      %v3819 = vpop.permute.xlu0 %3818
      %v3820 = vsel %vm747, %v3809, %v3811
      %v3821 = vsel %vm747, %v3813, %v3815
      %v3822 = vsel %vm747, %v3817, %v3819
      %3826 = vmatprep.subr.bf16.mxu0 0
      %3827 = vmatpush1.bf16.msra.mxu0 %v3820
      %3828 = vmatprep.subr.bf16.mxu0 0
      %3829 = vmatpush1.bf16.msra.mxu0 %v3821
      %3830 = vmatprep.subr.bf16.mxu0 0
      %3831 = vmatpush1.bf16.msra.mxu0 %v3822
      %3832 = vmatprep.subr.bf16.mxu0 0
      %3833 = vmatpush1.bf16.msra.mxu0 0
      %3834 = vmatprep.subr.bf16.mxu0 0
      %3835 = vmatpush1.bf16.msra.mxu0 0
      %3836 = vmatprep.subr.bf16.mxu0 0
      %3837 = vmatpush1.bf16.msra.mxu0 0
      %3838 = vmatprep.subr.bf16.mxu0 0
      %3839 = vmatpush1.bf16.msra.mxu0 0
      %3840 = vmatprep.subr.bf16.mxu0 0
      %3841 = vmatpush1.bf16.msra.mxu0 0
      %3842 = vmatprep.subr.bf16.mxu0 0
      %3843 = vmatpush1.bf16.msra.mxu0 0
      %3844 = vmatprep.subr.bf16.mxu0 0
      %3845 = vmatpush1.bf16.msra.mxu0 0
      %3846 = vmatprep.subr.bf16.mxu0 0
      %3847 = vmatpush1.bf16.msra.mxu0 0
      %3848 = vmatprep.subr.bf16.mxu0 0
      %3849 = vmatpush1.bf16.msra.mxu0 0
      %3850 = vmatprep.subr.bf16.mxu0 0
      %3851 = vmatpush1.bf16.msra.mxu0 0
      %3852 = vmatprep.subr.bf16.mxu0 0
      %3853 = vmatpush1.bf16.msra.mxu0 0
      %3854 = vmatprep.subr.bf16.mxu0 0
      %3855 = vmatpush1.bf16.msra.mxu0 0
      %3856 = vmatprep.subr.bf16.mxu0 0
      %3857 = vmatpush1.bf16.msra.mxu0 0
      %3858 = vmatprep.mubr.bf16.mxu0 0
      %3859 = vmatmul.mubr.bf16.gmra.mrb[0].mxu0 %v755
      %v3860 = vpop.f32.mrb[0].mxu0
      %v3861 = vadd.f32 0.0, %v3860
      %v3862 = vpop.f32.mrb[0].mxu0
      %v3863 = vpop.f32.mrb[0].mxu0
      %v3864 = vadd.f32 0.0, %v3863
      %v3865 = vpop.f32.mrb[0].mxu0
      %3866 = vdwg.mxu0
      %v3867 = vadd.f32 %v3806, %v3861
      %v3868 = vadd.f32 %v3807, %v3864
      %3869 = vrot.lane.b32.xlu0 %v3440, 107
      %v3870 = vpop.permute.xlu0 %3869
      %3871 = vrot.lane.b32.xlu0 %v3441, 107
      %v3872 = vpop.permute.xlu0 %3871
      %3873 = vrot.lane.b32.xlu0 %v3442, 107
      %v3874 = vpop.permute.xlu0 %3873
      %3875 = vrot.lane.b32.xlu0 %v3443, 107
      %v3876 = vpop.permute.xlu0 %3875
      %3877 = vrot.lane.b32.xlu0 %v3444, 107
      %v3878 = vpop.permute.xlu0 %3877
      %3879 = vrot.lane.b32.xlu0 %v3445, 107
      %v3880 = vpop.permute.xlu0 %3879
      %v3881 = vsel %vm817, %v3870, %v3872
      %v3882 = vsel %vm817, %v3874, %v3876
      %v3883 = vsel %vm817, %v3878, %v3880
      %3887 = vmatprep.subr.bf16.mxu0 0
      %3888 = vmatpush1.bf16.msra.mxu0 %v3881
      %3889 = vmatprep.subr.bf16.mxu0 0
      %3890 = vmatpush1.bf16.msra.mxu0 %v3882
      %3891 = vmatprep.subr.bf16.mxu0 0
      %3892 = vmatpush1.bf16.msra.mxu0 %v3883
      %3893 = vmatprep.subr.bf16.mxu0 0
      %3894 = vmatpush1.bf16.msra.mxu0 0
      %3895 = vmatprep.subr.bf16.mxu0 0
      %3896 = vmatpush1.bf16.msra.mxu0 0
      %3897 = vmatprep.subr.bf16.mxu0 0
      %3898 = vmatpush1.bf16.msra.mxu0 0
      %3899 = vmatprep.subr.bf16.mxu0 0
      %3900 = vmatpush1.bf16.msra.mxu0 0
      %3901 = vmatprep.subr.bf16.mxu0 0
      %3902 = vmatpush1.bf16.msra.mxu0 0
      %3903 = vmatprep.subr.bf16.mxu0 0
      %3904 = vmatpush1.bf16.msra.mxu0 0
      %3905 = vmatprep.subr.bf16.mxu0 0
      %3906 = vmatpush1.bf16.msra.mxu0 0
      %3907 = vmatprep.subr.bf16.mxu0 0
      %3908 = vmatpush1.bf16.msra.mxu0 0
      %3909 = vmatprep.subr.bf16.mxu0 0
      %3910 = vmatpush1.bf16.msra.mxu0 0
      %3911 = vmatprep.subr.bf16.mxu0 0
      %3912 = vmatpush1.bf16.msra.mxu0 0
      %3913 = vmatprep.subr.bf16.mxu0 0
      %3914 = vmatpush1.bf16.msra.mxu0 0
      %3915 = vmatprep.subr.bf16.mxu0 0
      %3916 = vmatpush1.bf16.msra.mxu0 0
      %3917 = vmatprep.subr.bf16.mxu0 0
      %3918 = vmatpush1.bf16.msra.mxu0 0
      %3919 = vmatprep.mubr.bf16.mxu0 0
      %3920 = vmatmul.mubr.bf16.gmra.mrb[0].mxu0 %v825
      %v3921 = vpop.f32.mrb[0].mxu0
      %v3922 = vadd.f32 0.0, %v3921
      %v3923 = vpop.f32.mrb[0].mxu0
      %v3924 = vpop.f32.mrb[0].mxu0
      %v3925 = vadd.f32 0.0, %v3924
      %v3926 = vpop.f32.mrb[0].mxu0
      %3927 = vdwg.mxu0
      %v3928 = vadd.f32 %v3867, %v3922
      %v3929 = vadd.f32 %v3868, %v3925
      %3930 = vrot.lane.b32.xlu0 %v3440, 106
      %v3931 = vpop.permute.xlu0 %3930
      %3932 = vrot.lane.b32.xlu0 %v3441, 106
      %v3933 = vpop.permute.xlu0 %3932
      %3934 = vrot.lane.b32.xlu0 %v3442, 106
      %v3935 = vpop.permute.xlu0 %3934
      %3936 = vrot.lane.b32.xlu0 %v3443, 106
      %v3937 = vpop.permute.xlu0 %3936
      %3938 = vrot.lane.b32.xlu0 %v3444, 106
      %v3939 = vpop.permute.xlu0 %3938
      %3940 = vrot.lane.b32.xlu0 %v3445, 106
      %v3941 = vpop.permute.xlu0 %3940
      %v3942 = vsel %vm887, %v3931, %v3933
      %v3943 = vsel %vm887, %v3935, %v3937
      %v3944 = vsel %vm887, %v3939, %v3941
      %3948 = vmatprep.subr.bf16.mxu0 0
      %3949 = vmatpush1.bf16.msra.mxu0 %v3942
      %3950 = vmatprep.subr.bf16.mxu0 0
      %3951 = vmatpush1.bf16.msra.mxu0 %v3943
      %3952 = vmatprep.subr.bf16.mxu0 0
      %3953 = vmatpush1.bf16.msra.mxu0 %v3944
      %3954 = vmatprep.subr.bf16.mxu0 0
      %3955 = vmatpush1.bf16.msra.mxu0 0
      %3956 = vmatprep.subr.bf16.mxu0 0
      %3957 = vmatpush1.bf16.msra.mxu0 0
      %3958 = vmatprep.subr.bf16.mxu0 0
      %3959 = vmatpush1.bf16.msra.mxu0 0
      %3960 = vmatprep.subr.bf16.mxu0 0
      %3961 = vmatpush1.bf16.msra.mxu0 0
      %3962 = vmatprep.subr.bf16.mxu0 0
      %3963 = vmatpush1.bf16.msra.mxu0 0
      %3964 = vmatprep.subr.bf16.mxu0 0
      %3965 = vmatpush1.bf16.msra.mxu0 0
      %3966 = vmatprep.subr.bf16.mxu0 0
      %3967 = vmatpush1.bf16.msra.mxu0 0
      %3968 = vmatprep.subr.bf16.mxu0 0
      %3969 = vmatpush1.bf16.msra.mxu0 0
      %3970 = vmatprep.subr.bf16.mxu0 0
      %3971 = vmatpush1.bf16.msra.mxu0 0
      %3972 = vmatprep.subr.bf16.mxu0 0
      %3973 = vmatpush1.bf16.msra.mxu0 0
      %3974 = vmatprep.subr.bf16.mxu0 0
      %3975 = vmatpush1.bf16.msra.mxu0 0
      %3976 = vmatprep.subr.bf16.mxu0 0
      %3977 = vmatpush1.bf16.msra.mxu0 0
      %3978 = vmatprep.subr.bf16.mxu0 0
      %3979 = vmatpush1.bf16.msra.mxu0 0
      %3980 = vmatprep.mubr.bf16.mxu0 0
      %3981 = vmatmul.mubr.bf16.gmra.mrb[0].mxu0 %v895
      %v3982 = vpop.f32.mrb[0].mxu0
      %v3983 = vadd.f32 0.0, %v3982
      %v3984 = vpop.f32.mrb[0].mxu0
      %v3985 = vpop.f32.mrb[0].mxu0
      %v3986 = vadd.f32 0.0, %v3985
      %v3987 = vpop.f32.mrb[0].mxu0
      %3988 = vdwg.mxu0
      %v3989 = vadd.f32 %v3928, %v3983
      %v3990 = vadd.f32 %v3929, %v3986
      %v3991 = vpack.c.bf16 %v3990, %v3989
      %v3993 = vunpack.c.l.b16 %v3991
      %v3994 = vunpack.c.h.b16 %v3991
      %v3995 = vpack.c.b16 %v3993, %v3993
      %v3996 = vpack.c.b16 %v3994, %v3994
      %s3999 = scalar_lea.vmem %s229, 40
      %4000 = vst [vmem:[%s3999] sm:$0xf] %v3995
      %4001 = vst [vmem:[%s3999 + $0x4] sm:$0xf] %v3996
      %v4002 = vunpack.c.l.bf16 %v3991
      %v4003 = vunpack.c.h.bf16 %v3991
      %v4004 = vmul.f32 %v4002, %v956
      %v4005 = vmul.f32 %v4003, %v956
      %v4006 = vadd.f32 %v3397, %v4004
      %v4007 = vadd.f32 %v3398, %v4005
      %v4008 = vmul.f32 %v4004, %v4002
      %v4009 = vmul.f32 %v4005, %v4003
      %v4010 = vadd.f32 %v3401, %v4008
      %v4011 = vadd.f32 %v3402, %v4009
      %s4012 = sadd.s32 %s966, 6
      %s4013 = smul.u32 %s4012, 16
      %s4014 = sshra.s32 %s4013, 3
      %s4015 = sand.u32 %s4013, 7
      %s4016 = smul.u32 %s4014, 2
      %s4017 = smul.addr %s4016, 4
      %s4018 = scalar_lea.vmem %s219, %s4017
      %v4019 = vld [vmem:[%s4018] sm:$0xf]
      %v4020 = vld [vmem:[%s4018 + $0x8] sm:$0xf]
      %v4021 = vld [vmem:[%s4018 + $0x10] sm:$0xf]
      %v4022 = vld [vmem:[%s4018 + $0x18] sm:$0xf]
      %v4023 = vld [vmem:[%s4018 + $0x20] sm:$0xf]
      %v4024 = vld [vmem:[%s4018 + $0x28] sm:$0xf]
      %v4025 = vld [vmem:[%s4018] sm:$0xff]
      %v4026 = vld [vmem:[%s4018 + $0x8] sm:$0xff]
      %v4027 = vld [vmem:[%s4018 + $0x10] sm:$0xff]
      %v4028 = vld [vmem:[%s4018 + $0x18] sm:$0xff]
      %v4029 = vld [vmem:[%s4018 + $0x20] sm:$0xff]
      %v4030 = vld [vmem:[%s4018 + $0x28] sm:$0xff]
      %v4037 = vunpack.c.l.b16 %v4025
      %v4038 = vunpack.c.h.b16 %v4025
      %v4039 = vunpack.c.l.b16 %v4026
      %v4040 = vunpack.c.h.b16 %v4026
      %v4041 = vunpack.c.l.b16 %v4027
      %v4042 = vunpack.c.h.b16 %v4027
      %v4043 = vunpack.c.l.b16 %v4028
      %v4044 = vunpack.c.h.b16 %v4028
      %v4045 = vunpack.c.l.b16 %v4029
      %v4046 = vunpack.c.h.b16 %v4029
      %v4047 = vunpack.c.l.b16 %v4030
      %v4048 = vunpack.c.h.b16 %v4030
      %v4049 = vpack.c.b16 %v4039, %v4037
      %v4050 = vpack.c.b16 %v4040, %v4038
      %v4051 = vpack.c.b16 %v4043, %v4041
      %v4052 = vpack.c.b16 %v4044, %v4042
      %v4053 = vpack.c.b16 %v4047, %v4045
      %v4054 = vpack.c.b16 %v4048, %v4046
      %4055 = vrot.lane.b32.xlu0 %v4049, 127
      %v4056 = vpop.permute.xlu0 %4055
      %4057 = vrot.lane.b32.xlu0 %v4050, 127
      %v4058 = vpop.permute.xlu0 %4057
      %4059 = vrot.lane.b32.xlu0 %v4051, 127
      %v4060 = vpop.permute.xlu0 %4059
      %4061 = vrot.lane.b32.xlu0 %v4052, 127
      %v4062 = vpop.permute.xlu0 %4061
      %4063 = vrot.lane.b32.xlu0 %v4053, 127
      %v4064 = vpop.permute.xlu0 %4063
      %4065 = vrot.lane.b32.xlu0 %v4054, 127
      %v4066 = vpop.permute.xlu0 %4065
      %v4067 = vsel %vm331, %v4056, %v4058
      %v4068 = vsel %vm331, %v4060, %v4062
      %v4069 = vsel %vm331, %v4064, %v4066
      %4073 = vmatprep.subr.bf16.mxu0 0
      %4074 = vmatpush1.bf16.msra.mxu0 %v4067
      %4075 = vmatprep.subr.bf16.mxu0 0
      %4076 = vmatpush1.bf16.msra.mxu0 %v4068
      %4077 = vmatprep.subr.bf16.mxu0 0
      %4078 = vmatpush1.bf16.msra.mxu0 %v4069
      %4079 = vmatprep.subr.bf16.mxu0 0
      %4080 = vmatpush1.bf16.msra.mxu0 0
      %4081 = vmatprep.subr.bf16.mxu0 0
      %4082 = vmatpush1.bf16.msra.mxu0 0
      %4083 = vmatprep.subr.bf16.mxu0 0
      %4084 = vmatpush1.bf16.msra.mxu0 0
      %4085 = vmatprep.subr.bf16.mxu0 0
      %4086 = vmatpush1.bf16.msra.mxu0 0
      %4087 = vmatprep.subr.bf16.mxu0 0
      %4088 = vmatpush1.bf16.msra.mxu0 0
      %4089 = vmatprep.subr.bf16.mxu0 0
      %4090 = vmatpush1.bf16.msra.mxu0 0
      %4091 = vmatprep.subr.bf16.mxu0 0
      %4092 = vmatpush1.bf16.msra.mxu0 0
      %4093 = vmatprep.subr.bf16.mxu0 0
      %4094 = vmatpush1.bf16.msra.mxu0 0
      %4095 = vmatprep.subr.bf16.mxu0 0
      %4096 = vmatpush1.bf16.msra.mxu0 0
      %4097 = vmatprep.subr.bf16.mxu0 0
      %4098 = vmatpush1.bf16.msra.mxu0 0
      %4099 = vmatprep.subr.bf16.mxu0 0
      %4100 = vmatpush1.bf16.msra.mxu0 0
      %4101 = vmatprep.subr.bf16.mxu0 0
      %4102 = vmatpush1.bf16.msra.mxu0 0
      %4103 = vmatprep.subr.bf16.mxu0 0
      %4104 = vmatpush1.bf16.msra.mxu0 0
      %4105 = vmatprep.mubr.bf16.mxu0 0
      %4106 = vmatmul.mubr.bf16.gmra.mrb[0].mxu0 %v340
      %v4107 = vpop.f32.mrb[0].mxu0
      %v4108 = vadd.f32 0.0, %v4107
      %v4109 = vpop.f32.mrb[0].mxu0
      %v4110 = vpop.f32.mrb[0].mxu0
      %v4111 = vadd.f32 0.0, %v4110
      %v4112 = vpop.f32.mrb[0].mxu0
      %4113 = vdwg.mxu0
      %v4120 = vunpack.c.l.b16 %v4019
      %v4121 = vunpack.c.l.b16 %v4020
      %v4122 = vunpack.c.l.b16 %v4021
      %v4123 = vunpack.c.l.b16 %v4022
      %v4124 = vunpack.c.l.b16 %v4023
      %v4125 = vunpack.c.l.b16 %v4024
      %v4126 = vpack.c.b16 %v4121, %v4120
      %v4127 = vpack.c.b16 %v4123, %v4122
      %v4128 = vpack.c.b16 %v4125, %v4124
      %4132 = vmatprep.subr.bf16.mxu0 0
      %4133 = vmatpush1.bf16.msra.mxu0 %v4126
      %4134 = vmatprep.subr.bf16.mxu0 0
      %4135 = vmatpush1.bf16.msra.mxu0 %v4127
      %4136 = vmatprep.subr.bf16.mxu0 0
      %4137 = vmatpush1.bf16.msra.mxu0 %v4128
      %4138 = vmatprep.subr.bf16.mxu0 0
      %4139 = vmatpush1.bf16.msra.mxu0 0
      %4140 = vmatprep.subr.bf16.mxu0 0
      %4141 = vmatpush1.bf16.msra.mxu0 0
      %4142 = vmatprep.subr.bf16.mxu0 0
      %4143 = vmatpush1.bf16.msra.mxu0 0
      %4144 = vmatprep.subr.bf16.mxu0 0
      %4145 = vmatpush1.bf16.msra.mxu0 0
      %4146 = vmatprep.subr.bf16.mxu0 0
      %4147 = vmatpush1.bf16.msra.mxu0 0
      %4148 = vmatprep.subr.bf16.mxu0 0
      %4149 = vmatpush1.bf16.msra.mxu0 0
      %4150 = vmatprep.subr.bf16.mxu0 0
      %4151 = vmatpush1.bf16.msra.mxu0 0
      %4152 = vmatprep.subr.bf16.mxu0 0
      %4153 = vmatpush1.bf16.msra.mxu0 0
      %4154 = vmatprep.subr.bf16.mxu0 0
      %4155 = vmatpush1.bf16.msra.mxu0 0
      %4156 = vmatprep.subr.bf16.mxu0 0
      %4157 = vmatpush1.bf16.msra.mxu0 0
      %4158 = vmatprep.subr.bf16.mxu0 0
      %4159 = vmatpush1.bf16.msra.mxu0 0
      %4160 = vmatprep.subr.bf16.mxu0 0
      %4161 = vmatpush1.bf16.msra.mxu0 0
      %4162 = vmatprep.subr.bf16.mxu0 0
      %4163 = vmatpush1.bf16.msra.mxu0 0
      %4164 = vmatprep.mubr.bf16.mxu0 0
      %4165 = vmatmul.mubr.bf16.gmra.mrb[0].mxu0 %v407
      %v4166 = vpop.f32.mrb[0].mxu0
      %v4167 = vadd.f32 %v4108, %v4166
      %v4168 = vpop.f32.mrb[0].mxu0
      %v4169 = vpop.f32.mrb[0].mxu0
      %v4170 = vadd.f32 %v4111, %v4169
      %v4171 = vpop.f32.mrb[0].mxu0
      %4172 = vdwg.mxu0
      %4173 = vrot.lane.b32.xlu0 %v4049, 126
      %v4174 = vpop.permute.xlu0 %4173
      %4175 = vrot.lane.b32.xlu0 %v4050, 126
      %v4176 = vpop.permute.xlu0 %4175
      %4177 = vrot.lane.b32.xlu0 %v4051, 126
      %v4178 = vpop.permute.xlu0 %4177
      %4179 = vrot.lane.b32.xlu0 %v4052, 126
      %v4180 = vpop.permute.xlu0 %4179
      %4181 = vrot.lane.b32.xlu0 %v4053, 126
      %v4182 = vpop.permute.xlu0 %4181
      %4183 = vrot.lane.b32.xlu0 %v4054, 126
      %v4184 = vpop.permute.xlu0 %4183
      %v4185 = vsel %vm467, %v4174, %v4176
      %v4186 = vsel %vm467, %v4178, %v4180
      %v4187 = vsel %vm467, %v4182, %v4184
      %4191 = vmatprep.subr.bf16.mxu0 0
      %4192 = vmatpush1.bf16.msra.mxu0 %v4185
      %4193 = vmatprep.subr.bf16.mxu0 0
      %4194 = vmatpush1.bf16.msra.mxu0 %v4186
      %4195 = vmatprep.subr.bf16.mxu0 0
      %4196 = vmatpush1.bf16.msra.mxu0 %v4187
      %4197 = vmatprep.subr.bf16.mxu0 0
      %4198 = vmatpush1.bf16.msra.mxu0 0
      %4199 = vmatprep.subr.bf16.mxu0 0
      %4200 = vmatpush1.bf16.msra.mxu0 0
      %4201 = vmatprep.subr.bf16.mxu0 0
      %4202 = vmatpush1.bf16.msra.mxu0 0
      %4203 = vmatprep.subr.bf16.mxu0 0
      %4204 = vmatpush1.bf16.msra.mxu0 0
      %4205 = vmatprep.subr.bf16.mxu0 0
      %4206 = vmatpush1.bf16.msra.mxu0 0
      %4207 = vmatprep.subr.bf16.mxu0 0
      %4208 = vmatpush1.bf16.msra.mxu0 0
      %4209 = vmatprep.subr.bf16.mxu0 0
      %4210 = vmatpush1.bf16.msra.mxu0 0
      %4211 = vmatprep.subr.bf16.mxu0 0
      %4212 = vmatpush1.bf16.msra.mxu0 0
      %4213 = vmatprep.subr.bf16.mxu0 0
      %4214 = vmatpush1.bf16.msra.mxu0 0
      %4215 = vmatprep.subr.bf16.mxu0 0
      %4216 = vmatpush1.bf16.msra.mxu0 0
      %4217 = vmatprep.subr.bf16.mxu0 0
      %4218 = vmatpush1.bf16.msra.mxu0 0
      %4219 = vmatprep.subr.bf16.mxu0 0
      %4220 = vmatpush1.bf16.msra.mxu0 0
      %4221 = vmatprep.subr.bf16.mxu0 0
      %4222 = vmatpush1.bf16.msra.mxu0 0
      %4223 = vmatprep.mubr.bf16.mxu0 0
      %4224 = vmatmul.mubr.bf16.gmra.mrb[0].mxu0 %v475
      %v4225 = vpop.f32.mrb[0].mxu0
      %v4226 = vadd.f32 0.0, %v4225
      %v4227 = vpop.f32.mrb[0].mxu0
      %v4228 = vpop.f32.mrb[0].mxu0
      %v4229 = vadd.f32 0.0, %v4228
      %v4230 = vpop.f32.mrb[0].mxu0
      %4231 = vdwg.mxu0
      %v4232 = vadd.f32 %v4167, %v4226
      %v4233 = vadd.f32 %v4170, %v4229
      %4234 = vrot.lane.b32.xlu0 %v4049, 118
      %v4235 = vpop.permute.xlu0 %4234
      %4236 = vrot.lane.b32.xlu0 %v4050, 118
      %v4237 = vpop.permute.xlu0 %4236
      %4238 = vrot.lane.b32.xlu0 %v4051, 118
      %v4239 = vpop.permute.xlu0 %4238
      %4240 = vrot.lane.b32.xlu0 %v4052, 118
      %v4241 = vpop.permute.xlu0 %4240
      %4242 = vrot.lane.b32.xlu0 %v4053, 118
      %v4243 = vpop.permute.xlu0 %4242
      %4244 = vrot.lane.b32.xlu0 %v4054, 118
      %v4245 = vpop.permute.xlu0 %4244
      %v4246 = vsel %vm537, %v4235, %v4237
      %v4247 = vsel %vm537, %v4239, %v4241
      %v4248 = vsel %vm537, %v4243, %v4245
      %4252 = vmatprep.subr.bf16.mxu0 0
      %4253 = vmatpush1.bf16.msra.mxu0 %v4246
      %4254 = vmatprep.subr.bf16.mxu0 0
      %4255 = vmatpush1.bf16.msra.mxu0 %v4247
      %4256 = vmatprep.subr.bf16.mxu0 0
      %4257 = vmatpush1.bf16.msra.mxu0 %v4248
      %4258 = vmatprep.subr.bf16.mxu0 0
      %4259 = vmatpush1.bf16.msra.mxu0 0
      %4260 = vmatprep.subr.bf16.mxu0 0
      %4261 = vmatpush1.bf16.msra.mxu0 0
      %4262 = vmatprep.subr.bf16.mxu0 0
      %4263 = vmatpush1.bf16.msra.mxu0 0
      %4264 = vmatprep.subr.bf16.mxu0 0
      %4265 = vmatpush1.bf16.msra.mxu0 0
      %4266 = vmatprep.subr.bf16.mxu0 0
      %4267 = vmatpush1.bf16.msra.mxu0 0
      %4268 = vmatprep.subr.bf16.mxu0 0
      %4269 = vmatpush1.bf16.msra.mxu0 0
      %4270 = vmatprep.subr.bf16.mxu0 0
      %4271 = vmatpush1.bf16.msra.mxu0 0
      %4272 = vmatprep.subr.bf16.mxu0 0
      %4273 = vmatpush1.bf16.msra.mxu0 0
      %4274 = vmatprep.subr.bf16.mxu0 0
      %4275 = vmatpush1.bf16.msra.mxu0 0
      %4276 = vmatprep.subr.bf16.mxu0 0
      %4277 = vmatpush1.bf16.msra.mxu0 0
      %4278 = vmatprep.subr.bf16.mxu0 0
      %4279 = vmatpush1.bf16.msra.mxu0 0
      %4280 = vmatprep.subr.bf16.mxu0 0
      %4281 = vmatpush1.bf16.msra.mxu0 0
      %4282 = vmatprep.subr.bf16.mxu0 0
      %4283 = vmatpush1.bf16.msra.mxu0 0
      %4284 = vmatprep.mubr.bf16.mxu0 0
      %4285 = vmatmul.mubr.bf16.gmra.mrb[0].mxu0 %v545
      %v4286 = vpop.f32.mrb[0].mxu0
      %v4287 = vadd.f32 0.0, %v4286
      %v4288 = vpop.f32.mrb[0].mxu0
      %v4289 = vpop.f32.mrb[0].mxu0
      %v4290 = vadd.f32 0.0, %v4289
      %v4291 = vpop.f32.mrb[0].mxu0
      %4292 = vdwg.mxu0
      %v4293 = vadd.f32 %v4232, %v4287
      %v4294 = vadd.f32 %v4233, %v4290
      %4295 = vrot.lane.b32.xlu0 %v4049, 117
      %v4296 = vpop.permute.xlu0 %4295
      %4297 = vrot.lane.b32.xlu0 %v4050, 117
      %v4298 = vpop.permute.xlu0 %4297
      %4299 = vrot.lane.b32.xlu0 %v4051, 117
      %v4300 = vpop.permute.xlu0 %4299
      %4301 = vrot.lane.b32.xlu0 %v4052, 117
      %v4302 = vpop.permute.xlu0 %4301
      %4303 = vrot.lane.b32.xlu0 %v4053, 117
      %v4304 = vpop.permute.xlu0 %4303
      %4305 = vrot.lane.b32.xlu0 %v4054, 117
      %v4306 = vpop.permute.xlu0 %4305
      %v4307 = vsel %vm607, %v4296, %v4298
      %v4308 = vsel %vm607, %v4300, %v4302
      %v4309 = vsel %vm607, %v4304, %v4306
      %4313 = vmatprep.subr.bf16.mxu0 0
      %4314 = vmatpush1.bf16.msra.mxu0 %v4307
      %4315 = vmatprep.subr.bf16.mxu0 0
      %4316 = vmatpush1.bf16.msra.mxu0 %v4308
      %4317 = vmatprep.subr.bf16.mxu0 0
      %4318 = vmatpush1.bf16.msra.mxu0 %v4309
      %4319 = vmatprep.subr.bf16.mxu0 0
      %4320 = vmatpush1.bf16.msra.mxu0 0
      %4321 = vmatprep.subr.bf16.mxu0 0
      %4322 = vmatpush1.bf16.msra.mxu0 0
      %4323 = vmatprep.subr.bf16.mxu0 0
      %4324 = vmatpush1.bf16.msra.mxu0 0
      %4325 = vmatprep.subr.bf16.mxu0 0
      %4326 = vmatpush1.bf16.msra.mxu0 0
      %4327 = vmatprep.subr.bf16.mxu0 0
      %4328 = vmatpush1.bf16.msra.mxu0 0
      %4329 = vmatprep.subr.bf16.mxu0 0
      %4330 = vmatpush1.bf16.msra.mxu0 0
      %4331 = vmatprep.subr.bf16.mxu0 0
      %4332 = vmatpush1.bf16.msra.mxu0 0
      %4333 = vmatprep.subr.bf16.mxu0 0
      %4334 = vmatpush1.bf16.msra.mxu0 0
      %4335 = vmatprep.subr.bf16.mxu0 0
      %4336 = vmatpush1.bf16.msra.mxu0 0
      %4337 = vmatprep.subr.bf16.mxu0 0
      %4338 = vmatpush1.bf16.msra.mxu0 0
      %4339 = vmatprep.subr.bf16.mxu0 0
      %4340 = vmatpush1.bf16.msra.mxu0 0
      %4341 = vmatprep.subr.bf16.mxu0 0
      %4342 = vmatpush1.bf16.msra.mxu0 0
      %4343 = vmatprep.subr.bf16.mxu0 0
      %4344 = vmatpush1.bf16.msra.mxu0 0
      %4345 = vmatprep.mubr.bf16.mxu0 0
      %4346 = vmatmul.mubr.bf16.gmra.mrb[0].mxu0 %v615
      %v4347 = vpop.f32.mrb[0].mxu0
      %v4348 = vadd.f32 0.0, %v4347
      %v4349 = vpop.f32.mrb[0].mxu0
      %v4350 = vpop.f32.mrb[0].mxu0
      %v4351 = vadd.f32 0.0, %v4350
      %v4352 = vpop.f32.mrb[0].mxu0
      %4353 = vdwg.mxu0
      %v4354 = vadd.f32 %v4293, %v4348
      %v4355 = vadd.f32 %v4294, %v4351
      %4356 = vrot.lane.b32.xlu0 %v4049, 116
      %v4357 = vpop.permute.xlu0 %4356
      %4358 = vrot.lane.b32.xlu0 %v4050, 116
      %v4359 = vpop.permute.xlu0 %4358
      %4360 = vrot.lane.b32.xlu0 %v4051, 116
      %v4361 = vpop.permute.xlu0 %4360
      %4362 = vrot.lane.b32.xlu0 %v4052, 116
      %v4363 = vpop.permute.xlu0 %4362
      %4364 = vrot.lane.b32.xlu0 %v4053, 116
      %v4365 = vpop.permute.xlu0 %4364
      %4366 = vrot.lane.b32.xlu0 %v4054, 116
      %v4367 = vpop.permute.xlu0 %4366
      %v4368 = vsel %vm677, %v4357, %v4359
      %v4369 = vsel %vm677, %v4361, %v4363
      %v4370 = vsel %vm677, %v4365, %v4367
      %4374 = vmatprep.subr.bf16.mxu0 0
      %4375 = vmatpush1.bf16.msra.mxu0 %v4368
      %4376 = vmatprep.subr.bf16.mxu0 0
      %4377 = vmatpush1.bf16.msra.mxu0 %v4369
      %4378 = vmatprep.subr.bf16.mxu0 0
      %4379 = vmatpush1.bf16.msra.mxu0 %v4370
      %4380 = vmatprep.subr.bf16.mxu0 0
      %4381 = vmatpush1.bf16.msra.mxu0 0
      %4382 = vmatprep.subr.bf16.mxu0 0
      %4383 = vmatpush1.bf16.msra.mxu0 0
      %4384 = vmatprep.subr.bf16.mxu0 0
      %4385 = vmatpush1.bf16.msra.mxu0 0
      %4386 = vmatprep.subr.bf16.mxu0 0
      %4387 = vmatpush1.bf16.msra.mxu0 0
      %4388 = vmatprep.subr.bf16.mxu0 0
      %4389 = vmatpush1.bf16.msra.mxu0 0
      %4390 = vmatprep.subr.bf16.mxu0 0
      %4391 = vmatpush1.bf16.msra.mxu0 0
      %4392 = vmatprep.subr.bf16.mxu0 0
      %4393 = vmatpush1.bf16.msra.mxu0 0
      %4394 = vmatprep.subr.bf16.mxu0 0
      %4395 = vmatpush1.bf16.msra.mxu0 0
      %4396 = vmatprep.subr.bf16.mxu0 0
      %4397 = vmatpush1.bf16.msra.mxu0 0
      %4398 = vmatprep.subr.bf16.mxu0 0
      %4399 = vmatpush1.bf16.msra.mxu0 0
      %4400 = vmatprep.subr.bf16.mxu0 0
      %4401 = vmatpush1.bf16.msra.mxu0 0
      %4402 = vmatprep.subr.bf16.mxu0 0
      %4403 = vmatpush1.bf16.msra.mxu0 0
      %4404 = vmatprep.subr.bf16.mxu0 0
      %4405 = vmatpush1.bf16.msra.mxu0 0
      %4406 = vmatprep.mubr.bf16.mxu0 0
      %4407 = vmatmul.mubr.bf16.gmra.mrb[0].mxu0 %v685
      %v4408 = vpop.f32.mrb[0].mxu0
      %v4409 = vadd.f32 0.0, %v4408
      %v4410 = vpop.f32.mrb[0].mxu0
      %v4411 = vpop.f32.mrb[0].mxu0
      %v4412 = vadd.f32 0.0, %v4411
      %v4413 = vpop.f32.mrb[0].mxu0
      %4414 = vdwg.mxu0
      %v4415 = vadd.f32 %v4354, %v4409
      %v4416 = vadd.f32 %v4355, %v4412
      %4417 = vrot.lane.b32.xlu0 %v4049, 108
      %v4418 = vpop.permute.xlu0 %4417
      %4419 = vrot.lane.b32.xlu0 %v4050, 108
      %v4420 = vpop.permute.xlu0 %4419
      %4421 = vrot.lane.b32.xlu0 %v4051, 108
      %v4422 = vpop.permute.xlu0 %4421
      %4423 = vrot.lane.b32.xlu0 %v4052, 108
      %v4424 = vpop.permute.xlu0 %4423
      %4425 = vrot.lane.b32.xlu0 %v4053, 108
      %v4426 = vpop.permute.xlu0 %4425
      %4427 = vrot.lane.b32.xlu0 %v4054, 108
      %v4428 = vpop.permute.xlu0 %4427
      %v4429 = vsel %vm747, %v4418, %v4420
      %v4430 = vsel %vm747, %v4422, %v4424
      %v4431 = vsel %vm747, %v4426, %v4428
      %4435 = vmatprep.subr.bf16.mxu0 0
      %4436 = vmatpush1.bf16.msra.mxu0 %v4429
      %4437 = vmatprep.subr.bf16.mxu0 0
      %4438 = vmatpush1.bf16.msra.mxu0 %v4430
      %4439 = vmatprep.subr.bf16.mxu0 0
      %4440 = vmatpush1.bf16.msra.mxu0 %v4431
      %4441 = vmatprep.subr.bf16.mxu0 0
      %4442 = vmatpush1.bf16.msra.mxu0 0
      %4443 = vmatprep.subr.bf16.mxu0 0
      %4444 = vmatpush1.bf16.msra.mxu0 0
      %4445 = vmatprep.subr.bf16.mxu0 0
      %4446 = vmatpush1.bf16.msra.mxu0 0
      %4447 = vmatprep.subr.bf16.mxu0 0
      %4448 = vmatpush1.bf16.msra.mxu0 0
      %4449 = vmatprep.subr.bf16.mxu0 0
      %4450 = vmatpush1.bf16.msra.mxu0 0
      %4451 = vmatprep.subr.bf16.mxu0 0
      %4452 = vmatpush1.bf16.msra.mxu0 0
      %4453 = vmatprep.subr.bf16.mxu0 0
      %4454 = vmatpush1.bf16.msra.mxu0 0
      %4455 = vmatprep.subr.bf16.mxu0 0
      %4456 = vmatpush1.bf16.msra.mxu0 0
      %4457 = vmatprep.subr.bf16.mxu0 0
      %4458 = vmatpush1.bf16.msra.mxu0 0
      %4459 = vmatprep.subr.bf16.mxu0 0
      %4460 = vmatpush1.bf16.msra.mxu0 0
      %4461 = vmatprep.subr.bf16.mxu0 0
      %4462 = vmatpush1.bf16.msra.mxu0 0
      %4463 = vmatprep.subr.bf16.mxu0 0
      %4464 = vmatpush1.bf16.msra.mxu0 0
      %4465 = vmatprep.subr.bf16.mxu0 0
      %4466 = vmatpush1.bf16.msra.mxu0 0
      %4467 = vmatprep.mubr.bf16.mxu0 0
      %4468 = vmatmul.mubr.bf16.gmra.mrb[0].mxu0 %v755
      %v4469 = vpop.f32.mrb[0].mxu0
      %v4470 = vadd.f32 0.0, %v4469
      %v4471 = vpop.f32.mrb[0].mxu0
      %v4472 = vpop.f32.mrb[0].mxu0
      %v4473 = vadd.f32 0.0, %v4472
      %v4474 = vpop.f32.mrb[0].mxu0
      %4475 = vdwg.mxu0
      %v4476 = vadd.f32 %v4415, %v4470
      %v4477 = vadd.f32 %v4416, %v4473
      %4478 = vrot.lane.b32.xlu0 %v4049, 107
      %v4479 = vpop.permute.xlu0 %4478
      %4480 = vrot.lane.b32.xlu0 %v4050, 107
      %v4481 = vpop.permute.xlu0 %4480
      %4482 = vrot.lane.b32.xlu0 %v4051, 107
      %v4483 = vpop.permute.xlu0 %4482
      %4484 = vrot.lane.b32.xlu0 %v4052, 107
      %v4485 = vpop.permute.xlu0 %4484
      %4486 = vrot.lane.b32.xlu0 %v4053, 107
      %v4487 = vpop.permute.xlu0 %4486
      %4488 = vrot.lane.b32.xlu0 %v4054, 107
      %v4489 = vpop.permute.xlu0 %4488
      %v4490 = vsel %vm817, %v4479, %v4481
      %v4491 = vsel %vm817, %v4483, %v4485
      %v4492 = vsel %vm817, %v4487, %v4489
      %4496 = vmatprep.subr.bf16.mxu0 0
      %4497 = vmatpush1.bf16.msra.mxu0 %v4490
      %4498 = vmatprep.subr.bf16.mxu0 0
      %4499 = vmatpush1.bf16.msra.mxu0 %v4491
      %4500 = vmatprep.subr.bf16.mxu0 0
      %4501 = vmatpush1.bf16.msra.mxu0 %v4492
      %4502 = vmatprep.subr.bf16.mxu0 0
      %4503 = vmatpush1.bf16.msra.mxu0 0
      %4504 = vmatprep.subr.bf16.mxu0 0
      %4505 = vmatpush1.bf16.msra.mxu0 0
      %4506 = vmatprep.subr.bf16.mxu0 0
      %4507 = vmatpush1.bf16.msra.mxu0 0
      %4508 = vmatprep.subr.bf16.mxu0 0
      %4509 = vmatpush1.bf16.msra.mxu0 0
      %4510 = vmatprep.subr.bf16.mxu0 0
      %4511 = vmatpush1.bf16.msra.mxu0 0
      %4512 = vmatprep.subr.bf16.mxu0 0
      %4513 = vmatpush1.bf16.msra.mxu0 0
      %4514 = vmatprep.subr.bf16.mxu0 0
      %4515 = vmatpush1.bf16.msra.mxu0 0
      %4516 = vmatprep.subr.bf16.mxu0 0
      %4517 = vmatpush1.bf16.msra.mxu0 0
      %4518 = vmatprep.subr.bf16.mxu0 0
      %4519 = vmatpush1.bf16.msra.mxu0 0
      %4520 = vmatprep.subr.bf16.mxu0 0
      %4521 = vmatpush1.bf16.msra.mxu0 0
      %4522 = vmatprep.subr.bf16.mxu0 0
      %4523 = vmatpush1.bf16.msra.mxu0 0
      %4524 = vmatprep.subr.bf16.mxu0 0
      %4525 = vmatpush1.bf16.msra.mxu0 0
      %4526 = vmatprep.subr.bf16.mxu0 0
      %4527 = vmatpush1.bf16.msra.mxu0 0
      %4528 = vmatprep.mubr.bf16.mxu0 0
      %4529 = vmatmul.mubr.bf16.gmra.mrb[0].mxu0 %v825
      %v4530 = vpop.f32.mrb[0].mxu0
      %v4531 = vadd.f32 0.0, %v4530
      %v4532 = vpop.f32.mrb[0].mxu0
      %v4533 = vpop.f32.mrb[0].mxu0
      %v4534 = vadd.f32 0.0, %v4533
      %v4535 = vpop.f32.mrb[0].mxu0
      %4536 = vdwg.mxu0
      %v4537 = vadd.f32 %v4476, %v4531
      %v4538 = vadd.f32 %v4477, %v4534
      %4539 = vrot.lane.b32.xlu0 %v4049, 106
      %v4540 = vpop.permute.xlu0 %4539
      %4541 = vrot.lane.b32.xlu0 %v4050, 106
      %v4542 = vpop.permute.xlu0 %4541
      %4543 = vrot.lane.b32.xlu0 %v4051, 106
      %v4544 = vpop.permute.xlu0 %4543
      %4545 = vrot.lane.b32.xlu0 %v4052, 106
      %v4546 = vpop.permute.xlu0 %4545
      %4547 = vrot.lane.b32.xlu0 %v4053, 106
      %v4548 = vpop.permute.xlu0 %4547
      %4549 = vrot.lane.b32.xlu0 %v4054, 106
      %v4550 = vpop.permute.xlu0 %4549
      %v4551 = vsel %vm887, %v4540, %v4542
      %v4552 = vsel %vm887, %v4544, %v4546
      %v4553 = vsel %vm887, %v4548, %v4550
      %4557 = vmatprep.subr.bf16.mxu0 0
      %4558 = vmatpush1.bf16.msra.mxu0 %v4551
      %4559 = vmatprep.subr.bf16.mxu0 0
      %4560 = vmatpush1.bf16.msra.mxu0 %v4552
      %4561 = vmatprep.subr.bf16.mxu0 0
      %4562 = vmatpush1.bf16.msra.mxu0 %v4553
      %4563 = vmatprep.subr.bf16.mxu0 0
      %4564 = vmatpush1.bf16.msra.mxu0 0
      %4565 = vmatprep.subr.bf16.mxu0 0
      %4566 = vmatpush1.bf16.msra.mxu0 0
      %4567 = vmatprep.subr.bf16.mxu0 0
      %4568 = vmatpush1.bf16.msra.mxu0 0
      %4569 = vmatprep.subr.bf16.mxu0 0
      %4570 = vmatpush1.bf16.msra.mxu0 0
      %4571 = vmatprep.subr.bf16.mxu0 0
      %4572 = vmatpush1.bf16.msra.mxu0 0
      %4573 = vmatprep.subr.bf16.mxu0 0
      %4574 = vmatpush1.bf16.msra.mxu0 0
      %4575 = vmatprep.subr.bf16.mxu0 0
      %4576 = vmatpush1.bf16.msra.mxu0 0
      %4577 = vmatprep.subr.bf16.mxu0 0
      %4578 = vmatpush1.bf16.msra.mxu0 0
      %4579 = vmatprep.subr.bf16.mxu0 0
      %4580 = vmatpush1.bf16.msra.mxu0 0
      %4581 = vmatprep.subr.bf16.mxu0 0
      %4582 = vmatpush1.bf16.msra.mxu0 0
      %4583 = vmatprep.subr.bf16.mxu0 0
      %4584 = vmatpush1.bf16.msra.mxu0 0
      %4585 = vmatprep.subr.bf16.mxu0 0
      %4586 = vmatpush1.bf16.msra.mxu0 0
      %4587 = vmatprep.subr.bf16.mxu0 0
      %4588 = vmatpush1.bf16.msra.mxu0 0
      %4589 = vmatprep.mubr.bf16.mxu0 0
      %4590 = vmatmul.mubr.bf16.gmra.mrb[0].mxu0 %v895
      %v4591 = vpop.f32.mrb[0].mxu0
      %v4592 = vadd.f32 0.0, %v4591
      %v4593 = vpop.f32.mrb[0].mxu0
      %v4594 = vpop.f32.mrb[0].mxu0
      %v4595 = vadd.f32 0.0, %v4594
      %v4596 = vpop.f32.mrb[0].mxu0
      %4597 = vdwg.mxu0
      %v4598 = vadd.f32 %v4537, %v4592
      %v4599 = vadd.f32 %v4538, %v4595
      %v4600 = vpack.c.bf16 %v4599, %v4598
      %v4602 = vunpack.c.l.b16 %v4600
      %v4603 = vunpack.c.h.b16 %v4600
      %v4604 = vpack.c.b16 %v4602, %v4602
      %v4605 = vpack.c.b16 %v4603, %v4603
      %s4608 = scalar_lea.vmem %s229, 48
      %4609 = vst [vmem:[%s4608] sm:$0xf] %v4604
      %4610 = vst [vmem:[%s4608 + $0x4] sm:$0xf] %v4605
      %v4611 = vunpack.c.l.bf16 %v4600
      %v4612 = vunpack.c.h.bf16 %v4600
      %v4613 = vmul.f32 %v4611, %v956
      %v4614 = vmul.f32 %v4612, %v956
      %v4615 = vadd.f32 %v4006, %v4613
      %v4616 = vadd.f32 %v4007, %v4614
      %v4617 = vmul.f32 %v4613, %v4611
      %v4618 = vmul.f32 %v4614, %v4612
      %v4619 = vadd.f32 %v4010, %v4617
      %v4620 = vadd.f32 %v4011, %v4618
      %s4621 = sadd.s32 %s966, 7
      %s4622 = smul.u32 %s4621, 16
      %s4623 = sshra.s32 %s4622, 3
      %s4624 = sand.u32 %s4622, 7
      %s4625 = smul.u32 %s4623, 2
      %s4626 = smul.addr %s4625, 4
      %s4627 = scalar_lea.vmem %s219, %s4626
      %v4628 = vld [vmem:[%s4627] sm:$0xf]
      %v4629 = vld [vmem:[%s4627 + $0x8] sm:$0xf]
      %v4630 = vld [vmem:[%s4627 + $0x10] sm:$0xf]
      %v4631 = vld [vmem:[%s4627 + $0x18] sm:$0xf]
      %v4632 = vld [vmem:[%s4627 + $0x20] sm:$0xf]
      %v4633 = vld [vmem:[%s4627 + $0x28] sm:$0xf]
      %v4634 = vld [vmem:[%s4627] sm:$0xff]
      %v4635 = vld [vmem:[%s4627 + $0x8] sm:$0xff]
      %v4636 = vld [vmem:[%s4627 + $0x10] sm:$0xff]
      %v4637 = vld [vmem:[%s4627 + $0x18] sm:$0xff]
      %v4638 = vld [vmem:[%s4627 + $0x20] sm:$0xff]
      %v4639 = vld [vmem:[%s4627 + $0x28] sm:$0xff]
      %v4646 = vunpack.c.l.b16 %v4634
      %v4647 = vunpack.c.h.b16 %v4634
      %v4648 = vunpack.c.l.b16 %v4635
      %v4649 = vunpack.c.h.b16 %v4635
      %v4650 = vunpack.c.l.b16 %v4636
      %v4651 = vunpack.c.h.b16 %v4636
      %v4652 = vunpack.c.l.b16 %v4637
      %v4653 = vunpack.c.h.b16 %v4637
      %v4654 = vunpack.c.l.b16 %v4638
      %v4655 = vunpack.c.h.b16 %v4638
      %v4656 = vunpack.c.l.b16 %v4639
      %v4657 = vunpack.c.h.b16 %v4639
      %v4658 = vpack.c.b16 %v4648, %v4646
      %v4659 = vpack.c.b16 %v4649, %v4647
      %v4660 = vpack.c.b16 %v4652, %v4650
      %v4661 = vpack.c.b16 %v4653, %v4651
      %v4662 = vpack.c.b16 %v4656, %v4654
      %v4663 = vpack.c.b16 %v4657, %v4655
      %4664 = vrot.lane.b32.xlu0 %v4658, 127
      %v4665 = vpop.permute.xlu0 %4664
      %4666 = vrot.lane.b32.xlu0 %v4659, 127
      %v4667 = vpop.permute.xlu0 %4666
      %4668 = vrot.lane.b32.xlu0 %v4660, 127
      %v4669 = vpop.permute.xlu0 %4668
      %4670 = vrot.lane.b32.xlu0 %v4661, 127
      %v4671 = vpop.permute.xlu0 %4670
      %4672 = vrot.lane.b32.xlu0 %v4662, 127
      %v4673 = vpop.permute.xlu0 %4672
      %4674 = vrot.lane.b32.xlu0 %v4663, 127
      %v4675 = vpop.permute.xlu0 %4674
      %v4676 = vsel %vm331, %v4665, %v4667
      %v4677 = vsel %vm331, %v4669, %v4671
      %v4678 = vsel %vm331, %v4673, %v4675
      %4682 = vmatprep.subr.bf16.mxu0 0
      %4683 = vmatpush1.bf16.msra.mxu0 %v4676
      %4684 = vmatprep.subr.bf16.mxu0 0
      %4685 = vmatpush1.bf16.msra.mxu0 %v4677
      %4686 = vmatprep.subr.bf16.mxu0 0
      %4687 = vmatpush1.bf16.msra.mxu0 %v4678
      %4688 = vmatprep.subr.bf16.mxu0 0
      %4689 = vmatpush1.bf16.msra.mxu0 0
      %4690 = vmatprep.subr.bf16.mxu0 0
      %4691 = vmatpush1.bf16.msra.mxu0 0
      %4692 = vmatprep.subr.bf16.mxu0 0
      %4693 = vmatpush1.bf16.msra.mxu0 0
      %4694 = vmatprep.subr.bf16.mxu0 0
      %4695 = vmatpush1.bf16.msra.mxu0 0
      %4696 = vmatprep.subr.bf16.mxu0 0
      %4697 = vmatpush1.bf16.msra.mxu0 0
      %4698 = vmatprep.subr.bf16.mxu0 0
      %4699 = vmatpush1.bf16.msra.mxu0 0
      %4700 = vmatprep.subr.bf16.mxu0 0
      %4701 = vmatpush1.bf16.msra.mxu0 0
      %4702 = vmatprep.subr.bf16.mxu0 0
      %4703 = vmatpush1.bf16.msra.mxu0 0
      %4704 = vmatprep.subr.bf16.mxu0 0
      %4705 = vmatpush1.bf16.msra.mxu0 0
      %4706 = vmatprep.subr.bf16.mxu0 0
      %4707 = vmatpush1.bf16.msra.mxu0 0
      %4708 = vmatprep.subr.bf16.mxu0 0
      %4709 = vmatpush1.bf16.msra.mxu0 0
      %4710 = vmatprep.subr.bf16.mxu0 0
      %4711 = vmatpush1.bf16.msra.mxu0 0
      %4712 = vmatprep.subr.bf16.mxu0 0
      %4713 = vmatpush1.bf16.msra.mxu0 0
      %4714 = vmatprep.mubr.bf16.mxu0 0
      %4715 = vmatmul.mubr.bf16.gmra.mrb[0].mxu0 %v340
      %v4716 = vpop.f32.mrb[0].mxu0
      %v4717 = vadd.f32 0.0, %v4716
      %v4718 = vpop.f32.mrb[0].mxu0
      %v4719 = vpop.f32.mrb[0].mxu0
      %v4720 = vadd.f32 0.0, %v4719
      %v4721 = vpop.f32.mrb[0].mxu0
      %4722 = vdwg.mxu0
      %v4729 = vunpack.c.l.b16 %v4628
      %v4730 = vunpack.c.l.b16 %v4629
      %v4731 = vunpack.c.l.b16 %v4630
      %v4732 = vunpack.c.l.b16 %v4631
      %v4733 = vunpack.c.l.b16 %v4632
      %v4734 = vunpack.c.l.b16 %v4633
      %v4735 = vpack.c.b16 %v4730, %v4729
      %v4736 = vpack.c.b16 %v4732, %v4731
      %v4737 = vpack.c.b16 %v4734, %v4733
      %4741 = vmatprep.subr.bf16.mxu0 0
      %4742 = vmatpush1.bf16.msra.mxu0 %v4735
      %4743 = vmatprep.subr.bf16.mxu0 0
      %4744 = vmatpush1.bf16.msra.mxu0 %v4736
      %4745 = vmatprep.subr.bf16.mxu0 0
      %4746 = vmatpush1.bf16.msra.mxu0 %v4737
      %4747 = vmatprep.subr.bf16.mxu0 0
      %4748 = vmatpush1.bf16.msra.mxu0 0
      %4749 = vmatprep.subr.bf16.mxu0 0
      %4750 = vmatpush1.bf16.msra.mxu0 0
      %4751 = vmatprep.subr.bf16.mxu0 0
      %4752 = vmatpush1.bf16.msra.mxu0 0
      %4753 = vmatprep.subr.bf16.mxu0 0
      %4754 = vmatpush1.bf16.msra.mxu0 0
      %4755 = vmatprep.subr.bf16.mxu0 0
      %4756 = vmatpush1.bf16.msra.mxu0 0
      %4757 = vmatprep.subr.bf16.mxu0 0
      %4758 = vmatpush1.bf16.msra.mxu0 0
      %4759 = vmatprep.subr.bf16.mxu0 0
      %4760 = vmatpush1.bf16.msra.mxu0 0
      %4761 = vmatprep.subr.bf16.mxu0 0
      %4762 = vmatpush1.bf16.msra.mxu0 0
      %4763 = vmatprep.subr.bf16.mxu0 0
      %4764 = vmatpush1.bf16.msra.mxu0 0
      %4765 = vmatprep.subr.bf16.mxu0 0
      %4766 = vmatpush1.bf16.msra.mxu0 0
      %4767 = vmatprep.subr.bf16.mxu0 0
      %4768 = vmatpush1.bf16.msra.mxu0 0
      %4769 = vmatprep.subr.bf16.mxu0 0
      %4770 = vmatpush1.bf16.msra.mxu0 0
      %4771 = vmatprep.subr.bf16.mxu0 0
      %4772 = vmatpush1.bf16.msra.mxu0 0
      %4773 = vmatprep.mubr.bf16.mxu0 0
      %4774 = vmatmul.mubr.bf16.gmra.mrb[0].mxu0 %v407
      %v4775 = vpop.f32.mrb[0].mxu0
      %v4776 = vadd.f32 %v4717, %v4775
      %v4777 = vpop.f32.mrb[0].mxu0
      %v4778 = vpop.f32.mrb[0].mxu0
      %v4779 = vadd.f32 %v4720, %v4778
      %v4780 = vpop.f32.mrb[0].mxu0
      %4781 = vdwg.mxu0
      %4782 = vrot.lane.b32.xlu0 %v4658, 126
      %v4783 = vpop.permute.xlu0 %4782
      %4784 = vrot.lane.b32.xlu0 %v4659, 126
      %v4785 = vpop.permute.xlu0 %4784
      %4786 = vrot.lane.b32.xlu0 %v4660, 126
      %v4787 = vpop.permute.xlu0 %4786
      %4788 = vrot.lane.b32.xlu0 %v4661, 126
      %v4789 = vpop.permute.xlu0 %4788
      %4790 = vrot.lane.b32.xlu0 %v4662, 126
      %v4791 = vpop.permute.xlu0 %4790
      %4792 = vrot.lane.b32.xlu0 %v4663, 126
      %v4793 = vpop.permute.xlu0 %4792
      %v4794 = vsel %vm467, %v4783, %v4785
      %v4795 = vsel %vm467, %v4787, %v4789
      %v4796 = vsel %vm467, %v4791, %v4793
      %4800 = vmatprep.subr.bf16.mxu0 0
      %4801 = vmatpush1.bf16.msra.mxu0 %v4794
      %4802 = vmatprep.subr.bf16.mxu0 0
      %4803 = vmatpush1.bf16.msra.mxu0 %v4795
      %4804 = vmatprep.subr.bf16.mxu0 0
      %4805 = vmatpush1.bf16.msra.mxu0 %v4796
      %4806 = vmatprep.subr.bf16.mxu0 0
      %4807 = vmatpush1.bf16.msra.mxu0 0
      %4808 = vmatprep.subr.bf16.mxu0 0
      %4809 = vmatpush1.bf16.msra.mxu0 0
      %4810 = vmatprep.subr.bf16.mxu0 0
      %4811 = vmatpush1.bf16.msra.mxu0 0
      %4812 = vmatprep.subr.bf16.mxu0 0
      %4813 = vmatpush1.bf16.msra.mxu0 0
      %4814 = vmatprep.subr.bf16.mxu0 0
      %4815 = vmatpush1.bf16.msra.mxu0 0
      %4816 = vmatprep.subr.bf16.mxu0 0
      %4817 = vmatpush1.bf16.msra.mxu0 0
      %4818 = vmatprep.subr.bf16.mxu0 0
      %4819 = vmatpush1.bf16.msra.mxu0 0
      %4820 = vmatprep.subr.bf16.mxu0 0
      %4821 = vmatpush1.bf16.msra.mxu0 0
      %4822 = vmatprep.subr.bf16.mxu0 0
      %4823 = vmatpush1.bf16.msra.mxu0 0
      %4824 = vmatprep.subr.bf16.mxu0 0
      %4825 = vmatpush1.bf16.msra.mxu0 0
      %4826 = vmatprep.subr.bf16.mxu0 0
      %4827 = vmatpush1.bf16.msra.mxu0 0
      %4828 = vmatprep.subr.bf16.mxu0 0
      %4829 = vmatpush1.bf16.msra.mxu0 0
      %4830 = vmatprep.subr.bf16.mxu0 0
      %4831 = vmatpush1.bf16.msra.mxu0 0
      %4832 = vmatprep.mubr.bf16.mxu0 0
      %4833 = vmatmul.mubr.bf16.gmra.mrb[0].mxu0 %v475
      %v4834 = vpop.f32.mrb[0].mxu0
      %v4835 = vadd.f32 0.0, %v4834
      %v4836 = vpop.f32.mrb[0].mxu0
      %v4837 = vpop.f32.mrb[0].mxu0
      %v4838 = vadd.f32 0.0, %v4837
      %v4839 = vpop.f32.mrb[0].mxu0
      %4840 = vdwg.mxu0
      %v4841 = vadd.f32 %v4776, %v4835
      %v4842 = vadd.f32 %v4779, %v4838
      %4843 = vrot.lane.b32.xlu0 %v4658, 118
      %v4844 = vpop.permute.xlu0 %4843
      %4845 = vrot.lane.b32.xlu0 %v4659, 118
      %v4846 = vpop.permute.xlu0 %4845
      %4847 = vrot.lane.b32.xlu0 %v4660, 118
      %v4848 = vpop.permute.xlu0 %4847
      %4849 = vrot.lane.b32.xlu0 %v4661, 118
      %v4850 = vpop.permute.xlu0 %4849
      %4851 = vrot.lane.b32.xlu0 %v4662, 118
      %v4852 = vpop.permute.xlu0 %4851
      %4853 = vrot.lane.b32.xlu0 %v4663, 118
      %v4854 = vpop.permute.xlu0 %4853
      %v4855 = vsel %vm537, %v4844, %v4846
      %v4856 = vsel %vm537, %v4848, %v4850
      %v4857 = vsel %vm537, %v4852, %v4854
      %4861 = vmatprep.subr.bf16.mxu0 0
      %4862 = vmatpush1.bf16.msra.mxu0 %v4855
      %4863 = vmatprep.subr.bf16.mxu0 0
      %4864 = vmatpush1.bf16.msra.mxu0 %v4856
      %4865 = vmatprep.subr.bf16.mxu0 0
      %4866 = vmatpush1.bf16.msra.mxu0 %v4857
      %4867 = vmatprep.subr.bf16.mxu0 0
      %4868 = vmatpush1.bf16.msra.mxu0 0
      %4869 = vmatprep.subr.bf16.mxu0 0
      %4870 = vmatpush1.bf16.msra.mxu0 0
      %4871 = vmatprep.subr.bf16.mxu0 0
      %4872 = vmatpush1.bf16.msra.mxu0 0
      %4873 = vmatprep.subr.bf16.mxu0 0
      %4874 = vmatpush1.bf16.msra.mxu0 0
      %4875 = vmatprep.subr.bf16.mxu0 0
      %4876 = vmatpush1.bf16.msra.mxu0 0
      %4877 = vmatprep.subr.bf16.mxu0 0
      %4878 = vmatpush1.bf16.msra.mxu0 0
      %4879 = vmatprep.subr.bf16.mxu0 0
      %4880 = vmatpush1.bf16.msra.mxu0 0
      %4881 = vmatprep.subr.bf16.mxu0 0
      %4882 = vmatpush1.bf16.msra.mxu0 0
      %4883 = vmatprep.subr.bf16.mxu0 0
      %4884 = vmatpush1.bf16.msra.mxu0 0
      %4885 = vmatprep.subr.bf16.mxu0 0
      %4886 = vmatpush1.bf16.msra.mxu0 0
      %4887 = vmatprep.subr.bf16.mxu0 0
      %4888 = vmatpush1.bf16.msra.mxu0 0
      %4889 = vmatprep.subr.bf16.mxu0 0
      %4890 = vmatpush1.bf16.msra.mxu0 0
      %4891 = vmatprep.subr.bf16.mxu0 0
      %4892 = vmatpush1.bf16.msra.mxu0 0
      %4893 = vmatprep.mubr.bf16.mxu0 0
      %4894 = vmatmul.mubr.bf16.gmra.mrb[0].mxu0 %v545
      %v4895 = vpop.f32.mrb[0].mxu0
      %v4896 = vadd.f32 0.0, %v4895
      %v4897 = vpop.f32.mrb[0].mxu0
      %v4898 = vpop.f32.mrb[0].mxu0
      %v4899 = vadd.f32 0.0, %v4898
      %v4900 = vpop.f32.mrb[0].mxu0
      %4901 = vdwg.mxu0
      %v4902 = vadd.f32 %v4841, %v4896
      %v4903 = vadd.f32 %v4842, %v4899
      %4904 = vrot.lane.b32.xlu0 %v4658, 117
      %v4905 = vpop.permute.xlu0 %4904
      %4906 = vrot.lane.b32.xlu0 %v4659, 117
      %v4907 = vpop.permute.xlu0 %4906
      %4908 = vrot.lane.b32.xlu0 %v4660, 117
      %v4909 = vpop.permute.xlu0 %4908
      %4910 = vrot.lane.b32.xlu0 %v4661, 117
      %v4911 = vpop.permute.xlu0 %4910
      %4912 = vrot.lane.b32.xlu0 %v4662, 117
      %v4913 = vpop.permute.xlu0 %4912
      %4914 = vrot.lane.b32.xlu0 %v4663, 117
      %v4915 = vpop.permute.xlu0 %4914
      %v4916 = vsel %vm607, %v4905, %v4907
      %v4917 = vsel %vm607, %v4909, %v4911
      %v4918 = vsel %vm607, %v4913, %v4915
      %4922 = vmatprep.subr.bf16.mxu0 0
      %4923 = vmatpush1.bf16.msra.mxu0 %v4916
      %4924 = vmatprep.subr.bf16.mxu0 0
      %4925 = vmatpush1.bf16.msra.mxu0 %v4917
      %4926 = vmatprep.subr.bf16.mxu0 0
      %4927 = vmatpush1.bf16.msra.mxu0 %v4918
      %4928 = vmatprep.subr.bf16.mxu0 0
      %4929 = vmatpush1.bf16.msra.mxu0 0
      %4930 = vmatprep.subr.bf16.mxu0 0
      %4931 = vmatpush1.bf16.msra.mxu0 0
      %4932 = vmatprep.subr.bf16.mxu0 0
      %4933 = vmatpush1.bf16.msra.mxu0 0
      %4934 = vmatprep.subr.bf16.mxu0 0
      %4935 = vmatpush1.bf16.msra.mxu0 0
      %4936 = vmatprep.subr.bf16.mxu0 0
      %4937 = vmatpush1.bf16.msra.mxu0 0
      %4938 = vmatprep.subr.bf16.mxu0 0
      %4939 = vmatpush1.bf16.msra.mxu0 0
      %4940 = vmatprep.subr.bf16.mxu0 0
      %4941 = vmatpush1.bf16.msra.mxu0 0
      %4942 = vmatprep.subr.bf16.mxu0 0
      %4943 = vmatpush1.bf16.msra.mxu0 0
      %4944 = vmatprep.subr.bf16.mxu0 0
      %4945 = vmatpush1.bf16.msra.mxu0 0
      %4946 = vmatprep.subr.bf16.mxu0 0
      %4947 = vmatpush1.bf16.msra.mxu0 0
      %4948 = vmatprep.subr.bf16.mxu0 0
      %4949 = vmatpush1.bf16.msra.mxu0 0
      %4950 = vmatprep.subr.bf16.mxu0 0
      %4951 = vmatpush1.bf16.msra.mxu0 0
      %4952 = vmatprep.subr.bf16.mxu0 0
      %4953 = vmatpush1.bf16.msra.mxu0 0
      %4954 = vmatprep.mubr.bf16.mxu0 0
      %4955 = vmatmul.mubr.bf16.gmra.mrb[0].mxu0 %v615
      %v4956 = vpop.f32.mrb[0].mxu0
      %v4957 = vadd.f32 0.0, %v4956
      %v4958 = vpop.f32.mrb[0].mxu0
      %v4959 = vpop.f32.mrb[0].mxu0
      %v4960 = vadd.f32 0.0, %v4959
      %v4961 = vpop.f32.mrb[0].mxu0
      %4962 = vdwg.mxu0
      %v4963 = vadd.f32 %v4902, %v4957
      %v4964 = vadd.f32 %v4903, %v4960
      %4965 = vrot.lane.b32.xlu0 %v4658, 116
      %v4966 = vpop.permute.xlu0 %4965
      %4967 = vrot.lane.b32.xlu0 %v4659, 116
      %v4968 = vpop.permute.xlu0 %4967
      %4969 = vrot.lane.b32.xlu0 %v4660, 116
      %v4970 = vpop.permute.xlu0 %4969
      %4971 = vrot.lane.b32.xlu0 %v4661, 116
      %v4972 = vpop.permute.xlu0 %4971
      %4973 = vrot.lane.b32.xlu0 %v4662, 116
      %v4974 = vpop.permute.xlu0 %4973
      %4975 = vrot.lane.b32.xlu0 %v4663, 116
      %v4976 = vpop.permute.xlu0 %4975
      %v4977 = vsel %vm677, %v4966, %v4968
      %v4978 = vsel %vm677, %v4970, %v4972
      %v4979 = vsel %vm677, %v4974, %v4976
      %4983 = vmatprep.subr.bf16.mxu0 0
      %4984 = vmatpush1.bf16.msra.mxu0 %v4977
      %4985 = vmatprep.subr.bf16.mxu0 0
      %4986 = vmatpush1.bf16.msra.mxu0 %v4978
      %4987 = vmatprep.subr.bf16.mxu0 0
      %4988 = vmatpush1.bf16.msra.mxu0 %v4979
      %4989 = vmatprep.subr.bf16.mxu0 0
      %4990 = vmatpush1.bf16.msra.mxu0 0
      %4991 = vmatprep.subr.bf16.mxu0 0
      %4992 = vmatpush1.bf16.msra.mxu0 0
      %4993 = vmatprep.subr.bf16.mxu0 0
      %4994 = vmatpush1.bf16.msra.mxu0 0
      %4995 = vmatprep.subr.bf16.mxu0 0
      %4996 = vmatpush1.bf16.msra.mxu0 0
      %4997 = vmatprep.subr.bf16.mxu0 0
      %4998 = vmatpush1.bf16.msra.mxu0 0
      %4999 = vmatprep.subr.bf16.mxu0 0
      %5000 = vmatpush1.bf16.msra.mxu0 0
      %5001 = vmatprep.subr.bf16.mxu0 0
      %5002 = vmatpush1.bf16.msra.mxu0 0
      %5003 = vmatprep.subr.bf16.mxu0 0
      %5004 = vmatpush1.bf16.msra.mxu0 0
      %5005 = vmatprep.subr.bf16.mxu0 0
      %5006 = vmatpush1.bf16.msra.mxu0 0
      %5007 = vmatprep.subr.bf16.mxu0 0
      %5008 = vmatpush1.bf16.msra.mxu0 0
      %5009 = vmatprep.subr.bf16.mxu0 0
      %5010 = vmatpush1.bf16.msra.mxu0 0
      %5011 = vmatprep.subr.bf16.mxu0 0
      %5012 = vmatpush1.bf16.msra.mxu0 0
      %5013 = vmatprep.subr.bf16.mxu0 0
      %5014 = vmatpush1.bf16.msra.mxu0 0
      %5015 = vmatprep.mubr.bf16.mxu0 0
      %5016 = vmatmul.mubr.bf16.gmra.mrb[0].mxu0 %v685
      %v5017 = vpop.f32.mrb[0].mxu0
      %v5018 = vadd.f32 0.0, %v5017
      %v5019 = vpop.f32.mrb[0].mxu0
      %v5020 = vpop.f32.mrb[0].mxu0
      %v5021 = vadd.f32 0.0, %v5020
      %v5022 = vpop.f32.mrb[0].mxu0
      %5023 = vdwg.mxu0
      %v5024 = vadd.f32 %v4963, %v5018
      %v5025 = vadd.f32 %v4964, %v5021
      %5026 = vrot.lane.b32.xlu0 %v4658, 108
      %v5027 = vpop.permute.xlu0 %5026
      %5028 = vrot.lane.b32.xlu0 %v4659, 108
      %v5029 = vpop.permute.xlu0 %5028
      %5030 = vrot.lane.b32.xlu0 %v4660, 108
      %v5031 = vpop.permute.xlu0 %5030
      %5032 = vrot.lane.b32.xlu0 %v4661, 108
      %v5033 = vpop.permute.xlu0 %5032
      %5034 = vrot.lane.b32.xlu0 %v4662, 108
      %v5035 = vpop.permute.xlu0 %5034
      %5036 = vrot.lane.b32.xlu0 %v4663, 108
      %v5037 = vpop.permute.xlu0 %5036
      %v5038 = vsel %vm747, %v5027, %v5029
      %v5039 = vsel %vm747, %v5031, %v5033
      %v5040 = vsel %vm747, %v5035, %v5037
      %5044 = vmatprep.subr.bf16.mxu0 0
      %5045 = vmatpush1.bf16.msra.mxu0 %v5038
      %5046 = vmatprep.subr.bf16.mxu0 0
      %5047 = vmatpush1.bf16.msra.mxu0 %v5039
      %5048 = vmatprep.subr.bf16.mxu0 0
      %5049 = vmatpush1.bf16.msra.mxu0 %v5040
      %5050 = vmatprep.subr.bf16.mxu0 0
      %5051 = vmatpush1.bf16.msra.mxu0 0
      %5052 = vmatprep.subr.bf16.mxu0 0
      %5053 = vmatpush1.bf16.msra.mxu0 0
      %5054 = vmatprep.subr.bf16.mxu0 0
      %5055 = vmatpush1.bf16.msra.mxu0 0
      %5056 = vmatprep.subr.bf16.mxu0 0
      %5057 = vmatpush1.bf16.msra.mxu0 0
      %5058 = vmatprep.subr.bf16.mxu0 0
      %5059 = vmatpush1.bf16.msra.mxu0 0
      %5060 = vmatprep.subr.bf16.mxu0 0
      %5061 = vmatpush1.bf16.msra.mxu0 0
      %5062 = vmatprep.subr.bf16.mxu0 0
      %5063 = vmatpush1.bf16.msra.mxu0 0
      %5064 = vmatprep.subr.bf16.mxu0 0
      %5065 = vmatpush1.bf16.msra.mxu0 0
      %5066 = vmatprep.subr.bf16.mxu0 0
      %5067 = vmatpush1.bf16.msra.mxu0 0
      %5068 = vmatprep.subr.bf16.mxu0 0
      %5069 = vmatpush1.bf16.msra.mxu0 0
      %5070 = vmatprep.subr.bf16.mxu0 0
      %5071 = vmatpush1.bf16.msra.mxu0 0
      %5072 = vmatprep.subr.bf16.mxu0 0
      %5073 = vmatpush1.bf16.msra.mxu0 0
      %5074 = vmatprep.subr.bf16.mxu0 0
      %5075 = vmatpush1.bf16.msra.mxu0 0
      %5076 = vmatprep.mubr.bf16.mxu0 0
      %5077 = vmatmul.mubr.bf16.gmra.mrb[0].mxu0 %v755
      %v5078 = vpop.f32.mrb[0].mxu0
      %v5079 = vadd.f32 0.0, %v5078
      %v5080 = vpop.f32.mrb[0].mxu0
      %v5081 = vpop.f32.mrb[0].mxu0
      %v5082 = vadd.f32 0.0, %v5081
      %v5083 = vpop.f32.mrb[0].mxu0
      %5084 = vdwg.mxu0
      %v5085 = vadd.f32 %v5024, %v5079
      %v5086 = vadd.f32 %v5025, %v5082
      %5087 = vrot.lane.b32.xlu0 %v4658, 107
      %v5088 = vpop.permute.xlu0 %5087
      %5089 = vrot.lane.b32.xlu0 %v4659, 107
      %v5090 = vpop.permute.xlu0 %5089
      %5091 = vrot.lane.b32.xlu0 %v4660, 107
      %v5092 = vpop.permute.xlu0 %5091
      %5093 = vrot.lane.b32.xlu0 %v4661, 107
      %v5094 = vpop.permute.xlu0 %5093
      %5095 = vrot.lane.b32.xlu0 %v4662, 107
      %v5096 = vpop.permute.xlu0 %5095
      %5097 = vrot.lane.b32.xlu0 %v4663, 107
      %v5098 = vpop.permute.xlu0 %5097
      %v5099 = vsel %vm817, %v5088, %v5090
      %v5100 = vsel %vm817, %v5092, %v5094
      %v5101 = vsel %vm817, %v5096, %v5098
      %5105 = vmatprep.subr.bf16.mxu0 0
      %5106 = vmatpush1.bf16.msra.mxu0 %v5099
      %5107 = vmatprep.subr.bf16.mxu0 0
      %5108 = vmatpush1.bf16.msra.mxu0 %v5100
      %5109 = vmatprep.subr.bf16.mxu0 0
      %5110 = vmatpush1.bf16.msra.mxu0 %v5101
      %5111 = vmatprep.subr.bf16.mxu0 0
      %5112 = vmatpush1.bf16.msra.mxu0 0
      %5113 = vmatprep.subr.bf16.mxu0 0
      %5114 = vmatpush1.bf16.msra.mxu0 0
      %5115 = vmatprep.subr.bf16.mxu0 0
      %5116 = vmatpush1.bf16.msra.mxu0 0
      %5117 = vmatprep.subr.bf16.mxu0 0
      %5118 = vmatpush1.bf16.msra.mxu0 0
      %5119 = vmatprep.subr.bf16.mxu0 0
      %5120 = vmatpush1.bf16.msra.mxu0 0
      %5121 = vmatprep.subr.bf16.mxu0 0
      %5122 = vmatpush1.bf16.msra.mxu0 0
      %5123 = vmatprep.subr.bf16.mxu0 0
      %5124 = vmatpush1.bf16.msra.mxu0 0
      %5125 = vmatprep.subr.bf16.mxu0 0
      %5126 = vmatpush1.bf16.msra.mxu0 0
      %5127 = vmatprep.subr.bf16.mxu0 0
      %5128 = vmatpush1.bf16.msra.mxu0 0
      %5129 = vmatprep.subr.bf16.mxu0 0
      %5130 = vmatpush1.bf16.msra.mxu0 0
      %5131 = vmatprep.subr.bf16.mxu0 0
      %5132 = vmatpush1.bf16.msra.mxu0 0
      %5133 = vmatprep.subr.bf16.mxu0 0
      %5134 = vmatpush1.bf16.msra.mxu0 0
      %5135 = vmatprep.subr.bf16.mxu0 0
      %5136 = vmatpush1.bf16.msra.mxu0 0
      %5137 = vmatprep.mubr.bf16.mxu0 0
      %5138 = vmatmul.mubr.bf16.gmra.mrb[0].mxu0 %v825
      %v5139 = vpop.f32.mrb[0].mxu0
      %v5140 = vadd.f32 0.0, %v5139
      %v5141 = vpop.f32.mrb[0].mxu0
      %v5142 = vpop.f32.mrb[0].mxu0
      %v5143 = vadd.f32 0.0, %v5142
      %v5144 = vpop.f32.mrb[0].mxu0
      %5145 = vdwg.mxu0
      %v5146 = vadd.f32 %v5085, %v5140
      %v5147 = vadd.f32 %v5086, %v5143
      %5148 = vrot.lane.b32.xlu0 %v4658, 106
      %v5149 = vpop.permute.xlu0 %5148
      %5150 = vrot.lane.b32.xlu0 %v4659, 106
      %v5151 = vpop.permute.xlu0 %5150
      %5152 = vrot.lane.b32.xlu0 %v4660, 106
      %v5153 = vpop.permute.xlu0 %5152
      %5154 = vrot.lane.b32.xlu0 %v4661, 106
      %v5155 = vpop.permute.xlu0 %5154
      %5156 = vrot.lane.b32.xlu0 %v4662, 106
      %v5157 = vpop.permute.xlu0 %5156
      %5158 = vrot.lane.b32.xlu0 %v4663, 106
      %v5159 = vpop.permute.xlu0 %5158
      %v5160 = vsel %vm887, %v5149, %v5151
      %v5161 = vsel %vm887, %v5153, %v5155
      %v5162 = vsel %vm887, %v5157, %v5159
      %5166 = vmatprep.subr.bf16.mxu0 0
      %5167 = vmatpush1.bf16.msra.mxu0 %v5160
      %5168 = vmatprep.subr.bf16.mxu0 0
      %5169 = vmatpush1.bf16.msra.mxu0 %v5161
      %5170 = vmatprep.subr.bf16.mxu0 0
      %5171 = vmatpush1.bf16.msra.mxu0 %v5162
      %5172 = vmatprep.subr.bf16.mxu0 0
      %5173 = vmatpush1.bf16.msra.mxu0 0
      %5174 = vmatprep.subr.bf16.mxu0 0
      %5175 = vmatpush1.bf16.msra.mxu0 0
      %5176 = vmatprep.subr.bf16.mxu0 0
      %5177 = vmatpush1.bf16.msra.mxu0 0
      %5178 = vmatprep.subr.bf16.mxu0 0
      %5179 = vmatpush1.bf16.msra.mxu0 0
      %5180 = vmatprep.subr.bf16.mxu0 0
      %5181 = vmatpush1.bf16.msra.mxu0 0
      %5182 = vmatprep.subr.bf16.mxu0 0
      %5183 = vmatpush1.bf16.msra.mxu0 0
      %5184 = vmatprep.subr.bf16.mxu0 0
      %5185 = vmatpush1.bf16.msra.mxu0 0
      %5186 = vmatprep.subr.bf16.mxu0 0
      %5187 = vmatpush1.bf16.msra.mxu0 0
      %5188 = vmatprep.subr.bf16.mxu0 0
      %5189 = vmatpush1.bf16.msra.mxu0 0
      %5190 = vmatprep.subr.bf16.mxu0 0
      %5191 = vmatpush1.bf16.msra.mxu0 0
      %5192 = vmatprep.subr.bf16.mxu0 0
      %5193 = vmatpush1.bf16.msra.mxu0 0
      %5194 = vmatprep.subr.bf16.mxu0 0
      %5195 = vmatpush1.bf16.msra.mxu0 0
      %5196 = vmatprep.subr.bf16.mxu0 0
      %5197 = vmatpush1.bf16.msra.mxu0 0
      %5198 = vmatprep.mubr.bf16.mxu0 0
      %5199 = vmatmul.mubr.bf16.gmra.mrb[0].mxu0 %v895
      %v5200 = vpop.f32.mrb[0].mxu0
      %v5201 = vadd.f32 0.0, %v5200
      %v5202 = vpop.f32.mrb[0].mxu0
      %v5203 = vpop.f32.mrb[0].mxu0
      %v5204 = vadd.f32 0.0, %v5203
      %v5205 = vpop.f32.mrb[0].mxu0
      %5206 = vdwg.mxu0
      %v5207 = vadd.f32 %v5146, %v5201
      %v5208 = vadd.f32 %v5147, %v5204
      %v5209 = vpack.c.bf16 %v5208, %v5207
      %v5211 = vunpack.c.l.b16 %v5209
      %v5212 = vunpack.c.h.b16 %v5209
      %v5213 = vpack.c.b16 %v5211, %v5211
      %v5214 = vpack.c.b16 %v5212, %v5212
      %s5217 = scalar_lea.vmem %s229, 56
      %5218 = vst [vmem:[%s5217] sm:$0xf] %v5213
      %5219 = vst [vmem:[%s5217 + $0x4] sm:$0xf] %v5214
      %v5220 = vunpack.c.l.bf16 %v5209
      %v5221 = vunpack.c.h.bf16 %v5209
      %v5222 = vmul.f32 %v5220, %v956
      %v5223 = vmul.f32 %v5221, %v956
      %v5224 = vadd.f32 %v4615, %v5222
      %v5225 = vadd.f32 %v4616, %v5223
      %v5226 = vmul.f32 %v5222, %v5220
      %v5227 = vmul.f32 %v5223, %v5221
      %v5228 = vadd.f32 %v4619, %v5226
      %v5229 = vadd.f32 %v4620, %v5227
      %v5230 = vld [vmem:[%s235] sm:$0xff]
      %v5231 = vld [vmem:[%s235 + $0x8] sm:$0xff]
      %v5232 = vadd.f32 %v5230, %v5224
      %v5233 = vadd.f32 %v5231, %v5225
      %5234 = vst [vmem:[%s235] sm:$0xff] %v5232
      %5235 = vst [vmem:[%s235 + $0x8] sm:$0xff] %v5233
      %s5236 = scalar_lea.vmem %s235, 16
      %v5237 = vld [vmem:[%s5236] sm:$0xff]
      %v5238 = vld [vmem:[%s5236 + $0x8] sm:$0xff]
      %v5239 = vadd.f32 %v5237, %v5228
      %v5240 = vadd.f32 %v5238, %v5229
      %5241 = vst [vmem:[%s5236] sm:$0xff] %v5239
      %5242 = vst [vmem:[%s5236 + $0x8] sm:$0xff] %v5240
      %s5243 = smul.u32 8, %s21
      %p5244 = scmp.lt.s32.totalorder %s20, 1
      %s5245 = scalar_select %p5244, %s20, 1
      %p5246 = scmp.lt.s32.totalorder %s5243, 7
      %s5247 = scalar_select %p5246, %s5243, 7
      %s5248 = smul.addr %s5247, 2
      %s5249 = smul.addr %s5245, 16
      %s5250 = sadd.s32 %s5248, %s5249
      %s5251 = smul.addr %s5250, 4
      %s5252 = scalar_lea.vmem %s3, %s5251
      %p5253 = scmp.lt.s32.totalorder %s20, 1
      %s5254 = scalar_select %p5253, %s20, 1
      %s5255 = smul.addr %s5254, 4
      %s5256 = smul.addr %s5255, 8
      %s5257 = scalar_lea.vmem %s4, %s5256
      // Predicated region
      $region37: #{up3d_forward.4} parent=31 // pred_check
        %p5258 = pneg %p116
      $region38: #{up3d_forward.4} parent=31 // pred_check_branch
        %5260 = sbr.rel (%p5258) target = $region40
      $region39: #{up3d_forward.4} parent=31 // pred_region
        %s5261 = smul.u32 8, %s21
      $region40: #{up3d_forward.4} parent=31 // pred_fallthru
        _
      // Predicated region
      $region41: #{up3d_forward.4} parent=31 // pred_check
        %p5262 = pneg %p142
      $region42: #{up3d_forward.4} parent=31 // pred_check_branch
        %5264 = sbr.rel (%p5262) target = $region44
      $region43: #{up3d_forward.4} parent=31 // pred_region
        _
      $region44: #{up3d_forward.4} parent=31 // pred_fallthru
        _
    $region32: #{up3d_forward.4} parent=5 // pred_fallthru
      _
    %p5265 = scmp.le.s32.totalorder 2, %s11
    // Predicated region
    $region45: #{up3d_forward.4} parent=5 // pred_check
      %p5266 = pneg %p5265
    $region46: #{up3d_forward.4} parent=5 // pred_check_branch
      %5268 = sbr.rel (%p5266) target = $region48
    $region47: #{up3d_forward.4} parent=5 // pred_region
      %s5269 = ssub.s32 %s11, 2
      // Predicated region
      $region49: #{up3d_forward.4} parent=47 // pred_check
        %p5270 = pneg %p122
      $region50: #{up3d_forward.4} parent=47 // pred_check_branch
        %5272 = sbr.rel (%p5270) target = $region52
      $region51: #{up3d_forward.4} parent=47 // pred_region
        %s5273 = smul.u32 8, %s23
        %p5274 = scmp.lt.s32.totalorder %s22, 1
        %s5275 = scalar_select %p5274, %s22, 1
        %p5276 = scmp.lt.s32.totalorder %s5273, 7
        %s5277 = scalar_select %p5276, %s5273, 7
        %s5278 = smul.addr %s5277, 2
        %s5279 = smul.addr %s5275, 16
        %s5280 = sadd.s32 %s5278, %s5279
        %s5281 = smul.addr %s5280, 4
        %s5282 = scalar_lea.vmem %s3, %s5281
      $region52: #{up3d_forward.4} parent=47 // pred_fallthru
        _
      // Predicated region
      $region53: #{up3d_forward.4} parent=47 // pred_check
        %p5283 = pneg %p148
      $region54: #{up3d_forward.4} parent=47 // pred_check_branch
        %5285 = sbr.rel (%p5283) target = $region56
      $region55: #{up3d_forward.4} parent=47 // pred_region
        %p5286 = scmp.lt.s32.totalorder %s22, 1
        %s5287 = scalar_select %p5286, %s22, 1
        %s5288 = smul.addr %s5287, 4
        %s5289 = smul.addr %s5288, 8
        %s5290 = scalar_lea.vmem %s4, %s5289
      $region56: #{up3d_forward.4} parent=47 // pred_fallthru
        _
    $region48: #{up3d_forward.4} parent=5 // pred_fallthru
      _
  $region6: #{up3d_forward.4} parent=0 // loop_footer
    %s15 = sadd.s32 1, %s11
  $region7: #{up3d_forward.4} parent=0 // loop_footer_branch
    %10 = sbr.rel target = $region3
  $region8: #{up3d_forward.4} parent=0 // loop_exit
    _

</llo_original>
